<compile_context>
chip_gen: v6e
topology: v6e:2x2x1
jax: 0.10.0
libtpu: 0.0.40
codegen_flags: <defaults>
</compile_context>

<pallas_src>
import functools

import jax
import jax.numpy as jnp
from jax import lax
from jax.experimental import pallas as pl
from jax.experimental.pallas import tpu as pltpu


# ----------------------------------------------------------------------------
# Fused patch_embed kernel: per batch element, everything stays in VMEM.
# ----------------------------------------------------------------------------
def _fused_patch_embed_kernel(x_ref, w1_ref, b1_ref, w2_ref, b2_ref,
                              w3_ref, b3_ref, w4_ref, b4_ref,
                              wloc_ref, pat_ref, o_ref, pad_ref,
                              *, H, W, C, nch, dembed):
    HW = H * W
    f32 = jnp.float32
    bf16 = jnp.bfloat16

    def bias_relu(y, b_ref):
        # BN scale is pre-folded into the weights; only bias + ReLU remain (f32, VPU).
        return jnp.maximum(y + b_ref[...], 0.0)

    # Zero the padded scratch every grid step (border must be zero; safe under
    # megacore "parallel" sharding where program_id 0 may not run on every core).
    pad_ref[...] = jnp.zeros(pad_ref.shape, pad_ref.dtype)

    # ---- conv1: 1x1 conv (+ folded BN) + ReLU == matmul over channels ----------
    x = x_ref[0]                                                   # (HW, nch) bf16
    y = jnp.dot(x, w1_ref[...], preferred_element_type=f32)        # (HW, C) f32
    y = bias_relu(y, b1_ref)

    # ---- two 3x3 convs (stride 1, pad 1, + folded BN) + ReLU --------------------
    # 9 whole-image per-tap MXU matmuls accumulated in f32; padding lives in VMEM.
    def conv3x3(y_in, w_ref, b_ref):
        pad_ref[1:1 + H, 1:1 + W, :] = y_in.reshape(H, W, C)       # interior write
        acc = jnp.zeros((HW, C), f32)
        for dy in range(3):
            for dx in range(3):
                tap = pad_ref[dy:dy + H, dx:dx + W, :].reshape(HW, C)
                acc = acc + jnp.dot(tap.astype(bf16), w_ref[dy * 3 + dx],
                                    preferred_element_type=f32)
        return bias_relu(acc, b_ref)

    y = conv3x3(y, w2_ref, b2_ref)
    y = conv3x3(y, w3_ref, b3_ref)

    # ---- conv4: 1x1 conv (+ folded BN) + ReLU, C -> nch (stays in VMEM) ---------
    y4 = jnp.dot(y.astype(bf16), w4_ref[...],
                 preferred_element_type=f32)                       # (HW, nch) f32
    y4 = bias_relu(y4, b4_ref)

    # ---- patch conv: kernel == stride == patch_shape, no bias -------------------
    # wloc[c, hw, e] = w5[tap(hw), c, e]  (per-location weight slab, precomputed)
    # t[hw, e]      = sum_c y4[hw, c] * wloc[c, hw, e]        (VPU, 4 bcast-mul-adds)
    # z[p, e]       = sum_hw pat[p, hw] * t[hw, e]            (one MXU matmul)
    t = y4[:, 0:1] * wloc_ref[0]
    for c in range(1, nch):
        t = t + y4[:, c:c + 1] * wloc_ref[c]                       # (HW, dembed) f32
    o_ref[0] = jnp.dot(pat_ref[...], t.astype(bf16),
                       preferred_element_type=f32)                 # (npatch, dembed)


# ----------------------------------------------------------------------------
# EmbedEncoder forward (model=['cnn', 'conformer'], mode='spat', use_cls=False)
# ----------------------------------------------------------------------------
def embed_encoder_forward(embed, params, *, sig_shape, patch_shape, dembed):
    nf, nt, nreim, nmic = sig_shape
    nch = nreim * nmic
    pf, pt = patch_shape
    assert nf % pf == 0 and nt % pt == 0
    npf, npt = nf // pf, nt // pt
    npatch = npf * npt
    dpatch = pf * pt
    B, npatch_in, dim = embed.shape
    assert npatch_in == npatch and dim == dpatch * nch

    C = params["w1"].shape[-1]           # conv_chs
    HW = nf * nt
    bf16 = jnp.bfloat16

    # PatchRecover: (B, npatch, dpatch, nch) -> (B, nf, nt, nch), flattened to
    # (B, HW, nch).  Pure layout plumbing on the kernel input; all compute is fused.
    x = embed.reshape(B, npf, npt, pf, pt, nch)
    x = x.transpose(0, 1, 3, 2, 4, 5).reshape(B, HW, nch).astype(bf16)

    # Fold eval-mode BN scale into the conv weights (exact: BN sits before ReLU),
    # cast matmul weights to bf16 once; biases stay f32 for the epilogue.
    w1 = (params["w1"] * params["s1"][None, :]).astype(bf16)                 # (nch, C)
    w2 = (params["w2"] * params["s2"]).reshape(9, C, C).astype(bf16)         # (9, C, C)
    w3 = (params["w3"] * params["s3"]).reshape(9, C, C).astype(bf16)
    w4 = (params["w4"] * params["s4"][None, :]).astype(bf16)                 # (C, nch)
    b1 = params["b1"].reshape(1, C)
    b2 = params["b2"].reshape(1, C)
    b3 = params["b3"].reshape(1, C)
    b4 = params["b4"].reshape(1, nch)

    # Patch-conv constants: per-location weight slab + patch-membership matrix.
    f = jnp.arange(nf)[:, None]
    t = jnp.arange(nt)[None, :]
    tap = ((f % pf) * pt + (t % pt)).reshape(-1)                             # (HW,)
    patid = ((f // pf) * npt + (t // pt)).reshape(-1)                        # (HW,)
    w5_flat = params["w5"].reshape(dpatch, nch, dembed)                      # (16, nch, dembed)
    wloc = jnp.transpose(w5_flat[tap], (1, 0, 2))                            # (nch, HW, dembed) f32
    pat = (patid[None, :] == jnp.arange(npatch)[:, None]).astype(bf16)       # (npatch, HW)

    kernel = functools.partial(_fused_patch_embed_kernel,
                               H=nf, W=nt, C=C, nch=nch, dembed=dembed)
    full2 = lambda b: (0, 0)
    full3 = lambda b: (0, 0, 0)

    out = pl.pallas_call(
        kernel,
        out_shape=jax.ShapeDtypeStruct((B, npatch, dembed), jnp.float32),
        grid=(B,),
        in_specs=[
            pl.BlockSpec((1, HW, nch), lambda b: (b, 0, 0)),        # x (per-batch)
            pl.BlockSpec((nch, C), full2),                          # w1 (scale-folded)
            pl.BlockSpec((1, C), full2),                            # b1
            pl.BlockSpec((9, C, C), full3),                         # w2
            pl.BlockSpec((1, C), full2),                            # b2
            pl.BlockSpec((9, C, C), full3),                         # w3
            pl.BlockSpec((1, C), full2),                            # b3
            pl.BlockSpec((C, nch), full2),                          # w4
            pl.BlockSpec((1, nch), full2),                          # b4
            pl.BlockSpec((nch, HW, dembed), full3),                 # wloc (patch conv)
            pl.BlockSpec((npatch, HW), full2),                      # pat (0/1 membership)
        ],
        out_specs=pl.BlockSpec((1, npatch, dembed), lambda b: (b, 0, 0)),
        scratch_shapes=[pltpu.VMEM((nf + 2, nt + 2, C), jnp.float32)],
        compiler_params=pltpu.CompilerParams(
            dimension_semantics=("parallel",)),
    )(x, w1, b1, w2, b2, w3, b3, w4, b4, wloc, pat)

    # TODO(synk): ConformerEncoder (model[1]) is an external module whose definition
    # is not provided in the reference code; we return the patch embeddings fed to it.
    return out


# ----------------------------------------------------------------------------
# Pure-JAX reference (same math, f32, XLA conv) for a numerical self-check.
# ----------------------------------------------------------------------------
def reference_forward(embed, params, *, sig_shape, patch_shape, dembed):
    nf, nt, nreim, nmic = sig_shape
    nch = nreim * nmic
    pf, pt = patch_shape
    npf, npt = nf // pf, nt // pt
    B = embed.shape[0]
    x = embed.reshape(B, npf, npt, pf, pt, nch).transpose(0, 1, 3, 2, 4, 5)
    x = x.reshape(B, nf, nt, nch)

    def bn_relu(y, s, b):
        return jnp.maximum(y * s + b, 0.0)

    dn = ("NHWC", "HWIO", "NHWC")
    y = bn_relu(jnp.einsum("bhwc,cd->bhwd", x, params["w1"]), params["s1"], params["b1"])
    y = bn_relu(lax.conv_general_dilated(y, params["w2"], (1, 1), ((1, 1), (1, 1)),
                                         dimension_numbers=dn), params["s2"], params["b2"])
    y = bn_relu(lax.conv_general_dilated(y, params["w3"], (1, 1), ((1, 1), (1, 1)),
                                         dimension_numbers=dn), params["s3"], params["b3"])
    y = bn_relu(jnp.einsum("bhwc,cd->bhwd", y, params["w4"]), params["s4"], params["b4"])
    z = lax.conv_general_dilated(y, params["w5"], (pf, pt), "VALID", dimension_numbers=dn)
    return z.reshape(B, npf * npt, dembed)


# ----------------------------------------------------------------------------
# Deterministic parameters (eval-mode BatchNorm as scale/bias).
# PyTorch Conv2d weights (Cout, Cin, kh, kw) == ours after transpose(2, 3, 1, 0).
# ----------------------------------------------------------------------------
def make_params(key, *, nch, conv_chs, patch_shape, dembed):
    eps = 1e-5
    ks = jax.random.split(key, 16)

    def bn_fold(kg, kb, n):
        gamma = 1.0 + 0.1 * jax.random.normal(kg, (n,), jnp.float32)
        beta = 0.1 * jax.random.normal(kb, (n,), jnp.float32)
        mean = jnp.zeros((n,), jnp.float32)
        var = jnp.ones((n,), jnp.float32)
        scale = gamma / jnp.sqrt(var + eps)
        bias = beta - mean * scale
        return scale, bias

    pf, pt = patch_shape
    p = {}
    p["w1"] = 0.1 * jax.random.normal(ks[0], (nch, conv_chs), jnp.float32)
    p["s1"], p["b1"] = bn_fold(ks[1], ks[2], conv_chs)
    p["w2"] = 0.05 * jax.random.normal(ks[3], (3, 3, conv_chs, conv_chs), jnp.float32)
    p["s2"], p["b2"] = bn_fold(ks[4], ks[5], conv_chs)
    p["w3"] = 0.05 * jax.random.normal(ks[6], (3, 3, conv_chs, conv_chs), jnp.float32)
    p["s3"], p["b3"] = bn_fold(ks[7], ks[8], conv_chs)
    p["w4"] = 0.1 * jax.random.normal(ks[9], (conv_chs, nch), jnp.float32)
    p["s4"], p["b4"] = bn_fold(ks[10], ks[11], nch)
    p["w5"] = 0.1 * jax.random.normal(ks[12], (pf, pt, nch, dembed), jnp.float32)
    return p


if __name__ == "__main__":
    # Config consistent with the module:
    # sig_shape = (nf, nt, nreim, nmic) = (16, 16, 2, 2) -> nch = 4
    # patch_shape = (4, 4) -> npatch = 16, dpatch = 16, dim = dpatch * nch = 64
    sig_shape = (16, 16, 2, 2)
    patch_shape = (4, 4)
    dembed = 32
    conv_chs = 64                 # mode='spat'
    nbatch = 2
    nch = sig_shape[2] * sig_shape[3]
    npatch = (sig_shape[0] // patch_shape[0]) * (sig_shape[1] // patch_shape[1])
    dim = patch_shape[0] * patch_shape[1] * nch

    key = jax.random.PRNGKey(0)
    k_in, k_par = jax.random.split(key)
    embed_in = jax.random.normal(k_in, (nbatch, npatch, dim), jnp.float32)
    params = make_params(k_par, nch=nch, conv_chs=conv_chs,
                         patch_shape=patch_shape, dembed=dembed)

    fwd = jax.jit(functools.partial(embed_encoder_forward, sig_shape=sig_shape,
                                    patch_shape=patch_shape, dembed=dembed))
    out = jax.block_until_ready(fwd(embed_in, params))
    assert out.shape == (nbatch, npatch, dembed)

    ref = jax.block_until_ready(reference_forward(embed_in, params, sig_shape=sig_shape,
                                                  patch_shape=patch_shape, dembed=dembed))
    rel_err = float(jnp.max(jnp.abs(out - ref)) / (jnp.max(jnp.abs(ref)) + 1e-6))
    assert rel_err < 5e-2, f"numerical mismatch vs reference: rel_err={rel_err:.4f}"
    print("KERNEL_OK")
</pallas_src>

<mosaic_0001>
module attributes {stable_mosaic.version = 11 : i64} {
  func.func @_fused_patch_embed_kernel(%arg0: i32, %arg1: memref<1x256x4xbf16, #tpu.memory_space<vmem>>, %arg2: memref<4x64xbf16, #tpu.memory_space<vmem>>, %arg3: memref<1x64xf32, #tpu.memory_space<vmem>>, %arg4: memref<9x64x64xbf16, #tpu.memory_space<vmem>>, %arg5: memref<1x64xf32, #tpu.memory_space<vmem>>, %arg6: memref<9x64x64xbf16, #tpu.memory_space<vmem>>, %arg7: memref<1x64xf32, #tpu.memory_space<vmem>>, %arg8: memref<64x4xbf16, #tpu.memory_space<vmem>>, %arg9: memref<1x4xf32, #tpu.memory_space<vmem>>, %arg10: memref<4x256x32xf32, #tpu.memory_space<vmem>>, %arg11: memref<16x256xbf16, #tpu.memory_space<vmem>>, %arg12: memref<1x16x32xf32, #tpu.memory_space<vmem>>, %arg13: memref<18x18x64xf32, #tpu.memory_space<vmem>>) attributes {dimension_semantics = [#tpu.dimension_semantics<parallel>], iteration_bounds = array<i64: 2>, scalar_prefetch = 0 : i64, scratch_operands = 1 : i64, tpu.core_type = #tpu.core_type<tc>, window_params = [{transform_indices = @transform_0, window_bounds = array<i64: 1, 256, 4>}, {pipeline_mode = #tpu.pipeline_mode<synchronous>, transform_indices = @transform_1, window_bounds = array<i64: 4, 64>}, {pipeline_mode = #tpu.pipeline_mode<synchronous>, transform_indices = @transform_2, window_bounds = array<i64: 1, 64>}, {pipeline_mode = #tpu.pipeline_mode<synchronous>, transform_indices = @transform_3, window_bounds = array<i64: 9, 64, 64>}, {pipeline_mode = #tpu.pipeline_mode<synchronous>, transform_indices = @transform_4, window_bounds = array<i64: 1, 64>}, {pipeline_mode = #tpu.pipeline_mode<synchronous>, transform_indices = @transform_5, window_bounds = array<i64: 9, 64, 64>}, {pipeline_mode = #tpu.pipeline_mode<synchronous>, transform_indices = @transform_6, window_bounds = array<i64: 1, 64>}, {pipeline_mode = #tpu.pipeline_mode<synchronous>, transform_indices = @transform_7, window_bounds = array<i64: 64, 4>}, {pipeline_mode = #tpu.pipeline_mode<synchronous>, transform_indices = @transform_8, window_bounds = array<i64: 1, 4>}, {pipeline_mode = #tpu.pipeline_mode<synchronous>, transform_indices = @transform_9, window_bounds = array<i64: 4, 256, 32>}, {pipeline_mode = #tpu.pipeline_mode<synchronous>, transform_indices = @transform_10, window_bounds = array<i64: 16, 256>}, {transform_indices = @transform_11, window_bounds = array<i64: 1, 16, 32>}]} {
    %cst = arith.constant 0.000000e+00 : f32
    %0 = vector.broadcast %cst : f32 to vector<18x18x64xf32>
    %c0 = arith.constant 0 : index
    %c0_0 = arith.constant 0 : index
    %c0_1 = arith.constant 0 : index
    %1 = vector.load %arg13[%c0, %c0_0, %c0_1] : memref<18x18x64xf32, #tpu.memory_space<vmem>>, vector<18x18x64xf32>
    tpu.vector_store %arg13[%c0, %c0_0, %c0_1], %0 {strides = array<i32>} : memref<18x18x64xf32, #tpu.memory_space<vmem>>, vector<18x18x64xf32>,
    %c0_2 = arith.constant 0 : index
    %c0_3 = arith.constant 0 : index
    %c0_4 = arith.constant 0 : index
    %2 = vector.load %arg1[%c0_2, %c0_3, %c0_4] : memref<1x256x4xbf16, #tpu.memory_space<vmem>>, vector<1x256x4xbf16>
    %3 = vector.shape_cast %2 : vector<1x256x4xbf16> to vector<256x4xbf16>
    %c0_5 = arith.constant 0 : index
    %c0_6 = arith.constant 0 : index
    %4 = vector.load %arg2[%c0_5, %c0_6] : memref<4x64xbf16, #tpu.memory_space<vmem>>, vector<4x64xbf16>
    %cst_7 = arith.constant dense<0.000000e+00> : vector<256x64xf32>
    %5 = tpu.matmul %3, %4, %cst_7 {dimension_numbers = #tpu.dot_dimension_numbers<[1], [0], [0], [1], [0, 0, 1, 1], [], []>} : vector<256x4xbf16>, vector<4x64xbf16>, vector<256x64xf32> -> vector<256x64xf32>
    %c0_8 = arith.constant 0 : index
    %c0_9 = arith.constant 0 : index
    %6 = vector.load %arg3[%c0_8, %c0_9] : memref<1x64xf32, #tpu.memory_space<vmem>>, vector<1x64xf32>
    %7 = vector.broadcast %6 : vector<1x64xf32> to vector<256x64xf32>
    %8 = arith.addf %5, %7 : vector<256x64xf32>
    %cst_10 = arith.constant 0.000000e+00 : f32
    %9 = vector.broadcast %cst_10 : f32 to vector<256x64xf32>
    %10 = arith.maximumf %8, %9 : vector<256x64xf32>
    %11 = vector.shape_cast %10 : vector<256x64xf32> to vector<16x16x64xf32>
    %c1 = arith.constant 1 : index
    %c1_11 = arith.constant 1 : index
    %c0_12 = arith.constant 0 : index
    %12 = vector.load %arg13[%c1, %c1_11, %c0_12] : memref<18x18x64xf32, #tpu.memory_space<vmem>>, vector<16x16x64xf32>
    tpu.vector_store %arg13[%c1, %c1_11, %c0_12], %11 {strides = array<i32>} : memref<18x18x64xf32, #tpu.memory_space<vmem>>, vector<16x16x64xf32>,
    %cst_13 = arith.constant 0.000000e+00 : f32
    %13 = vector.broadcast %cst_13 : f32 to vector<256x64xf32>
    %c0_14 = arith.constant 0 : index
    %c0_15 = arith.constant 0 : index
    %c0_16 = arith.constant 0 : index
    %14 = vector.load %arg13[%c0_14, %c0_15, %c0_16] : memref<18x18x64xf32, #tpu.memory_space<vmem>>, vector<16x16x64xf32>
    %15 = vector.shape_cast %14 : vector<16x16x64xf32> to vector<256x64xf32>
    %16 = arith.truncf %15 : vector<256x64xf32> to vector<256x64xbf16>
    %c0_17 = arith.constant 0 : index
    %c0_18 = arith.constant 0 : index
    %c0_19 = arith.constant 0 : index
    %17 = vector.load %arg4[%c0_17, %c0_18, %c0_19] : memref<9x64x64xbf16, #tpu.memory_space<vmem>>, vector<1x64x64xbf16>
    %18 = vector.shape_cast %17 : vector<1x64x64xbf16> to vector<64x64xbf16>
    %cst_20 = arith.constant dense<0.000000e+00> : vector<256x64xf32>
    %19 = tpu.matmul %16, %18, %cst_20 {dimension_numbers = #tpu.dot_dimension_numbers<[1], [0], [0], [1], [0, 0, 1, 1], [], []>} : vector<256x64xbf16>, vector<64x64xbf16>, vector<256x64xf32> -> vector<256x64xf32>
    %20 = arith.addf %13, %19 : vector<256x64xf32>
    %c0_21 = arith.constant 0 : index
    %c1_22 = arith.constant 1 : index
    %c0_23 = arith.constant 0 : index
    %21 = vector.load %arg13[%c0_21, %c1_22, %c0_23] : memref<18x18x64xf32, #tpu.memory_space<vmem>>, vector<16x16x64xf32>
    %22 = vector.shape_cast %21 : vector<16x16x64xf32> to vector<256x64xf32>
    %23 = arith.truncf %22 : vector<256x64xf32> to vector<256x64xbf16>
    %c1_24 = arith.constant 1 : index
    %c0_25 = arith.constant 0 : index
    %c0_26 = arith.constant 0 : index
    %24 = vector.load %arg4[%c1_24, %c0_25, %c0_26] : memref<9x64x64xbf16, #tpu.memory_space<vmem>>, vector<1x64x64xbf16>
    %25 = vector.shape_cast %24 : vector<1x64x64xbf16> to vector<64x64xbf16>
    %cst_27 = arith.constant dense<0.000000e+00> : vector<256x64xf32>
    %26 = tpu.matmul %23, %25, %cst_27 {dimension_numbers = #tpu.dot_dimension_numbers<[1], [0], [0], [1], [0, 0, 1, 1], [], []>} : vector<256x64xbf16>, vector<64x64xbf16>, vector<256x64xf32> -> vector<256x64xf32>
    %27 = arith.addf %20, %26 : vector<256x64xf32>
    %c0_28 = arith.constant 0 : index
    %c2 = arith.constant 2 : index
    %c0_29 = arith.constant 0 : index
    %28 = vector.load %arg13[%c0_28, %c2, %c0_29] : memref<18x18x64xf32, #tpu.memory_space<vmem>>, vector<16x16x64xf32>
    %29 = vector.shape_cast %28 : vector<16x16x64xf32> to vector<256x64xf32>
    %30 = arith.truncf %29 : vector<256x64xf32> to vector<256x64xbf16>
    %c2_30 = arith.constant 2 : index
    %c0_31 = arith.constant 0 : index
    %c0_32 = arith.constant 0 : index
    %31 = vector.load %arg4[%c2_30, %c0_31, %c0_32] : memref<9x64x64xbf16, #tpu.memory_space<vmem>>, vector<1x64x64xbf16>
    %32 = vector.shape_cast %31 : vector<1x64x64xbf16> to vector<64x64xbf16>
    %cst_33 = arith.constant dense<0.000000e+00> : vector<256x64xf32>
    %33 = tpu.matmul %30, %32, %cst_33 {dimension_numbers = #tpu.dot_dimension_numbers<[1], [0], [0], [1], [0, 0, 1, 1], [], []>} : vector<256x64xbf16>, vector<64x64xbf16>, vector<256x64xf32> -> vector<256x64xf32>
    %34 = arith.addf %27, %33 : vector<256x64xf32>
    %c1_34 = arith.constant 1 : index
    %c0_35 = arith.constant 0 : index
    %c0_36 = arith.constant 0 : index
    %35 = vector.load %arg13[%c1_34, %c0_35, %c0_36] : memref<18x18x64xf32, #tpu.memory_space<vmem>>, vector<16x16x64xf32>
    %36 = vector.shape_cast %35 : vector<16x16x64xf32> to vector<256x64xf32>
    %37 = arith.truncf %36 : vector<256x64xf32> to vector<256x64xbf16>
    %c3 = arith.constant 3 : index
    %c0_37 = arith.constant 0 : index
    %c0_38 = arith.constant 0 : index
    %38 = vector.load %arg4[%c3, %c0_37, %c0_38] : memref<9x64x64xbf16, #tpu.memory_space<vmem>>, vector<1x64x64xbf16>
    %39 = vector.shape_cast %38 : vector<1x64x64xbf16> to vector<64x64xbf16>
    %cst_39 = arith.constant dense<0.000000e+00> : vector<256x64xf32>
    %40 = tpu.matmul %37, %39, %cst_39 {dimension_numbers = #tpu.dot_dimension_numbers<[1], [0], [0], [1], [0, 0, 1, 1], [], []>} : vector<256x64xbf16>, vector<64x64xbf16>, vector<256x64xf32> -> vector<256x64xf32>
    %41 = arith.addf %34, %40 : vector<256x64xf32>
    %c1_40 = arith.constant 1 : index
    %c1_41 = arith.constant 1 : index
    %c0_42 = arith.constant 0 : index
    %42 = vector.load %arg13[%c1_40, %c1_41, %c0_42] : memref<18x18x64xf32, #tpu.memory_space<vmem>>, vector<16x16x64xf32>
    %43 = vector.shape_cast %42 : vector<16x16x64xf32> to vector<256x64xf32>
    %44 = arith.truncf %43 : vector<256x64xf32> to vector<256x64xbf16>
    %c4 = arith.constant 4 : index
    %c0_43 = arith.constant 0 : index
    %c0_44 = arith.constant 0 : index
    %45 = vector.load %arg4[%c4, %c0_43, %c0_44] : memref<9x64x64xbf16, #tpu.memory_space<vmem>>, vector<1x64x64xbf16>
    %46 = vector.shape_cast %45 : vector<1x64x64xbf16> to vector<64x64xbf16>
    %cst_45 = arith.constant dense<0.000000e+00> : vector<256x64xf32>
    %47 = tpu.matmul %44, %46, %cst_45 {dimension_numbers = #tpu.dot_dimension_numbers<[1], [0], [0], [1], [0, 0, 1, 1], [], []>} : vector<256x64xbf16>, vector<64x64xbf16>, vector<256x64xf32> -> vector<256x64xf32>
    %48 = arith.addf %41, %47 : vector<256x64xf32>
    %c1_46 = arith.constant 1 : index
    %c2_47 = arith.constant 2 : index
    %c0_48 = arith.constant 0 : index
    %49 = vector.load %arg13[%c1_46, %c2_47, %c0_48] : memref<18x18x64xf32, #tpu.memory_space<vmem>>, vector<16x16x64xf32>
    %50 = vector.shape_cast %49 : vector<16x16x64xf32> to vector<256x64xf32>
    %51 = arith.truncf %50 : vector<256x64xf32> to vector<256x64xbf16>
    %c5 = arith.constant 5 : index
    %c0_49 = arith.constant 0 : index
    %c0_50 = arith.constant 0 : index
    %52 = vector.load %arg4[%c5, %c0_49, %c0_50] : memref<9x64x64xbf16, #tpu.memory_space<vmem>>, vector<1x64x64xbf16>
    %53 = vector.shape_cast %52 : vector<1x64x64xbf16> to vector<64x64xbf16>
    %cst_51 = arith.constant dense<0.000000e+00> : vector<256x64xf32>
    %54 = tpu.matmul %51, %53, %cst_51 {dimension_numbers = #tpu.dot_dimension_numbers<[1], [0], [0], [1], [0, 0, 1, 1], [], []>} : vector<256x64xbf16>, vector<64x64xbf16>, vector<256x64xf32> -> vector<256x64xf32>
    %55 = arith.addf %48, %54 : vector<256x64xf32>
    %c2_52 = arith.constant 2 : index
    %c0_53 = arith.constant 0 : index
    %c0_54 = arith.constant 0 : index
    %56 = vector.load %arg13[%c2_52, %c0_53, %c0_54] : memref<18x18x64xf32, #tpu.memory_space<vmem>>, vector<16x16x64xf32>
    %57 = vector.shape_cast %56 : vector<16x16x64xf32> to vector<256x64xf32>
    %58 = arith.truncf %57 : vector<256x64xf32> to vector<256x64xbf16>
    %c6 = arith.constant 6 : index
    %c0_55 = arith.constant 0 : index
    %c0_56 = arith.constant 0 : index
    %59 = vector.load %arg4[%c6, %c0_55, %c0_56] : memref<9x64x64xbf16, #tpu.memory_space<vmem>>, vector<1x64x64xbf16>
    %60 = vector.shape_cast %59 : vector<1x64x64xbf16> to vector<64x64xbf16>
    %cst_57 = arith.constant dense<0.000000e+00> : vector<256x64xf32>
    %61 = tpu.matmul %58, %60, %cst_57 {dimension_numbers = #tpu.dot_dimension_numbers<[1], [0], [0], [1], [0, 0, 1, 1], [], []>} : vector<256x64xbf16>, vector<64x64xbf16>, vector<256x64xf32> -> vector<256x64xf32>
    %62 = arith.addf %55, %61 : vector<256x64xf32>
    %c2_58 = arith.constant 2 : index
    %c1_59 = arith.constant 1 : index
    %c0_60 = arith.constant 0 : index
    %63 = vector.load %arg13[%c2_58, %c1_59, %c0_60] : memref<18x18x64xf32, #tpu.memory_space<vmem>>, vector<16x16x64xf32>
    %64 = vector.shape_cast %63 : vector<16x16x64xf32> to vector<256x64xf32>
    %65 = arith.truncf %64 : vector<256x64xf32> to vector<256x64xbf16>
    %c7 = arith.constant 7 : index
    %c0_61 = arith.constant 0 : index
    %c0_62 = arith.constant 0 : index
    %66 = vector.load %arg4[%c7, %c0_61, %c0_62] : memref<9x64x64xbf16, #tpu.memory_space<vmem>>, vector<1x64x64xbf16>
    %67 = vector.shape_cast %66 : vector<1x64x64xbf16> to vector<64x64xbf16>
    %cst_63 = arith.constant dense<0.000000e+00> : vector<256x64xf32>
    %68 = tpu.matmul %65, %67, %cst_63 {dimension_numbers = #tpu.dot_dimension_numbers<[1], [0], [0], [1], [0, 0, 1, 1], [], []>} : vector<256x64xbf16>, vector<64x64xbf16>, vector<256x64xf32> -> vector<256x64xf32>
    %69 = arith.addf %62, %68 : vector<256x64xf32>
    %c2_64 = arith.constant 2 : index
    %c2_65 = arith.constant 2 : index
    %c0_66 = arith.constant 0 : index
    %70 = vector.load %arg13[%c2_64, %c2_65, %c0_66] : memref<18x18x64xf32, #tpu.memory_space<vmem>>, vector<16x16x64xf32>
    %71 = vector.shape_cast %70 : vector<16x16x64xf32> to vector<256x64xf32>
    %72 = arith.truncf %71 : vector<256x64xf32> to vector<256x64xbf16>
    %c8 = arith.constant 8 : index
    %c0_67 = arith.constant 0 : index
    %c0_68 = arith.constant 0 : index
    %73 = vector.load %arg4[%c8, %c0_67, %c0_68] : memref<9x64x64xbf16, #tpu.memory_space<vmem>>, vector<1x64x64xbf16>
    %74 = vector.shape_cast %73 : vector<1x64x64xbf16> to vector<64x64xbf16>
    %cst_69 = arith.constant dense<0.000000e+00> : vector<256x64xf32>
    %75 = tpu.matmul %72, %74, %cst_69 {dimension_numbers = #tpu.dot_dimension_numbers<[1], [0], [0], [1], [0, 0, 1, 1], [], []>} : vector<256x64xbf16>, vector<64x64xbf16>, vector<256x64xf32> -> vector<256x64xf32>
    %76 = arith.addf %69, %75 : vector<256x64xf32>
    %c0_70 = arith.constant 0 : index
    %c0_71 = arith.constant 0 : index
    %77 = vector.load %arg5[%c0_70, %c0_71] : memref<1x64xf32, #tpu.memory_space<vmem>>, vector<1x64xf32>
    %78 = vector.broadcast %77 : vector<1x64xf32> to vector<256x64xf32>
    %79 = arith.addf %76, %78 : vector<256x64xf32>
    %cst_72 = arith.constant 0.000000e+00 : f32
    %80 = vector.broadcast %cst_72 : f32 to vector<256x64xf32>
    %81 = arith.maximumf %79, %80 : vector<256x64xf32>
    %82 = vector.shape_cast %81 : vector<256x64xf32> to vector<16x16x64xf32>
    %c1_73 = arith.constant 1 : index
    %c1_74 = arith.constant 1 : index
    %c0_75 = arith.constant 0 : index
    %83 = vector.load %arg13[%c1_73, %c1_74, %c0_75] : memref<18x18x64xf32, #tpu.memory_space<vmem>>, vector<16x16x64xf32>
    tpu.vector_store %arg13[%c1_73, %c1_74, %c0_75], %82 {strides = array<i32>} : memref<18x18x64xf32, #tpu.memory_space<vmem>>, vector<16x16x64xf32>,
    %cst_76 = arith.constant 0.000000e+00 : f32
    %84 = vector.broadcast %cst_76 : f32 to vector<256x64xf32>
    %c0_77 = arith.constant 0 : index
    %c0_78 = arith.constant 0 : index
    %c0_79 = arith.constant 0 : index
    %85 = vector.load %arg13[%c0_77, %c0_78, %c0_79] : memref<18x18x64xf32, #tpu.memory_space<vmem>>, vector<16x16x64xf32>
    %86 = vector.shape_cast %85 : vector<16x16x64xf32> to vector<256x64xf32>
    %87 = arith.truncf %86 : vector<256x64xf32> to vector<256x64xbf16>
    %c0_80 = arith.constant 0 : index
    %c0_81 = arith.constant 0 : index
    %c0_82 = arith.constant 0 : index
    %88 = vector.load %arg6[%c0_80, %c0_81, %c0_82] : memref<9x64x64xbf16, #tpu.memory_space<vmem>>, vector<1x64x64xbf16>
    %89 = vector.shape_cast %88 : vector<1x64x64xbf16> to vector<64x64xbf16>
    %cst_83 = arith.constant dense<0.000000e+00> : vector<256x64xf32>
    %90 = tpu.matmul %87, %89, %cst_83 {dimension_numbers = #tpu.dot_dimension_numbers<[1], [0], [0], [1], [0, 0, 1, 1], [], []>} : vector<256x64xbf16>, vector<64x64xbf16>, vector<256x64xf32> -> vector<256x64xf32>
    %91 = arith.addf %84, %90 : vector<256x64xf32>
    %c0_84 = arith.constant 0 : index
    %c1_85 = arith.constant 1 : index
    %c0_86 = arith.constant 0 : index
    %92 = vector.load %arg13[%c0_84, %c1_85, %c0_86] : memref<18x18x64xf32, #tpu.memory_space<vmem>>, vector<16x16x64xf32>
    %93 = vector.shape_cast %92 : vector<16x16x64xf32> to vector<256x64xf32>
    %94 = arith.truncf %93 : vector<256x64xf32> to vector<256x64xbf16>
    %c1_87 = arith.constant 1 : index
    %c0_88 = arith.constant 0 : index
    %c0_89 = arith.constant 0 : index
    %95 = vector.load %arg6[%c1_87, %c0_88, %c0_89] : memref<9x64x64xbf16, #tpu.memory_space<vmem>>, vector<1x64x64xbf16>
    %96 = vector.shape_cast %95 : vector<1x64x64xbf16> to vector<64x64xbf16>
    %cst_90 = arith.constant dense<0.000000e+00> : vector<256x64xf32>
    %97 = tpu.matmul %94, %96, %cst_90 {dimension_numbers = #tpu.dot_dimension_numbers<[1], [0], [0], [1], [0, 0, 1, 1], [], []>} : vector<256x64xbf16>, vector<64x64xbf16>, vector<256x64xf32> -> vector<256x64xf32>
    %98 = arith.addf %91, %97 : vector<256x64xf32>
    %c0_91 = arith.constant 0 : index
    %c2_92 = arith.constant 2 : index
    %c0_93 = arith.constant 0 : index
    %99 = vector.load %arg13[%c0_91, %c2_92, %c0_93] : memref<18x18x64xf32, #tpu.memory_space<vmem>>, vector<16x16x64xf32>
    %100 = vector.shape_cast %99 : vector<16x16x64xf32> to vector<256x64xf32>
    %101 = arith.truncf %100 : vector<256x64xf32> to vector<256x64xbf16>
    %c2_94 = arith.constant 2 : index
    %c0_95 = arith.constant 0 : index
    %c0_96 = arith.constant 0 : index
    %102 = vector.load %arg6[%c2_94, %c0_95, %c0_96] : memref<9x64x64xbf16, #tpu.memory_space<vmem>>, vector<1x64x64xbf16>
    %103 = vector.shape_cast %102 : vector<1x64x64xbf16> to vector<64x64xbf16>
    %cst_97 = arith.constant dense<0.000000e+00> : vector<256x64xf32>
    %104 = tpu.matmul %101, %103, %cst_97 {dimension_numbers = #tpu.dot_dimension_numbers<[1], [0], [0], [1], [0, 0, 1, 1], [], []>} : vector<256x64xbf16>, vector<64x64xbf16>, vector<256x64xf32> -> vector<256x64xf32>
    %105 = arith.addf %98, %104 : vector<256x64xf32>
    %c1_98 = arith.constant 1 : index
    %c0_99 = arith.constant 0 : index
    %c0_100 = arith.constant 0 : index
    %106 = vector.load %arg13[%c1_98, %c0_99, %c0_100] : memref<18x18x64xf32, #tpu.memory_space<vmem>>, vector<16x16x64xf32>
    %107 = vector.shape_cast %106 : vector<16x16x64xf32> to vector<256x64xf32>
    %108 = arith.truncf %107 : vector<256x64xf32> to vector<256x64xbf16>
    %c3_101 = arith.constant 3 : index
    %c0_102 = arith.constant 0 : index
    %c0_103 = arith.constant 0 : index
    %109 = vector.load %arg6[%c3_101, %c0_102, %c0_103] : memref<9x64x64xbf16, #tpu.memory_space<vmem>>, vector<1x64x64xbf16>
    %110 = vector.shape_cast %109 : vector<1x64x64xbf16> to vector<64x64xbf16>
    %cst_104 = arith.constant dense<0.000000e+00> : vector<256x64xf32>
    %111 = tpu.matmul %108, %110, %cst_104 {dimension_numbers = #tpu.dot_dimension_numbers<[1], [0], [0], [1], [0, 0, 1, 1], [], []>} : vector<256x64xbf16>, vector<64x64xbf16>, vector<256x64xf32> -> vector<256x64xf32>
    %112 = arith.addf %105, %111 : vector<256x64xf32>
    %c1_105 = arith.constant 1 : index
    %c1_106 = arith.constant 1 : index
    %c0_107 = arith.constant 0 : index
    %113 = vector.load %arg13[%c1_105, %c1_106, %c0_107] : memref<18x18x64xf32, #tpu.memory_space<vmem>>, vector<16x16x64xf32>
    %114 = vector.shape_cast %113 : vector<16x16x64xf32> to vector<256x64xf32>
    %115 = arith.truncf %114 : vector<256x64xf32> to vector<256x64xbf16>
    %c4_108 = arith.constant 4 : index
    %c0_109 = arith.constant 0 : index
    %c0_110 = arith.constant 0 : index
    %116 = vector.load %arg6[%c4_108, %c0_109, %c0_110] : memref<9x64x64xbf16, #tpu.memory_space<vmem>>, vector<1x64x64xbf16>
    %117 = vector.shape_cast %116 : vector<1x64x64xbf16> to vector<64x64xbf16>
    %cst_111 = arith.constant dense<0.000000e+00> : vector<256x64xf32>
    %118 = tpu.matmul %115, %117, %cst_111 {dimension_numbers = #tpu.dot_dimension_numbers<[1], [0], [0], [1], [0, 0, 1, 1], [], []>} : vector<256x64xbf16>, vector<64x64xbf16>, vector<256x64xf32> -> vector<256x64xf32>
    %119 = arith.addf %112, %118 : vector<256x64xf32>
    %c1_112 = arith.constant 1 : index
    %c2_113 = arith.constant 2 : index
    %c0_114 = arith.constant 0 : index
    %120 = vector.load %arg13[%c1_112, %c2_113, %c0_114] : memref<18x18x64xf32, #tpu.memory_space<vmem>>, vector<16x16x64xf32>
    %121 = vector.shape_cast %120 : vector<16x16x64xf32> to vector<256x64xf32>
    %122 = arith.truncf %121 : vector<256x64xf32> to vector<256x64xbf16>
    %c5_115 = arith.constant 5 : index
    %c0_116 = arith.constant 0 : index
    %c0_117 = arith.constant 0 : index
    %123 = vector.load %arg6[%c5_115, %c0_116, %c0_117] : memref<9x64x64xbf16, #tpu.memory_space<vmem>>, vector<1x64x64xbf16>
    %124 = vector.shape_cast %123 : vector<1x64x64xbf16> to vector<64x64xbf16>
    %cst_118 = arith.constant dense<0.000000e+00> : vector<256x64xf32>
    %125 = tpu.matmul %122, %124, %cst_118 {dimension_numbers = #tpu.dot_dimension_numbers<[1], [0], [0], [1], [0, 0, 1, 1], [], []>} : vector<256x64xbf16>, vector<64x64xbf16>, vector<256x64xf32> -> vector<256x64xf32>
    %126 = arith.addf %119, %125 : vector<256x64xf32>
    %c2_119 = arith.constant 2 : index
    %c0_120 = arith.constant 0 : index
    %c0_121 = arith.constant 0 : index
    %127 = vector.load %arg13[%c2_119, %c0_120, %c0_121] : memref<18x18x64xf32, #tpu.memory_space<vmem>>, vector<16x16x64xf32>
    %128 = vector.shape_cast %127 : vector<16x16x64xf32> to vector<256x64xf32>
    %129 = arith.truncf %128 : vector<256x64xf32> to vector<256x64xbf16>
    %c6_122 = arith.constant 6 : index
    %c0_123 = arith.constant 0 : index
    %c0_124 = arith.constant 0 : index
    %130 = vector.load %arg6[%c6_122, %c0_123, %c0_124] : memref<9x64x64xbf16, #tpu.memory_space<vmem>>, vector<1x64x64xbf16>
    %131 = vector.shape_cast %130 : vector<1x64x64xbf16> to vector<64x64xbf16>
    %cst_125 = arith.constant dense<0.000000e+00> : vector<256x64xf32>
    %132 = tpu.matmul %129, %131, %cst_125 {dimension_numbers = #tpu.dot_dimension_numbers<[1], [0], [0], [1], [0, 0, 1, 1], [], []>} : vector<256x64xbf16>, vector<64x64xbf16>, vector<256x64xf32> -> vector<256x64xf32>
    %133 = arith.addf %126, %132 : vector<256x64xf32>
    %c2_126 = arith.constant 2 : index
    %c1_127 = arith.constant 1 : index
    %c0_128 = arith.constant 0 : index
    %134 = vector.load %arg13[%c2_126, %c1_127, %c0_128] : memref<18x18x64xf32, #tpu.memory_space<vmem>>, vector<16x16x64xf32>
    %135 = vector.shape_cast %134 : vector<16x16x64xf32> to vector<256x64xf32>
    %136 = arith.truncf %135 : vector<256x64xf32> to vector<256x64xbf16>
    %c7_129 = arith.constant 7 : index
    %c0_130 = arith.constant 0 : index
    %c0_131 = arith.constant 0 : index
    %137 = vector.load %arg6[%c7_129, %c0_130, %c0_131] : memref<9x64x64xbf16, #tpu.memory_space<vmem>>, vector<1x64x64xbf16>
    %138 = vector.shape_cast %137 : vector<1x64x64xbf16> to vector<64x64xbf16>
    %cst_132 = arith.constant dense<0.000000e+00> : vector<256x64xf32>
    %139 = tpu.matmul %136, %138, %cst_132 {dimension_numbers = #tpu.dot_dimension_numbers<[1], [0], [0], [1], [0, 0, 1, 1], [], []>} : vector<256x64xbf16>, vector<64x64xbf16>, vector<256x64xf32> -> vector<256x64xf32>
    %140 = arith.addf %133, %139 : vector<256x64xf32>
    %c2_133 = arith.constant 2 : index
    %c2_134 = arith.constant 2 : index
    %c0_135 = arith.constant 0 : index
    %141 = vector.load %arg13[%c2_133, %c2_134, %c0_135] : memref<18x18x64xf32, #tpu.memory_space<vmem>>, vector<16x16x64xf32>
    %142 = vector.shape_cast %141 : vector<16x16x64xf32> to vector<256x64xf32>
    %143 = arith.truncf %142 : vector<256x64xf32> to vector<256x64xbf16>
    %c8_136 = arith.constant 8 : index
    %c0_137 = arith.constant 0 : index
    %c0_138 = arith.constant 0 : index
    %144 = vector.load %arg6[%c8_136, %c0_137, %c0_138] : memref<9x64x64xbf16, #tpu.memory_space<vmem>>, vector<1x64x64xbf16>
    %145 = vector.shape_cast %144 : vector<1x64x64xbf16> to vector<64x64xbf16>
    %cst_139 = arith.constant dense<0.000000e+00> : vector<256x64xf32>
    %146 = tpu.matmul %143, %145, %cst_139 {dimension_numbers = #tpu.dot_dimension_numbers<[1], [0], [0], [1], [0, 0, 1, 1], [], []>} : vector<256x64xbf16>, vector<64x64xbf16>, vector<256x64xf32> -> vector<256x64xf32>
    %147 = arith.addf %140, %146 : vector<256x64xf32>
    %c0_140 = arith.constant 0 : index
    %c0_141 = arith.constant 0 : index
    %148 = vector.load %arg7[%c0_140, %c0_141] : memref<1x64xf32, #tpu.memory_space<vmem>>, vector<1x64xf32>
    %149 = vector.broadcast %148 : vector<1x64xf32> to vector<256x64xf32>
    %150 = arith.addf %147, %149 : vector<256x64xf32>
    %cst_142 = arith.constant 0.000000e+00 : f32
    %151 = vector.broadcast %cst_142 : f32 to vector<256x64xf32>
    %152 = arith.maximumf %150, %151 : vector<256x64xf32>
    %153 = arith.truncf %152 : vector<256x64xf32> to vector<256x64xbf16>
    %c0_143 = arith.constant 0 : index
    %c0_144 = arith.constant 0 : index
    %154 = vector.load %arg8[%c0_143, %c0_144] : memref<64x4xbf16, #tpu.memory_space<vmem>>, vector<64x4xbf16>
    %cst_145 = arith.constant dense<0.000000e+00> : vector<256x4xf32>
    %155 = tpu.matmul %153, %154, %cst_145 {dimension_numbers = #tpu.dot_dimension_numbers<[1], [0], [0], [1], [0, 0, 1, 1], [], []>} : vector<256x64xbf16>, vector<64x4xbf16>, vector<256x4xf32> -> vector<256x4xf32>
    %c0_146 = arith.constant 0 : index
    %c0_147 = arith.constant 0 : index
    %156 = vector.load %arg9[%c0_146, %c0_147] : memref<1x4xf32, #tpu.memory_space<vmem>>, vector<1x4xf32>
    %157 = vector.broadcast %156 : vector<1x4xf32> to vector<256x4xf32>
    %158 = arith.addf %155, %157 : vector<256x4xf32>
    %cst_148 = arith.constant 0.000000e+00 : f32
    %159 = vector.broadcast %cst_148 : f32 to vector<256x4xf32>
    %160 = arith.maximumf %158, %159 : vector<256x4xf32>
    %161 = vector.extract_strided_slice %160 {offsets = [0, 0], sizes = [256, 1], strides = [1, 1]} : vector<256x4xf32> to vector<256x1xf32>
    %c0_149 = arith.constant 0 : index
    %c0_150 = arith.constant 0 : index
    %c0_151 = arith.constant 0 : index
    %162 = vector.load %arg10[%c0_149, %c0_150, %c0_151] : memref<4x256x32xf32, #tpu.memory_space<vmem>>, vector<1x256x32xf32>
    %163 = vector.shape_cast %162 : vector<1x256x32xf32> to vector<256x32xf32>
    %164 = vector.broadcast %161 : vector<256x1xf32> to vector<256x32xf32>
    %165 = arith.mulf %164, %163 : vector<256x32xf32>
    %166 = vector.extract_strided_slice %160 {offsets = [0, 1], sizes = [256, 1], strides = [1, 1]} : vector<256x4xf32> to vector<256x1xf32>
    %c1_152 = arith.constant 1 : index
    %c0_153 = arith.constant 0 : index
    %c0_154 = arith.constant 0 : index
    %167 = vector.load %arg10[%c1_152, %c0_153, %c0_154] : memref<4x256x32xf32, #tpu.memory_space<vmem>>, vector<1x256x32xf32>
    %168 = vector.shape_cast %167 : vector<1x256x32xf32> to vector<256x32xf32>
    %169 = vector.broadcast %166 : vector<256x1xf32> to vector<256x32xf32>
    %170 = arith.mulf %169, %168 : vector<256x32xf32>
    %171 = arith.addf %165, %170 : vector<256x32xf32>
    %172 = vector.extract_strided_slice %160 {offsets = [0, 2], sizes = [256, 1], strides = [1, 1]} : vector<256x4xf32> to vector<256x1xf32>
    %c2_155 = arith.constant 2 : index
    %c0_156 = arith.constant 0 : index
    %c0_157 = arith.constant 0 : index
    %173 = vector.load %arg10[%c2_155, %c0_156, %c0_157] : memref<4x256x32xf32, #tpu.memory_space<vmem>>, vector<1x256x32xf32>
    %174 = vector.shape_cast %173 : vector<1x256x32xf32> to vector<256x32xf32>
    %175 = vector.broadcast %172 : vector<256x1xf32> to vector<256x32xf32>
    %176 = arith.mulf %175, %174 : vector<256x32xf32>
    %177 = arith.addf %171, %176 : vector<256x32xf32>
    %178 = vector.extract_strided_slice %160 {offsets = [0, 3], sizes = [256, 1], strides = [1, 1]} : vector<256x4xf32> to vector<256x1xf32>
    %c3_158 = arith.constant 3 : index
    %c0_159 = arith.constant 0 : index
    %c0_160 = arith.constant 0 : index
    %179 = vector.load %arg10[%c3_158, %c0_159, %c0_160] : memref<4x256x32xf32, #tpu.memory_space<vmem>>, vector<1x256x32xf32>
    %180 = vector.shape_cast %179 : vector<1x256x32xf32> to vector<256x32xf32>
    %181 = vector.broadcast %178 : vector<256x1xf32> to vector<256x32xf32>
    %182 = arith.mulf %181, %180 : vector<256x32xf32>
    %183 = arith.addf %177, %182 : vector<256x32xf32>
    %c0_161 = arith.constant 0 : index
    %c0_162 = arith.constant 0 : index
    %184 = vector.load %arg11[%c0_161, %c0_162] : memref<16x256xbf16, #tpu.memory_space<vmem>>, vector<16x256xbf16>
    %185 = arith.truncf %183 : vector<256x32xf32> to vector<256x32xbf16>
    %cst_163 = arith.constant dense<0.000000e+00> : vector<16x32xf32>
    %186 = tpu.matmul %184, %185, %cst_163 {dimension_numbers = #tpu.dot_dimension_numbers<[1], [0], [0], [1], [0, 0, 1, 1], [], []>} : vector<16x256xbf16>, vector<256x32xbf16>, vector<16x32xf32> -> vector<16x32xf32>
    %c0_164 = arith.constant 0 : index
    %c0_165 = arith.constant 0 : index
    %c0_166 = arith.constant 0 : index
    %187 = vector.load %arg12[%c0_164, %c0_165, %c0_166] : memref<1x16x32xf32, #tpu.memory_space<vmem>>, vector<1x16x32xf32>
    %188 = vector.shape_cast %187 : vector<1x16x32xf32> to vector<16x32xf32>
    %189 = vector.shape_cast %186 : vector<16x32xf32> to vector<1x16x32xf32>
    tpu.vector_store %arg12[%c0_164, %c0_165, %c0_166], %189 {strides = array<i32>} : memref<1x16x32xf32, #tpu.memory_space<vmem>>, vector<1x16x32xf32>,
    return
  }
  func.func @transform_0(%arg0: i32) -> (i32, i32, i32) {
    %c0_i32 = arith.constant 0 : i32
    %c0_i32_0 = arith.constant 0 : i32
    %c0_i32_1 = arith.constant 0 : i32
    return %arg0, %c0_i32, %c0_i32_0 : i32, i32, i32
  }
  func.func @transform_1(%arg0: i32) -> (i32, i32) {
    %c0_i32 = arith.constant 0 : i32
    %c0_i32_0 = arith.constant 0 : i32
    %c0_i32_1 = arith.constant 0 : i32
    return %c0_i32, %c0_i32_0 : i32, i32
  }
  func.func @transform_2(%arg0: i32) -> (i32, i32) {
    %c0_i32 = arith.constant 0 : i32
    %c0_i32_0 = arith.constant 0 : i32
    %c0_i32_1 = arith.constant 0 : i32
    return %c0_i32, %c0_i32_0 : i32, i32
  }
  func.func @transform_3(%arg0: i32) -> (i32, i32, i32) {
    %c0_i32 = arith.constant 0 : i32
    %c0_i32_0 = arith.constant 0 : i32
    %c0_i32_1 = arith.constant 0 : i32
    %c0_i32_2 = arith.constant 0 : i32
    return %c0_i32, %c0_i32_0, %c0_i32_1 : i32, i32, i32
  }
  func.func @transform_4(%arg0: i32) -> (i32, i32) {
    %c0_i32 = arith.constant 0 : i32
    %c0_i32_0 = arith.constant 0 : i32
    %c0_i32_1 = arith.constant 0 : i32
    return %c0_i32, %c0_i32_0 : i32, i32
  }
  func.func @transform_5(%arg0: i32) -> (i32, i32, i32) {
    %c0_i32 = arith.constant 0 : i32
    %c0_i32_0 = arith.constant 0 : i32
    %c0_i32_1 = arith.constant 0 : i32
    %c0_i32_2 = arith.constant 0 : i32
    return %c0_i32, %c0_i32_0, %c0_i32_1 : i32, i32, i32
  }
  func.func @transform_6(%arg0: i32) -> (i32, i32) {
    %c0_i32 = arith.constant 0 : i32
    %c0_i32_0 = arith.constant 0 : i32
    %c0_i32_1 = arith.constant 0 : i32
    return %c0_i32, %c0_i32_0 : i32, i32
  }
  func.func @transform_7(%arg0: i32) -> (i32, i32) {
    %c0_i32 = arith.constant 0 : i32
    %c0_i32_0 = arith.constant 0 : i32
    %c0_i32_1 = arith.constant 0 : i32
    return %c0_i32, %c0_i32_0 : i32, i32
  }
  func.func @transform_8(%arg0: i32) -> (i32, i32) {
    %c0_i32 = arith.constant 0 : i32
    %c0_i32_0 = arith.constant 0 : i32
    %c0_i32_1 = arith.constant 0 : i32
    return %c0_i32, %c0_i32_0 : i32, i32
  }
  func.func @transform_9(%arg0: i32) -> (i32, i32, i32) {
    %c0_i32 = arith.constant 0 : i32
    %c0_i32_0 = arith.constant 0 : i32
    %c0_i32_1 = arith.constant 0 : i32
    %c0_i32_2 = arith.constant 0 : i32
    return %c0_i32, %c0_i32_0, %c0_i32_1 : i32, i32, i32
  }
  func.func @transform_10(%arg0: i32) -> (i32, i32) {
    %c0_i32 = arith.constant 0 : i32
    %c0_i32_0 = arith.constant 0 : i32
    %c0_i32_1 = arith.constant 0 : i32
    return %c0_i32, %c0_i32_0 : i32, i32
  }
  func.func @transform_11(%arg0: i32) -> (i32, i32, i32) {
    %c0_i32 = arith.constant 0 : i32
    %c0_i32_0 = arith.constant 0 : i32
    %c0_i32_1 = arith.constant 0 : i32
    return %arg0, %c0_i32, %c0_i32_0 : i32, i32, i32
  }
}

</mosaic_0001>

<llo_original>
// kernel: embed_encoder_forward.1
$region0: #{embed_encoder_forward.1}
  #allocation0 [shape = 'u32[]', space=smem, size = 0x4, offset = 0x4, fixed_abs, tag = 'smem constant byte address 0x4 - core index']
  #allocation1 [shape = 'u32[144,128]{1,0:T(1,128)}', space=vmem, size = 0x12000, scoped, tag = 'internal scratch']
  #allocation2 [shape = 'f32[18,18,64]{2,1,0:T(8,128)}', space=vmem, size = 0x36000, scoped, tag = 'scratch operand']
  %s0 = inlined_call_operand.vmem [shape: bf16[2,256,4], index: 0, kind: input, shape index: {}]
  %s1 = inlined_call_operand.vmem [shape: bf16[4,64], index: 1, kind: input, shape index: {}]
  %s2 = inlined_call_operand.vmem [shape: f32[1,64], index: 2, kind: input, shape index: {}]
  %s3 = inlined_call_operand.vmem [shape: bf16[9,64,64], index: 3, kind: input, shape index: {}]
  %s4 = inlined_call_operand.vmem [shape: f32[1,64], index: 4, kind: input, shape index: {}]
  %s5 = inlined_call_operand.vmem [shape: bf16[9,64,64], index: 5, kind: input, shape index: {}]
  %s6 = inlined_call_operand.vmem [shape: f32[1,64], index: 6, kind: input, shape index: {}]
  %s7 = inlined_call_operand.vmem [shape: bf16[64,4], index: 7, kind: input, shape index: {}]
  %s8 = inlined_call_operand.vmem [shape: f32[1,4], index: 8, kind: input, shape index: {}]
  %s9 = inlined_call_operand.vmem [shape: f32[4,256,32], index: 9, kind: input, shape index: {}]
  %s10 = inlined_call_operand.vmem [shape: bf16[16,256], index: 10, kind: input, shape index: {}]
  %s11 = inlined_call_operand.hbm [shape: f32[2,16,32], index: 11, kind: output, shape index: {}]
  %s12 = sld [smem:[#allocation0]]
  $region77: #{embed_encoder_forward.1} parent=0
    _
  %s14 = ssub.s32 1, %s12
  %s15 = scalar_select 0, %s14, %s12
  $region1: #{embed_encoder_forward.1} parent=0
    #allocation3 [shape = 'u8[16384]{0}', space=vmem, size = 0x4000, scoped, tag = 'output window, operand 0']
    #allocation4 [shape = 's32[2]{0}', space=sflag, size = 0x8, scoped, tag = 'scoped memory for embed_encoder_forward.1']
    %16 = vsyncpa [#allocation4], 0
    %s17 = scalar_lea.sflag [#allocation4], 1
    %18 = vsyncpa %s17, 0
    loop: start=0, step=1, limit=4
    $region2: #{embed_encoder_forward.1} parent=1 // loop_pre_header
      _
    $region3: #{embed_encoder_forward.1} parent=1 // loop_header
      %s20 = sphi 0, %s24
      %p21 = scmp.ge.s32.totalorder %s20, 4
      %s30 = sphi 0, %s32
      %s33 = sphi 0, %s30
      %s34 = sphi 0, %s33
      %s50 = sphi 0, %s34
      %s54 = sphi 0, %s54
      %s56 = sphi 0, %s54
      %s57 = sphi 0, %s56
      %s71 = sphi 0, %s57
      %s75 = sphi 0, %s75
      %s77 = sphi 0, %s75
      %s78 = sphi 0, %s77
      %s92 = sphi 0, %s78
      %s96 = sphi 0, %s96
      %s98 = sphi 0, %s96
      %s99 = sphi 0, %s98
      %s113 = sphi 0, %s99
      %s117 = sphi 0, %s117
      %s119 = sphi 0, %s117
      %s120 = sphi 0, %s119
      %s134 = sphi 0, %s120
      %s138 = sphi 0, %s138
      %s140 = sphi 0, %s138
      %s141 = sphi 0, %s140
      %s155 = sphi 0, %s141
      %s159 = sphi 0, %s159
      %s161 = sphi 0, %s159
      %s162 = sphi 0, %s161
      %s176 = sphi 0, %s162
      %s180 = sphi 0, %s180
      %s182 = sphi 0, %s180
      %s183 = sphi 0, %s182
      %s197 = sphi 0, %s183
      %s201 = sphi 0, %s201
      %s203 = sphi 0, %s201
      %s204 = sphi 0, %s203
      %s218 = sphi 0, %s204
      %s222 = sphi 0, %s222
      %s224 = sphi 0, %s222
      %s225 = sphi 0, %s224
      %s239 = sphi 0, %s225
      %s243 = sphi 0, %s243
      %s245 = sphi 0, %s243
      %s246 = sphi 0, %s245
      %s260 = sphi 0, %s246
      %s266 = sphi 0, %s268
      %s269 = sphi 0, %s266
      %s270 = sphi 0, %s269
      %s286 = sphi 0, %s270
    $region4: #{embed_encoder_forward.1} parent=1 // loop_header_branch
      %23 = sbr.rel (%p21) target = $region8
    $region5: #{embed_encoder_forward.1} parent=1 // loop_body
      %s25 = ssub.s32 %s20, 1
      %s26 = ssub.s32 %s20, 2
      %s27 = sadd.s32 %s20, 1
      %s28 = ssub.s32 %s20, %s27
      %p29 = scmp.eq.s32.totalorder %s28, 0
      %s31 = sadd.s32 %s30, 1
      %s32 = scalar_select %p29, %s30, %s31
      %p35 = pneg %p29
      %p36 = scmp.eq.s32.totalorder %s20, 1
      %p37 = por %p35, %p36
      %p38 = scmp.ne.s32.totalorder %s30, %s33
      %p39 = scmp.eq.s32.totalorder %s20, 0
      %p40 = por %p38, %p39
      %p41 = scmp.ne.s32.totalorder %s30, %s33
      %p42 = scmp.eq.s32.totalorder %s25, 1
      %p43 = por %p41, %p42
      %p44 = scmp.ne.s32.totalorder %s33, %s34
      %p45 = scmp.eq.s32.totalorder %s25, 0
      %p46 = por %p44, %p45
      %p47 = scmp.ne.s32.totalorder %s33, %s34
      %p48 = scmp.eq.s32.totalorder %s26, 1
      %p49 = por %p47, %p48
      %p51 = scmp.ne.s32.totalorder %s34, %s50
      %p52 = scmp.eq.s32.totalorder %s26, 0
      %p53 = por %p51, %p52
      %s55 = sadd.s32 %s54, 1
      %p58 = scmp.eq.s32.totalorder %s20, 1
      %p59 = scmp.ne.s32.totalorder %s54, %s56
      %p60 = scmp.eq.s32.totalorder %s20, 0
      %p61 = por %p59, %p60
      %p62 = scmp.ne.s32.totalorder %s54, %s56
      %p63 = scmp.eq.s32.totalorder %s25, 1
      %p64 = por %p62, %p63
      %p65 = scmp.ne.s32.totalorder %s56, %s57
      %p66 = scmp.eq.s32.totalorder %s25, 0
      %p67 = por %p65, %p66
      %p68 = scmp.ne.s32.totalorder %s56, %s57
      %p69 = scmp.eq.s32.totalorder %s26, 1
      %p70 = por %p68, %p69
      %p72 = scmp.ne.s32.totalorder %s57, %s71
      %p73 = scmp.eq.s32.totalorder %s26, 0
      %p74 = por %p72, %p73
      %s76 = sadd.s32 %s75, 1
      %p79 = scmp.eq.s32.totalorder %s20, 1
      %p80 = scmp.ne.s32.totalorder %s75, %s77
      %p81 = scmp.eq.s32.totalorder %s20, 0
      %p82 = por %p80, %p81
      %p83 = scmp.ne.s32.totalorder %s75, %s77
      %p84 = scmp.eq.s32.totalorder %s25, 1
      %p85 = por %p83, %p84
      %p86 = scmp.ne.s32.totalorder %s77, %s78
      %p87 = scmp.eq.s32.totalorder %s25, 0
      %p88 = por %p86, %p87
      %p89 = scmp.ne.s32.totalorder %s77, %s78
      %p90 = scmp.eq.s32.totalorder %s26, 1
      %p91 = por %p89, %p90
      %p93 = scmp.ne.s32.totalorder %s78, %s92
      %p94 = scmp.eq.s32.totalorder %s26, 0
      %p95 = por %p93, %p94
      %s97 = sadd.s32 %s96, 1
      %p100 = scmp.eq.s32.totalorder %s20, 1
      %p101 = scmp.ne.s32.totalorder %s96, %s98
      %p102 = scmp.eq.s32.totalorder %s20, 0
      %p103 = por %p101, %p102
      %p104 = scmp.ne.s32.totalorder %s96, %s98
      %p105 = scmp.eq.s32.totalorder %s25, 1
      %p106 = por %p104, %p105
      %p107 = scmp.ne.s32.totalorder %s98, %s99
      %p108 = scmp.eq.s32.totalorder %s25, 0
      %p109 = por %p107, %p108
      %p110 = scmp.ne.s32.totalorder %s98, %s99
      %p111 = scmp.eq.s32.totalorder %s26, 1
      %p112 = por %p110, %p111
      %p114 = scmp.ne.s32.totalorder %s99, %s113
      %p115 = scmp.eq.s32.totalorder %s26, 0
      %p116 = por %p114, %p115
      %s118 = sadd.s32 %s117, 1
      %p121 = scmp.eq.s32.totalorder %s20, 1
      %p122 = scmp.ne.s32.totalorder %s117, %s119
      %p123 = scmp.eq.s32.totalorder %s20, 0
      %p124 = por %p122, %p123
      %p125 = scmp.ne.s32.totalorder %s117, %s119
      %p126 = scmp.eq.s32.totalorder %s25, 1
      %p127 = por %p125, %p126
      %p128 = scmp.ne.s32.totalorder %s119, %s120
      %p129 = scmp.eq.s32.totalorder %s25, 0
      %p130 = por %p128, %p129
      %p131 = scmp.ne.s32.totalorder %s119, %s120
      %p132 = scmp.eq.s32.totalorder %s26, 1
      %p133 = por %p131, %p132
      %p135 = scmp.ne.s32.totalorder %s120, %s134
      %p136 = scmp.eq.s32.totalorder %s26, 0
      %p137 = por %p135, %p136
      %s139 = sadd.s32 %s138, 1
      %p142 = scmp.eq.s32.totalorder %s20, 1
      %p143 = scmp.ne.s32.totalorder %s138, %s140
      %p144 = scmp.eq.s32.totalorder %s20, 0
      %p145 = por %p143, %p144
      %p146 = scmp.ne.s32.totalorder %s138, %s140
      %p147 = scmp.eq.s32.totalorder %s25, 1
      %p148 = por %p146, %p147
      %p149 = scmp.ne.s32.totalorder %s140, %s141
      %p150 = scmp.eq.s32.totalorder %s25, 0
      %p151 = por %p149, %p150
      %p152 = scmp.ne.s32.totalorder %s140, %s141
      %p153 = scmp.eq.s32.totalorder %s26, 1
      %p154 = por %p152, %p153
      %p156 = scmp.ne.s32.totalorder %s141, %s155
      %p157 = scmp.eq.s32.totalorder %s26, 0
      %p158 = por %p156, %p157
      %s160 = sadd.s32 %s159, 1
      %p163 = scmp.eq.s32.totalorder %s20, 1
      %p164 = scmp.ne.s32.totalorder %s159, %s161
      %p165 = scmp.eq.s32.totalorder %s20, 0
      %p166 = por %p164, %p165
      %p167 = scmp.ne.s32.totalorder %s159, %s161
      %p168 = scmp.eq.s32.totalorder %s25, 1
      %p169 = por %p167, %p168
      %p170 = scmp.ne.s32.totalorder %s161, %s162
      %p171 = scmp.eq.s32.totalorder %s25, 0
      %p172 = por %p170, %p171
      %p173 = scmp.ne.s32.totalorder %s161, %s162
      %p174 = scmp.eq.s32.totalorder %s26, 1
      %p175 = por %p173, %p174
      %p177 = scmp.ne.s32.totalorder %s162, %s176
      %p178 = scmp.eq.s32.totalorder %s26, 0
      %p179 = por %p177, %p178
      %s181 = sadd.s32 %s180, 1
      %p184 = scmp.eq.s32.totalorder %s20, 1
      %p185 = scmp.ne.s32.totalorder %s180, %s182
      %p186 = scmp.eq.s32.totalorder %s20, 0
      %p187 = por %p185, %p186
      %p188 = scmp.ne.s32.totalorder %s180, %s182
      %p189 = scmp.eq.s32.totalorder %s25, 1
      %p190 = por %p188, %p189
      %p191 = scmp.ne.s32.totalorder %s182, %s183
      %p192 = scmp.eq.s32.totalorder %s25, 0
      %p193 = por %p191, %p192
      %p194 = scmp.ne.s32.totalorder %s182, %s183
      %p195 = scmp.eq.s32.totalorder %s26, 1
      %p196 = por %p194, %p195
      %p198 = scmp.ne.s32.totalorder %s183, %s197
      %p199 = scmp.eq.s32.totalorder %s26, 0
      %p200 = por %p198, %p199
      %s202 = sadd.s32 %s201, 1
      %p205 = scmp.eq.s32.totalorder %s20, 1
      %p206 = scmp.ne.s32.totalorder %s201, %s203
      %p207 = scmp.eq.s32.totalorder %s20, 0
      %p208 = por %p206, %p207
      %p209 = scmp.ne.s32.totalorder %s201, %s203
      %p210 = scmp.eq.s32.totalorder %s25, 1
      %p211 = por %p209, %p210
      %p212 = scmp.ne.s32.totalorder %s203, %s204
      %p213 = scmp.eq.s32.totalorder %s25, 0
      %p214 = por %p212, %p213
      %p215 = scmp.ne.s32.totalorder %s203, %s204
      %p216 = scmp.eq.s32.totalorder %s26, 1
      %p217 = por %p215, %p216
      %p219 = scmp.ne.s32.totalorder %s204, %s218
      %p220 = scmp.eq.s32.totalorder %s26, 0
      %p221 = por %p219, %p220
      %s223 = sadd.s32 %s222, 1
      %p226 = scmp.eq.s32.totalorder %s20, 1
      %p227 = scmp.ne.s32.totalorder %s222, %s224
      %p228 = scmp.eq.s32.totalorder %s20, 0
      %p229 = por %p227, %p228
      %p230 = scmp.ne.s32.totalorder %s222, %s224
      %p231 = scmp.eq.s32.totalorder %s25, 1
      %p232 = por %p230, %p231
      %p233 = scmp.ne.s32.totalorder %s224, %s225
      %p234 = scmp.eq.s32.totalorder %s25, 0
      %p235 = por %p233, %p234
      %p236 = scmp.ne.s32.totalorder %s224, %s225
      %p237 = scmp.eq.s32.totalorder %s26, 1
      %p238 = por %p236, %p237
      %p240 = scmp.ne.s32.totalorder %s225, %s239
      %p241 = scmp.eq.s32.totalorder %s26, 0
      %p242 = por %p240, %p241
      %s244 = sadd.s32 %s243, 1
      %p247 = scmp.eq.s32.totalorder %s20, 1
      %p248 = scmp.ne.s32.totalorder %s243, %s245
      %p249 = scmp.eq.s32.totalorder %s20, 0
      %p250 = por %p248, %p249
      %p251 = scmp.ne.s32.totalorder %s243, %s245
      %p252 = scmp.eq.s32.totalorder %s25, 1
      %p253 = por %p251, %p252
      %p254 = scmp.ne.s32.totalorder %s245, %s246
      %p255 = scmp.eq.s32.totalorder %s25, 0
      %p256 = por %p254, %p255
      %p257 = scmp.ne.s32.totalorder %s245, %s246
      %p258 = scmp.eq.s32.totalorder %s26, 1
      %p259 = por %p257, %p258
      %p261 = scmp.ne.s32.totalorder %s246, %s260
      %p262 = scmp.eq.s32.totalorder %s26, 0
      %p263 = por %p261, %p262
      %s264 = ssub.s32 %s20, %s27
      %p265 = scmp.eq.s32.totalorder %s264, 0
      %s267 = sadd.s32 %s266, 1
      %s268 = scalar_select %p265, %s266, %s267
      %p271 = pneg %p265
      %p272 = scmp.eq.s32.totalorder %s20, 1
      %p273 = por %p271, %p272
      %p274 = scmp.ne.s32.totalorder %s266, %s269
      %p275 = scmp.eq.s32.totalorder %s20, 0
      %p276 = por %p274, %p275
      %p277 = scmp.ne.s32.totalorder %s266, %s269
      %p278 = scmp.eq.s32.totalorder %s25, 1
      %p279 = por %p277, %p278
      %p280 = scmp.ne.s32.totalorder %s269, %s270
      %p281 = scmp.eq.s32.totalorder %s25, 0
      %p282 = por %p280, %p281
      %p283 = scmp.ne.s32.totalorder %s269, %s270
      %p284 = scmp.eq.s32.totalorder %s26, 1
      %p285 = por %p283, %p284
      %p287 = scmp.ne.s32.totalorder %s270, %s286
      %p288 = scmp.eq.s32.totalorder %s26, 0
      %p289 = por %p287, %p288
      %p290 = scmp.le.s32.totalorder 1, %s20
      %p291 = scmp.lt.s32.totalorder %s20, 3
      %p292 = pnand %p290, %p291
      %p293 = pneg %p292
      // Predicated region
      $region9: #{embed_encoder_forward.1} parent=5 // pred_check
        _
      $region10: #{embed_encoder_forward.1} parent=5 // pred_check_branch
        %295 = sbr.rel (%p292) target = $region12
      $region11: #{embed_encoder_forward.1} parent=5 // pred_region
        %s296 = ssub.s32 %s20, 1
        // Predicated region
        $region13: #{embed_encoder_forward.1} parent=11 // pred_check
          %p297 = pneg %p67
        $region14: #{embed_encoder_forward.1} parent=11 // pred_check_branch
          %299 = sbr.rel (%p297) target = $region16
        $region15: #{embed_encoder_forward.1} parent=11 // pred_region
          _
        $region16: #{embed_encoder_forward.1} parent=11 // pred_fallthru
          _
        // Predicated region
        $region17: #{embed_encoder_forward.1} parent=11 // pred_check
          %p300 = pneg %p88
        $region18: #{embed_encoder_forward.1} parent=11 // pred_check_branch
          %302 = sbr.rel (%p300) target = $region20
        $region19: #{embed_encoder_forward.1} parent=11 // pred_region
          _
        $region20: #{embed_encoder_forward.1} parent=11 // pred_fallthru
          _
        // Predicated region
        $region21: #{embed_encoder_forward.1} parent=11 // pred_check
          %p303 = pneg %p109
        $region22: #{embed_encoder_forward.1} parent=11 // pred_check_branch
          %305 = sbr.rel (%p303) target = $region24
        $region23: #{embed_encoder_forward.1} parent=11 // pred_region
          _
        $region24: #{embed_encoder_forward.1} parent=11 // pred_fallthru
          _
        // Predicated region
        $region25: #{embed_encoder_forward.1} parent=11 // pred_check
          %p306 = pneg %p130
        $region26: #{embed_encoder_forward.1} parent=11 // pred_check_branch
          %308 = sbr.rel (%p306) target = $region28
        $region27: #{embed_encoder_forward.1} parent=11 // pred_region
          _
        $region28: #{embed_encoder_forward.1} parent=11 // pred_fallthru
          _
        // Predicated region
        $region29: #{embed_encoder_forward.1} parent=11 // pred_check
          %p309 = pneg %p151
        $region30: #{embed_encoder_forward.1} parent=11 // pred_check_branch
          %311 = sbr.rel (%p309) target = $region32
        $region31: #{embed_encoder_forward.1} parent=11 // pred_region
          _
        $region32: #{embed_encoder_forward.1} parent=11 // pred_fallthru
          _
        // Predicated region
        $region33: #{embed_encoder_forward.1} parent=11 // pred_check
          %p312 = pneg %p172
        $region34: #{embed_encoder_forward.1} parent=11 // pred_check_branch
          %314 = sbr.rel (%p312) target = $region36
        $region35: #{embed_encoder_forward.1} parent=11 // pred_region
          _
        $region36: #{embed_encoder_forward.1} parent=11 // pred_fallthru
          _
        // Predicated region
        $region37: #{embed_encoder_forward.1} parent=11 // pred_check
          %p315 = pneg %p193
        $region38: #{embed_encoder_forward.1} parent=11 // pred_check_branch
          %317 = sbr.rel (%p315) target = $region40
        $region39: #{embed_encoder_forward.1} parent=11 // pred_region
          _
        $region40: #{embed_encoder_forward.1} parent=11 // pred_fallthru
          _
        // Predicated region
        $region41: #{embed_encoder_forward.1} parent=11 // pred_check
          %p318 = pneg %p214
        $region42: #{embed_encoder_forward.1} parent=11 // pred_check_branch
          %320 = sbr.rel (%p318) target = $region44
        $region43: #{embed_encoder_forward.1} parent=11 // pred_region
          _
        $region44: #{embed_encoder_forward.1} parent=11 // pred_fallthru
          _
        // Predicated region
        $region45: #{embed_encoder_forward.1} parent=11 // pred_check
          %p321 = pneg %p235
        $region46: #{embed_encoder_forward.1} parent=11 // pred_check_branch
          %323 = sbr.rel (%p321) target = $region48
        $region47: #{embed_encoder_forward.1} parent=11 // pred_region
          _
        $region48: #{embed_encoder_forward.1} parent=11 // pred_fallthru
          _
        // Predicated region
        $region49: #{embed_encoder_forward.1} parent=11 // pred_check
          %p324 = pneg %p256
        $region50: #{embed_encoder_forward.1} parent=11 // pred_check_branch
          %326 = sbr.rel (%p324) target = $region52
        $region51: #{embed_encoder_forward.1} parent=11 // pred_region
          _
        $region52: #{embed_encoder_forward.1} parent=11 // pred_fallthru
          _
      $region12: #{embed_encoder_forward.1} parent=5 // pred_fallthru
        _
      %p327 = scmp.lt.s32.totalorder %s20, 2
      // Predicated region
      $region53: #{embed_encoder_forward.1} parent=5 // pred_check
        %p328 = pneg %p327
      $region54: #{embed_encoder_forward.1} parent=5 // pred_check_branch
        %330 = sbr.rel (%p328) target = $region56
      $region55: #{embed_encoder_forward.1} parent=5 // pred_region
        // Predicated region
        $region57: #{embed_encoder_forward.1} parent=55 // pred_check
          %p331 = pneg %p40
        $region58: #{embed_encoder_forward.1} parent=55 // pred_check_branch
          %333 = sbr.rel (%p331) target = $region60
        $region59: #{embed_encoder_forward.1} parent=55 // pred_region
          %p334 = scmp.lt.s32.totalorder %s20, 1
          %s335 = scalar_select %p334, %s20, 1
          %s336 = smul.addr %s335, 32
          %s337 = smul.addr %s336, 4
          %s338 = scalar_lea.vmem %s0, %s337
        $region60: #{embed_encoder_forward.1} parent=55 // pred_fallthru
          _
      $region56: #{embed_encoder_forward.1} parent=5 // pred_fallthru
        _
      %p339 = scmp.le.s32.totalorder 1, %s20
      %p340 = scmp.lt.s32.totalorder %s20, 3
      %p341 = pnand %p339, %p340
      %p342 = pneg %p341
      // Predicated region
      $region61: #{embed_encoder_forward.1} parent=5 // pred_check
        _
      $region62: #{embed_encoder_forward.1} parent=5 // pred_check_branch
        %344 = sbr.rel (%p341) target = $region64
      $region63: #{embed_encoder_forward.1} parent=5 // pred_region
        %s345 = ssub.s32 %s20, 1
        %p346 = scmp.lt.s32.totalorder %s25, 1
        %s347 = scalar_select %p346, %s25, 1
        %s348 = smul.addr %s347, 32
        %s349 = smul.addr %s348, 4
        %s350 = scalar_lea.vmem %s0, %s349
        %p351 = pneg %p46
        %p352 = pneg %p43
        %p353 = pneg %p67
        %p354 = pneg %p64
        %p355 = pneg %p88
        %p356 = pneg %p85
        %p357 = pneg %p109
        %p358 = pneg %p106
        %p359 = pneg %p130
        %p360 = pneg %p127
        %p361 = pneg %p151
        %p362 = pneg %p148
        %p363 = pneg %p172
        %p364 = pneg %p169
        %p365 = pneg %p193
        %p366 = pneg %p190
        %p367 = pneg %p214
        %p368 = pneg %p211
        %p369 = pneg %p235
        %p370 = pneg %p232
        %p371 = pneg %p256
        %p372 = pneg %p253
        %p373 = pneg %p282
        %p374 = pneg %p279
        %s375 = sand.u32 %s269, 1
        %s376 = scalar_lea.sflag [#allocation4], %s375
        %s377 = sand.u32 %s269, 1
        %s378 = smul.addr %s377, 16
        %s379 = scalar_lea.vmem [#allocation3], %s378
        %p380 = scmp.lt.s32.totalorder %s25, 1
        %s381 = scalar_select %p380, %s25, 1
        %s382 = smul.addr %s381, 32
        %s383 = smul.addr %s382, 4
        %s384 = scalar_lea.vmem %s0, %s383
        %vm386 = vcmask 523264
        %387 = vst.msk [vmem:[#allocation2] sm:$0xff] %vm386, 0.0
        %388 = vst.msk [vmem:[#allocation2 + $0x8] sm:$0xff] %vm386, 0.0
        %vm389 = vcmask 517120
        %390 = vst.msk [vmem:[#allocation2 + $0x10] sm:$0x3] %vm389, 0.0
        %391 = vst.msk [vmem:[#allocation2 + $0x18] sm:$0xff] %vm386, 0.0
        %392 = vst.msk [vmem:[#allocation2 + $0x20] sm:$0xff] %vm386, 0.0
        %393 = vst.msk [vmem:[#allocation2 + $0x28] sm:$0x3] %vm389, 0.0
        %394 = vst.msk [vmem:[#allocation2 + $0x30] sm:$0xff] %vm386, 0.0
        %395 = vst.msk [vmem:[#allocation2 + $0x38] sm:$0xff] %vm386, 0.0
        %396 = vst.msk [vmem:[#allocation2 + $0x40] sm:$0x3] %vm389, 0.0
        %397 = vst.msk [vmem:[#allocation2 + $0x48] sm:$0xff] %vm386, 0.0
        %398 = vst.msk [vmem:[#allocation2 + $0x50] sm:$0xff] %vm386, 0.0
        %399 = vst.msk [vmem:[#allocation2 + $0x58] sm:$0x3] %vm389, 0.0
        %400 = vst.msk [vmem:[#allocation2 + $0x60] sm:$0xff] %vm386, 0.0
        %401 = vst.msk [vmem:[#allocation2 + $0x68] sm:$0xff] %vm386, 0.0
        %402 = vst.msk [vmem:[#allocation2 + $0x70] sm:$0x3] %vm389, 0.0
        %403 = vst.msk [vmem:[#allocation2 + $0x78] sm:$0xff] %vm386, 0.0
        %404 = vst.msk [vmem:[#allocation2 + $0x80] sm:$0xff] %vm386, 0.0
        %405 = vst.msk [vmem:[#allocation2 + $0x88] sm:$0x3] %vm389, 0.0
        %406 = vst.msk [vmem:[#allocation2 + $0x90] sm:$0xff] %vm386, 0.0
        %407 = vst.msk [vmem:[#allocation2 + $0x98] sm:$0xff] %vm386, 0.0
        %408 = vst.msk [vmem:[#allocation2 + $0xa0] sm:$0x3] %vm389, 0.0
        %409 = vst.msk [vmem:[#allocation2 + $0xa8] sm:$0xff] %vm386, 0.0
        %410 = vst.msk [vmem:[#allocation2 + $0xb0] sm:$0xff] %vm386, 0.0
        %411 = vst.msk [vmem:[#allocation2 + $0xb8] sm:$0x3] %vm389, 0.0
        %412 = vst.msk [vmem:[#allocation2 + $0xc0] sm:$0xff] %vm386, 0.0
        %413 = vst.msk [vmem:[#allocation2 + $0xc8] sm:$0xff] %vm386, 0.0
        %414 = vst.msk [vmem:[#allocation2 + $0xd0] sm:$0x3] %vm389, 0.0
        %415 = vst.msk [vmem:[#allocation2 + $0xd8] sm:$0xff] %vm386, 0.0
        %416 = vst.msk [vmem:[#allocation2 + $0xe0] sm:$0xff] %vm386, 0.0
        %417 = vst.msk [vmem:[#allocation2 + $0xe8] sm:$0x3] %vm389, 0.0
        %418 = vst.msk [vmem:[#allocation2 + $0xf0] sm:$0xff] %vm386, 0.0
        %419 = vst.msk [vmem:[#allocation2 + $0xf8] sm:$0xff] %vm386, 0.0
        %420 = vst.msk [vmem:[#allocation2 + $0x100] sm:$0x3] %vm389, 0.0
        %421 = vst.msk [vmem:[#allocation2 + $0x108] sm:$0xff] %vm386, 0.0
        %422 = vst.msk [vmem:[#allocation2 + $0x110] sm:$0xff] %vm386, 0.0
        %423 = vst.msk [vmem:[#allocation2 + $0x118] sm:$0x3] %vm389, 0.0
        %424 = vst.msk [vmem:[#allocation2 + $0x120] sm:$0xff] %vm386, 0.0
        %425 = vst.msk [vmem:[#allocation2 + $0x128] sm:$0xff] %vm386, 0.0
        %426 = vst.msk [vmem:[#allocation2 + $0x130] sm:$0x3] %vm389, 0.0
        %427 = vst.msk [vmem:[#allocation2 + $0x138] sm:$0xff] %vm386, 0.0
        %428 = vst.msk [vmem:[#allocation2 + $0x140] sm:$0xff] %vm386, 0.0
        %429 = vst.msk [vmem:[#allocation2 + $0x148] sm:$0x3] %vm389, 0.0
        %430 = vst.msk [vmem:[#allocation2 + $0x150] sm:$0xff] %vm386, 0.0
        %431 = vst.msk [vmem:[#allocation2 + $0x158] sm:$0xff] %vm386, 0.0
        %432 = vst.msk [vmem:[#allocation2 + $0x160] sm:$0x3] %vm389, 0.0
        %433 = vst.msk [vmem:[#allocation2 + $0x168] sm:$0xff] %vm386, 0.0
        %434 = vst.msk [vmem:[#allocation2 + $0x170] sm:$0xff] %vm386, 0.0
        %435 = vst.msk [vmem:[#allocation2 + $0x178] sm:$0x3] %vm389, 0.0
        %436 = vst.msk [vmem:[#allocation2 + $0x180] sm:$0xff] %vm386, 0.0
        %437 = vst.msk [vmem:[#allocation2 + $0x188] sm:$0xff] %vm386, 0.0
        %438 = vst.msk [vmem:[#allocation2 + $0x190] sm:$0x3] %vm389, 0.0
        %439 = vst.msk [vmem:[#allocation2 + $0x198] sm:$0xff] %vm386, 0.0
        %440 = vst.msk [vmem:[#allocation2 + $0x1a0] sm:$0xff] %vm386, 0.0
        %441 = vst.msk [vmem:[#allocation2 + $0x1a8] sm:$0x3] %vm389, 0.0
        %v442 = vld [vmem:[%s384] sm:$0xf]
        %v443 = vld [vmem:[%s384 + $0x4] sm:$0xf]
        %v444 = vld [vmem:[%s384 + $0x8] sm:$0xf]
        %v445 = vld [vmem:[%s384 + $0xc] sm:$0xf]
        %v446 = vld [vmem:[%s384 + $0x10] sm:$0xf]
        %v447 = vld [vmem:[%s384 + $0x14] sm:$0xf]
        %v448 = vld [vmem:[%s384 + $0x18] sm:$0xf]
        %v449 = vld [vmem:[%s384 + $0x1c] sm:$0xf]
        %v450 = vld [vmem:[%s384 + $0x20] sm:$0xf]
        %v451 = vld [vmem:[%s384 + $0x24] sm:$0xf]
        %v452 = vld [vmem:[%s384 + $0x28] sm:$0xf]
        %v453 = vld [vmem:[%s384 + $0x2c] sm:$0xf]
        %v454 = vld [vmem:[%s384 + $0x30] sm:$0xf]
        %v455 = vld [vmem:[%s384 + $0x34] sm:$0xf]
        %v456 = vld [vmem:[%s384 + $0x38] sm:$0xf]
        %v457 = vld [vmem:[%s384 + $0x3c] sm:$0xf]
        %v458 = vld [vmem:[%s384 + $0x40] sm:$0xf]
        %v459 = vld [vmem:[%s384 + $0x44] sm:$0xf]
        %v460 = vld [vmem:[%s384 + $0x48] sm:$0xf]
        %v461 = vld [vmem:[%s384 + $0x4c] sm:$0xf]
        %v462 = vld [vmem:[%s384 + $0x50] sm:$0xf]
        %v463 = vld [vmem:[%s384 + $0x54] sm:$0xf]
        %v464 = vld [vmem:[%s384 + $0x58] sm:$0xf]
        %v465 = vld [vmem:[%s384 + $0x5c] sm:$0xf]
        %v466 = vld [vmem:[%s384 + $0x60] sm:$0xf]
        %v467 = vld [vmem:[%s384 + $0x64] sm:$0xf]
        %v468 = vld [vmem:[%s384 + $0x68] sm:$0xf]
        %v469 = vld [vmem:[%s384 + $0x6c] sm:$0xf]
        %v470 = vld [vmem:[%s384 + $0x70] sm:$0xf]
        %v471 = vld [vmem:[%s384 + $0x74] sm:$0xf]
        %v472 = vld [vmem:[%s384 + $0x78] sm:$0xf]
        %v473 = vld [vmem:[%s384 + $0x7c] sm:$0xf]
        %v474 = vld [vmem:[%s1] sm:$0x3]
        %v475 = vld [vmem:[%s2] sm:$0x1]
        %v477 = vlaneseq
        %v478 = vshrl.u32 %v477, 7
        %v479 = vsub.s32 0, %v478
        %v480 = vrot.slane %v475, %v479
        %v514 = vunpack.c.l.b16 %v442
        %v515 = vunpack.c.l.b16 %v443
        %v516 = vunpack.c.l.b16 %v444
        %v517 = vunpack.c.l.b16 %v445
        %v518 = vunpack.c.l.b16 %v446
        %v519 = vunpack.c.l.b16 %v447
        %v520 = vunpack.c.l.b16 %v448
        %v521 = vunpack.c.l.b16 %v449
        %v522 = vunpack.c.l.b16 %v450
        %v523 = vunpack.c.l.b16 %v451
        %v524 = vunpack.c.l.b16 %v452
        %v525 = vunpack.c.l.b16 %v453
        %v526 = vunpack.c.l.b16 %v454
        %v527 = vunpack.c.l.b16 %v455
        %v528 = vunpack.c.l.b16 %v456
        %v529 = vunpack.c.l.b16 %v457
        %v530 = vunpack.c.l.b16 %v458
        %v531 = vunpack.c.l.b16 %v459
        %v532 = vunpack.c.l.b16 %v460
        %v533 = vunpack.c.l.b16 %v461
        %v534 = vunpack.c.l.b16 %v462
        %v535 = vunpack.c.l.b16 %v463
        %v536 = vunpack.c.l.b16 %v464
        %v537 = vunpack.c.l.b16 %v465
        %v538 = vunpack.c.l.b16 %v466
        %v539 = vunpack.c.l.b16 %v467
        %v540 = vunpack.c.l.b16 %v468
        %v541 = vunpack.c.l.b16 %v469
        %v542 = vunpack.c.l.b16 %v470
        %v543 = vunpack.c.l.b16 %v471
        %v544 = vunpack.c.l.b16 %v472
        %v545 = vunpack.c.l.b16 %v473
        %v546 = vpack.c.b16 %v515, %v514
        %v547 = vpack.c.b16 %v517, %v516
        %v548 = vpack.c.b16 %v519, %v518
        %v549 = vpack.c.b16 %v521, %v520
        %v550 = vpack.c.b16 %v523, %v522
        %v551 = vpack.c.b16 %v525, %v524
        %v552 = vpack.c.b16 %v527, %v526
        %v553 = vpack.c.b16 %v529, %v528
        %v554 = vpack.c.b16 %v531, %v530
        %v555 = vpack.c.b16 %v533, %v532
        %v556 = vpack.c.b16 %v535, %v534
        %v557 = vpack.c.b16 %v537, %v536
        %v558 = vpack.c.b16 %v539, %v538
        %v559 = vpack.c.b16 %v541, %v540
        %v560 = vpack.c.b16 %v543, %v542
        %v561 = vpack.c.b16 %v545, %v544
        %vm562 = vcmask 31744
        %v564 = vsel %vm562, %v546, 0
        %v567 = vsel %vm562, %v547, 0
        %v570 = vsel %vm562, %v548, 0
        %v573 = vsel %vm562, %v549, 0
        %v576 = vsel %vm562, %v550, 0
        %v579 = vsel %vm562, %v551, 0
        %v582 = vsel %vm562, %v552, 0
        %v585 = vsel %vm562, %v553, 0
        %v588 = vsel %vm562, %v554, 0
        %v591 = vsel %vm562, %v555, 0
        %v594 = vsel %vm562, %v556, 0
        %v597 = vsel %vm562, %v557, 0
        %v600 = vsel %vm562, %v558, 0
        %v603 = vsel %vm562, %v559, 0
        %v606 = vsel %vm562, %v560, 0
        %v609 = vsel %vm562, %v561, 0
        %vm611 = vcmask 1041408
        %v613 = vsel %vm611, %v474, 0
        %615 = vmatprep.subr.bf16.mxu0 0
        %616 = vmatpush1.bf16.msra.mxu0 0
        %617 = vmatprep.subr.bf16.mxu0 0
        %618 = vmatpush1.bf16.msra.mxu0 0
        %619 = vmatprep.subr.bf16.mxu0 0
        %620 = vmatpush1.bf16.msra.mxu0 0
        %621 = vmatprep.subr.bf16.mxu0 0
        %622 = vmatpush1.bf16.msra.mxu0 0
        %623 = vmatprep.subr.bf16.mxu0 0
        %624 = vmatpush1.bf16.msra.mxu0 0
        %625 = vmatprep.subr.bf16.mxu0 0
        %626 = vmatpush1.bf16.msra.mxu0 0
        %627 = vmatprep.subr.bf16.mxu0 0
        %628 = vmatpush1.bf16.msra.mxu0 0
        %629 = vmatprep.subr.bf16.mxu0 0
        %630 = vmatpush1.bf16.msra.mxu0 %v613
        %631 = vmatprep.subr.bf16.mxu0 0
        %632 = vmatpush2.bf16.msra.mxu0 0
        %633 = vmatprep.subr.bf16.mxu0 0
        %634 = vmatpush2.bf16.msra.mxu0 0
        %635 = vmatprep.subr.bf16.mxu0 0
        %636 = vmatpush2.bf16.msra.mxu0 0
        %637 = vmatprep.subr.bf16.mxu0 0
        %638 = vmatpush2.bf16.msra.mxu0 0
        %639 = vmatprep.subr.bf16.mxu0 0
        %640 = vmatpush2.bf16.msra.mxu0 0
        %641 = vmatprep.subr.bf16.mxu0 0
        %642 = vmatpush2.bf16.msra.mxu0 0
        %643 = vmatprep.subr.bf16.mxu0 0
        %644 = vmatpush2.bf16.msra.mxu0 0
        %645 = vmatprep.subr.bf16.mxu0 0
        %646 = vmatpush2.bf16.msra.mxu0 0
        %647 = vmatprep.mubr.bf16.mxu0 0
        %648 = vmatmul.mubr.bf16.gmra.mxu0 %v564
        %v649 = vpop.f32.mrf.mxu0
        %v650 = vadd.f32 %v480, %v649
        %v651 = vpop.f32.mrf.mxu0
        %v652 = vpop.f32.mrf.mxu0
        %v653 = vadd.f32 %v480, %v652
        %v654 = vpop.f32.mrf.mxu0
        %655 = vmatprep.mubr.bf16.mxu0 0
        %656 = vmatmul.mubr.bf16.gmra.mxu0 %v567
        %v657 = vpop.f32.mrf.mxu0
        %v658 = vadd.f32 %v480, %v657
        %v659 = vpop.f32.mrf.mxu0
        %v660 = vpop.f32.mrf.mxu0
        %v661 = vadd.f32 %v480, %v660
        %v662 = vpop.f32.mrf.mxu0
        %663 = vmatprep.mubr.bf16.mxu0 0
        %664 = vmatmul.mubr.bf16.gmra.mxu0 %v570
        %v665 = vpop.f32.mrf.mxu0
        %v666 = vadd.f32 %v480, %v665
        %v667 = vpop.f32.mrf.mxu0
        %v668 = vpop.f32.mrf.mxu0
        %v669 = vadd.f32 %v480, %v668
        %v670 = vpop.f32.mrf.mxu0
        %671 = vmatprep.mubr.bf16.mxu0 0
        %672 = vmatmul.mubr.bf16.gmra.mxu0 %v573
        %v673 = vpop.f32.mrf.mxu0
        %v674 = vadd.f32 %v480, %v673
        %v675 = vpop.f32.mrf.mxu0
        %v676 = vpop.f32.mrf.mxu0
        %v677 = vadd.f32 %v480, %v676
        %v678 = vpop.f32.mrf.mxu0
        %679 = vmatprep.mubr.bf16.mxu0 0
        %680 = vmatmul.mubr.bf16.gmra.mxu0 %v576
        %v681 = vpop.f32.mrf.mxu0
        %v682 = vadd.f32 %v480, %v681
        %v683 = vpop.f32.mrf.mxu0
        %v684 = vpop.f32.mrf.mxu0
        %v685 = vadd.f32 %v480, %v684
        %v686 = vpop.f32.mrf.mxu0
        %687 = vmatprep.mubr.bf16.mxu0 0
        %688 = vmatmul.mubr.bf16.gmra.mxu0 %v579
        %v689 = vpop.f32.mrf.mxu0
        %v690 = vadd.f32 %v480, %v689
        %v691 = vpop.f32.mrf.mxu0
        %v692 = vpop.f32.mrf.mxu0
        %v693 = vadd.f32 %v480, %v692
        %v694 = vpop.f32.mrf.mxu0
        %695 = vmatprep.mubr.bf16.mxu0 0
        %696 = vmatmul.mubr.bf16.gmra.mxu0 %v582
        %v697 = vpop.f32.mrf.mxu0
        %v698 = vadd.f32 %v480, %v697
        %v699 = vpop.f32.mrf.mxu0
        %v700 = vpop.f32.mrf.mxu0
        %v701 = vadd.f32 %v480, %v700
        %v702 = vpop.f32.mrf.mxu0
        %703 = vmatprep.mubr.bf16.mxu0 0
        %704 = vmatmul.mubr.bf16.gmra.mxu0 %v585
        %v705 = vpop.f32.mrf.mxu0
        %v706 = vadd.f32 %v480, %v705
        %v707 = vpop.f32.mrf.mxu0
        %v708 = vpop.f32.mrf.mxu0
        %v709 = vadd.f32 %v480, %v708
        %v710 = vpop.f32.mrf.mxu0
        %711 = vmatprep.mubr.bf16.mxu0 0
        %712 = vmatmul.mubr.bf16.gmra.mxu0 %v588
        %v713 = vpop.f32.mrf.mxu0
        %v714 = vadd.f32 %v480, %v713
        %v715 = vpop.f32.mrf.mxu0
        %v716 = vpop.f32.mrf.mxu0
        %v717 = vadd.f32 %v480, %v716
        %v718 = vpop.f32.mrf.mxu0
        %719 = vmatprep.mubr.bf16.mxu0 0
        %720 = vmatmul.mubr.bf16.gmra.mxu0 %v591
        %v721 = vpop.f32.mrf.mxu0
        %v722 = vadd.f32 %v480, %v721
        %v723 = vpop.f32.mrf.mxu0
        %v724 = vpop.f32.mrf.mxu0
        %v725 = vadd.f32 %v480, %v724
        %v726 = vpop.f32.mrf.mxu0
        %727 = vmatprep.mubr.bf16.mxu0 0
        %728 = vmatmul.mubr.bf16.gmra.mxu0 %v594
        %v729 = vpop.f32.mrf.mxu0
        %v730 = vadd.f32 %v480, %v729
        %v731 = vpop.f32.mrf.mxu0
        %v732 = vpop.f32.mrf.mxu0
        %v733 = vadd.f32 %v480, %v732
        %v734 = vpop.f32.mrf.mxu0
        %735 = vmatprep.mubr.bf16.mxu0 0
        %736 = vmatmul.mubr.bf16.gmra.mxu0 %v597
        %v737 = vpop.f32.mrf.mxu0
        %v738 = vadd.f32 %v480, %v737
        %v739 = vpop.f32.mrf.mxu0
        %v740 = vpop.f32.mrf.mxu0
        %v741 = vadd.f32 %v480, %v740
        %v742 = vpop.f32.mrf.mxu0
        %743 = vmatprep.mubr.bf16.mxu0 0
        %744 = vmatmul.mubr.bf16.gmra.mxu0 %v600
        %v745 = vpop.f32.mrf.mxu0
        %v746 = vadd.f32 %v480, %v745
        %v747 = vpop.f32.mrf.mxu0
        %v748 = vpop.f32.mrf.mxu0
        %v749 = vadd.f32 %v480, %v748
        %v750 = vpop.f32.mrf.mxu0
        %751 = vmatprep.mubr.bf16.mxu0 0
        %752 = vmatmul.mubr.bf16.gmra.mxu0 %v603
        %v753 = vpop.f32.mrf.mxu0
        %v754 = vadd.f32 %v480, %v753
        %v755 = vpop.f32.mrf.mxu0
        %v756 = vpop.f32.mrf.mxu0
        %v757 = vadd.f32 %v480, %v756
        %v758 = vpop.f32.mrf.mxu0
        %759 = vmatprep.mubr.bf16.mxu0 0
        %760 = vmatmul.mubr.bf16.gmra.mxu0 %v606
        %v761 = vpop.f32.mrf.mxu0
        %v762 = vadd.f32 %v480, %v761
        %v763 = vpop.f32.mrf.mxu0
        %v764 = vpop.f32.mrf.mxu0
        %v765 = vadd.f32 %v480, %v764
        %v766 = vpop.f32.mrf.mxu0
        %767 = vmatprep.mubr.bf16.mxu0 0
        %768 = vmatmul.mubr.bf16.gmra.mxu0 %v609
        %v769 = vpop.f32.mrf.mxu0
        %v770 = vadd.f32 %v480, %v769
        %v771 = vpop.f32.mrf.mxu0
        %v772 = vpop.f32.mrf.mxu0
        %v773 = vadd.f32 %v480, %v772
        %v774 = vpop.f32.mrf.mxu0
        %775 = vdwg.mxu0
        %v776 = vmax.f32 %v650, 0.0
        %v777 = vmax.f32 %v653, 0.0
        %v778 = vmax.f32 %v658, 0.0
        %v779 = vmax.f32 %v661, 0.0
        %v780 = vmax.f32 %v666, 0.0
        %v781 = vmax.f32 %v669, 0.0
        %v782 = vmax.f32 %v674, 0.0
        %v783 = vmax.f32 %v677, 0.0
        %v784 = vmax.f32 %v682, 0.0
        %v785 = vmax.f32 %v685, 0.0
        %v786 = vmax.f32 %v690, 0.0
        %v787 = vmax.f32 %v693, 0.0
        %v788 = vmax.f32 %v698, 0.0
        %v789 = vmax.f32 %v701, 0.0
        %v790 = vmax.f32 %v706, 0.0
        %v791 = vmax.f32 %v709, 0.0
        %v792 = vmax.f32 %v714, 0.0
        %v793 = vmax.f32 %v717, 0.0
        %v794 = vmax.f32 %v722, 0.0
        %v795 = vmax.f32 %v725, 0.0
        %v796 = vmax.f32 %v730, 0.0
        %v797 = vmax.f32 %v733, 0.0
        %v798 = vmax.f32 %v738, 0.0
        %v799 = vmax.f32 %v741, 0.0
        %v800 = vmax.f32 %v746, 0.0
        %v801 = vmax.f32 %v749, 0.0
        %v802 = vmax.f32 %v754, 0.0
        %v803 = vmax.f32 %v757, 0.0
        %v804 = vmax.f32 %v762, 0.0
        %v805 = vmax.f32 %v765, 0.0
        %v806 = vmax.f32 %v770, 0.0
        %v807 = vmax.f32 %v773, 0.0
        %s808 = scalar_lea.vmem [#allocation2], 24
        %809 = vst.msk [vmem:[%s808 + $0x1] sm:$0xff] %vm386, %v776
        %810 = vst.msk [vmem:[%s808 + $0x9] sm:$0xff] %vm386, %v777
        %811 = vst.msk [vmem:[%s808 + $0x19] sm:$0xff] %vm386, %v778
        %812 = vst.msk [vmem:[%s808 + $0x21] sm:$0xff] %vm386, %v779
        %813 = vst.msk [vmem:[%s808 + $0x31] sm:$0xff] %vm386, %v780
        %814 = vst.msk [vmem:[%s808 + $0x39] sm:$0xff] %vm386, %v781
        %815 = vst.msk [vmem:[%s808 + $0x49] sm:$0xff] %vm386, %v782
        %816 = vst.msk [vmem:[%s808 + $0x51] sm:$0xff] %vm386, %v783
        %817 = vst.msk [vmem:[%s808 + $0x61] sm:$0xff] %vm386, %v784
        %818 = vst.msk [vmem:[%s808 + $0x69] sm:$0xff] %vm386, %v785
        %819 = vst.msk [vmem:[%s808 + $0x79] sm:$0xff] %vm386, %v786
        %820 = vst.msk [vmem:[%s808 + $0x81] sm:$0xff] %vm386, %v787
        %821 = vst.msk [vmem:[%s808 + $0x91] sm:$0xff] %vm386, %v788
        %822 = vst.msk [vmem:[%s808 + $0x99] sm:$0xff] %vm386, %v789
        %823 = vst.msk [vmem:[%s808 + $0xa9] sm:$0xff] %vm386, %v790
        %824 = vst.msk [vmem:[%s808 + $0xb1] sm:$0xff] %vm386, %v791
        %825 = vst.msk [vmem:[%s808 + $0xc1] sm:$0xff] %vm386, %v792
        %826 = vst.msk [vmem:[%s808 + $0xc9] sm:$0xff] %vm386, %v793
        %827 = vst.msk [vmem:[%s808 + $0xd9] sm:$0xff] %vm386, %v794
        %828 = vst.msk [vmem:[%s808 + $0xe1] sm:$0xff] %vm386, %v795
        %829 = vst.msk [vmem:[%s808 + $0xf1] sm:$0xff] %vm386, %v796
        %830 = vst.msk [vmem:[%s808 + $0xf9] sm:$0xff] %vm386, %v797
        %831 = vst.msk [vmem:[%s808 + $0x109] sm:$0xff] %vm386, %v798
        %832 = vst.msk [vmem:[%s808 + $0x111] sm:$0xff] %vm386, %v799
        %833 = vst.msk [vmem:[%s808 + $0x121] sm:$0xff] %vm386, %v800
        %834 = vst.msk [vmem:[%s808 + $0x129] sm:$0xff] %vm386, %v801
        %835 = vst.msk [vmem:[%s808 + $0x139] sm:$0xff] %vm386, %v802
        %836 = vst.msk [vmem:[%s808 + $0x141] sm:$0xff] %vm386, %v803
        %837 = vst.msk [vmem:[%s808 + $0x151] sm:$0xff] %vm386, %v804
        %838 = vst.msk [vmem:[%s808 + $0x159] sm:$0xff] %vm386, %v805
        %839 = vst.msk [vmem:[%s808 + $0x169] sm:$0xff] %vm386, %v806
        %840 = vst.msk [vmem:[%s808 + $0x171] sm:$0xff] %vm386, %v807
        %v841 = vld [vmem:[#allocation2] sm:$0xff]
        %v842 = vld [vmem:[#allocation2 + $0x8] sm:$0xff]
        %v843 = vld [vmem:[#allocation2 + $0x18] sm:$0xff]
        %v844 = vld [vmem:[#allocation2 + $0x20] sm:$0xff]
        %v845 = vld [vmem:[#allocation2 + $0x30] sm:$0xff]
        %v846 = vld [vmem:[#allocation2 + $0x38] sm:$0xff]
        %v847 = vld [vmem:[#allocation2 + $0x48] sm:$0xff]
        %v848 = vld [vmem:[#allocation2 + $0x50] sm:$0xff]
        %v849 = vld [vmem:[#allocation2 + $0x60] sm:$0xff]
        %v850 = vld [vmem:[#allocation2 + $0x68] sm:$0xff]
        %v851 = vld [vmem:[#allocation2 + $0x78] sm:$0xff]
        %v852 = vld [vmem:[#allocation2 + $0x80] sm:$0xff]
        %v853 = vld [vmem:[#allocation2 + $0x90] sm:$0xff]
        %v854 = vld [vmem:[#allocation2 + $0x98] sm:$0xff]
        %v855 = vld [vmem:[#allocation2 + $0xa8] sm:$0xff]
        %v856 = vld [vmem:[#allocation2 + $0xb0] sm:$0xff]
        %v857 = vld [vmem:[#allocation2 + $0xc0] sm:$0xff]
        %v858 = vld [vmem:[#allocation2 + $0xc8] sm:$0xff]
        %v859 = vld [vmem:[#allocation2 + $0xd8] sm:$0xff]
        %v860 = vld [vmem:[#allocation2 + $0xe0] sm:$0xff]
        %v861 = vld [vmem:[#allocation2 + $0xf0] sm:$0xff]
        %v862 = vld [vmem:[#allocation2 + $0xf8] sm:$0xff]
        %v863 = vld [vmem:[#allocation2 + $0x108] sm:$0xff]
        %v864 = vld [vmem:[#allocation2 + $0x110] sm:$0xff]
        %v865 = vld [vmem:[#allocation2 + $0x120] sm:$0xff]
        %v866 = vld [vmem:[#allocation2 + $0x128] sm:$0xff]
        %v867 = vld [vmem:[#allocation2 + $0x138] sm:$0xff]
        %v868 = vld [vmem:[#allocation2 + $0x140] sm:$0xff]
        %v869 = vld [vmem:[#allocation2 + $0x150] sm:$0xff]
        %v870 = vld [vmem:[#allocation2 + $0x158] sm:$0xff]
        %v871 = vld [vmem:[#allocation2 + $0x168] sm:$0xff]
        %v872 = vld [vmem:[#allocation2 + $0x170] sm:$0xff]
        %v873 = vpack.c.bf16 %v842, %v841
        %v874 = vpack.c.bf16 %v844, %v843
        %v875 = vpack.c.bf16 %v846, %v845
        %v876 = vpack.c.bf16 %v848, %v847
        %v877 = vpack.c.bf16 %v850, %v849
        %v878 = vpack.c.bf16 %v852, %v851
        %v879 = vpack.c.bf16 %v854, %v853
        %v880 = vpack.c.bf16 %v856, %v855
        %v881 = vpack.c.bf16 %v858, %v857
        %v882 = vpack.c.bf16 %v860, %v859
        %v883 = vpack.c.bf16 %v862, %v861
        %v884 = vpack.c.bf16 %v864, %v863
        %v885 = vpack.c.bf16 %v866, %v865
        %v886 = vpack.c.bf16 %v868, %v867
        %v887 = vpack.c.bf16 %v870, %v869
        %v888 = vpack.c.bf16 %v872, %v871
        %v889 = vld [vmem:[%s3] sm:$0xf]
        %v890 = vld [vmem:[%s3 + $0x4] sm:$0xf]
        %v891 = vld [vmem:[%s3 + $0x8] sm:$0xf]
        %v892 = vld [vmem:[%s3 + $0xc] sm:$0xf]
        %v893 = vld [vmem:[%s3 + $0x10] sm:$0xf]
        %v894 = vld [vmem:[%s3 + $0x14] sm:$0xf]
        %v895 = vld [vmem:[%s3 + $0x18] sm:$0xf]
        %v896 = vld [vmem:[%s3 + $0x1c] sm:$0xf]
        %v897 = vld [vmem:[#allocation2 + $0x1] sm:$0xff]
        %v898 = vld [vmem:[#allocation2 + $0x9] sm:$0xff]
        %v899 = vld [vmem:[#allocation2 + $0x19] sm:$0xff]
        %v900 = vld [vmem:[#allocation2 + $0x21] sm:$0xff]
        %v901 = vld [vmem:[#allocation2 + $0x31] sm:$0xff]
        %v902 = vld [vmem:[#allocation2 + $0x39] sm:$0xff]
        %v903 = vld [vmem:[#allocation2 + $0x49] sm:$0xff]
        %v904 = vld [vmem:[#allocation2 + $0x51] sm:$0xff]
        %v905 = vld [vmem:[#allocation2 + $0x61] sm:$0xff]
        %v906 = vld [vmem:[#allocation2 + $0x69] sm:$0xff]
        %v907 = vld [vmem:[#allocation2 + $0x79] sm:$0xff]
        %v908 = vld [vmem:[#allocation2 + $0x81] sm:$0xff]
        %v909 = vld [vmem:[#allocation2 + $0x91] sm:$0xff]
        %v910 = vld [vmem:[#allocation2 + $0x99] sm:$0xff]
        %v911 = vld [vmem:[#allocation2 + $0xa9] sm:$0xff]
        %v912 = vld [vmem:[#allocation2 + $0xb1] sm:$0xff]
        %v913 = vld [vmem:[#allocation2 + $0xc1] sm:$0xff]
        %v914 = vld [vmem:[#allocation2 + $0xc9] sm:$0xff]
        %v915 = vld [vmem:[#allocation2 + $0xd9] sm:$0xff]
        %v916 = vld [vmem:[#allocation2 + $0xe1] sm:$0xff]
        %v917 = vld [vmem:[#allocation2 + $0xf1] sm:$0xff]
        %v918 = vld [vmem:[#allocation2 + $0xf9] sm:$0xff]
        %v919 = vld [vmem:[#allocation2 + $0x109] sm:$0xff]
        %v920 = vld [vmem:[#allocation2 + $0x111] sm:$0xff]
        %v921 = vld [vmem:[#allocation2 + $0x121] sm:$0xff]
        %v922 = vld [vmem:[#allocation2 + $0x129] sm:$0xff]
        %v923 = vld [vmem:[#allocation2 + $0x139] sm:$0xff]
        %v924 = vld [vmem:[#allocation2 + $0x141] sm:$0xff]
        %v925 = vld [vmem:[#allocation2 + $0x151] sm:$0xff]
        %v926 = vld [vmem:[#allocation2 + $0x159] sm:$0xff]
        %v927 = vld [vmem:[#allocation2 + $0x169] sm:$0xff]
        %v928 = vld [vmem:[#allocation2 + $0x171] sm:$0xff]
        %v929 = vpack.c.bf16 %v898, %v897
        %v930 = vpack.c.bf16 %v900, %v899
        %v931 = vpack.c.bf16 %v902, %v901
        %v932 = vpack.c.bf16 %v904, %v903
        %v933 = vpack.c.bf16 %v906, %v905
        %v934 = vpack.c.bf16 %v908, %v907
        %v935 = vpack.c.bf16 %v910, %v909
        %v936 = vpack.c.bf16 %v912, %v911
        %v937 = vpack.c.bf16 %v914, %v913
        %v938 = vpack.c.bf16 %v916, %v915
        %v939 = vpack.c.bf16 %v918, %v917
        %v940 = vpack.c.bf16 %v920, %v919
        %v941 = vpack.c.bf16 %v922, %v921
        %v942 = vpack.c.bf16 %v924, %v923
        %v943 = vpack.c.bf16 %v926, %v925
        %v944 = vpack.c.bf16 %v928, %v927
        %s945 = scalar_lea.vmem %s3, 32
        %v946 = vld [vmem:[%s945] sm:$0xf]
        %v947 = vld [vmem:[%s945 + $0x4] sm:$0xf]
        %v948 = vld [vmem:[%s945 + $0x8] sm:$0xf]
        %v949 = vld [vmem:[%s945 + $0xc] sm:$0xf]
        %v950 = vld [vmem:[%s945 + $0x10] sm:$0xf]
        %v951 = vld [vmem:[%s945 + $0x14] sm:$0xf]
        %v952 = vld [vmem:[%s945 + $0x18] sm:$0xf]
        %v953 = vld [vmem:[%s945 + $0x1c] sm:$0xf]
        %v962 = vunpack.c.l.b16 %v946
        %v963 = vunpack.c.l.b16 %v947
        %v964 = vunpack.c.l.b16 %v948
        %v965 = vunpack.c.l.b16 %v949
        %v966 = vunpack.c.l.b16 %v950
        %v967 = vunpack.c.l.b16 %v951
        %v968 = vunpack.c.l.b16 %v952
        %v969 = vunpack.c.l.b16 %v953
        %v970 = vpack.c.b16 %v963, %v962
        %v971 = vpack.c.b16 %v965, %v964
        %v972 = vpack.c.b16 %v967, %v966
        %v973 = vpack.c.b16 %v969, %v968
        %v979 = vsel %vm386, %v929, 0
        %v982 = vsel %vm386, %v930, 0
        %v985 = vsel %vm386, %v931, 0
        %v988 = vsel %vm386, %v932, 0
        %v991 = vsel %vm386, %v933, 0
        %v994 = vsel %vm386, %v934, 0
        %v997 = vsel %vm386, %v935, 0
        %v1000 = vsel %vm386, %v936, 0
        %v1003 = vsel %vm386, %v937, 0
        %v1006 = vsel %vm386, %v938, 0
        %v1009 = vsel %vm386, %v939, 0
        %v1012 = vsel %vm386, %v940, 0
        %v1015 = vsel %vm386, %v941, 0
        %v1018 = vsel %vm386, %v942, 0
        %v1021 = vsel %vm386, %v943, 0
        %v1024 = vsel %vm386, %v944, 0
        %1026 = vmatprep.subr.bf16.mxu0 0
        %1027 = vmatpush1.bf16.msra.mxu0 0
        %1028 = vmatprep.subr.bf16.mxu0 0
        %1029 = vmatpush1.bf16.msra.mxu0 0
        %1030 = vmatprep.subr.bf16.mxu0 0
        %1031 = vmatpush1.bf16.msra.mxu0 0
        %1032 = vmatprep.subr.bf16.mxu0 0
        %1033 = vmatpush1.bf16.msra.mxu0 0
        %1034 = vmatprep.subr.bf16.mxu0 0
        %1035 = vmatpush1.bf16.msra.mxu0 %v973
        %1036 = vmatprep.subr.bf16.mxu0 0
        %1037 = vmatpush1.bf16.msra.mxu0 %v972
        %1038 = vmatprep.subr.bf16.mxu0 0
        %1039 = vmatpush1.bf16.msra.mxu0 %v971
        %1040 = vmatprep.subr.bf16.mxu0 0
        %1041 = vmatpush1.bf16.msra.mxu0 %v970
        %1042 = vmatprep.subr.bf16.mxu0 0
        %1043 = vmatpush2.bf16.msra.mxu0 0
        %1044 = vmatprep.subr.bf16.mxu0 0
        %1045 = vmatpush2.bf16.msra.mxu0 0
        %1046 = vmatprep.subr.bf16.mxu0 0
        %1047 = vmatpush2.bf16.msra.mxu0 0
        %1048 = vmatprep.subr.bf16.mxu0 0
        %1049 = vmatpush2.bf16.msra.mxu0 0
        %1050 = vmatprep.subr.bf16.mxu0 0
        %1051 = vmatpush2.bf16.msra.mxu0 0
        %1052 = vmatprep.subr.bf16.mxu0 0
        %1053 = vmatpush2.bf16.msra.mxu0 0
        %1054 = vmatprep.subr.bf16.mxu0 0
        %1055 = vmatpush2.bf16.msra.mxu0 0
        %1056 = vmatprep.subr.bf16.mxu0 0
        %1057 = vmatpush2.bf16.msra.mxu0 0
        %1058 = vmatprep.mubr.bf16.mxu0 0
        %1059 = vmatmul.mubr.bf16.gmra.mxu0 %v979
        %v1060 = vpop.f32.mrf.mxu0
        %v1061 = vadd.f32 0.0, %v1060
        %v1062 = vpop.f32.mrf.mxu0
        %v1063 = vpop.f32.mrf.mxu0
        %v1064 = vadd.f32 0.0, %v1063
        %v1065 = vpop.f32.mrf.mxu0
        %1066 = vmatprep.mubr.bf16.mxu0 0
        %1067 = vmatmul.mubr.bf16.gmra.mxu0 %v982
        %v1068 = vpop.f32.mrf.mxu0
        %v1069 = vadd.f32 0.0, %v1068
        %v1070 = vpop.f32.mrf.mxu0
        %v1071 = vpop.f32.mrf.mxu0
        %v1072 = vadd.f32 0.0, %v1071
        %v1073 = vpop.f32.mrf.mxu0
        %1074 = vmatprep.mubr.bf16.mxu0 0
        %1075 = vmatmul.mubr.bf16.gmra.mxu0 %v985
        %v1076 = vpop.f32.mrf.mxu0
        %v1077 = vadd.f32 0.0, %v1076
        %v1078 = vpop.f32.mrf.mxu0
        %v1079 = vpop.f32.mrf.mxu0
        %v1080 = vadd.f32 0.0, %v1079
        %v1081 = vpop.f32.mrf.mxu0
        %1082 = vmatprep.mubr.bf16.mxu0 0
        %1083 = vmatmul.mubr.bf16.gmra.mxu0 %v988
        %v1084 = vpop.f32.mrf.mxu0
        %v1085 = vadd.f32 0.0, %v1084
        %v1086 = vpop.f32.mrf.mxu0
        %v1087 = vpop.f32.mrf.mxu0
        %v1088 = vadd.f32 0.0, %v1087
        %v1089 = vpop.f32.mrf.mxu0
        %1090 = vmatprep.mubr.bf16.mxu0 0
        %1091 = vmatmul.mubr.bf16.gmra.mxu0 %v991
        %v1092 = vpop.f32.mrf.mxu0
        %v1093 = vadd.f32 0.0, %v1092
        %v1094 = vpop.f32.mrf.mxu0
        %v1095 = vpop.f32.mrf.mxu0
        %v1096 = vadd.f32 0.0, %v1095
        %v1097 = vpop.f32.mrf.mxu0
        %1098 = vmatprep.mubr.bf16.mxu0 0
        %1099 = vmatmul.mubr.bf16.gmra.mxu0 %v994
        %v1100 = vpop.f32.mrf.mxu0
        %v1101 = vadd.f32 0.0, %v1100
        %v1102 = vpop.f32.mrf.mxu0
        %v1103 = vpop.f32.mrf.mxu0
        %v1104 = vadd.f32 0.0, %v1103
        %v1105 = vpop.f32.mrf.mxu0
        %1106 = vmatprep.mubr.bf16.mxu0 0
        %1107 = vmatmul.mubr.bf16.gmra.mxu0 %v997
        %v1108 = vpop.f32.mrf.mxu0
        %v1109 = vadd.f32 0.0, %v1108
        %v1110 = vpop.f32.mrf.mxu0
        %v1111 = vpop.f32.mrf.mxu0
        %v1112 = vadd.f32 0.0, %v1111
        %v1113 = vpop.f32.mrf.mxu0
        %1114 = vmatprep.mubr.bf16.mxu0 0
        %1115 = vmatmul.mubr.bf16.gmra.mxu0 %v1000
        %v1116 = vpop.f32.mrf.mxu0
        %v1117 = vadd.f32 0.0, %v1116
        %v1118 = vpop.f32.mrf.mxu0
        %v1119 = vpop.f32.mrf.mxu0
        %v1120 = vadd.f32 0.0, %v1119
        %v1121 = vpop.f32.mrf.mxu0
        %1122 = vmatprep.mubr.bf16.mxu0 0
        %1123 = vmatmul.mubr.bf16.gmra.mxu0 %v1003
        %v1124 = vpop.f32.mrf.mxu0
        %v1125 = vadd.f32 0.0, %v1124
        %v1126 = vpop.f32.mrf.mxu0
        %v1127 = vpop.f32.mrf.mxu0
        %v1128 = vadd.f32 0.0, %v1127
        %v1129 = vpop.f32.mrf.mxu0
        %1130 = vmatprep.mubr.bf16.mxu0 0
        %1131 = vmatmul.mubr.bf16.gmra.mxu0 %v1006
        %v1132 = vpop.f32.mrf.mxu0
        %v1133 = vadd.f32 0.0, %v1132
        %v1134 = vpop.f32.mrf.mxu0
        %v1135 = vpop.f32.mrf.mxu0
        %v1136 = vadd.f32 0.0, %v1135
        %v1137 = vpop.f32.mrf.mxu0
        %1138 = vmatprep.mubr.bf16.mxu0 0
        %1139 = vmatmul.mubr.bf16.gmra.mxu0 %v1009
        %v1140 = vpop.f32.mrf.mxu0
        %v1141 = vadd.f32 0.0, %v1140
        %v1142 = vpop.f32.mrf.mxu0
        %v1143 = vpop.f32.mrf.mxu0
        %v1144 = vadd.f32 0.0, %v1143
        %v1145 = vpop.f32.mrf.mxu0
        %1146 = vmatprep.mubr.bf16.mxu0 0
        %1147 = vmatmul.mubr.bf16.gmra.mxu0 %v1012
        %v1148 = vpop.f32.mrf.mxu0
        %v1149 = vadd.f32 0.0, %v1148
        %v1150 = vpop.f32.mrf.mxu0
        %v1151 = vpop.f32.mrf.mxu0
        %v1152 = vadd.f32 0.0, %v1151
        %v1153 = vpop.f32.mrf.mxu0
        %1154 = vmatprep.mubr.bf16.mxu0 0
        %1155 = vmatmul.mubr.bf16.gmra.mxu0 %v1015
        %v1156 = vpop.f32.mrf.mxu0
        %v1157 = vadd.f32 0.0, %v1156
        %v1158 = vpop.f32.mrf.mxu0
        %v1159 = vpop.f32.mrf.mxu0
        %v1160 = vadd.f32 0.0, %v1159
        %v1161 = vpop.f32.mrf.mxu0
        %1162 = vmatprep.mubr.bf16.mxu0 0
        %1163 = vmatmul.mubr.bf16.gmra.mxu0 %v1018
        %v1164 = vpop.f32.mrf.mxu0
        %v1165 = vadd.f32 0.0, %v1164
        %v1166 = vpop.f32.mrf.mxu0
        %v1167 = vpop.f32.mrf.mxu0
        %v1168 = vadd.f32 0.0, %v1167
        %v1169 = vpop.f32.mrf.mxu0
        %1170 = vmatprep.mubr.bf16.mxu0 0
        %1171 = vmatmul.mubr.bf16.gmra.mxu0 %v1021
        %v1172 = vpop.f32.mrf.mxu0
        %v1173 = vadd.f32 0.0, %v1172
        %v1174 = vpop.f32.mrf.mxu0
        %v1175 = vpop.f32.mrf.mxu0
        %v1176 = vadd.f32 0.0, %v1175
        %v1177 = vpop.f32.mrf.mxu0
        %1178 = vmatprep.mubr.bf16.mxu0 0
        %1179 = vmatmul.mubr.bf16.gmra.mxu0 %v1024
        %v1180 = vpop.f32.mrf.mxu0
        %v1181 = vadd.f32 0.0, %v1180
        %v1182 = vpop.f32.mrf.mxu0
        %v1183 = vpop.f32.mrf.mxu0
        %v1184 = vadd.f32 0.0, %v1183
        %v1185 = vpop.f32.mrf.mxu0
        %1186 = vdwg.mxu0
        %v1195 = vunpack.c.l.b16 %v889
        %v1196 = vunpack.c.l.b16 %v890
        %v1197 = vunpack.c.l.b16 %v891
        %v1198 = vunpack.c.l.b16 %v892
        %v1199 = vunpack.c.l.b16 %v893
        %v1200 = vunpack.c.l.b16 %v894
        %v1201 = vunpack.c.l.b16 %v895
        %v1202 = vunpack.c.l.b16 %v896
        %v1203 = vpack.c.b16 %v1196, %v1195
        %v1204 = vpack.c.b16 %v1198, %v1197
        %v1205 = vpack.c.b16 %v1200, %v1199
        %v1206 = vpack.c.b16 %v1202, %v1201
        %v1212 = vsel %vm386, %v873, 0
        %v1215 = vsel %vm386, %v874, 0
        %v1218 = vsel %vm386, %v875, 0
        %v1221 = vsel %vm386, %v876, 0
        %v1224 = vsel %vm386, %v877, 0
        %v1227 = vsel %vm386, %v878, 0
        %v1230 = vsel %vm386, %v879, 0
        %v1233 = vsel %vm386, %v880, 0
        %v1236 = vsel %vm386, %v881, 0
        %v1239 = vsel %vm386, %v882, 0
        %v1242 = vsel %vm386, %v883, 0
        %v1245 = vsel %vm386, %v884, 0
        %v1248 = vsel %vm386, %v885, 0
        %v1251 = vsel %vm386, %v886, 0
        %v1254 = vsel %vm386, %v887, 0
        %v1257 = vsel %vm386, %v888, 0
        %1259 = vmatprep.subr.bf16.mxu0 0
        %1260 = vmatpush1.bf16.msra.mxu0 0
        %1261 = vmatprep.subr.bf16.mxu0 0
        %1262 = vmatpush1.bf16.msra.mxu0 0
        %1263 = vmatprep.subr.bf16.mxu0 0
        %1264 = vmatpush1.bf16.msra.mxu0 0
        %1265 = vmatprep.subr.bf16.mxu0 0
        %1266 = vmatpush1.bf16.msra.mxu0 0
        %1267 = vmatprep.subr.bf16.mxu0 0
        %1268 = vmatpush1.bf16.msra.mxu0 %v1206
        %1269 = vmatprep.subr.bf16.mxu0 0
        %1270 = vmatpush1.bf16.msra.mxu0 %v1205
        %1271 = vmatprep.subr.bf16.mxu0 0
        %1272 = vmatpush1.bf16.msra.mxu0 %v1204
        %1273 = vmatprep.subr.bf16.mxu0 0
        %1274 = vmatpush1.bf16.msra.mxu0 %v1203
        %1275 = vmatprep.subr.bf16.mxu0 0
        %1276 = vmatpush2.bf16.msra.mxu0 0
        %1277 = vmatprep.subr.bf16.mxu0 0
        %1278 = vmatpush2.bf16.msra.mxu0 0
        %1279 = vmatprep.subr.bf16.mxu0 0
        %1280 = vmatpush2.bf16.msra.mxu0 0
        %1281 = vmatprep.subr.bf16.mxu0 0
        %1282 = vmatpush2.bf16.msra.mxu0 0
        %1283 = vmatprep.subr.bf16.mxu0 0
        %1284 = vmatpush2.bf16.msra.mxu0 0
        %1285 = vmatprep.subr.bf16.mxu0 0
        %1286 = vmatpush2.bf16.msra.mxu0 0
        %1287 = vmatprep.subr.bf16.mxu0 0
        %1288 = vmatpush2.bf16.msra.mxu0 0
        %1289 = vmatprep.subr.bf16.mxu0 0
        %1290 = vmatpush2.bf16.msra.mxu0 0
        %1291 = vmatprep.mubr.bf16.mxu0 0
        %1292 = vmatmul.mubr.bf16.gmra.mxu0 %v1212
        %v1293 = vpop.f32.mrf.mxu0
        %v1294 = vadd.f32 %v1061, %v1293
        %v1295 = vpop.f32.mrf.mxu0
        %v1296 = vpop.f32.mrf.mxu0
        %v1297 = vadd.f32 %v1064, %v1296
        %v1298 = vpop.f32.mrf.mxu0
        %1299 = vmatprep.mubr.bf16.mxu0 0
        %1300 = vmatmul.mubr.bf16.gmra.mxu0 %v1215
        %v1301 = vpop.f32.mrf.mxu0
        %v1302 = vadd.f32 %v1069, %v1301
        %v1303 = vpop.f32.mrf.mxu0
        %v1304 = vpop.f32.mrf.mxu0
        %v1305 = vadd.f32 %v1072, %v1304
        %v1306 = vpop.f32.mrf.mxu0
        %1307 = vmatprep.mubr.bf16.mxu0 0
        %1308 = vmatmul.mubr.bf16.gmra.mxu0 %v1218
        %v1309 = vpop.f32.mrf.mxu0
        %v1310 = vadd.f32 %v1077, %v1309
        %v1311 = vpop.f32.mrf.mxu0
        %v1312 = vpop.f32.mrf.mxu0
        %v1313 = vadd.f32 %v1080, %v1312
        %v1314 = vpop.f32.mrf.mxu0
        %1315 = vmatprep.mubr.bf16.mxu0 0
        %1316 = vmatmul.mubr.bf16.gmra.mxu0 %v1221
        %v1317 = vpop.f32.mrf.mxu0
        %v1318 = vadd.f32 %v1085, %v1317
        %v1319 = vpop.f32.mrf.mxu0
        %v1320 = vpop.f32.mrf.mxu0
        %v1321 = vadd.f32 %v1088, %v1320
        %v1322 = vpop.f32.mrf.mxu0
        %1323 = vmatprep.mubr.bf16.mxu0 0
        %1324 = vmatmul.mubr.bf16.gmra.mxu0 %v1224
        %v1325 = vpop.f32.mrf.mxu0
        %v1326 = vadd.f32 %v1093, %v1325
        %v1327 = vpop.f32.mrf.mxu0
        %v1328 = vpop.f32.mrf.mxu0
        %v1329 = vadd.f32 %v1096, %v1328
        %v1330 = vpop.f32.mrf.mxu0
        %1331 = vmatprep.mubr.bf16.mxu0 0
        %1332 = vmatmul.mubr.bf16.gmra.mxu0 %v1227
        %v1333 = vpop.f32.mrf.mxu0
        %v1334 = vadd.f32 %v1101, %v1333
        %v1335 = vpop.f32.mrf.mxu0
        %v1336 = vpop.f32.mrf.mxu0
        %v1337 = vadd.f32 %v1104, %v1336
        %v1338 = vpop.f32.mrf.mxu0
        %1339 = vmatprep.mubr.bf16.mxu0 0
        %1340 = vmatmul.mubr.bf16.gmra.mxu0 %v1230
        %v1341 = vpop.f32.mrf.mxu0
        %v1342 = vadd.f32 %v1109, %v1341
        %v1343 = vpop.f32.mrf.mxu0
        %v1344 = vpop.f32.mrf.mxu0
        %v1345 = vadd.f32 %v1112, %v1344
        %v1346 = vpop.f32.mrf.mxu0
        %1347 = vmatprep.mubr.bf16.mxu0 0
        %1348 = vmatmul.mubr.bf16.gmra.mxu0 %v1233
        %v1349 = vpop.f32.mrf.mxu0
        %v1350 = vadd.f32 %v1117, %v1349
        %v1351 = vpop.f32.mrf.mxu0
        %v1352 = vpop.f32.mrf.mxu0
        %v1353 = vadd.f32 %v1120, %v1352
        %v1354 = vpop.f32.mrf.mxu0
        %1355 = vmatprep.mubr.bf16.mxu0 0
        %1356 = vmatmul.mubr.bf16.gmra.mxu0 %v1236
        %v1357 = vpop.f32.mrf.mxu0
        %v1358 = vadd.f32 %v1125, %v1357
        %v1359 = vpop.f32.mrf.mxu0
        %v1360 = vpop.f32.mrf.mxu0
        %v1361 = vadd.f32 %v1128, %v1360
        %v1362 = vpop.f32.mrf.mxu0
        %1363 = vmatprep.mubr.bf16.mxu0 0
        %1364 = vmatmul.mubr.bf16.gmra.mxu0 %v1239
        %v1365 = vpop.f32.mrf.mxu0
        %v1366 = vadd.f32 %v1133, %v1365
        %v1367 = vpop.f32.mrf.mxu0
        %v1368 = vpop.f32.mrf.mxu0
        %v1369 = vadd.f32 %v1136, %v1368
        %v1370 = vpop.f32.mrf.mxu0
        %1371 = vmatprep.mubr.bf16.mxu0 0
        %1372 = vmatmul.mubr.bf16.gmra.mxu0 %v1242
        %v1373 = vpop.f32.mrf.mxu0
        %v1374 = vadd.f32 %v1141, %v1373
        %v1375 = vpop.f32.mrf.mxu0
        %v1376 = vpop.f32.mrf.mxu0
        %v1377 = vadd.f32 %v1144, %v1376
        %v1378 = vpop.f32.mrf.mxu0
        %1379 = vmatprep.mubr.bf16.mxu0 0
        %1380 = vmatmul.mubr.bf16.gmra.mxu0 %v1245
        %v1381 = vpop.f32.mrf.mxu0
        %v1382 = vadd.f32 %v1149, %v1381
        %v1383 = vpop.f32.mrf.mxu0
        %v1384 = vpop.f32.mrf.mxu0
        %v1385 = vadd.f32 %v1152, %v1384
        %v1386 = vpop.f32.mrf.mxu0
        %1387 = vmatprep.mubr.bf16.mxu0 0
        %1388 = vmatmul.mubr.bf16.gmra.mxu0 %v1248
        %v1389 = vpop.f32.mrf.mxu0
        %v1390 = vadd.f32 %v1157, %v1389
        %v1391 = vpop.f32.mrf.mxu0
        %v1392 = vpop.f32.mrf.mxu0
        %v1393 = vadd.f32 %v1160, %v1392
        %v1394 = vpop.f32.mrf.mxu0
        %1395 = vmatprep.mubr.bf16.mxu0 0
        %1396 = vmatmul.mubr.bf16.gmra.mxu0 %v1251
        %v1397 = vpop.f32.mrf.mxu0
        %v1398 = vadd.f32 %v1165, %v1397
        %v1399 = vpop.f32.mrf.mxu0
        %v1400 = vpop.f32.mrf.mxu0
        %v1401 = vadd.f32 %v1168, %v1400
        %v1402 = vpop.f32.mrf.mxu0
        %1403 = vmatprep.mubr.bf16.mxu0 0
        %1404 = vmatmul.mubr.bf16.gmra.mxu0 %v1254
        %v1405 = vpop.f32.mrf.mxu0
        %v1406 = vadd.f32 %v1173, %v1405
        %v1407 = vpop.f32.mrf.mxu0
        %v1408 = vpop.f32.mrf.mxu0
        %v1409 = vadd.f32 %v1176, %v1408
        %v1410 = vpop.f32.mrf.mxu0
        %1411 = vmatprep.mubr.bf16.mxu0 0
        %1412 = vmatmul.mubr.bf16.gmra.mxu0 %v1257
        %v1413 = vpop.f32.mrf.mxu0
        %v1414 = vadd.f32 %v1181, %v1413
        %v1415 = vpop.f32.mrf.mxu0
        %v1416 = vpop.f32.mrf.mxu0
        %v1417 = vadd.f32 %v1184, %v1416
        %v1418 = vpop.f32.mrf.mxu0
        %1419 = vdwg.mxu0
        %v1420 = vld [vmem:[#allocation2 + $0x2] sm:$0xff]
        %v1421 = vld [vmem:[#allocation2 + $0xa] sm:$0xff]
        %v1422 = vld [vmem:[#allocation2 + $0x1a] sm:$0xff]
        %v1423 = vld [vmem:[#allocation2 + $0x22] sm:$0xff]
        %v1424 = vld [vmem:[#allocation2 + $0x32] sm:$0xff]
        %v1425 = vld [vmem:[#allocation2 + $0x3a] sm:$0xff]
        %v1426 = vld [vmem:[#allocation2 + $0x4a] sm:$0xff]
        %v1427 = vld [vmem:[#allocation2 + $0x52] sm:$0xff]
        %v1428 = vld [vmem:[#allocation2 + $0x62] sm:$0xff]
        %v1429 = vld [vmem:[#allocation2 + $0x6a] sm:$0xff]
        %v1430 = vld [vmem:[#allocation2 + $0x7a] sm:$0xff]
        %v1431 = vld [vmem:[#allocation2 + $0x82] sm:$0xff]
        %v1432 = vld [vmem:[#allocation2 + $0x92] sm:$0xff]
        %v1433 = vld [vmem:[#allocation2 + $0x9a] sm:$0xff]
        %v1434 = vld [vmem:[#allocation2 + $0xaa] sm:$0xff]
        %v1435 = vld [vmem:[#allocation2 + $0xb2] sm:$0xff]
        %v1436 = vld [vmem:[#allocation2 + $0xc2] sm:$0xff]
        %v1437 = vld [vmem:[#allocation2 + $0xca] sm:$0xff]
        %v1438 = vld [vmem:[#allocation2 + $0xda] sm:$0xff]
        %v1439 = vld [vmem:[#allocation2 + $0xe2] sm:$0xff]
        %v1440 = vld [vmem:[#allocation2 + $0xf2] sm:$0xff]
        %v1441 = vld [vmem:[#allocation2 + $0xfa] sm:$0xff]
        %v1442 = vld [vmem:[#allocation2 + $0x10a] sm:$0xff]
        %v1443 = vld [vmem:[#allocation2 + $0x112] sm:$0xff]
        %v1444 = vld [vmem:[#allocation2 + $0x122] sm:$0xff]
        %v1445 = vld [vmem:[#allocation2 + $0x12a] sm:$0xff]
        %v1446 = vld [vmem:[#allocation2 + $0x13a] sm:$0xff]
        %v1447 = vld [vmem:[#allocation2 + $0x142] sm:$0xff]
        %v1448 = vld [vmem:[#allocation2 + $0x152] sm:$0xff]
        %v1449 = vld [vmem:[#allocation2 + $0x15a] sm:$0xff]
        %v1450 = vld [vmem:[#allocation2 + $0x16a] sm:$0xff]
        %v1451 = vld [vmem:[#allocation2 + $0x172] sm:$0xff]
        %v1452 = vpack.c.bf16 %v1421, %v1420
        %v1453 = vpack.c.bf16 %v1423, %v1422
        %v1454 = vpack.c.bf16 %v1425, %v1424
        %v1455 = vpack.c.bf16 %v1427, %v1426
        %v1456 = vpack.c.bf16 %v1429, %v1428
        %v1457 = vpack.c.bf16 %v1431, %v1430
        %v1458 = vpack.c.bf16 %v1433, %v1432
        %v1459 = vpack.c.bf16 %v1435, %v1434
        %v1460 = vpack.c.bf16 %v1437, %v1436
        %v1461 = vpack.c.bf16 %v1439, %v1438
        %v1462 = vpack.c.bf16 %v1441, %v1440
        %v1463 = vpack.c.bf16 %v1443, %v1442
        %v1464 = vpack.c.bf16 %v1445, %v1444
        %v1465 = vpack.c.bf16 %v1447, %v1446
        %v1466 = vpack.c.bf16 %v1449, %v1448
        %v1467 = vpack.c.bf16 %v1451, %v1450
        %s1468 = scalar_lea.vmem %s3, 64
        %v1469 = vld [vmem:[%s1468] sm:$0xf]
        %v1470 = vld [vmem:[%s1468 + $0x4] sm:$0xf]
        %v1471 = vld [vmem:[%s1468 + $0x8] sm:$0xf]
        %v1472 = vld [vmem:[%s1468 + $0xc] sm:$0xf]
        %v1473 = vld [vmem:[%s1468 + $0x10] sm:$0xf]
        %v1474 = vld [vmem:[%s1468 + $0x14] sm:$0xf]
        %v1475 = vld [vmem:[%s1468 + $0x18] sm:$0xf]
        %v1476 = vld [vmem:[%s1468 + $0x1c] sm:$0xf]
        %v1485 = vunpack.c.l.b16 %v1469
        %v1486 = vunpack.c.l.b16 %v1470
        %v1487 = vunpack.c.l.b16 %v1471
        %v1488 = vunpack.c.l.b16 %v1472
        %v1489 = vunpack.c.l.b16 %v1473
        %v1490 = vunpack.c.l.b16 %v1474
        %v1491 = vunpack.c.l.b16 %v1475
        %v1492 = vunpack.c.l.b16 %v1476
        %v1493 = vpack.c.b16 %v1486, %v1485
        %v1494 = vpack.c.b16 %v1488, %v1487
        %v1495 = vpack.c.b16 %v1490, %v1489
        %v1496 = vpack.c.b16 %v1492, %v1491
        %v1502 = vsel %vm386, %v1452, 0
        %v1505 = vsel %vm386, %v1453, 0
        %v1508 = vsel %vm386, %v1454, 0
        %v1511 = vsel %vm386, %v1455, 0
        %v1514 = vsel %vm386, %v1456, 0
        %v1517 = vsel %vm386, %v1457, 0
        %v1520 = vsel %vm386, %v1458, 0
        %v1523 = vsel %vm386, %v1459, 0
        %v1526 = vsel %vm386, %v1460, 0
        %v1529 = vsel %vm386, %v1461, 0
        %v1532 = vsel %vm386, %v1462, 0
        %v1535 = vsel %vm386, %v1463, 0
        %v1538 = vsel %vm386, %v1464, 0
        %v1541 = vsel %vm386, %v1465, 0
        %v1544 = vsel %vm386, %v1466, 0
        %v1547 = vsel %vm386, %v1467, 0
        %1549 = vmatprep.subr.bf16.mxu0 0
        %1550 = vmatpush1.bf16.msra.mxu0 0
        %1551 = vmatprep.subr.bf16.mxu0 0
        %1552 = vmatpush1.bf16.msra.mxu0 0
        %1553 = vmatprep.subr.bf16.mxu0 0
        %1554 = vmatpush1.bf16.msra.mxu0 0
        %1555 = vmatprep.subr.bf16.mxu0 0
        %1556 = vmatpush1.bf16.msra.mxu0 0
        %1557 = vmatprep.subr.bf16.mxu0 0
        %1558 = vmatpush1.bf16.msra.mxu0 %v1496
        %1559 = vmatprep.subr.bf16.mxu0 0
        %1560 = vmatpush1.bf16.msra.mxu0 %v1495
        %1561 = vmatprep.subr.bf16.mxu0 0
        %1562 = vmatpush1.bf16.msra.mxu0 %v1494
        %1563 = vmatprep.subr.bf16.mxu0 0
        %1564 = vmatpush1.bf16.msra.mxu0 %v1493
        %1565 = vmatprep.subr.bf16.mxu0 0
        %1566 = vmatpush2.bf16.msra.mxu0 0
        %1567 = vmatprep.subr.bf16.mxu0 0
        %1568 = vmatpush2.bf16.msra.mxu0 0
        %1569 = vmatprep.subr.bf16.mxu0 0
        %1570 = vmatpush2.bf16.msra.mxu0 0
        %1571 = vmatprep.subr.bf16.mxu0 0
        %1572 = vmatpush2.bf16.msra.mxu0 0
        %1573 = vmatprep.subr.bf16.mxu0 0
        %1574 = vmatpush2.bf16.msra.mxu0 0
        %1575 = vmatprep.subr.bf16.mxu0 0
        %1576 = vmatpush2.bf16.msra.mxu0 0
        %1577 = vmatprep.subr.bf16.mxu0 0
        %1578 = vmatpush2.bf16.msra.mxu0 0
        %1579 = vmatprep.subr.bf16.mxu0 0
        %1580 = vmatpush2.bf16.msra.mxu0 0
        %1581 = vmatprep.mubr.bf16.mxu0 0
        %1582 = vmatmul.mubr.bf16.gmra.mxu0 %v1502
        %v1583 = vpop.f32.mrf.mxu0
        %v1584 = vadd.f32 0.0, %v1583
        %v1585 = vpop.f32.mrf.mxu0
        %v1586 = vpop.f32.mrf.mxu0
        %v1587 = vadd.f32 0.0, %v1586
        %v1588 = vpop.f32.mrf.mxu0
        %1589 = vmatprep.mubr.bf16.mxu0 0
        %1590 = vmatmul.mubr.bf16.gmra.mxu0 %v1505
        %v1591 = vpop.f32.mrf.mxu0
        %v1592 = vadd.f32 0.0, %v1591
        %v1593 = vpop.f32.mrf.mxu0
        %v1594 = vpop.f32.mrf.mxu0
        %v1595 = vadd.f32 0.0, %v1594
        %v1596 = vpop.f32.mrf.mxu0
        %1597 = vmatprep.mubr.bf16.mxu0 0
        %1598 = vmatmul.mubr.bf16.gmra.mxu0 %v1508
        %v1599 = vpop.f32.mrf.mxu0
        %v1600 = vadd.f32 0.0, %v1599
        %v1601 = vpop.f32.mrf.mxu0
        %v1602 = vpop.f32.mrf.mxu0
        %v1603 = vadd.f32 0.0, %v1602
        %v1604 = vpop.f32.mrf.mxu0
        %1605 = vmatprep.mubr.bf16.mxu0 0
        %1606 = vmatmul.mubr.bf16.gmra.mxu0 %v1511
        %v1607 = vpop.f32.mrf.mxu0
        %v1608 = vadd.f32 0.0, %v1607
        %v1609 = vpop.f32.mrf.mxu0
        %v1610 = vpop.f32.mrf.mxu0
        %v1611 = vadd.f32 0.0, %v1610
        %v1612 = vpop.f32.mrf.mxu0
        %1613 = vmatprep.mubr.bf16.mxu0 0
        %1614 = vmatmul.mubr.bf16.gmra.mxu0 %v1514
        %v1615 = vpop.f32.mrf.mxu0
        %v1616 = vadd.f32 0.0, %v1615
        %v1617 = vpop.f32.mrf.mxu0
        %v1618 = vpop.f32.mrf.mxu0
        %v1619 = vadd.f32 0.0, %v1618
        %v1620 = vpop.f32.mrf.mxu0
        %1621 = vmatprep.mubr.bf16.mxu0 0
        %1622 = vmatmul.mubr.bf16.gmra.mxu0 %v1517
        %v1623 = vpop.f32.mrf.mxu0
        %v1624 = vadd.f32 0.0, %v1623
        %v1625 = vpop.f32.mrf.mxu0
        %v1626 = vpop.f32.mrf.mxu0
        %v1627 = vadd.f32 0.0, %v1626
        %v1628 = vpop.f32.mrf.mxu0
        %1629 = vmatprep.mubr.bf16.mxu0 0
        %1630 = vmatmul.mubr.bf16.gmra.mxu0 %v1520
        %v1631 = vpop.f32.mrf.mxu0
        %v1632 = vadd.f32 0.0, %v1631
        %v1633 = vpop.f32.mrf.mxu0
        %v1634 = vpop.f32.mrf.mxu0
        %v1635 = vadd.f32 0.0, %v1634
        %v1636 = vpop.f32.mrf.mxu0
        %1637 = vmatprep.mubr.bf16.mxu0 0
        %1638 = vmatmul.mubr.bf16.gmra.mxu0 %v1523
        %v1639 = vpop.f32.mrf.mxu0
        %v1640 = vadd.f32 0.0, %v1639
        %v1641 = vpop.f32.mrf.mxu0
        %v1642 = vpop.f32.mrf.mxu0
        %v1643 = vadd.f32 0.0, %v1642
        %v1644 = vpop.f32.mrf.mxu0
        %1645 = vmatprep.mubr.bf16.mxu0 0
        %1646 = vmatmul.mubr.bf16.gmra.mxu0 %v1526
        %v1647 = vpop.f32.mrf.mxu0
        %v1648 = vadd.f32 0.0, %v1647
        %v1649 = vpop.f32.mrf.mxu0
        %v1650 = vpop.f32.mrf.mxu0
        %v1651 = vadd.f32 0.0, %v1650
        %v1652 = vpop.f32.mrf.mxu0
        %1653 = vmatprep.mubr.bf16.mxu0 0
        %1654 = vmatmul.mubr.bf16.gmra.mxu0 %v1529
        %v1655 = vpop.f32.mrf.mxu0
        %v1656 = vadd.f32 0.0, %v1655
        %v1657 = vpop.f32.mrf.mxu0
        %v1658 = vpop.f32.mrf.mxu0
        %v1659 = vadd.f32 0.0, %v1658
        %v1660 = vpop.f32.mrf.mxu0
        %1661 = vmatprep.mubr.bf16.mxu0 0
        %1662 = vmatmul.mubr.bf16.gmra.mxu0 %v1532
        %v1663 = vpop.f32.mrf.mxu0
        %v1664 = vadd.f32 0.0, %v1663
        %v1665 = vpop.f32.mrf.mxu0
        %v1666 = vpop.f32.mrf.mxu0
        %v1667 = vadd.f32 0.0, %v1666
        %v1668 = vpop.f32.mrf.mxu0
        %1669 = vmatprep.mubr.bf16.mxu0 0
        %1670 = vmatmul.mubr.bf16.gmra.mxu0 %v1535
        %v1671 = vpop.f32.mrf.mxu0
        %v1672 = vadd.f32 0.0, %v1671
        %v1673 = vpop.f32.mrf.mxu0
        %v1674 = vpop.f32.mrf.mxu0
        %v1675 = vadd.f32 0.0, %v1674
        %v1676 = vpop.f32.mrf.mxu0
        %1677 = vmatprep.mubr.bf16.mxu0 0
        %1678 = vmatmul.mubr.bf16.gmra.mxu0 %v1538
        %v1679 = vpop.f32.mrf.mxu0
        %v1680 = vadd.f32 0.0, %v1679
        %v1681 = vpop.f32.mrf.mxu0
        %v1682 = vpop.f32.mrf.mxu0
        %v1683 = vadd.f32 0.0, %v1682
        %v1684 = vpop.f32.mrf.mxu0
        %1685 = vmatprep.mubr.bf16.mxu0 0
        %1686 = vmatmul.mubr.bf16.gmra.mxu0 %v1541
        %v1687 = vpop.f32.mrf.mxu0
        %v1688 = vadd.f32 0.0, %v1687
        %v1689 = vpop.f32.mrf.mxu0
        %v1690 = vpop.f32.mrf.mxu0
        %v1691 = vadd.f32 0.0, %v1690
        %v1692 = vpop.f32.mrf.mxu0
        %1693 = vmatprep.mubr.bf16.mxu0 0
        %1694 = vmatmul.mubr.bf16.gmra.mxu0 %v1544
        %v1695 = vpop.f32.mrf.mxu0
        %v1696 = vadd.f32 0.0, %v1695
        %v1697 = vpop.f32.mrf.mxu0
        %v1698 = vpop.f32.mrf.mxu0
        %v1699 = vadd.f32 0.0, %v1698
        %v1700 = vpop.f32.mrf.mxu0
        %1701 = vmatprep.mubr.bf16.mxu0 0
        %1702 = vmatmul.mubr.bf16.gmra.mxu0 %v1547
        %v1703 = vpop.f32.mrf.mxu0
        %v1704 = vadd.f32 0.0, %v1703
        %v1705 = vpop.f32.mrf.mxu0
        %v1706 = vpop.f32.mrf.mxu0
        %v1707 = vadd.f32 0.0, %v1706
        %v1708 = vpop.f32.mrf.mxu0
        %1709 = vdwg.mxu0
        %v1710 = vadd.f32 %v1294, %v1584
        %v1711 = vadd.f32 %v1297, %v1587
        %v1712 = vadd.f32 %v1302, %v1592
        %v1713 = vadd.f32 %v1305, %v1595
        %v1714 = vadd.f32 %v1310, %v1600
        %v1715 = vadd.f32 %v1313, %v1603
        %v1716 = vadd.f32 %v1318, %v1608
        %v1717 = vadd.f32 %v1321, %v1611
        %v1718 = vadd.f32 %v1326, %v1616
        %v1719 = vadd.f32 %v1329, %v1619
        %v1720 = vadd.f32 %v1334, %v1624
        %v1721 = vadd.f32 %v1337, %v1627
        %v1722 = vadd.f32 %v1342, %v1632
        %v1723 = vadd.f32 %v1345, %v1635
        %v1724 = vadd.f32 %v1350, %v1640
        %v1725 = vadd.f32 %v1353, %v1643
        %v1726 = vadd.f32 %v1358, %v1648
        %v1727 = vadd.f32 %v1361, %v1651
        %v1728 = vadd.f32 %v1366, %v1656
        %v1729 = vadd.f32 %v1369, %v1659
        %v1730 = vadd.f32 %v1374, %v1664
        %v1731 = vadd.f32 %v1377, %v1667
        %v1732 = vadd.f32 %v1382, %v1672
        %v1733 = vadd.f32 %v1385, %v1675
        %v1734 = vadd.f32 %v1390, %v1680
        %v1735 = vadd.f32 %v1393, %v1683
        %v1736 = vadd.f32 %v1398, %v1688
        %v1737 = vadd.f32 %v1401, %v1691
        %v1738 = vadd.f32 %v1406, %v1696
        %v1739 = vadd.f32 %v1409, %v1699
        %v1740 = vadd.f32 %v1414, %v1704
        %v1741 = vadd.f32 %v1417, %v1707
        %v1742 = vld [vmem:[%s808] sm:$0xff]
        %v1743 = vld [vmem:[%s808 + $0x8] sm:$0xff]
        %v1744 = vld [vmem:[%s808 + $0x18] sm:$0xff]
        %v1745 = vld [vmem:[%s808 + $0x20] sm:$0xff]
        %v1746 = vld [vmem:[%s808 + $0x30] sm:$0xff]
        %v1747 = vld [vmem:[%s808 + $0x38] sm:$0xff]
        %v1748 = vld [vmem:[%s808 + $0x48] sm:$0xff]
        %v1749 = vld [vmem:[%s808 + $0x50] sm:$0xff]
        %v1750 = vld [vmem:[%s808 + $0x60] sm:$0xff]
        %v1751 = vld [vmem:[%s808 + $0x68] sm:$0xff]
        %v1752 = vld [vmem:[%s808 + $0x78] sm:$0xff]
        %v1753 = vld [vmem:[%s808 + $0x80] sm:$0xff]
        %v1754 = vld [vmem:[%s808 + $0x90] sm:$0xff]
        %v1755 = vld [vmem:[%s808 + $0x98] sm:$0xff]
        %v1756 = vld [vmem:[%s808 + $0xa8] sm:$0xff]
        %v1757 = vld [vmem:[%s808 + $0xb0] sm:$0xff]
        %v1758 = vld [vmem:[%s808 + $0xc0] sm:$0xff]
        %v1759 = vld [vmem:[%s808 + $0xc8] sm:$0xff]
        %v1760 = vld [vmem:[%s808 + $0xd8] sm:$0xff]
        %v1761 = vld [vmem:[%s808 + $0xe0] sm:$0xff]
        %v1762 = vld [vmem:[%s808 + $0xf0] sm:$0xff]
        %v1763 = vld [vmem:[%s808 + $0xf8] sm:$0xff]
        %v1764 = vld [vmem:[%s808 + $0x108] sm:$0xff]
        %v1765 = vld [vmem:[%s808 + $0x110] sm:$0xff]
        %v1766 = vld [vmem:[%s808 + $0x120] sm:$0xff]
        %v1767 = vld [vmem:[%s808 + $0x128] sm:$0xff]
        %v1768 = vld [vmem:[%s808 + $0x138] sm:$0xff]
        %v1769 = vld [vmem:[%s808 + $0x140] sm:$0xff]
        %v1770 = vld [vmem:[%s808 + $0x150] sm:$0xff]
        %v1771 = vld [vmem:[%s808 + $0x158] sm:$0xff]
        %v1772 = vld [vmem:[%s808 + $0x168] sm:$0xff]
        %v1773 = vld [vmem:[%s808 + $0x170] sm:$0xff]
        %v1774 = vpack.c.bf16 %v1743, %v1742
        %v1775 = vpack.c.bf16 %v1745, %v1744
        %v1776 = vpack.c.bf16 %v1747, %v1746
        %v1777 = vpack.c.bf16 %v1749, %v1748
        %v1778 = vpack.c.bf16 %v1751, %v1750
        %v1779 = vpack.c.bf16 %v1753, %v1752
        %v1780 = vpack.c.bf16 %v1755, %v1754
        %v1781 = vpack.c.bf16 %v1757, %v1756
        %v1782 = vpack.c.bf16 %v1759, %v1758
        %v1783 = vpack.c.bf16 %v1761, %v1760
        %v1784 = vpack.c.bf16 %v1763, %v1762
        %v1785 = vpack.c.bf16 %v1765, %v1764
        %v1786 = vpack.c.bf16 %v1767, %v1766
        %v1787 = vpack.c.bf16 %v1769, %v1768
        %v1788 = vpack.c.bf16 %v1771, %v1770
        %v1789 = vpack.c.bf16 %v1773, %v1772
        %s1790 = scalar_lea.vmem %s3, 96
        %v1791 = vld [vmem:[%s1790] sm:$0xf]
        %v1792 = vld [vmem:[%s1790 + $0x4] sm:$0xf]
        %v1793 = vld [vmem:[%s1790 + $0x8] sm:$0xf]
        %v1794 = vld [vmem:[%s1790 + $0xc] sm:$0xf]
        %v1795 = vld [vmem:[%s1790 + $0x10] sm:$0xf]
        %v1796 = vld [vmem:[%s1790 + $0x14] sm:$0xf]
        %v1797 = vld [vmem:[%s1790 + $0x18] sm:$0xf]
        %v1798 = vld [vmem:[%s1790 + $0x1c] sm:$0xf]
        %v1807 = vunpack.c.l.b16 %v1791
        %v1808 = vunpack.c.l.b16 %v1792
        %v1809 = vunpack.c.l.b16 %v1793
        %v1810 = vunpack.c.l.b16 %v1794
        %v1811 = vunpack.c.l.b16 %v1795
        %v1812 = vunpack.c.l.b16 %v1796
        %v1813 = vunpack.c.l.b16 %v1797
        %v1814 = vunpack.c.l.b16 %v1798
        %v1815 = vpack.c.b16 %v1808, %v1807
        %v1816 = vpack.c.b16 %v1810, %v1809
        %v1817 = vpack.c.b16 %v1812, %v1811
        %v1818 = vpack.c.b16 %v1814, %v1813
        %v1824 = vsel %vm386, %v1774, 0
        %v1827 = vsel %vm386, %v1775, 0
        %v1830 = vsel %vm386, %v1776, 0
        %v1833 = vsel %vm386, %v1777, 0
        %v1836 = vsel %vm386, %v1778, 0
        %v1839 = vsel %vm386, %v1779, 0
        %v1842 = vsel %vm386, %v1780, 0
        %v1845 = vsel %vm386, %v1781, 0
        %v1848 = vsel %vm386, %v1782, 0
        %v1851 = vsel %vm386, %v1783, 0
        %v1854 = vsel %vm386, %v1784, 0
        %v1857 = vsel %vm386, %v1785, 0
        %v1860 = vsel %vm386, %v1786, 0
        %v1863 = vsel %vm386, %v1787, 0
        %v1866 = vsel %vm386, %v1788, 0
        %v1869 = vsel %vm386, %v1789, 0
        %1871 = vmatprep.subr.bf16.mxu0 0
        %1872 = vmatpush1.bf16.msra.mxu0 0
        %1873 = vmatprep.subr.bf16.mxu0 0
        %1874 = vmatpush1.bf16.msra.mxu0 0
        %1875 = vmatprep.subr.bf16.mxu0 0
        %1876 = vmatpush1.bf16.msra.mxu0 0
        %1877 = vmatprep.subr.bf16.mxu0 0
        %1878 = vmatpush1.bf16.msra.mxu0 0
        %1879 = vmatprep.subr.bf16.mxu0 0
        %1880 = vmatpush1.bf16.msra.mxu0 %v1818
        %1881 = vmatprep.subr.bf16.mxu0 0
        %1882 = vmatpush1.bf16.msra.mxu0 %v1817
        %1883 = vmatprep.subr.bf16.mxu0 0
        %1884 = vmatpush1.bf16.msra.mxu0 %v1816
        %1885 = vmatprep.subr.bf16.mxu0 0
        %1886 = vmatpush1.bf16.msra.mxu0 %v1815
        %1887 = vmatprep.subr.bf16.mxu0 0
        %1888 = vmatpush2.bf16.msra.mxu0 0
        %1889 = vmatprep.subr.bf16.mxu0 0
        %1890 = vmatpush2.bf16.msra.mxu0 0
        %1891 = vmatprep.subr.bf16.mxu0 0
        %1892 = vmatpush2.bf16.msra.mxu0 0
        %1893 = vmatprep.subr.bf16.mxu0 0
        %1894 = vmatpush2.bf16.msra.mxu0 0
        %1895 = vmatprep.subr.bf16.mxu0 0
        %1896 = vmatpush2.bf16.msra.mxu0 0
        %1897 = vmatprep.subr.bf16.mxu0 0
        %1898 = vmatpush2.bf16.msra.mxu0 0
        %1899 = vmatprep.subr.bf16.mxu0 0
        %1900 = vmatpush2.bf16.msra.mxu0 0
        %1901 = vmatprep.subr.bf16.mxu0 0
        %1902 = vmatpush2.bf16.msra.mxu0 0
        %1903 = vmatprep.mubr.bf16.mxu0 0
        %1904 = vmatmul.mubr.bf16.gmra.mxu0 %v1824
        %v1905 = vpop.f32.mrf.mxu0
        %v1906 = vadd.f32 0.0, %v1905
        %v1907 = vpop.f32.mrf.mxu0
        %v1908 = vpop.f32.mrf.mxu0
        %v1909 = vadd.f32 0.0, %v1908
        %v1910 = vpop.f32.mrf.mxu0
        %1911 = vmatprep.mubr.bf16.mxu0 0
        %1912 = vmatmul.mubr.bf16.gmra.mxu0 %v1827
        %v1913 = vpop.f32.mrf.mxu0
        %v1914 = vadd.f32 0.0, %v1913
        %v1915 = vpop.f32.mrf.mxu0
        %v1916 = vpop.f32.mrf.mxu0
        %v1917 = vadd.f32 0.0, %v1916
        %v1918 = vpop.f32.mrf.mxu0
        %1919 = vmatprep.mubr.bf16.mxu0 0
        %1920 = vmatmul.mubr.bf16.gmra.mxu0 %v1830
        %v1921 = vpop.f32.mrf.mxu0
        %v1922 = vadd.f32 0.0, %v1921
        %v1923 = vpop.f32.mrf.mxu0
        %v1924 = vpop.f32.mrf.mxu0
        %v1925 = vadd.f32 0.0, %v1924
        %v1926 = vpop.f32.mrf.mxu0
        %1927 = vmatprep.mubr.bf16.mxu0 0
        %1928 = vmatmul.mubr.bf16.gmra.mxu0 %v1833
        %v1929 = vpop.f32.mrf.mxu0
        %v1930 = vadd.f32 0.0, %v1929
        %v1931 = vpop.f32.mrf.mxu0
        %v1932 = vpop.f32.mrf.mxu0
        %v1933 = vadd.f32 0.0, %v1932
        %v1934 = vpop.f32.mrf.mxu0
        %1935 = vmatprep.mubr.bf16.mxu0 0
        %1936 = vmatmul.mubr.bf16.gmra.mxu0 %v1836
        %v1937 = vpop.f32.mrf.mxu0
        %v1938 = vadd.f32 0.0, %v1937
        %v1939 = vpop.f32.mrf.mxu0
        %v1940 = vpop.f32.mrf.mxu0
        %v1941 = vadd.f32 0.0, %v1940
        %v1942 = vpop.f32.mrf.mxu0
        %1943 = vmatprep.mubr.bf16.mxu0 0
        %1944 = vmatmul.mubr.bf16.gmra.mxu0 %v1839
        %v1945 = vpop.f32.mrf.mxu0
        %v1946 = vadd.f32 0.0, %v1945
        %v1947 = vpop.f32.mrf.mxu0
        %v1948 = vpop.f32.mrf.mxu0
        %v1949 = vadd.f32 0.0, %v1948
        %v1950 = vpop.f32.mrf.mxu0
        %1951 = vmatprep.mubr.bf16.mxu0 0
        %1952 = vmatmul.mubr.bf16.gmra.mxu0 %v1842
        %v1953 = vpop.f32.mrf.mxu0
        %v1954 = vadd.f32 0.0, %v1953
        %v1955 = vpop.f32.mrf.mxu0
        %v1956 = vpop.f32.mrf.mxu0
        %v1957 = vadd.f32 0.0, %v1956
        %v1958 = vpop.f32.mrf.mxu0
        %1959 = vmatprep.mubr.bf16.mxu0 0
        %1960 = vmatmul.mubr.bf16.gmra.mxu0 %v1845
        %v1961 = vpop.f32.mrf.mxu0
        %v1962 = vadd.f32 0.0, %v1961
        %v1963 = vpop.f32.mrf.mxu0
        %v1964 = vpop.f32.mrf.mxu0
        %v1965 = vadd.f32 0.0, %v1964
        %v1966 = vpop.f32.mrf.mxu0
        %1967 = vmatprep.mubr.bf16.mxu0 0
        %1968 = vmatmul.mubr.bf16.gmra.mxu0 %v1848
        %v1969 = vpop.f32.mrf.mxu0
        %v1970 = vadd.f32 0.0, %v1969
        %v1971 = vpop.f32.mrf.mxu0
        %v1972 = vpop.f32.mrf.mxu0
        %v1973 = vadd.f32 0.0, %v1972
        %v1974 = vpop.f32.mrf.mxu0
        %1975 = vmatprep.mubr.bf16.mxu0 0
        %1976 = vmatmul.mubr.bf16.gmra.mxu0 %v1851
        %v1977 = vpop.f32.mrf.mxu0
        %v1978 = vadd.f32 0.0, %v1977
        %v1979 = vpop.f32.mrf.mxu0
        %v1980 = vpop.f32.mrf.mxu0
        %v1981 = vadd.f32 0.0, %v1980
        %v1982 = vpop.f32.mrf.mxu0
        %1983 = vmatprep.mubr.bf16.mxu0 0
        %1984 = vmatmul.mubr.bf16.gmra.mxu0 %v1854
        %v1985 = vpop.f32.mrf.mxu0
        %v1986 = vadd.f32 0.0, %v1985
        %v1987 = vpop.f32.mrf.mxu0
        %v1988 = vpop.f32.mrf.mxu0
        %v1989 = vadd.f32 0.0, %v1988
        %v1990 = vpop.f32.mrf.mxu0
        %1991 = vmatprep.mubr.bf16.mxu0 0
        %1992 = vmatmul.mubr.bf16.gmra.mxu0 %v1857
        %v1993 = vpop.f32.mrf.mxu0
        %v1994 = vadd.f32 0.0, %v1993
        %v1995 = vpop.f32.mrf.mxu0
        %v1996 = vpop.f32.mrf.mxu0
        %v1997 = vadd.f32 0.0, %v1996
        %v1998 = vpop.f32.mrf.mxu0
        %1999 = vmatprep.mubr.bf16.mxu0 0
        %2000 = vmatmul.mubr.bf16.gmra.mxu0 %v1860
        %v2001 = vpop.f32.mrf.mxu0
        %v2002 = vadd.f32 0.0, %v2001
        %v2003 = vpop.f32.mrf.mxu0
        %v2004 = vpop.f32.mrf.mxu0
        %v2005 = vadd.f32 0.0, %v2004
        %v2006 = vpop.f32.mrf.mxu0
        %2007 = vmatprep.mubr.bf16.mxu0 0
        %2008 = vmatmul.mubr.bf16.gmra.mxu0 %v1863
        %v2009 = vpop.f32.mrf.mxu0
        %v2010 = vadd.f32 0.0, %v2009
        %v2011 = vpop.f32.mrf.mxu0
        %v2012 = vpop.f32.mrf.mxu0
        %v2013 = vadd.f32 0.0, %v2012
        %v2014 = vpop.f32.mrf.mxu0
        %2015 = vmatprep.mubr.bf16.mxu0 0
        %2016 = vmatmul.mubr.bf16.gmra.mxu0 %v1866
        %v2017 = vpop.f32.mrf.mxu0
        %v2018 = vadd.f32 0.0, %v2017
        %v2019 = vpop.f32.mrf.mxu0
        %v2020 = vpop.f32.mrf.mxu0
        %v2021 = vadd.f32 0.0, %v2020
        %v2022 = vpop.f32.mrf.mxu0
        %2023 = vmatprep.mubr.bf16.mxu0 0
        %2024 = vmatmul.mubr.bf16.gmra.mxu0 %v1869
        %v2025 = vpop.f32.mrf.mxu0
        %v2026 = vadd.f32 0.0, %v2025
        %v2027 = vpop.f32.mrf.mxu0
        %v2028 = vpop.f32.mrf.mxu0
        %v2029 = vadd.f32 0.0, %v2028
        %v2030 = vpop.f32.mrf.mxu0
        %2031 = vdwg.mxu0
        %v2032 = vadd.f32 %v1710, %v1906
        %v2033 = vadd.f32 %v1711, %v1909
        %v2034 = vadd.f32 %v1712, %v1914
        %v2035 = vadd.f32 %v1713, %v1917
        %v2036 = vadd.f32 %v1714, %v1922
        %v2037 = vadd.f32 %v1715, %v1925
        %v2038 = vadd.f32 %v1716, %v1930
        %v2039 = vadd.f32 %v1717, %v1933
        %v2040 = vadd.f32 %v1718, %v1938
        %v2041 = vadd.f32 %v1719, %v1941
        %v2042 = vadd.f32 %v1720, %v1946
        %v2043 = vadd.f32 %v1721, %v1949
        %v2044 = vadd.f32 %v1722, %v1954
        %v2045 = vadd.f32 %v1723, %v1957
        %v2046 = vadd.f32 %v1724, %v1962
        %v2047 = vadd.f32 %v1725, %v1965
        %v2048 = vadd.f32 %v1726, %v1970
        %v2049 = vadd.f32 %v1727, %v1973
        %v2050 = vadd.f32 %v1728, %v1978
        %v2051 = vadd.f32 %v1729, %v1981
        %v2052 = vadd.f32 %v1730, %v1986
        %v2053 = vadd.f32 %v1731, %v1989
        %v2054 = vadd.f32 %v1732, %v1994
        %v2055 = vadd.f32 %v1733, %v1997
        %v2056 = vadd.f32 %v1734, %v2002
        %v2057 = vadd.f32 %v1735, %v2005
        %v2058 = vadd.f32 %v1736, %v2010
        %v2059 = vadd.f32 %v1737, %v2013
        %v2060 = vadd.f32 %v1738, %v2018
        %v2061 = vadd.f32 %v1739, %v2021
        %v2062 = vadd.f32 %v1740, %v2026
        %v2063 = vadd.f32 %v1741, %v2029
        %v2064 = vld [vmem:[%s808 + $0x1] sm:$0xff]
        %v2065 = vld [vmem:[%s808 + $0x9] sm:$0xff]
        %v2066 = vld [vmem:[%s808 + $0x19] sm:$0xff]
        %v2067 = vld [vmem:[%s808 + $0x21] sm:$0xff]
        %v2068 = vld [vmem:[%s808 + $0x31] sm:$0xff]
        %v2069 = vld [vmem:[%s808 + $0x39] sm:$0xff]
        %v2070 = vld [vmem:[%s808 + $0x49] sm:$0xff]
        %v2071 = vld [vmem:[%s808 + $0x51] sm:$0xff]
        %v2072 = vld [vmem:[%s808 + $0x61] sm:$0xff]
        %v2073 = vld [vmem:[%s808 + $0x69] sm:$0xff]
        %v2074 = vld [vmem:[%s808 + $0x79] sm:$0xff]
        %v2075 = vld [vmem:[%s808 + $0x81] sm:$0xff]
        %v2076 = vld [vmem:[%s808 + $0x91] sm:$0xff]
        %v2077 = vld [vmem:[%s808 + $0x99] sm:$0xff]
        %v2078 = vld [vmem:[%s808 + $0xa9] sm:$0xff]
        %v2079 = vld [vmem:[%s808 + $0xb1] sm:$0xff]
        %v2080 = vld [vmem:[%s808 + $0xc1] sm:$0xff]
        %v2081 = vld [vmem:[%s808 + $0xc9] sm:$0xff]
        %v2082 = vld [vmem:[%s808 + $0xd9] sm:$0xff]
        %v2083 = vld [vmem:[%s808 + $0xe1] sm:$0xff]
        %v2084 = vld [vmem:[%s808 + $0xf1] sm:$0xff]
        %v2085 = vld [vmem:[%s808 + $0xf9] sm:$0xff]
        %v2086 = vld [vmem:[%s808 + $0x109] sm:$0xff]
        %v2087 = vld [vmem:[%s808 + $0x111] sm:$0xff]
        %v2088 = vld [vmem:[%s808 + $0x121] sm:$0xff]
        %v2089 = vld [vmem:[%s808 + $0x129] sm:$0xff]
        %v2090 = vld [vmem:[%s808 + $0x139] sm:$0xff]
        %v2091 = vld [vmem:[%s808 + $0x141] sm:$0xff]
        %v2092 = vld [vmem:[%s808 + $0x151] sm:$0xff]
        %v2093 = vld [vmem:[%s808 + $0x159] sm:$0xff]
        %v2094 = vld [vmem:[%s808 + $0x169] sm:$0xff]
        %v2095 = vld [vmem:[%s808 + $0x171] sm:$0xff]
        %v2096 = vpack.c.bf16 %v2065, %v2064
        %v2097 = vpack.c.bf16 %v2067, %v2066
        %v2098 = vpack.c.bf16 %v2069, %v2068
        %v2099 = vpack.c.bf16 %v2071, %v2070
        %v2100 = vpack.c.bf16 %v2073, %v2072
        %v2101 = vpack.c.bf16 %v2075, %v2074
        %v2102 = vpack.c.bf16 %v2077, %v2076
        %v2103 = vpack.c.bf16 %v2079, %v2078
        %v2104 = vpack.c.bf16 %v2081, %v2080
        %v2105 = vpack.c.bf16 %v2083, %v2082
        %v2106 = vpack.c.bf16 %v2085, %v2084
        %v2107 = vpack.c.bf16 %v2087, %v2086
        %v2108 = vpack.c.bf16 %v2089, %v2088
        %v2109 = vpack.c.bf16 %v2091, %v2090
        %v2110 = vpack.c.bf16 %v2093, %v2092
        %v2111 = vpack.c.bf16 %v2095, %v2094
        %s2112 = scalar_lea.vmem %s3, 128
        %v2113 = vld [vmem:[%s2112] sm:$0xf]
        %v2114 = vld [vmem:[%s2112 + $0x4] sm:$0xf]
        %v2115 = vld [vmem:[%s2112 + $0x8] sm:$0xf]
        %v2116 = vld [vmem:[%s2112 + $0xc] sm:$0xf]
        %v2117 = vld [vmem:[%s2112 + $0x10] sm:$0xf]
        %v2118 = vld [vmem:[%s2112 + $0x14] sm:$0xf]
        %v2119 = vld [vmem:[%s2112 + $0x18] sm:$0xf]
        %v2120 = vld [vmem:[%s2112 + $0x1c] sm:$0xf]
        %v2129 = vunpack.c.l.b16 %v2113
        %v2130 = vunpack.c.l.b16 %v2114
        %v2131 = vunpack.c.l.b16 %v2115
        %v2132 = vunpack.c.l.b16 %v2116
        %v2133 = vunpack.c.l.b16 %v2117
        %v2134 = vunpack.c.l.b16 %v2118
        %v2135 = vunpack.c.l.b16 %v2119
        %v2136 = vunpack.c.l.b16 %v2120
        %v2137 = vpack.c.b16 %v2130, %v2129
        %v2138 = vpack.c.b16 %v2132, %v2131
        %v2139 = vpack.c.b16 %v2134, %v2133
        %v2140 = vpack.c.b16 %v2136, %v2135
        %v2146 = vsel %vm386, %v2096, 0
        %v2149 = vsel %vm386, %v2097, 0
        %v2152 = vsel %vm386, %v2098, 0
        %v2155 = vsel %vm386, %v2099, 0
        %v2158 = vsel %vm386, %v2100, 0
        %v2161 = vsel %vm386, %v2101, 0
        %v2164 = vsel %vm386, %v2102, 0
        %v2167 = vsel %vm386, %v2103, 0
        %v2170 = vsel %vm386, %v2104, 0
        %v2173 = vsel %vm386, %v2105, 0
        %v2176 = vsel %vm386, %v2106, 0
        %v2179 = vsel %vm386, %v2107, 0
        %v2182 = vsel %vm386, %v2108, 0
        %v2185 = vsel %vm386, %v2109, 0
        %v2188 = vsel %vm386, %v2110, 0
        %v2191 = vsel %vm386, %v2111, 0
        %2193 = vmatprep.subr.bf16.mxu0 0
        %2194 = vmatpush1.bf16.msra.mxu0 0
        %2195 = vmatprep.subr.bf16.mxu0 0
        %2196 = vmatpush1.bf16.msra.mxu0 0
        %2197 = vmatprep.subr.bf16.mxu0 0
        %2198 = vmatpush1.bf16.msra.mxu0 0
        %2199 = vmatprep.subr.bf16.mxu0 0
        %2200 = vmatpush1.bf16.msra.mxu0 0
        %2201 = vmatprep.subr.bf16.mxu0 0
        %2202 = vmatpush1.bf16.msra.mxu0 %v2140
        %2203 = vmatprep.subr.bf16.mxu0 0
        %2204 = vmatpush1.bf16.msra.mxu0 %v2139
        %2205 = vmatprep.subr.bf16.mxu0 0
        %2206 = vmatpush1.bf16.msra.mxu0 %v2138
        %2207 = vmatprep.subr.bf16.mxu0 0
        %2208 = vmatpush1.bf16.msra.mxu0 %v2137
        %2209 = vmatprep.subr.bf16.mxu0 0
        %2210 = vmatpush2.bf16.msra.mxu0 0
        %2211 = vmatprep.subr.bf16.mxu0 0
        %2212 = vmatpush2.bf16.msra.mxu0 0
        %2213 = vmatprep.subr.bf16.mxu0 0
        %2214 = vmatpush2.bf16.msra.mxu0 0
        %2215 = vmatprep.subr.bf16.mxu0 0
        %2216 = vmatpush2.bf16.msra.mxu0 0
        %2217 = vmatprep.subr.bf16.mxu0 0
        %2218 = vmatpush2.bf16.msra.mxu0 0
        %2219 = vmatprep.subr.bf16.mxu0 0
        %2220 = vmatpush2.bf16.msra.mxu0 0
        %2221 = vmatprep.subr.bf16.mxu0 0
        %2222 = vmatpush2.bf16.msra.mxu0 0
        %2223 = vmatprep.subr.bf16.mxu0 0
        %2224 = vmatpush2.bf16.msra.mxu0 0
        %2225 = vmatprep.mubr.bf16.mxu0 0
        %2226 = vmatmul.mubr.bf16.gmra.mxu0 %v2146
        %v2227 = vpop.f32.mrf.mxu0
        %v2228 = vadd.f32 0.0, %v2227
        %v2229 = vpop.f32.mrf.mxu0
        %v2230 = vpop.f32.mrf.mxu0
        %v2231 = vadd.f32 0.0, %v2230
        %v2232 = vpop.f32.mrf.mxu0
        %2233 = vmatprep.mubr.bf16.mxu0 0
        %2234 = vmatmul.mubr.bf16.gmra.mxu0 %v2149
        %v2235 = vpop.f32.mrf.mxu0
        %v2236 = vadd.f32 0.0, %v2235
        %v2237 = vpop.f32.mrf.mxu0
        %v2238 = vpop.f32.mrf.mxu0
        %v2239 = vadd.f32 0.0, %v2238
        %v2240 = vpop.f32.mrf.mxu0
        %2241 = vmatprep.mubr.bf16.mxu0 0
        %2242 = vmatmul.mubr.bf16.gmra.mxu0 %v2152
        %v2243 = vpop.f32.mrf.mxu0
        %v2244 = vadd.f32 0.0, %v2243
        %v2245 = vpop.f32.mrf.mxu0
        %v2246 = vpop.f32.mrf.mxu0
        %v2247 = vadd.f32 0.0, %v2246
        %v2248 = vpop.f32.mrf.mxu0
        %2249 = vmatprep.mubr.bf16.mxu0 0
        %2250 = vmatmul.mubr.bf16.gmra.mxu0 %v2155
        %v2251 = vpop.f32.mrf.mxu0
        %v2252 = vadd.f32 0.0, %v2251
        %v2253 = vpop.f32.mrf.mxu0
        %v2254 = vpop.f32.mrf.mxu0
        %v2255 = vadd.f32 0.0, %v2254
        %v2256 = vpop.f32.mrf.mxu0
        %2257 = vmatprep.mubr.bf16.mxu0 0
        %2258 = vmatmul.mubr.bf16.gmra.mxu0 %v2158
        %v2259 = vpop.f32.mrf.mxu0
        %v2260 = vadd.f32 0.0, %v2259
        %v2261 = vpop.f32.mrf.mxu0
        %v2262 = vpop.f32.mrf.mxu0
        %v2263 = vadd.f32 0.0, %v2262
        %v2264 = vpop.f32.mrf.mxu0
        %2265 = vmatprep.mubr.bf16.mxu0 0
        %2266 = vmatmul.mubr.bf16.gmra.mxu0 %v2161
        %v2267 = vpop.f32.mrf.mxu0
        %v2268 = vadd.f32 0.0, %v2267
        %v2269 = vpop.f32.mrf.mxu0
        %v2270 = vpop.f32.mrf.mxu0
        %v2271 = vadd.f32 0.0, %v2270
        %v2272 = vpop.f32.mrf.mxu0
        %2273 = vmatprep.mubr.bf16.mxu0 0
        %2274 = vmatmul.mubr.bf16.gmra.mxu0 %v2164
        %v2275 = vpop.f32.mrf.mxu0
        %v2276 = vadd.f32 0.0, %v2275
        %v2277 = vpop.f32.mrf.mxu0
        %v2278 = vpop.f32.mrf.mxu0
        %v2279 = vadd.f32 0.0, %v2278
        %v2280 = vpop.f32.mrf.mxu0
        %2281 = vmatprep.mubr.bf16.mxu0 0
        %2282 = vmatmul.mubr.bf16.gmra.mxu0 %v2167
        %v2283 = vpop.f32.mrf.mxu0
        %v2284 = vadd.f32 0.0, %v2283
        %v2285 = vpop.f32.mrf.mxu0
        %v2286 = vpop.f32.mrf.mxu0
        %v2287 = vadd.f32 0.0, %v2286
        %v2288 = vpop.f32.mrf.mxu0
        %2289 = vmatprep.mubr.bf16.mxu0 0
        %2290 = vmatmul.mubr.bf16.gmra.mxu0 %v2170
        %v2291 = vpop.f32.mrf.mxu0
        %v2292 = vadd.f32 0.0, %v2291
        %v2293 = vpop.f32.mrf.mxu0
        %v2294 = vpop.f32.mrf.mxu0
        %v2295 = vadd.f32 0.0, %v2294
        %v2296 = vpop.f32.mrf.mxu0
        %2297 = vmatprep.mubr.bf16.mxu0 0
        %2298 = vmatmul.mubr.bf16.gmra.mxu0 %v2173
        %v2299 = vpop.f32.mrf.mxu0
        %v2300 = vadd.f32 0.0, %v2299
        %v2301 = vpop.f32.mrf.mxu0
        %v2302 = vpop.f32.mrf.mxu0
        %v2303 = vadd.f32 0.0, %v2302
        %v2304 = vpop.f32.mrf.mxu0
        %2305 = vmatprep.mubr.bf16.mxu0 0
        %2306 = vmatmul.mubr.bf16.gmra.mxu0 %v2176
        %v2307 = vpop.f32.mrf.mxu0
        %v2308 = vadd.f32 0.0, %v2307
        %v2309 = vpop.f32.mrf.mxu0
        %v2310 = vpop.f32.mrf.mxu0
        %v2311 = vadd.f32 0.0, %v2310
        %v2312 = vpop.f32.mrf.mxu0
        %2313 = vmatprep.mubr.bf16.mxu0 0
        %2314 = vmatmul.mubr.bf16.gmra.mxu0 %v2179
        %v2315 = vpop.f32.mrf.mxu0
        %v2316 = vadd.f32 0.0, %v2315
        %v2317 = vpop.f32.mrf.mxu0
        %v2318 = vpop.f32.mrf.mxu0
        %v2319 = vadd.f32 0.0, %v2318
        %v2320 = vpop.f32.mrf.mxu0
        %2321 = vmatprep.mubr.bf16.mxu0 0
        %2322 = vmatmul.mubr.bf16.gmra.mxu0 %v2182
        %v2323 = vpop.f32.mrf.mxu0
        %v2324 = vadd.f32 0.0, %v2323
        %v2325 = vpop.f32.mrf.mxu0
        %v2326 = vpop.f32.mrf.mxu0
        %v2327 = vadd.f32 0.0, %v2326
        %v2328 = vpop.f32.mrf.mxu0
        %2329 = vmatprep.mubr.bf16.mxu0 0
        %2330 = vmatmul.mubr.bf16.gmra.mxu0 %v2185
        %v2331 = vpop.f32.mrf.mxu0
        %v2332 = vadd.f32 0.0, %v2331
        %v2333 = vpop.f32.mrf.mxu0
        %v2334 = vpop.f32.mrf.mxu0
        %v2335 = vadd.f32 0.0, %v2334
        %v2336 = vpop.f32.mrf.mxu0
        %2337 = vmatprep.mubr.bf16.mxu0 0
        %2338 = vmatmul.mubr.bf16.gmra.mxu0 %v2188
        %v2339 = vpop.f32.mrf.mxu0
        %v2340 = vadd.f32 0.0, %v2339
        %v2341 = vpop.f32.mrf.mxu0
        %v2342 = vpop.f32.mrf.mxu0
        %v2343 = vadd.f32 0.0, %v2342
        %v2344 = vpop.f32.mrf.mxu0
        %2345 = vmatprep.mubr.bf16.mxu0 0
        %2346 = vmatmul.mubr.bf16.gmra.mxu0 %v2191
        %v2347 = vpop.f32.mrf.mxu0
        %v2348 = vadd.f32 0.0, %v2347
        %v2349 = vpop.f32.mrf.mxu0
        %v2350 = vpop.f32.mrf.mxu0
        %v2351 = vadd.f32 0.0, %v2350
        %v2352 = vpop.f32.mrf.mxu0
        %2353 = vdwg.mxu0
        %v2354 = vadd.f32 %v2032, %v2228
        %v2355 = vadd.f32 %v2033, %v2231
        %v2356 = vadd.f32 %v2034, %v2236
        %v2357 = vadd.f32 %v2035, %v2239
        %v2358 = vadd.f32 %v2036, %v2244
        %v2359 = vadd.f32 %v2037, %v2247
        %v2360 = vadd.f32 %v2038, %v2252
        %v2361 = vadd.f32 %v2039, %v2255
        %v2362 = vadd.f32 %v2040, %v2260
        %v2363 = vadd.f32 %v2041, %v2263
        %v2364 = vadd.f32 %v2042, %v2268
        %v2365 = vadd.f32 %v2043, %v2271
        %v2366 = vadd.f32 %v2044, %v2276
        %v2367 = vadd.f32 %v2045, %v2279
        %v2368 = vadd.f32 %v2046, %v2284
        %v2369 = vadd.f32 %v2047, %v2287
        %v2370 = vadd.f32 %v2048, %v2292
        %v2371 = vadd.f32 %v2049, %v2295
        %v2372 = vadd.f32 %v2050, %v2300
        %v2373 = vadd.f32 %v2051, %v2303
        %v2374 = vadd.f32 %v2052, %v2308
        %v2375 = vadd.f32 %v2053, %v2311
        %v2376 = vadd.f32 %v2054, %v2316
        %v2377 = vadd.f32 %v2055, %v2319
        %v2378 = vadd.f32 %v2056, %v2324
        %v2379 = vadd.f32 %v2057, %v2327
        %v2380 = vadd.f32 %v2058, %v2332
        %v2381 = vadd.f32 %v2059, %v2335
        %v2382 = vadd.f32 %v2060, %v2340
        %v2383 = vadd.f32 %v2061, %v2343
        %v2384 = vadd.f32 %v2062, %v2348
        %v2385 = vadd.f32 %v2063, %v2351
        %v2386 = vld [vmem:[%s808 + $0x2] sm:$0xff]
        %v2387 = vld [vmem:[%s808 + $0xa] sm:$0xff]
        %v2388 = vld [vmem:[%s808 + $0x1a] sm:$0xff]
        %v2389 = vld [vmem:[%s808 + $0x22] sm:$0xff]
        %v2390 = vld [vmem:[%s808 + $0x32] sm:$0xff]
        %v2391 = vld [vmem:[%s808 + $0x3a] sm:$0xff]
        %v2392 = vld [vmem:[%s808 + $0x4a] sm:$0xff]
        %v2393 = vld [vmem:[%s808 + $0x52] sm:$0xff]
        %v2394 = vld [vmem:[%s808 + $0x62] sm:$0xff]
        %v2395 = vld [vmem:[%s808 + $0x6a] sm:$0xff]
        %v2396 = vld [vmem:[%s808 + $0x7a] sm:$0xff]
        %v2397 = vld [vmem:[%s808 + $0x82] sm:$0xff]
        %v2398 = vld [vmem:[%s808 + $0x92] sm:$0xff]
        %v2399 = vld [vmem:[%s808 + $0x9a] sm:$0xff]
        %v2400 = vld [vmem:[%s808 + $0xaa] sm:$0xff]
        %v2401 = vld [vmem:[%s808 + $0xb2] sm:$0xff]
        %v2402 = vld [vmem:[%s808 + $0xc2] sm:$0xff]
        %v2403 = vld [vmem:[%s808 + $0xca] sm:$0xff]
        %v2404 = vld [vmem:[%s808 + $0xda] sm:$0xff]
        %v2405 = vld [vmem:[%s808 + $0xe2] sm:$0xff]
        %v2406 = vld [vmem:[%s808 + $0xf2] sm:$0xff]
        %v2407 = vld [vmem:[%s808 + $0xfa] sm:$0xff]
        %v2408 = vld [vmem:[%s808 + $0x10a] sm:$0xff]
        %v2409 = vld [vmem:[%s808 + $0x112] sm:$0xff]
        %v2410 = vld [vmem:[%s808 + $0x122] sm:$0xff]
        %v2411 = vld [vmem:[%s808 + $0x12a] sm:$0xff]
        %v2412 = vld [vmem:[%s808 + $0x13a] sm:$0xff]
        %v2413 = vld [vmem:[%s808 + $0x142] sm:$0xff]
        %v2414 = vld [vmem:[%s808 + $0x152] sm:$0xff]
        %v2415 = vld [vmem:[%s808 + $0x15a] sm:$0xff]
        %v2416 = vld [vmem:[%s808 + $0x16a] sm:$0xff]
        %v2417 = vld [vmem:[%s808 + $0x172] sm:$0xff]
        %v2418 = vpack.c.bf16 %v2387, %v2386
        %v2419 = vpack.c.bf16 %v2389, %v2388
        %v2420 = vpack.c.bf16 %v2391, %v2390
        %v2421 = vpack.c.bf16 %v2393, %v2392
        %v2422 = vpack.c.bf16 %v2395, %v2394
        %v2423 = vpack.c.bf16 %v2397, %v2396
        %v2424 = vpack.c.bf16 %v2399, %v2398
        %v2425 = vpack.c.bf16 %v2401, %v2400
        %v2426 = vpack.c.bf16 %v2403, %v2402
        %v2427 = vpack.c.bf16 %v2405, %v2404
        %v2428 = vpack.c.bf16 %v2407, %v2406
        %v2429 = vpack.c.bf16 %v2409, %v2408
        %v2430 = vpack.c.bf16 %v2411, %v2410
        %v2431 = vpack.c.bf16 %v2413, %v2412
        %v2432 = vpack.c.bf16 %v2415, %v2414
        %v2433 = vpack.c.bf16 %v2417, %v2416
        %s2434 = scalar_lea.vmem %s3, 160
        %v2435 = vld [vmem:[%s2434] sm:$0xf]
        %v2436 = vld [vmem:[%s2434 + $0x4] sm:$0xf]
        %v2437 = vld [vmem:[%s2434 + $0x8] sm:$0xf]
        %v2438 = vld [vmem:[%s2434 + $0xc] sm:$0xf]
        %v2439 = vld [vmem:[%s2434 + $0x10] sm:$0xf]
        %v2440 = vld [vmem:[%s2434 + $0x14] sm:$0xf]
        %v2441 = vld [vmem:[%s2434 + $0x18] sm:$0xf]
        %v2442 = vld [vmem:[%s2434 + $0x1c] sm:$0xf]
        %v2451 = vunpack.c.l.b16 %v2435
        %v2452 = vunpack.c.l.b16 %v2436
        %v2453 = vunpack.c.l.b16 %v2437
        %v2454 = vunpack.c.l.b16 %v2438
        %v2455 = vunpack.c.l.b16 %v2439
        %v2456 = vunpack.c.l.b16 %v2440
        %v2457 = vunpack.c.l.b16 %v2441
        %v2458 = vunpack.c.l.b16 %v2442
        %v2459 = vpack.c.b16 %v2452, %v2451
        %v2460 = vpack.c.b16 %v2454, %v2453
        %v2461 = vpack.c.b16 %v2456, %v2455
        %v2462 = vpack.c.b16 %v2458, %v2457
        %v2468 = vsel %vm386, %v2418, 0
        %v2471 = vsel %vm386, %v2419, 0
        %v2474 = vsel %vm386, %v2420, 0
        %v2477 = vsel %vm386, %v2421, 0
        %v2480 = vsel %vm386, %v2422, 0
        %v2483 = vsel %vm386, %v2423, 0
        %v2486 = vsel %vm386, %v2424, 0
        %v2489 = vsel %vm386, %v2425, 0
        %v2492 = vsel %vm386, %v2426, 0
        %v2495 = vsel %vm386, %v2427, 0
        %v2498 = vsel %vm386, %v2428, 0
        %v2501 = vsel %vm386, %v2429, 0
        %v2504 = vsel %vm386, %v2430, 0
        %v2507 = vsel %vm386, %v2431, 0
        %v2510 = vsel %vm386, %v2432, 0
        %v2513 = vsel %vm386, %v2433, 0
        %2515 = vmatprep.subr.bf16.mxu0 0
        %2516 = vmatpush1.bf16.msra.mxu0 0
        %2517 = vmatprep.subr.bf16.mxu0 0
        %2518 = vmatpush1.bf16.msra.mxu0 0
        %2519 = vmatprep.subr.bf16.mxu0 0
        %2520 = vmatpush1.bf16.msra.mxu0 0
        %2521 = vmatprep.subr.bf16.mxu0 0
        %2522 = vmatpush1.bf16.msra.mxu0 0
        %2523 = vmatprep.subr.bf16.mxu0 0
        %2524 = vmatpush1.bf16.msra.mxu0 %v2462
        %2525 = vmatprep.subr.bf16.mxu0 0
        %2526 = vmatpush1.bf16.msra.mxu0 %v2461
        %2527 = vmatprep.subr.bf16.mxu0 0
        %2528 = vmatpush1.bf16.msra.mxu0 %v2460
        %2529 = vmatprep.subr.bf16.mxu0 0
        %2530 = vmatpush1.bf16.msra.mxu0 %v2459
        %2531 = vmatprep.subr.bf16.mxu0 0
        %2532 = vmatpush2.bf16.msra.mxu0 0
        %2533 = vmatprep.subr.bf16.mxu0 0
        %2534 = vmatpush2.bf16.msra.mxu0 0
        %2535 = vmatprep.subr.bf16.mxu0 0
        %2536 = vmatpush2.bf16.msra.mxu0 0
        %2537 = vmatprep.subr.bf16.mxu0 0
        %2538 = vmatpush2.bf16.msra.mxu0 0
        %2539 = vmatprep.subr.bf16.mxu0 0
        %2540 = vmatpush2.bf16.msra.mxu0 0
        %2541 = vmatprep.subr.bf16.mxu0 0
        %2542 = vmatpush2.bf16.msra.mxu0 0
        %2543 = vmatprep.subr.bf16.mxu0 0
        %2544 = vmatpush2.bf16.msra.mxu0 0
        %2545 = vmatprep.subr.bf16.mxu0 0
        %2546 = vmatpush2.bf16.msra.mxu0 0
        %2547 = vmatprep.mubr.bf16.mxu0 0
        %2548 = vmatmul.mubr.bf16.gmra.mxu0 %v2468
        %v2549 = vpop.f32.mrf.mxu0
        %v2550 = vadd.f32 0.0, %v2549
        %v2551 = vpop.f32.mrf.mxu0
        %v2552 = vpop.f32.mrf.mxu0
        %v2553 = vadd.f32 0.0, %v2552
        %v2554 = vpop.f32.mrf.mxu0
        %2555 = vmatprep.mubr.bf16.mxu0 0
        %2556 = vmatmul.mubr.bf16.gmra.mxu0 %v2471
        %v2557 = vpop.f32.mrf.mxu0
        %v2558 = vadd.f32 0.0, %v2557
        %v2559 = vpop.f32.mrf.mxu0
        %v2560 = vpop.f32.mrf.mxu0
        %v2561 = vadd.f32 0.0, %v2560
        %v2562 = vpop.f32.mrf.mxu0
        %2563 = vmatprep.mubr.bf16.mxu0 0
        %2564 = vmatmul.mubr.bf16.gmra.mxu0 %v2474
        %v2565 = vpop.f32.mrf.mxu0
        %v2566 = vadd.f32 0.0, %v2565
        %v2567 = vpop.f32.mrf.mxu0
        %v2568 = vpop.f32.mrf.mxu0
        %v2569 = vadd.f32 0.0, %v2568
        %v2570 = vpop.f32.mrf.mxu0
        %2571 = vmatprep.mubr.bf16.mxu0 0
        %2572 = vmatmul.mubr.bf16.gmra.mxu0 %v2477
        %v2573 = vpop.f32.mrf.mxu0
        %v2574 = vadd.f32 0.0, %v2573
        %v2575 = vpop.f32.mrf.mxu0
        %v2576 = vpop.f32.mrf.mxu0
        %v2577 = vadd.f32 0.0, %v2576
        %v2578 = vpop.f32.mrf.mxu0
        %2579 = vmatprep.mubr.bf16.mxu0 0
        %2580 = vmatmul.mubr.bf16.gmra.mxu0 %v2480
        %v2581 = vpop.f32.mrf.mxu0
        %v2582 = vadd.f32 0.0, %v2581
        %v2583 = vpop.f32.mrf.mxu0
        %v2584 = vpop.f32.mrf.mxu0
        %v2585 = vadd.f32 0.0, %v2584
        %v2586 = vpop.f32.mrf.mxu0
        %2587 = vmatprep.mubr.bf16.mxu0 0
        %2588 = vmatmul.mubr.bf16.gmra.mxu0 %v2483
        %v2589 = vpop.f32.mrf.mxu0
        %v2590 = vadd.f32 0.0, %v2589
        %v2591 = vpop.f32.mrf.mxu0
        %v2592 = vpop.f32.mrf.mxu0
        %v2593 = vadd.f32 0.0, %v2592
        %v2594 = vpop.f32.mrf.mxu0
        %2595 = vmatprep.mubr.bf16.mxu0 0
        %2596 = vmatmul.mubr.bf16.gmra.mxu0 %v2486
        %v2597 = vpop.f32.mrf.mxu0
        %v2598 = vadd.f32 0.0, %v2597
        %v2599 = vpop.f32.mrf.mxu0
        %v2600 = vpop.f32.mrf.mxu0
        %v2601 = vadd.f32 0.0, %v2600
        %v2602 = vpop.f32.mrf.mxu0
        %2603 = vmatprep.mubr.bf16.mxu0 0
        %2604 = vmatmul.mubr.bf16.gmra.mxu0 %v2489
        %v2605 = vpop.f32.mrf.mxu0
        %v2606 = vadd.f32 0.0, %v2605
        %v2607 = vpop.f32.mrf.mxu0
        %v2608 = vpop.f32.mrf.mxu0
        %v2609 = vadd.f32 0.0, %v2608
        %v2610 = vpop.f32.mrf.mxu0
        %2611 = vmatprep.mubr.bf16.mxu0 0
        %2612 = vmatmul.mubr.bf16.gmra.mxu0 %v2492
        %v2613 = vpop.f32.mrf.mxu0
        %v2614 = vadd.f32 0.0, %v2613
        %v2615 = vpop.f32.mrf.mxu0
        %v2616 = vpop.f32.mrf.mxu0
        %v2617 = vadd.f32 0.0, %v2616
        %v2618 = vpop.f32.mrf.mxu0
        %2619 = vmatprep.mubr.bf16.mxu0 0
        %2620 = vmatmul.mubr.bf16.gmra.mxu0 %v2495
        %v2621 = vpop.f32.mrf.mxu0
        %v2622 = vadd.f32 0.0, %v2621
        %v2623 = vpop.f32.mrf.mxu0
        %v2624 = vpop.f32.mrf.mxu0
        %v2625 = vadd.f32 0.0, %v2624
        %v2626 = vpop.f32.mrf.mxu0
        %2627 = vmatprep.mubr.bf16.mxu0 0
        %2628 = vmatmul.mubr.bf16.gmra.mxu0 %v2498
        %v2629 = vpop.f32.mrf.mxu0
        %v2630 = vadd.f32 0.0, %v2629
        %v2631 = vpop.f32.mrf.mxu0
        %v2632 = vpop.f32.mrf.mxu0
        %v2633 = vadd.f32 0.0, %v2632
        %v2634 = vpop.f32.mrf.mxu0
        %2635 = vmatprep.mubr.bf16.mxu0 0
        %2636 = vmatmul.mubr.bf16.gmra.mxu0 %v2501
        %v2637 = vpop.f32.mrf.mxu0
        %v2638 = vadd.f32 0.0, %v2637
        %v2639 = vpop.f32.mrf.mxu0
        %v2640 = vpop.f32.mrf.mxu0
        %v2641 = vadd.f32 0.0, %v2640
        %v2642 = vpop.f32.mrf.mxu0
        %2643 = vmatprep.mubr.bf16.mxu0 0
        %2644 = vmatmul.mubr.bf16.gmra.mxu0 %v2504
        %v2645 = vpop.f32.mrf.mxu0
        %v2646 = vadd.f32 0.0, %v2645
        %v2647 = vpop.f32.mrf.mxu0
        %v2648 = vpop.f32.mrf.mxu0
        %v2649 = vadd.f32 0.0, %v2648
        %v2650 = vpop.f32.mrf.mxu0
        %2651 = vmatprep.mubr.bf16.mxu0 0
        %2652 = vmatmul.mubr.bf16.gmra.mxu0 %v2507
        %v2653 = vpop.f32.mrf.mxu0
        %v2654 = vadd.f32 0.0, %v2653
        %v2655 = vpop.f32.mrf.mxu0
        %v2656 = vpop.f32.mrf.mxu0
        %v2657 = vadd.f32 0.0, %v2656
        %v2658 = vpop.f32.mrf.mxu0
        %2659 = vmatprep.mubr.bf16.mxu0 0
        %2660 = vmatmul.mubr.bf16.gmra.mxu0 %v2510
        %v2661 = vpop.f32.mrf.mxu0
        %v2662 = vadd.f32 0.0, %v2661
        %v2663 = vpop.f32.mrf.mxu0
        %v2664 = vpop.f32.mrf.mxu0
        %v2665 = vadd.f32 0.0, %v2664
        %v2666 = vpop.f32.mrf.mxu0
        %2667 = vmatprep.mubr.bf16.mxu0 0
        %2668 = vmatmul.mubr.bf16.gmra.mxu0 %v2513
        %v2669 = vpop.f32.mrf.mxu0
        %v2670 = vadd.f32 0.0, %v2669
        %v2671 = vpop.f32.mrf.mxu0
        %v2672 = vpop.f32.mrf.mxu0
        %v2673 = vadd.f32 0.0, %v2672
        %v2674 = vpop.f32.mrf.mxu0
        %2675 = vdwg.mxu0
        %v2676 = vadd.f32 %v2354, %v2550
        %v2677 = vadd.f32 %v2355, %v2553
        %v2678 = vadd.f32 %v2356, %v2558
        %v2679 = vadd.f32 %v2357, %v2561
        %v2680 = vadd.f32 %v2358, %v2566
        %v2681 = vadd.f32 %v2359, %v2569
        %v2682 = vadd.f32 %v2360, %v2574
        %v2683 = vadd.f32 %v2361, %v2577
        %v2684 = vadd.f32 %v2362, %v2582
        %v2685 = vadd.f32 %v2363, %v2585
        %v2686 = vadd.f32 %v2364, %v2590
        %v2687 = vadd.f32 %v2365, %v2593
        %v2688 = vadd.f32 %v2366, %v2598
        %v2689 = vadd.f32 %v2367, %v2601
        %v2690 = vadd.f32 %v2368, %v2606
        %v2691 = vadd.f32 %v2369, %v2609
        %v2692 = vadd.f32 %v2370, %v2614
        %v2693 = vadd.f32 %v2371, %v2617
        %v2694 = vadd.f32 %v2372, %v2622
        %v2695 = vadd.f32 %v2373, %v2625
        %v2696 = vadd.f32 %v2374, %v2630
        %v2697 = vadd.f32 %v2375, %v2633
        %v2698 = vadd.f32 %v2376, %v2638
        %v2699 = vadd.f32 %v2377, %v2641
        %v2700 = vadd.f32 %v2378, %v2646
        %v2701 = vadd.f32 %v2379, %v2649
        %v2702 = vadd.f32 %v2380, %v2654
        %v2703 = vadd.f32 %v2381, %v2657
        %v2704 = vadd.f32 %v2382, %v2662
        %v2705 = vadd.f32 %v2383, %v2665
        %v2706 = vadd.f32 %v2384, %v2670
        %v2707 = vadd.f32 %v2385, %v2673
        %s2708 = scalar_lea.vmem [#allocation2], 48
        %v2709 = vld [vmem:[%s2708] sm:$0xff]
        %v2710 = vld [vmem:[%s2708 + $0x8] sm:$0xff]
        %v2711 = vld [vmem:[%s2708 + $0x18] sm:$0xff]
        %v2712 = vld [vmem:[%s2708 + $0x20] sm:$0xff]
        %v2713 = vld [vmem:[%s2708 + $0x30] sm:$0xff]
        %v2714 = vld [vmem:[%s2708 + $0x38] sm:$0xff]
        %v2715 = vld [vmem:[%s2708 + $0x48] sm:$0xff]
        %v2716 = vld [vmem:[%s2708 + $0x50] sm:$0xff]
        %v2717 = vld [vmem:[%s2708 + $0x60] sm:$0xff]
        %v2718 = vld [vmem:[%s2708 + $0x68] sm:$0xff]
        %v2719 = vld [vmem:[%s2708 + $0x78] sm:$0xff]
        %v2720 = vld [vmem:[%s2708 + $0x80] sm:$0xff]
        %v2721 = vld [vmem:[%s2708 + $0x90] sm:$0xff]
        %v2722 = vld [vmem:[%s2708 + $0x98] sm:$0xff]
        %v2723 = vld [vmem:[%s2708 + $0xa8] sm:$0xff]
        %v2724 = vld [vmem:[%s2708 + $0xb0] sm:$0xff]
        %v2725 = vld [vmem:[%s2708 + $0xc0] sm:$0xff]
        %v2726 = vld [vmem:[%s2708 + $0xc8] sm:$0xff]
        %v2727 = vld [vmem:[%s2708 + $0xd8] sm:$0xff]
        %v2728 = vld [vmem:[%s2708 + $0xe0] sm:$0xff]
        %v2729 = vld [vmem:[%s2708 + $0xf0] sm:$0xff]
        %v2730 = vld [vmem:[%s2708 + $0xf8] sm:$0xff]
        %v2731 = vld [vmem:[%s2708 + $0x108] sm:$0xff]
        %v2732 = vld [vmem:[%s2708 + $0x110] sm:$0xff]
        %v2733 = vld [vmem:[%s2708 + $0x120] sm:$0xff]
        %v2734 = vld [vmem:[%s2708 + $0x128] sm:$0xff]
        %v2735 = vld [vmem:[%s2708 + $0x138] sm:$0xff]
        %v2736 = vld [vmem:[%s2708 + $0x140] sm:$0xff]
        %v2737 = vld [vmem:[%s2708 + $0x150] sm:$0xff]
        %v2738 = vld [vmem:[%s2708 + $0x158] sm:$0xff]
        %v2739 = vld [vmem:[%s2708 + $0x168] sm:$0xff]
        %v2740 = vld [vmem:[%s2708 + $0x170] sm:$0xff]
        %v2741 = vpack.c.bf16 %v2710, %v2709
        %v2742 = vpack.c.bf16 %v2712, %v2711
        %v2743 = vpack.c.bf16 %v2714, %v2713
        %v2744 = vpack.c.bf16 %v2716, %v2715
        %v2745 = vpack.c.bf16 %v2718, %v2717
        %v2746 = vpack.c.bf16 %v2720, %v2719
        %v2747 = vpack.c.bf16 %v2722, %v2721
        %v2748 = vpack.c.bf16 %v2724, %v2723
        %v2749 = vpack.c.bf16 %v2726, %v2725
        %v2750 = vpack.c.bf16 %v2728, %v2727
        %v2751 = vpack.c.bf16 %v2730, %v2729
        %v2752 = vpack.c.bf16 %v2732, %v2731
        %v2753 = vpack.c.bf16 %v2734, %v2733
        %v2754 = vpack.c.bf16 %v2736, %v2735
        %v2755 = vpack.c.bf16 %v2738, %v2737
        %v2756 = vpack.c.bf16 %v2740, %v2739
        %s2757 = scalar_lea.vmem %s3, 192
        %v2758 = vld [vmem:[%s2757] sm:$0xf]
        %v2759 = vld [vmem:[%s2757 + $0x4] sm:$0xf]
        %v2760 = vld [vmem:[%s2757 + $0x8] sm:$0xf]
        %v2761 = vld [vmem:[%s2757 + $0xc] sm:$0xf]
        %v2762 = vld [vmem:[%s2757 + $0x10] sm:$0xf]
        %v2763 = vld [vmem:[%s2757 + $0x14] sm:$0xf]
        %v2764 = vld [vmem:[%s2757 + $0x18] sm:$0xf]
        %v2765 = vld [vmem:[%s2757 + $0x1c] sm:$0xf]
        %v2774 = vunpack.c.l.b16 %v2758
        %v2775 = vunpack.c.l.b16 %v2759
        %v2776 = vunpack.c.l.b16 %v2760
        %v2777 = vunpack.c.l.b16 %v2761
        %v2778 = vunpack.c.l.b16 %v2762
        %v2779 = vunpack.c.l.b16 %v2763
        %v2780 = vunpack.c.l.b16 %v2764
        %v2781 = vunpack.c.l.b16 %v2765
        %v2782 = vpack.c.b16 %v2775, %v2774
        %v2783 = vpack.c.b16 %v2777, %v2776
        %v2784 = vpack.c.b16 %v2779, %v2778
        %v2785 = vpack.c.b16 %v2781, %v2780
        %v2791 = vsel %vm386, %v2741, 0
        %v2794 = vsel %vm386, %v2742, 0
        %v2797 = vsel %vm386, %v2743, 0
        %v2800 = vsel %vm386, %v2744, 0
        %v2803 = vsel %vm386, %v2745, 0
        %v2806 = vsel %vm386, %v2746, 0
        %v2809 = vsel %vm386, %v2747, 0
        %v2812 = vsel %vm386, %v2748, 0
        %v2815 = vsel %vm386, %v2749, 0
        %v2818 = vsel %vm386, %v2750, 0
        %v2821 = vsel %vm386, %v2751, 0
        %v2824 = vsel %vm386, %v2752, 0
        %v2827 = vsel %vm386, %v2753, 0
        %v2830 = vsel %vm386, %v2754, 0
        %v2833 = vsel %vm386, %v2755, 0
        %v2836 = vsel %vm386, %v2756, 0
        %2838 = vmatprep.subr.bf16.mxu0 0
        %2839 = vmatpush1.bf16.msra.mxu0 0
        %2840 = vmatprep.subr.bf16.mxu0 0
        %2841 = vmatpush1.bf16.msra.mxu0 0
        %2842 = vmatprep.subr.bf16.mxu0 0
        %2843 = vmatpush1.bf16.msra.mxu0 0
        %2844 = vmatprep.subr.bf16.mxu0 0
        %2845 = vmatpush1.bf16.msra.mxu0 0
        %2846 = vmatprep.subr.bf16.mxu0 0
        %2847 = vmatpush1.bf16.msra.mxu0 %v2785
        %2848 = vmatprep.subr.bf16.mxu0 0
        %2849 = vmatpush1.bf16.msra.mxu0 %v2784
        %2850 = vmatprep.subr.bf16.mxu0 0
        %2851 = vmatpush1.bf16.msra.mxu0 %v2783
        %2852 = vmatprep.subr.bf16.mxu0 0
        %2853 = vmatpush1.bf16.msra.mxu0 %v2782
        %2854 = vmatprep.subr.bf16.mxu0 0
        %2855 = vmatpush2.bf16.msra.mxu0 0
        %2856 = vmatprep.subr.bf16.mxu0 0
        %2857 = vmatpush2.bf16.msra.mxu0 0
        %2858 = vmatprep.subr.bf16.mxu0 0
        %2859 = vmatpush2.bf16.msra.mxu0 0
        %2860 = vmatprep.subr.bf16.mxu0 0
        %2861 = vmatpush2.bf16.msra.mxu0 0
        %2862 = vmatprep.subr.bf16.mxu0 0
        %2863 = vmatpush2.bf16.msra.mxu0 0
        %2864 = vmatprep.subr.bf16.mxu0 0
        %2865 = vmatpush2.bf16.msra.mxu0 0
        %2866 = vmatprep.subr.bf16.mxu0 0
        %2867 = vmatpush2.bf16.msra.mxu0 0
        %2868 = vmatprep.subr.bf16.mxu0 0
        %2869 = vmatpush2.bf16.msra.mxu0 0
        %2870 = vmatprep.mubr.bf16.mxu0 0
        %2871 = vmatmul.mubr.bf16.gmra.mxu0 %v2791
        %v2872 = vpop.f32.mrf.mxu0
        %v2873 = vadd.f32 0.0, %v2872
        %v2874 = vpop.f32.mrf.mxu0
        %v2875 = vpop.f32.mrf.mxu0
        %v2876 = vadd.f32 0.0, %v2875
        %v2877 = vpop.f32.mrf.mxu0
        %2878 = vmatprep.mubr.bf16.mxu0 0
        %2879 = vmatmul.mubr.bf16.gmra.mxu0 %v2794
        %v2880 = vpop.f32.mrf.mxu0
        %v2881 = vadd.f32 0.0, %v2880
        %v2882 = vpop.f32.mrf.mxu0
        %v2883 = vpop.f32.mrf.mxu0
        %v2884 = vadd.f32 0.0, %v2883
        %v2885 = vpop.f32.mrf.mxu0
        %2886 = vmatprep.mubr.bf16.mxu0 0
        %2887 = vmatmul.mubr.bf16.gmra.mxu0 %v2797
        %v2888 = vpop.f32.mrf.mxu0
        %v2889 = vadd.f32 0.0, %v2888
        %v2890 = vpop.f32.mrf.mxu0
        %v2891 = vpop.f32.mrf.mxu0
        %v2892 = vadd.f32 0.0, %v2891
        %v2893 = vpop.f32.mrf.mxu0
        %2894 = vmatprep.mubr.bf16.mxu0 0
        %2895 = vmatmul.mubr.bf16.gmra.mxu0 %v2800
        %v2896 = vpop.f32.mrf.mxu0
        %v2897 = vadd.f32 0.0, %v2896
        %v2898 = vpop.f32.mrf.mxu0
        %v2899 = vpop.f32.mrf.mxu0
        %v2900 = vadd.f32 0.0, %v2899
        %v2901 = vpop.f32.mrf.mxu0
        %2902 = vmatprep.mubr.bf16.mxu0 0
        %2903 = vmatmul.mubr.bf16.gmra.mxu0 %v2803
        %v2904 = vpop.f32.mrf.mxu0
        %v2905 = vadd.f32 0.0, %v2904
        %v2906 = vpop.f32.mrf.mxu0
        %v2907 = vpop.f32.mrf.mxu0
        %v2908 = vadd.f32 0.0, %v2907
        %v2909 = vpop.f32.mrf.mxu0
        %2910 = vmatprep.mubr.bf16.mxu0 0
        %2911 = vmatmul.mubr.bf16.gmra.mxu0 %v2806
        %v2912 = vpop.f32.mrf.mxu0
        %v2913 = vadd.f32 0.0, %v2912
        %v2914 = vpop.f32.mrf.mxu0
        %v2915 = vpop.f32.mrf.mxu0
        %v2916 = vadd.f32 0.0, %v2915
        %v2917 = vpop.f32.mrf.mxu0
        %2918 = vmatprep.mubr.bf16.mxu0 0
        %2919 = vmatmul.mubr.bf16.gmra.mxu0 %v2809
        %v2920 = vpop.f32.mrf.mxu0
        %v2921 = vadd.f32 0.0, %v2920
        %v2922 = vpop.f32.mrf.mxu0
        %v2923 = vpop.f32.mrf.mxu0
        %v2924 = vadd.f32 0.0, %v2923
        %v2925 = vpop.f32.mrf.mxu0
        %2926 = vmatprep.mubr.bf16.mxu0 0
        %2927 = vmatmul.mubr.bf16.gmra.mxu0 %v2812
        %v2928 = vpop.f32.mrf.mxu0
        %v2929 = vadd.f32 0.0, %v2928
        %v2930 = vpop.f32.mrf.mxu0
        %v2931 = vpop.f32.mrf.mxu0
        %v2932 = vadd.f32 0.0, %v2931
        %v2933 = vpop.f32.mrf.mxu0
        %2934 = vmatprep.mubr.bf16.mxu0 0
        %2935 = vmatmul.mubr.bf16.gmra.mxu0 %v2815
        %v2936 = vpop.f32.mrf.mxu0
        %v2937 = vadd.f32 0.0, %v2936
        %v2938 = vpop.f32.mrf.mxu0
        %v2939 = vpop.f32.mrf.mxu0
        %v2940 = vadd.f32 0.0, %v2939
        %v2941 = vpop.f32.mrf.mxu0
        %2942 = vmatprep.mubr.bf16.mxu0 0
        %2943 = vmatmul.mubr.bf16.gmra.mxu0 %v2818
        %v2944 = vpop.f32.mrf.mxu0
        %v2945 = vadd.f32 0.0, %v2944
        %v2946 = vpop.f32.mrf.mxu0
        %v2947 = vpop.f32.mrf.mxu0
        %v2948 = vadd.f32 0.0, %v2947
        %v2949 = vpop.f32.mrf.mxu0
        %2950 = vmatprep.mubr.bf16.mxu0 0
        %2951 = vmatmul.mubr.bf16.gmra.mxu0 %v2821
        %v2952 = vpop.f32.mrf.mxu0
        %v2953 = vadd.f32 0.0, %v2952
        %v2954 = vpop.f32.mrf.mxu0
        %v2955 = vpop.f32.mrf.mxu0
        %v2956 = vadd.f32 0.0, %v2955
        %v2957 = vpop.f32.mrf.mxu0
        %2958 = vmatprep.mubr.bf16.mxu0 0
        %2959 = vmatmul.mubr.bf16.gmra.mxu0 %v2824
        %v2960 = vpop.f32.mrf.mxu0
        %v2961 = vadd.f32 0.0, %v2960
        %v2962 = vpop.f32.mrf.mxu0
        %v2963 = vpop.f32.mrf.mxu0
        %v2964 = vadd.f32 0.0, %v2963
        %v2965 = vpop.f32.mrf.mxu0
        %2966 = vmatprep.mubr.bf16.mxu0 0
        %2967 = vmatmul.mubr.bf16.gmra.mxu0 %v2827
        %v2968 = vpop.f32.mrf.mxu0
        %v2969 = vadd.f32 0.0, %v2968
        %v2970 = vpop.f32.mrf.mxu0
        %v2971 = vpop.f32.mrf.mxu0
        %v2972 = vadd.f32 0.0, %v2971
        %v2973 = vpop.f32.mrf.mxu0
        %2974 = vmatprep.mubr.bf16.mxu0 0
        %2975 = vmatmul.mubr.bf16.gmra.mxu0 %v2830
        %v2976 = vpop.f32.mrf.mxu0
        %v2977 = vadd.f32 0.0, %v2976
        %v2978 = vpop.f32.mrf.mxu0
        %v2979 = vpop.f32.mrf.mxu0
        %v2980 = vadd.f32 0.0, %v2979
        %v2981 = vpop.f32.mrf.mxu0
        %2982 = vmatprep.mubr.bf16.mxu0 0
        %2983 = vmatmul.mubr.bf16.gmra.mxu0 %v2833
        %v2984 = vpop.f32.mrf.mxu0
        %v2985 = vadd.f32 0.0, %v2984
        %v2986 = vpop.f32.mrf.mxu0
        %v2987 = vpop.f32.mrf.mxu0
        %v2988 = vadd.f32 0.0, %v2987
        %v2989 = vpop.f32.mrf.mxu0
        %2990 = vmatprep.mubr.bf16.mxu0 0
        %2991 = vmatmul.mubr.bf16.gmra.mxu0 %v2836
        %v2992 = vpop.f32.mrf.mxu0
        %v2993 = vadd.f32 0.0, %v2992
        %v2994 = vpop.f32.mrf.mxu0
        %v2995 = vpop.f32.mrf.mxu0
        %v2996 = vadd.f32 0.0, %v2995
        %v2997 = vpop.f32.mrf.mxu0
        %2998 = vdwg.mxu0
        %v2999 = vadd.f32 %v2676, %v2873
        %v3000 = vadd.f32 %v2677, %v2876
        %v3001 = vadd.f32 %v2678, %v2881
        %v3002 = vadd.f32 %v2679, %v2884
        %v3003 = vadd.f32 %v2680, %v2889
        %v3004 = vadd.f32 %v2681, %v2892
        %v3005 = vadd.f32 %v2682, %v2897
        %v3006 = vadd.f32 %v2683, %v2900
        %v3007 = vadd.f32 %v2684, %v2905
        %v3008 = vadd.f32 %v2685, %v2908
        %v3009 = vadd.f32 %v2686, %v2913
        %v3010 = vadd.f32 %v2687, %v2916
        %v3011 = vadd.f32 %v2688, %v2921
        %v3012 = vadd.f32 %v2689, %v2924
        %v3013 = vadd.f32 %v2690, %v2929
        %v3014 = vadd.f32 %v2691, %v2932
        %v3015 = vadd.f32 %v2692, %v2937
        %v3016 = vadd.f32 %v2693, %v2940
        %v3017 = vadd.f32 %v2694, %v2945
        %v3018 = vadd.f32 %v2695, %v2948
        %v3019 = vadd.f32 %v2696, %v2953
        %v3020 = vadd.f32 %v2697, %v2956
        %v3021 = vadd.f32 %v2698, %v2961
        %v3022 = vadd.f32 %v2699, %v2964
        %v3023 = vadd.f32 %v2700, %v2969
        %v3024 = vadd.f32 %v2701, %v2972
        %v3025 = vadd.f32 %v2702, %v2977
        %v3026 = vadd.f32 %v2703, %v2980
        %v3027 = vadd.f32 %v2704, %v2985
        %v3028 = vadd.f32 %v2705, %v2988
        %v3029 = vadd.f32 %v2706, %v2993
        %v3030 = vadd.f32 %v2707, %v2996
        %v3031 = vld [vmem:[%s2708 + $0x1] sm:$0xff]
        %v3032 = vld [vmem:[%s2708 + $0x9] sm:$0xff]
        %v3033 = vld [vmem:[%s2708 + $0x19] sm:$0xff]
        %v3034 = vld [vmem:[%s2708 + $0x21] sm:$0xff]
        %v3035 = vld [vmem:[%s2708 + $0x31] sm:$0xff]
        %v3036 = vld [vmem:[%s2708 + $0x39] sm:$0xff]
        %v3037 = vld [vmem:[%s2708 + $0x49] sm:$0xff]
        %v3038 = vld [vmem:[%s2708 + $0x51] sm:$0xff]
        %v3039 = vld [vmem:[%s2708 + $0x61] sm:$0xff]
        %v3040 = vld [vmem:[%s2708 + $0x69] sm:$0xff]
        %v3041 = vld [vmem:[%s2708 + $0x79] sm:$0xff]
        %v3042 = vld [vmem:[%s2708 + $0x81] sm:$0xff]
        %v3043 = vld [vmem:[%s2708 + $0x91] sm:$0xff]
        %v3044 = vld [vmem:[%s2708 + $0x99] sm:$0xff]
        %v3045 = vld [vmem:[%s2708 + $0xa9] sm:$0xff]
        %v3046 = vld [vmem:[%s2708 + $0xb1] sm:$0xff]
        %v3047 = vld [vmem:[%s2708 + $0xc1] sm:$0xff]
        %v3048 = vld [vmem:[%s2708 + $0xc9] sm:$0xff]
        %v3049 = vld [vmem:[%s2708 + $0xd9] sm:$0xff]
        %v3050 = vld [vmem:[%s2708 + $0xe1] sm:$0xff]
        %v3051 = vld [vmem:[%s2708 + $0xf1] sm:$0xff]
        %v3052 = vld [vmem:[%s2708 + $0xf9] sm:$0xff]
        %v3053 = vld [vmem:[%s2708 + $0x109] sm:$0xff]
        %v3054 = vld [vmem:[%s2708 + $0x111] sm:$0xff]
        %v3055 = vld [vmem:[%s2708 + $0x121] sm:$0xff]
        %v3056 = vld [vmem:[%s2708 + $0x129] sm:$0xff]
        %v3057 = vld [vmem:[%s2708 + $0x139] sm:$0xff]
        %v3058 = vld [vmem:[%s2708 + $0x141] sm:$0xff]
        %v3059 = vld [vmem:[%s2708 + $0x151] sm:$0xff]
        %v3060 = vld [vmem:[%s2708 + $0x159] sm:$0xff]
        %v3061 = vld [vmem:[%s2708 + $0x169] sm:$0xff]
        %v3062 = vld [vmem:[%s2708 + $0x171] sm:$0xff]
        %v3063 = vpack.c.bf16 %v3032, %v3031
        %v3064 = vpack.c.bf16 %v3034, %v3033
        %v3065 = vpack.c.bf16 %v3036, %v3035
        %v3066 = vpack.c.bf16 %v3038, %v3037
        %v3067 = vpack.c.bf16 %v3040, %v3039
        %v3068 = vpack.c.bf16 %v3042, %v3041
        %v3069 = vpack.c.bf16 %v3044, %v3043
        %v3070 = vpack.c.bf16 %v3046, %v3045
        %v3071 = vpack.c.bf16 %v3048, %v3047
        %v3072 = vpack.c.bf16 %v3050, %v3049
        %v3073 = vpack.c.bf16 %v3052, %v3051
        %v3074 = vpack.c.bf16 %v3054, %v3053
        %v3075 = vpack.c.bf16 %v3056, %v3055
        %v3076 = vpack.c.bf16 %v3058, %v3057
        %v3077 = vpack.c.bf16 %v3060, %v3059
        %v3078 = vpack.c.bf16 %v3062, %v3061
        %s3079 = scalar_lea.vmem %s3, 224
        %v3080 = vld [vmem:[%s3079] sm:$0xf]
        %v3081 = vld [vmem:[%s3079 + $0x4] sm:$0xf]
        %v3082 = vld [vmem:[%s3079 + $0x8] sm:$0xf]
        %v3083 = vld [vmem:[%s3079 + $0xc] sm:$0xf]
        %v3084 = vld [vmem:[%s3079 + $0x10] sm:$0xf]
        %v3085 = vld [vmem:[%s3079 + $0x14] sm:$0xf]
        %v3086 = vld [vmem:[%s3079 + $0x18] sm:$0xf]
        %v3087 = vld [vmem:[%s3079 + $0x1c] sm:$0xf]
        %v3096 = vunpack.c.l.b16 %v3080
        %v3097 = vunpack.c.l.b16 %v3081
        %v3098 = vunpack.c.l.b16 %v3082
        %v3099 = vunpack.c.l.b16 %v3083
        %v3100 = vunpack.c.l.b16 %v3084
        %v3101 = vunpack.c.l.b16 %v3085
        %v3102 = vunpack.c.l.b16 %v3086
        %v3103 = vunpack.c.l.b16 %v3087
        %v3104 = vpack.c.b16 %v3097, %v3096
        %v3105 = vpack.c.b16 %v3099, %v3098
        %v3106 = vpack.c.b16 %v3101, %v3100
        %v3107 = vpack.c.b16 %v3103, %v3102
        %v3113 = vsel %vm386, %v3063, 0
        %v3116 = vsel %vm386, %v3064, 0
        %v3119 = vsel %vm386, %v3065, 0
        %v3122 = vsel %vm386, %v3066, 0
        %v3125 = vsel %vm386, %v3067, 0
        %v3128 = vsel %vm386, %v3068, 0
        %v3131 = vsel %vm386, %v3069, 0
        %v3134 = vsel %vm386, %v3070, 0
        %v3137 = vsel %vm386, %v3071, 0
        %v3140 = vsel %vm386, %v3072, 0
        %v3143 = vsel %vm386, %v3073, 0
        %v3146 = vsel %vm386, %v3074, 0
        %v3149 = vsel %vm386, %v3075, 0
        %v3152 = vsel %vm386, %v3076, 0
        %v3155 = vsel %vm386, %v3077, 0
        %v3158 = vsel %vm386, %v3078, 0
        %3160 = vmatprep.subr.bf16.mxu0 0
        %3161 = vmatpush1.bf16.msra.mxu0 0
        %3162 = vmatprep.subr.bf16.mxu0 0
        %3163 = vmatpush1.bf16.msra.mxu0 0
        %3164 = vmatprep.subr.bf16.mxu0 0
        %3165 = vmatpush1.bf16.msra.mxu0 0
        %3166 = vmatprep.subr.bf16.mxu0 0
        %3167 = vmatpush1.bf16.msra.mxu0 0
        %3168 = vmatprep.subr.bf16.mxu0 0
        %3169 = vmatpush1.bf16.msra.mxu0 %v3107
        %3170 = vmatprep.subr.bf16.mxu0 0
        %3171 = vmatpush1.bf16.msra.mxu0 %v3106
        %3172 = vmatprep.subr.bf16.mxu0 0
        %3173 = vmatpush1.bf16.msra.mxu0 %v3105
        %3174 = vmatprep.subr.bf16.mxu0 0
        %3175 = vmatpush1.bf16.msra.mxu0 %v3104
        %3176 = vmatprep.subr.bf16.mxu0 0
        %3177 = vmatpush2.bf16.msra.mxu0 0
        %3178 = vmatprep.subr.bf16.mxu0 0
        %3179 = vmatpush2.bf16.msra.mxu0 0
        %3180 = vmatprep.subr.bf16.mxu0 0
        %3181 = vmatpush2.bf16.msra.mxu0 0
        %3182 = vmatprep.subr.bf16.mxu0 0
        %3183 = vmatpush2.bf16.msra.mxu0 0
        %3184 = vmatprep.subr.bf16.mxu0 0
        %3185 = vmatpush2.bf16.msra.mxu0 0
        %3186 = vmatprep.subr.bf16.mxu0 0
        %3187 = vmatpush2.bf16.msra.mxu0 0
        %3188 = vmatprep.subr.bf16.mxu0 0
        %3189 = vmatpush2.bf16.msra.mxu0 0
        %3190 = vmatprep.subr.bf16.mxu0 0
        %3191 = vmatpush2.bf16.msra.mxu0 0
        %3192 = vmatprep.mubr.bf16.mxu0 0
        %3193 = vmatmul.mubr.bf16.gmra.mxu0 %v3113
        %v3194 = vpop.f32.mrf.mxu0
        %v3195 = vadd.f32 0.0, %v3194
        %v3196 = vpop.f32.mrf.mxu0
        %v3197 = vpop.f32.mrf.mxu0
        %v3198 = vadd.f32 0.0, %v3197
        %v3199 = vpop.f32.mrf.mxu0
        %3200 = vmatprep.mubr.bf16.mxu0 0
        %3201 = vmatmul.mubr.bf16.gmra.mxu0 %v3116
        %v3202 = vpop.f32.mrf.mxu0
        %v3203 = vadd.f32 0.0, %v3202
        %v3204 = vpop.f32.mrf.mxu0
        %v3205 = vpop.f32.mrf.mxu0
        %v3206 = vadd.f32 0.0, %v3205
        %v3207 = vpop.f32.mrf.mxu0
        %3208 = vmatprep.mubr.bf16.mxu0 0
        %3209 = vmatmul.mubr.bf16.gmra.mxu0 %v3119
        %v3210 = vpop.f32.mrf.mxu0
        %v3211 = vadd.f32 0.0, %v3210
        %v3212 = vpop.f32.mrf.mxu0
        %v3213 = vpop.f32.mrf.mxu0
        %v3214 = vadd.f32 0.0, %v3213
        %v3215 = vpop.f32.mrf.mxu0
        %3216 = vmatprep.mubr.bf16.mxu0 0
        %3217 = vmatmul.mubr.bf16.gmra.mxu0 %v3122
        %v3218 = vpop.f32.mrf.mxu0
        %v3219 = vadd.f32 0.0, %v3218
        %v3220 = vpop.f32.mrf.mxu0
        %v3221 = vpop.f32.mrf.mxu0
        %v3222 = vadd.f32 0.0, %v3221
        %v3223 = vpop.f32.mrf.mxu0
        %3224 = vmatprep.mubr.bf16.mxu0 0
        %3225 = vmatmul.mubr.bf16.gmra.mxu0 %v3125
        %v3226 = vpop.f32.mrf.mxu0
        %v3227 = vadd.f32 0.0, %v3226
        %v3228 = vpop.f32.mrf.mxu0
        %v3229 = vpop.f32.mrf.mxu0
        %v3230 = vadd.f32 0.0, %v3229
        %v3231 = vpop.f32.mrf.mxu0
        %3232 = vmatprep.mubr.bf16.mxu0 0
        %3233 = vmatmul.mubr.bf16.gmra.mxu0 %v3128
        %v3234 = vpop.f32.mrf.mxu0
        %v3235 = vadd.f32 0.0, %v3234
        %v3236 = vpop.f32.mrf.mxu0
        %v3237 = vpop.f32.mrf.mxu0
        %v3238 = vadd.f32 0.0, %v3237
        %v3239 = vpop.f32.mrf.mxu0
        %3240 = vmatprep.mubr.bf16.mxu0 0
        %3241 = vmatmul.mubr.bf16.gmra.mxu0 %v3131
        %v3242 = vpop.f32.mrf.mxu0
        %v3243 = vadd.f32 0.0, %v3242
        %v3244 = vpop.f32.mrf.mxu0
        %v3245 = vpop.f32.mrf.mxu0
        %v3246 = vadd.f32 0.0, %v3245
        %v3247 = vpop.f32.mrf.mxu0
        %3248 = vmatprep.mubr.bf16.mxu0 0
        %3249 = vmatmul.mubr.bf16.gmra.mxu0 %v3134
        %v3250 = vpop.f32.mrf.mxu0
        %v3251 = vadd.f32 0.0, %v3250
        %v3252 = vpop.f32.mrf.mxu0
        %v3253 = vpop.f32.mrf.mxu0
        %v3254 = vadd.f32 0.0, %v3253
        %v3255 = vpop.f32.mrf.mxu0
        %3256 = vmatprep.mubr.bf16.mxu0 0
        %3257 = vmatmul.mubr.bf16.gmra.mxu0 %v3137
        %v3258 = vpop.f32.mrf.mxu0
        %v3259 = vadd.f32 0.0, %v3258
        %v3260 = vpop.f32.mrf.mxu0
        %v3261 = vpop.f32.mrf.mxu0
        %v3262 = vadd.f32 0.0, %v3261
        %v3263 = vpop.f32.mrf.mxu0
        %3264 = vmatprep.mubr.bf16.mxu0 0
        %3265 = vmatmul.mubr.bf16.gmra.mxu0 %v3140
        %v3266 = vpop.f32.mrf.mxu0
        %v3267 = vadd.f32 0.0, %v3266
        %v3268 = vpop.f32.mrf.mxu0
        %v3269 = vpop.f32.mrf.mxu0
        %v3270 = vadd.f32 0.0, %v3269
        %v3271 = vpop.f32.mrf.mxu0
        %3272 = vmatprep.mubr.bf16.mxu0 0
        %3273 = vmatmul.mubr.bf16.gmra.mxu0 %v3143
        %v3274 = vpop.f32.mrf.mxu0
        %v3275 = vadd.f32 0.0, %v3274
        %v3276 = vpop.f32.mrf.mxu0
        %v3277 = vpop.f32.mrf.mxu0
        %v3278 = vadd.f32 0.0, %v3277
        %v3279 = vpop.f32.mrf.mxu0
        %3280 = vmatprep.mubr.bf16.mxu0 0
        %3281 = vmatmul.mubr.bf16.gmra.mxu0 %v3146
        %v3282 = vpop.f32.mrf.mxu0
        %v3283 = vadd.f32 0.0, %v3282
        %v3284 = vpop.f32.mrf.mxu0
        %v3285 = vpop.f32.mrf.mxu0
        %v3286 = vadd.f32 0.0, %v3285
        %v3287 = vpop.f32.mrf.mxu0
        %3288 = vmatprep.mubr.bf16.mxu0 0
        %3289 = vmatmul.mubr.bf16.gmra.mxu0 %v3149
        %v3290 = vpop.f32.mrf.mxu0
        %v3291 = vadd.f32 0.0, %v3290
        %v3292 = vpop.f32.mrf.mxu0
        %v3293 = vpop.f32.mrf.mxu0
        %v3294 = vadd.f32 0.0, %v3293
        %v3295 = vpop.f32.mrf.mxu0
        %3296 = vmatprep.mubr.bf16.mxu0 0
        %3297 = vmatmul.mubr.bf16.gmra.mxu0 %v3152
        %v3298 = vpop.f32.mrf.mxu0
        %v3299 = vadd.f32 0.0, %v3298
        %v3300 = vpop.f32.mrf.mxu0
        %v3301 = vpop.f32.mrf.mxu0
        %v3302 = vadd.f32 0.0, %v3301
        %v3303 = vpop.f32.mrf.mxu0
        %3304 = vmatprep.mubr.bf16.mxu0 0
        %3305 = vmatmul.mubr.bf16.gmra.mxu0 %v3155
        %v3306 = vpop.f32.mrf.mxu0
        %v3307 = vadd.f32 0.0, %v3306
        %v3308 = vpop.f32.mrf.mxu0
        %v3309 = vpop.f32.mrf.mxu0
        %v3310 = vadd.f32 0.0, %v3309
        %v3311 = vpop.f32.mrf.mxu0
        %3312 = vmatprep.mubr.bf16.mxu0 0
        %3313 = vmatmul.mubr.bf16.gmra.mxu0 %v3158
        %v3314 = vpop.f32.mrf.mxu0
        %v3315 = vadd.f32 0.0, %v3314
        %v3316 = vpop.f32.mrf.mxu0
        %v3317 = vpop.f32.mrf.mxu0
        %v3318 = vadd.f32 0.0, %v3317
        %v3319 = vpop.f32.mrf.mxu0
        %3320 = vdwg.mxu0
        %v3321 = vadd.f32 %v2999, %v3195
        %v3322 = vadd.f32 %v3000, %v3198
        %v3323 = vadd.f32 %v3001, %v3203
        %v3324 = vadd.f32 %v3002, %v3206
        %v3325 = vadd.f32 %v3003, %v3211
        %v3326 = vadd.f32 %v3004, %v3214
        %v3327 = vadd.f32 %v3005, %v3219
        %v3328 = vadd.f32 %v3006, %v3222
        %v3329 = vadd.f32 %v3007, %v3227
        %v3330 = vadd.f32 %v3008, %v3230
        %v3331 = vadd.f32 %v3009, %v3235
        %v3332 = vadd.f32 %v3010, %v3238
        %v3333 = vadd.f32 %v3011, %v3243
        %v3334 = vadd.f32 %v3012, %v3246
        %v3335 = vadd.f32 %v3013, %v3251
        %v3336 = vadd.f32 %v3014, %v3254
        %v3337 = vadd.f32 %v3015, %v3259
        %v3338 = vadd.f32 %v3016, %v3262
        %v3339 = vadd.f32 %v3017, %v3267
        %v3340 = vadd.f32 %v3018, %v3270
        %v3341 = vadd.f32 %v3019, %v3275
        %v3342 = vadd.f32 %v3020, %v3278
        %v3343 = vadd.f32 %v3021, %v3283
        %v3344 = vadd.f32 %v3022, %v3286
        %v3345 = vadd.f32 %v3023, %v3291
        %v3346 = vadd.f32 %v3024, %v3294
        %v3347 = vadd.f32 %v3025, %v3299
        %v3348 = vadd.f32 %v3026, %v3302
        %v3349 = vadd.f32 %v3027, %v3307
        %v3350 = vadd.f32 %v3028, %v3310
        %v3351 = vadd.f32 %v3029, %v3315
        %v3352 = vadd.f32 %v3030, %v3318
        %v3353 = vld [vmem:[%s2708 + $0x2] sm:$0xff]
        %v3354 = vld [vmem:[%s2708 + $0xa] sm:$0xff]
        %v3355 = vld [vmem:[%s2708 + $0x1a] sm:$0xff]
        %v3356 = vld [vmem:[%s2708 + $0x22] sm:$0xff]
        %v3357 = vld [vmem:[%s2708 + $0x32] sm:$0xff]
        %v3358 = vld [vmem:[%s2708 + $0x3a] sm:$0xff]
        %v3359 = vld [vmem:[%s2708 + $0x4a] sm:$0xff]
        %v3360 = vld [vmem:[%s2708 + $0x52] sm:$0xff]
        %v3361 = vld [vmem:[%s2708 + $0x62] sm:$0xff]
        %v3362 = vld [vmem:[%s2708 + $0x6a] sm:$0xff]
        %v3363 = vld [vmem:[%s2708 + $0x7a] sm:$0xff]
        %v3364 = vld [vmem:[%s2708 + $0x82] sm:$0xff]
        %v3365 = vld [vmem:[%s2708 + $0x92] sm:$0xff]
        %v3366 = vld [vmem:[%s2708 + $0x9a] sm:$0xff]
        %v3367 = vld [vmem:[%s2708 + $0xaa] sm:$0xff]
        %v3368 = vld [vmem:[%s2708 + $0xb2] sm:$0xff]
        %v3369 = vld [vmem:[%s2708 + $0xc2] sm:$0xff]
        %v3370 = vld [vmem:[%s2708 + $0xca] sm:$0xff]
        %v3371 = vld [vmem:[%s2708 + $0xda] sm:$0xff]
        %v3372 = vld [vmem:[%s2708 + $0xe2] sm:$0xff]
        %v3373 = vld [vmem:[%s2708 + $0xf2] sm:$0xff]
        %v3374 = vld [vmem:[%s2708 + $0xfa] sm:$0xff]
        %v3375 = vld [vmem:[%s2708 + $0x10a] sm:$0xff]
        %v3376 = vld [vmem:[%s2708 + $0x112] sm:$0xff]
        %v3377 = vld [vmem:[%s2708 + $0x122] sm:$0xff]
        %v3378 = vld [vmem:[%s2708 + $0x12a] sm:$0xff]
        %v3379 = vld [vmem:[%s2708 + $0x13a] sm:$0xff]
        %v3380 = vld [vmem:[%s2708 + $0x142] sm:$0xff]
        %v3381 = vld [vmem:[%s2708 + $0x152] sm:$0xff]
        %v3382 = vld [vmem:[%s2708 + $0x15a] sm:$0xff]
        %v3383 = vld [vmem:[%s2708 + $0x16a] sm:$0xff]
        %v3384 = vld [vmem:[%s2708 + $0x172] sm:$0xff]
        %v3385 = vpack.c.bf16 %v3354, %v3353
        %v3386 = vpack.c.bf16 %v3356, %v3355
        %v3387 = vpack.c.bf16 %v3358, %v3357
        %v3388 = vpack.c.bf16 %v3360, %v3359
        %v3389 = vpack.c.bf16 %v3362, %v3361
        %v3390 = vpack.c.bf16 %v3364, %v3363
        %v3391 = vpack.c.bf16 %v3366, %v3365
        %v3392 = vpack.c.bf16 %v3368, %v3367
        %v3393 = vpack.c.bf16 %v3370, %v3369
        %v3394 = vpack.c.bf16 %v3372, %v3371
        %v3395 = vpack.c.bf16 %v3374, %v3373
        %v3396 = vpack.c.bf16 %v3376, %v3375
        %v3397 = vpack.c.bf16 %v3378, %v3377
        %v3398 = vpack.c.bf16 %v3380, %v3379
        %v3399 = vpack.c.bf16 %v3382, %v3381
        %v3400 = vpack.c.bf16 %v3384, %v3383
        %s3401 = scalar_lea.vmem %s3, 256
        %v3402 = vld [vmem:[%s3401] sm:$0xf]
        %v3403 = vld [vmem:[%s3401 + $0x4] sm:$0xf]
        %v3404 = vld [vmem:[%s3401 + $0x8] sm:$0xf]
        %v3405 = vld [vmem:[%s3401 + $0xc] sm:$0xf]
        %v3406 = vld [vmem:[%s3401 + $0x10] sm:$0xf]
        %v3407 = vld [vmem:[%s3401 + $0x14] sm:$0xf]
        %v3408 = vld [vmem:[%s3401 + $0x18] sm:$0xf]
        %v3409 = vld [vmem:[%s3401 + $0x1c] sm:$0xf]
        %v3418 = vunpack.c.l.b16 %v3402
        %v3419 = vunpack.c.l.b16 %v3403
        %v3420 = vunpack.c.l.b16 %v3404
        %v3421 = vunpack.c.l.b16 %v3405
        %v3422 = vunpack.c.l.b16 %v3406
        %v3423 = vunpack.c.l.b16 %v3407
        %v3424 = vunpack.c.l.b16 %v3408
        %v3425 = vunpack.c.l.b16 %v3409
        %v3426 = vpack.c.b16 %v3419, %v3418
        %v3427 = vpack.c.b16 %v3421, %v3420
        %v3428 = vpack.c.b16 %v3423, %v3422
        %v3429 = vpack.c.b16 %v3425, %v3424
        %v3435 = vsel %vm386, %v3385, 0
        %v3438 = vsel %vm386, %v3386, 0
        %v3441 = vsel %vm386, %v3387, 0
        %v3444 = vsel %vm386, %v3388, 0
        %v3447 = vsel %vm386, %v3389, 0
        %v3450 = vsel %vm386, %v3390, 0
        %v3453 = vsel %vm386, %v3391, 0
        %v3456 = vsel %vm386, %v3392, 0
        %v3459 = vsel %vm386, %v3393, 0
        %v3462 = vsel %vm386, %v3394, 0
        %v3465 = vsel %vm386, %v3395, 0
        %v3468 = vsel %vm386, %v3396, 0
        %v3471 = vsel %vm386, %v3397, 0
        %v3474 = vsel %vm386, %v3398, 0
        %v3477 = vsel %vm386, %v3399, 0
        %v3480 = vsel %vm386, %v3400, 0
        %3482 = vmatprep.subr.bf16.mxu0 0
        %3483 = vmatpush1.bf16.msra.mxu0 0
        %3484 = vmatprep.subr.bf16.mxu0 0
        %3485 = vmatpush1.bf16.msra.mxu0 0
        %3486 = vmatprep.subr.bf16.mxu0 0
        %3487 = vmatpush1.bf16.msra.mxu0 0
        %3488 = vmatprep.subr.bf16.mxu0 0
        %3489 = vmatpush1.bf16.msra.mxu0 0
        %3490 = vmatprep.subr.bf16.mxu0 0
        %3491 = vmatpush1.bf16.msra.mxu0 %v3429
        %3492 = vmatprep.subr.bf16.mxu0 0
        %3493 = vmatpush1.bf16.msra.mxu0 %v3428
        %3494 = vmatprep.subr.bf16.mxu0 0
        %3495 = vmatpush1.bf16.msra.mxu0 %v3427
        %3496 = vmatprep.subr.bf16.mxu0 0
        %3497 = vmatpush1.bf16.msra.mxu0 %v3426
        %3498 = vmatprep.subr.bf16.mxu0 0
        %3499 = vmatpush2.bf16.msra.mxu0 0
        %3500 = vmatprep.subr.bf16.mxu0 0
        %3501 = vmatpush2.bf16.msra.mxu0 0
        %3502 = vmatprep.subr.bf16.mxu0 0
        %3503 = vmatpush2.bf16.msra.mxu0 0
        %3504 = vmatprep.subr.bf16.mxu0 0
        %3505 = vmatpush2.bf16.msra.mxu0 0
        %3506 = vmatprep.subr.bf16.mxu0 0
        %3507 = vmatpush2.bf16.msra.mxu0 0
        %3508 = vmatprep.subr.bf16.mxu0 0
        %3509 = vmatpush2.bf16.msra.mxu0 0
        %3510 = vmatprep.subr.bf16.mxu0 0
        %3511 = vmatpush2.bf16.msra.mxu0 0
        %3512 = vmatprep.subr.bf16.mxu0 0
        %3513 = vmatpush2.bf16.msra.mxu0 0
        %3514 = vmatprep.mubr.bf16.mxu0 0
        %3515 = vmatmul.mubr.bf16.gmra.mxu0 %v3435
        %v3516 = vpop.f32.mrf.mxu0
        %v3517 = vadd.f32 0.0, %v3516
        %v3518 = vpop.f32.mrf.mxu0
        %v3519 = vpop.f32.mrf.mxu0
        %v3520 = vadd.f32 0.0, %v3519
        %v3521 = vpop.f32.mrf.mxu0
        %3522 = vmatprep.mubr.bf16.mxu0 0
        %3523 = vmatmul.mubr.bf16.gmra.mxu0 %v3438
        %v3524 = vpop.f32.mrf.mxu0
        %v3525 = vadd.f32 0.0, %v3524
        %v3526 = vpop.f32.mrf.mxu0
        %v3527 = vpop.f32.mrf.mxu0
        %v3528 = vadd.f32 0.0, %v3527
        %v3529 = vpop.f32.mrf.mxu0
        %3530 = vmatprep.mubr.bf16.mxu0 0
        %3531 = vmatmul.mubr.bf16.gmra.mxu0 %v3441
        %v3532 = vpop.f32.mrf.mxu0
        %v3533 = vadd.f32 0.0, %v3532
        %v3534 = vpop.f32.mrf.mxu0
        %v3535 = vpop.f32.mrf.mxu0
        %v3536 = vadd.f32 0.0, %v3535
        %v3537 = vpop.f32.mrf.mxu0
        %3538 = vmatprep.mubr.bf16.mxu0 0
        %3539 = vmatmul.mubr.bf16.gmra.mxu0 %v3444
        %v3540 = vpop.f32.mrf.mxu0
        %v3541 = vadd.f32 0.0, %v3540
        %v3542 = vpop.f32.mrf.mxu0
        %v3543 = vpop.f32.mrf.mxu0
        %v3544 = vadd.f32 0.0, %v3543
        %v3545 = vpop.f32.mrf.mxu0
        %3546 = vmatprep.mubr.bf16.mxu0 0
        %3547 = vmatmul.mubr.bf16.gmra.mxu0 %v3447
        %v3548 = vpop.f32.mrf.mxu0
        %v3549 = vadd.f32 0.0, %v3548
        %v3550 = vpop.f32.mrf.mxu0
        %v3551 = vpop.f32.mrf.mxu0
        %v3552 = vadd.f32 0.0, %v3551
        %v3553 = vpop.f32.mrf.mxu0
        %3554 = vmatprep.mubr.bf16.mxu0 0
        %3555 = vmatmul.mubr.bf16.gmra.mxu0 %v3450
        %v3556 = vpop.f32.mrf.mxu0
        %v3557 = vadd.f32 0.0, %v3556
        %v3558 = vpop.f32.mrf.mxu0
        %v3559 = vpop.f32.mrf.mxu0
        %v3560 = vadd.f32 0.0, %v3559
        %v3561 = vpop.f32.mrf.mxu0
        %3562 = vmatprep.mubr.bf16.mxu0 0
        %3563 = vmatmul.mubr.bf16.gmra.mxu0 %v3453
        %v3564 = vpop.f32.mrf.mxu0
        %v3565 = vadd.f32 0.0, %v3564
        %v3566 = vpop.f32.mrf.mxu0
        %v3567 = vpop.f32.mrf.mxu0
        %v3568 = vadd.f32 0.0, %v3567
        %v3569 = vpop.f32.mrf.mxu0
        %3570 = vmatprep.mubr.bf16.mxu0 0
        %3571 = vmatmul.mubr.bf16.gmra.mxu0 %v3456
        %v3572 = vpop.f32.mrf.mxu0
        %v3573 = vadd.f32 0.0, %v3572
        %v3574 = vpop.f32.mrf.mxu0
        %v3575 = vpop.f32.mrf.mxu0
        %v3576 = vadd.f32 0.0, %v3575
        %v3577 = vpop.f32.mrf.mxu0
        %3578 = vmatprep.mubr.bf16.mxu0 0
        %3579 = vmatmul.mubr.bf16.gmra.mxu0 %v3459
        %v3580 = vpop.f32.mrf.mxu0
        %v3581 = vadd.f32 0.0, %v3580
        %v3582 = vpop.f32.mrf.mxu0
        %v3583 = vpop.f32.mrf.mxu0
        %v3584 = vadd.f32 0.0, %v3583
        %v3585 = vpop.f32.mrf.mxu0
        %3586 = vmatprep.mubr.bf16.mxu0 0
        %3587 = vmatmul.mubr.bf16.gmra.mxu0 %v3462
        %v3588 = vpop.f32.mrf.mxu0
        %v3589 = vadd.f32 0.0, %v3588
        %v3590 = vpop.f32.mrf.mxu0
        %v3591 = vpop.f32.mrf.mxu0
        %v3592 = vadd.f32 0.0, %v3591
        %v3593 = vpop.f32.mrf.mxu0
        %3594 = vmatprep.mubr.bf16.mxu0 0
        %3595 = vmatmul.mubr.bf16.gmra.mxu0 %v3465
        %v3596 = vpop.f32.mrf.mxu0
        %v3597 = vadd.f32 0.0, %v3596
        %v3598 = vpop.f32.mrf.mxu0
        %v3599 = vpop.f32.mrf.mxu0
        %v3600 = vadd.f32 0.0, %v3599
        %v3601 = vpop.f32.mrf.mxu0
        %3602 = vmatprep.mubr.bf16.mxu0 0
        %3603 = vmatmul.mubr.bf16.gmra.mxu0 %v3468
        %v3604 = vpop.f32.mrf.mxu0
        %v3605 = vadd.f32 0.0, %v3604
        %v3606 = vpop.f32.mrf.mxu0
        %v3607 = vpop.f32.mrf.mxu0
        %v3608 = vadd.f32 0.0, %v3607
        %v3609 = vpop.f32.mrf.mxu0
        %3610 = vmatprep.mubr.bf16.mxu0 0
        %3611 = vmatmul.mubr.bf16.gmra.mxu0 %v3471
        %v3612 = vpop.f32.mrf.mxu0
        %v3613 = vadd.f32 0.0, %v3612
        %v3614 = vpop.f32.mrf.mxu0
        %v3615 = vpop.f32.mrf.mxu0
        %v3616 = vadd.f32 0.0, %v3615
        %v3617 = vpop.f32.mrf.mxu0
        %3618 = vmatprep.mubr.bf16.mxu0 0
        %3619 = vmatmul.mubr.bf16.gmra.mxu0 %v3474
        %v3620 = vpop.f32.mrf.mxu0
        %v3621 = vadd.f32 0.0, %v3620
        %v3622 = vpop.f32.mrf.mxu0
        %v3623 = vpop.f32.mrf.mxu0
        %v3624 = vadd.f32 0.0, %v3623
        %v3625 = vpop.f32.mrf.mxu0
        %3626 = vmatprep.mubr.bf16.mxu0 0
        %3627 = vmatmul.mubr.bf16.gmra.mxu0 %v3477
        %v3628 = vpop.f32.mrf.mxu0
        %v3629 = vadd.f32 0.0, %v3628
        %v3630 = vpop.f32.mrf.mxu0
        %v3631 = vpop.f32.mrf.mxu0
        %v3632 = vadd.f32 0.0, %v3631
        %v3633 = vpop.f32.mrf.mxu0
        %3634 = vmatprep.mubr.bf16.mxu0 0
        %3635 = vmatmul.mubr.bf16.gmra.mxu0 %v3480
        %v3636 = vpop.f32.mrf.mxu0
        %v3637 = vadd.f32 0.0, %v3636
        %v3638 = vpop.f32.mrf.mxu0
        %v3639 = vpop.f32.mrf.mxu0
        %v3640 = vadd.f32 0.0, %v3639
        %v3641 = vpop.f32.mrf.mxu0
        %3642 = vdwg.mxu0
        %v3643 = vadd.f32 %v3321, %v3517
        %v3644 = vadd.f32 %v3322, %v3520
        %v3645 = vadd.f32 %v3323, %v3525
        %v3646 = vadd.f32 %v3324, %v3528
        %v3647 = vadd.f32 %v3325, %v3533
        %v3648 = vadd.f32 %v3326, %v3536
        %v3649 = vadd.f32 %v3327, %v3541
        %v3650 = vadd.f32 %v3328, %v3544
        %v3651 = vadd.f32 %v3329, %v3549
        %v3652 = vadd.f32 %v3330, %v3552
        %v3653 = vadd.f32 %v3331, %v3557
        %v3654 = vadd.f32 %v3332, %v3560
        %v3655 = vadd.f32 %v3333, %v3565
        %v3656 = vadd.f32 %v3334, %v3568
        %v3657 = vadd.f32 %v3335, %v3573
        %v3658 = vadd.f32 %v3336, %v3576
        %v3659 = vadd.f32 %v3337, %v3581
        %v3660 = vadd.f32 %v3338, %v3584
        %v3661 = vadd.f32 %v3339, %v3589
        %v3662 = vadd.f32 %v3340, %v3592
        %v3663 = vadd.f32 %v3341, %v3597
        %v3664 = vadd.f32 %v3342, %v3600
        %v3665 = vadd.f32 %v3343, %v3605
        %v3666 = vadd.f32 %v3344, %v3608
        %v3667 = vadd.f32 %v3345, %v3613
        %v3668 = vadd.f32 %v3346, %v3616
        %v3669 = vadd.f32 %v3347, %v3621
        %v3670 = vadd.f32 %v3348, %v3624
        %v3671 = vadd.f32 %v3349, %v3629
        %v3672 = vadd.f32 %v3350, %v3632
        %v3673 = vadd.f32 %v3351, %v3637
        %v3674 = vadd.f32 %v3352, %v3640
        %v3675 = vld [vmem:[%s4] sm:$0x1]
        %v3677 = vlaneseq
        %v3678 = vshrl.u32 %v3677, 7
        %v3679 = vsub.s32 0, %v3678
        %v3680 = vrot.slane %v3675, %v3679
        %v3682 = vadd.f32 %v3643, %v3680
        %v3683 = vadd.f32 %v3644, %v3680
        %v3684 = vadd.f32 %v3645, %v3680
        %v3685 = vadd.f32 %v3646, %v3680
        %v3686 = vadd.f32 %v3647, %v3680
        %v3687 = vadd.f32 %v3648, %v3680
        %v3688 = vadd.f32 %v3649, %v3680
        %v3689 = vadd.f32 %v3650, %v3680
        %v3690 = vadd.f32 %v3651, %v3680
        %v3691 = vadd.f32 %v3652, %v3680
        %v3692 = vadd.f32 %v3653, %v3680
        %v3693 = vadd.f32 %v3654, %v3680
        %v3694 = vadd.f32 %v3655, %v3680
        %v3695 = vadd.f32 %v3656, %v3680
        %v3696 = vadd.f32 %v3657, %v3680
        %v3697 = vadd.f32 %v3658, %v3680
        %v3698 = vadd.f32 %v3659, %v3680
        %v3699 = vadd.f32 %v3660, %v3680
        %v3700 = vadd.f32 %v3661, %v3680
        %v3701 = vadd.f32 %v3662, %v3680
        %v3702 = vadd.f32 %v3663, %v3680
        %v3703 = vadd.f32 %v3664, %v3680
        %v3704 = vadd.f32 %v3665, %v3680
        %v3705 = vadd.f32 %v3666, %v3680
        %v3706 = vadd.f32 %v3667, %v3680
        %v3707 = vadd.f32 %v3668, %v3680
        %v3708 = vadd.f32 %v3669, %v3680
        %v3709 = vadd.f32 %v3670, %v3680
        %v3710 = vadd.f32 %v3671, %v3680
        %v3711 = vadd.f32 %v3672, %v3680
        %v3712 = vadd.f32 %v3673, %v3680
        %v3713 = vadd.f32 %v3674, %v3680
        %v3714 = vmax.f32 %v3682, 0.0
        %v3715 = vmax.f32 %v3683, 0.0
        %v3716 = vmax.f32 %v3684, 0.0
        %v3717 = vmax.f32 %v3685, 0.0
        %v3718 = vmax.f32 %v3686, 0.0
        %v3719 = vmax.f32 %v3687, 0.0
        %v3720 = vmax.f32 %v3688, 0.0
        %v3721 = vmax.f32 %v3689, 0.0
        %v3722 = vmax.f32 %v3690, 0.0
        %v3723 = vmax.f32 %v3691, 0.0
        %v3724 = vmax.f32 %v3692, 0.0
        %v3725 = vmax.f32 %v3693, 0.0
        %v3726 = vmax.f32 %v3694, 0.0
        %v3727 = vmax.f32 %v3695, 0.0
        %v3728 = vmax.f32 %v3696, 0.0
        %v3729 = vmax.f32 %v3697, 0.0
        %v3730 = vmax.f32 %v3698, 0.0
        %v3731 = vmax.f32 %v3699, 0.0
        %v3732 = vmax.f32 %v3700, 0.0
        %v3733 = vmax.f32 %v3701, 0.0
        %v3734 = vmax.f32 %v3702, 0.0
        %v3735 = vmax.f32 %v3703, 0.0
        %v3736 = vmax.f32 %v3704, 0.0
        %v3737 = vmax.f32 %v3705, 0.0
        %v3738 = vmax.f32 %v3706, 0.0
        %v3739 = vmax.f32 %v3707, 0.0
        %v3740 = vmax.f32 %v3708, 0.0
        %v3741 = vmax.f32 %v3709, 0.0
        %v3742 = vmax.f32 %v3710, 0.0
        %v3743 = vmax.f32 %v3711, 0.0
        %v3744 = vmax.f32 %v3712, 0.0
        %v3745 = vmax.f32 %v3713, 0.0
        %3746 = vst.msk [vmem:[%s808 + $0x1] sm:$0xff] %vm386, %v3714
        %3747 = vst.msk [vmem:[%s808 + $0x9] sm:$0xff] %vm386, %v3715
        %3748 = vst.msk [vmem:[%s808 + $0x19] sm:$0xff] %vm386, %v3716
        %3749 = vst.msk [vmem:[%s808 + $0x21] sm:$0xff] %vm386, %v3717
        %3750 = vst.msk [vmem:[%s808 + $0x31] sm:$0xff] %vm386, %v3718
        %3751 = vst.msk [vmem:[%s808 + $0x39] sm:$0xff] %vm386, %v3719
        %3752 = vst.msk [vmem:[%s808 + $0x49] sm:$0xff] %vm386, %v3720
        %3753 = vst.msk [vmem:[%s808 + $0x51] sm:$0xff] %vm386, %v3721
        %3754 = vst.msk [vmem:[%s808 + $0x61] sm:$0xff] %vm386, %v3722
        %3755 = vst.msk [vmem:[%s808 + $0x69] sm:$0xff] %vm386, %v3723
        %3756 = vst.msk [vmem:[%s808 + $0x79] sm:$0xff] %vm386, %v3724
        %3757 = vst.msk [vmem:[%s808 + $0x81] sm:$0xff] %vm386, %v3725
        %3758 = vst.msk [vmem:[%s808 + $0x91] sm:$0xff] %vm386, %v3726
        %3759 = vst.msk [vmem:[%s808 + $0x99] sm:$0xff] %vm386, %v3727
        %3760 = vst.msk [vmem:[%s808 + $0xa9] sm:$0xff] %vm386, %v3728
        %3761 = vst.msk [vmem:[%s808 + $0xb1] sm:$0xff] %vm386, %v3729
        %3762 = vst.msk [vmem:[%s808 + $0xc1] sm:$0xff] %vm386, %v3730
        %3763 = vst.msk [vmem:[%s808 + $0xc9] sm:$0xff] %vm386, %v3731
        %3764 = vst.msk [vmem:[%s808 + $0xd9] sm:$0xff] %vm386, %v3732
        %3765 = vst.msk [vmem:[%s808 + $0xe1] sm:$0xff] %vm386, %v3733
        %3766 = vst.msk [vmem:[%s808 + $0xf1] sm:$0xff] %vm386, %v3734
        %3767 = vst.msk [vmem:[%s808 + $0xf9] sm:$0xff] %vm386, %v3735
        %3768 = vst.msk [vmem:[%s808 + $0x109] sm:$0xff] %vm386, %v3736
        %3769 = vst.msk [vmem:[%s808 + $0x111] sm:$0xff] %vm386, %v3737
        %3770 = vst.msk [vmem:[%s808 + $0x121] sm:$0xff] %vm386, %v3738
        %3771 = vst.msk [vmem:[%s808 + $0x129] sm:$0xff] %vm386, %v3739
        %3772 = vst.msk [vmem:[%s808 + $0x139] sm:$0xff] %vm386, %v3740
        %3773 = vst.msk [vmem:[%s808 + $0x141] sm:$0xff] %vm386, %v3741
        %3774 = vst.msk [vmem:[%s808 + $0x151] sm:$0xff] %vm386, %v3742
        %3775 = vst.msk [vmem:[%s808 + $0x159] sm:$0xff] %vm386, %v3743
        %3776 = vst.msk [vmem:[%s808 + $0x169] sm:$0xff] %vm386, %v3744
        %3777 = vst.msk [vmem:[%s808 + $0x171] sm:$0xff] %vm386, %v3745
        %v3778 = vld [vmem:[#allocation2] sm:$0xff]
        %v3779 = vld [vmem:[#allocation2 + $0x8] sm:$0xff]
        %v3780 = vld [vmem:[#allocation2 + $0x18] sm:$0xff]
        %v3781 = vld [vmem:[#allocation2 + $0x20] sm:$0xff]
        %v3782 = vld [vmem:[#allocation2 + $0x30] sm:$0xff]
        %v3783 = vld [vmem:[#allocation2 + $0x38] sm:$0xff]
        %v3784 = vld [vmem:[#allocation2 + $0x48] sm:$0xff]
        %v3785 = vld [vmem:[#allocation2 + $0x50] sm:$0xff]
        %v3786 = vld [vmem:[#allocation2 + $0x60] sm:$0xff]
        %v3787 = vld [vmem:[#allocation2 + $0x68] sm:$0xff]
        %v3788 = vld [vmem:[#allocation2 + $0x78] sm:$0xff]
        %v3789 = vld [vmem:[#allocation2 + $0x80] sm:$0xff]
        %v3790 = vld [vmem:[#allocation2 + $0x90] sm:$0xff]
        %v3791 = vld [vmem:[#allocation2 + $0x98] sm:$0xff]
        %v3792 = vld [vmem:[#allocation2 + $0xa8] sm:$0xff]
        %v3793 = vld [vmem:[#allocation2 + $0xb0] sm:$0xff]
        %v3794 = vld [vmem:[#allocation2 + $0xc0] sm:$0xff]
        %v3795 = vld [vmem:[#allocation2 + $0xc8] sm:$0xff]
        %v3796 = vld [vmem:[#allocation2 + $0xd8] sm:$0xff]
        %v3797 = vld [vmem:[#allocation2 + $0xe0] sm:$0xff]
        %v3798 = vld [vmem:[#allocation2 + $0xf0] sm:$0xff]
        %v3799 = vld [vmem:[#allocation2 + $0xf8] sm:$0xff]
        %v3800 = vld [vmem:[#allocation2 + $0x108] sm:$0xff]
        %v3801 = vld [vmem:[#allocation2 + $0x110] sm:$0xff]
        %v3802 = vld [vmem:[#allocation2 + $0x120] sm:$0xff]
        %v3803 = vld [vmem:[#allocation2 + $0x128] sm:$0xff]
        %v3804 = vld [vmem:[#allocation2 + $0x138] sm:$0xff]
        %v3805 = vld [vmem:[#allocation2 + $0x140] sm:$0xff]
        %v3806 = vld [vmem:[#allocation2 + $0x150] sm:$0xff]
        %v3807 = vld [vmem:[#allocation2 + $0x158] sm:$0xff]
        %v3808 = vld [vmem:[#allocation2 + $0x168] sm:$0xff]
        %v3809 = vld [vmem:[#allocation2 + $0x170] sm:$0xff]
        %v3810 = vpack.c.bf16 %v3779, %v3778
        %v3811 = vpack.c.bf16 %v3781, %v3780
        %v3812 = vpack.c.bf16 %v3783, %v3782
        %v3813 = vpack.c.bf16 %v3785, %v3784
        %v3814 = vpack.c.bf16 %v3787, %v3786
        %v3815 = vpack.c.bf16 %v3789, %v3788
        %v3816 = vpack.c.bf16 %v3791, %v3790
        %v3817 = vpack.c.bf16 %v3793, %v3792
        %v3818 = vpack.c.bf16 %v3795, %v3794
        %v3819 = vpack.c.bf16 %v3797, %v3796
        %v3820 = vpack.c.bf16 %v3799, %v3798
        %v3821 = vpack.c.bf16 %v3801, %v3800
        %v3822 = vpack.c.bf16 %v3803, %v3802
        %v3823 = vpack.c.bf16 %v3805, %v3804
        %v3824 = vpack.c.bf16 %v3807, %v3806
        %v3825 = vpack.c.bf16 %v3809, %v3808
        %v3826 = vld [vmem:[%s5] sm:$0xf]
        %v3827 = vld [vmem:[%s5 + $0x4] sm:$0xf]
        %v3828 = vld [vmem:[%s5 + $0x8] sm:$0xf]
        %v3829 = vld [vmem:[%s5 + $0xc] sm:$0xf]
        %v3830 = vld [vmem:[%s5 + $0x10] sm:$0xf]
        %v3831 = vld [vmem:[%s5 + $0x14] sm:$0xf]
        %v3832 = vld [vmem:[%s5 + $0x18] sm:$0xf]
        %v3833 = vld [vmem:[%s5 + $0x1c] sm:$0xf]
        %v3834 = vld [vmem:[#allocation2 + $0x1] sm:$0xff]
        %v3835 = vld [vmem:[#allocation2 + $0x9] sm:$0xff]
        %v3836 = vld [vmem:[#allocation2 + $0x19] sm:$0xff]
        %v3837 = vld [vmem:[#allocation2 + $0x21] sm:$0xff]
        %v3838 = vld [vmem:[#allocation2 + $0x31] sm:$0xff]
        %v3839 = vld [vmem:[#allocation2 + $0x39] sm:$0xff]
        %v3840 = vld [vmem:[#allocation2 + $0x49] sm:$0xff]
        %v3841 = vld [vmem:[#allocation2 + $0x51] sm:$0xff]
        %v3842 = vld [vmem:[#allocation2 + $0x61] sm:$0xff]
        %v3843 = vld [vmem:[#allocation2 + $0x69] sm:$0xff]
        %v3844 = vld [vmem:[#allocation2 + $0x79] sm:$0xff]
        %v3845 = vld [vmem:[#allocation2 + $0x81] sm:$0xff]
        %v3846 = vld [vmem:[#allocation2 + $0x91] sm:$0xff]
        %v3847 = vld [vmem:[#allocation2 + $0x99] sm:$0xff]
        %v3848 = vld [vmem:[#allocation2 + $0xa9] sm:$0xff]
        %v3849 = vld [vmem:[#allocation2 + $0xb1] sm:$0xff]
        %v3850 = vld [vmem:[#allocation2 + $0xc1] sm:$0xff]
        %v3851 = vld [vmem:[#allocation2 + $0xc9] sm:$0xff]
        %v3852 = vld [vmem:[#allocation2 + $0xd9] sm:$0xff]
        %v3853 = vld [vmem:[#allocation2 + $0xe1] sm:$0xff]
        %v3854 = vld [vmem:[#allocation2 + $0xf1] sm:$0xff]
        %v3855 = vld [vmem:[#allocation2 + $0xf9] sm:$0xff]
        %v3856 = vld [vmem:[#allocation2 + $0x109] sm:$0xff]
        %v3857 = vld [vmem:[#allocation2 + $0x111] sm:$0xff]
        %v3858 = vld [vmem:[#allocation2 + $0x121] sm:$0xff]
        %v3859 = vld [vmem:[#allocation2 + $0x129] sm:$0xff]
        %v3860 = vld [vmem:[#allocation2 + $0x139] sm:$0xff]
        %v3861 = vld [vmem:[#allocation2 + $0x141] sm:$0xff]
        %v3862 = vld [vmem:[#allocation2 + $0x151] sm:$0xff]
        %v3863 = vld [vmem:[#allocation2 + $0x159] sm:$0xff]
        %v3864 = vld [vmem:[#allocation2 + $0x169] sm:$0xff]
        %v3865 = vld [vmem:[#allocation2 + $0x171] sm:$0xff]
        %v3866 = vpack.c.bf16 %v3835, %v3834
        %v3867 = vpack.c.bf16 %v3837, %v3836
        %v3868 = vpack.c.bf16 %v3839, %v3838
        %v3869 = vpack.c.bf16 %v3841, %v3840
        %v3870 = vpack.c.bf16 %v3843, %v3842
        %v3871 = vpack.c.bf16 %v3845, %v3844
        %v3872 = vpack.c.bf16 %v3847, %v3846
        %v3873 = vpack.c.bf16 %v3849, %v3848
        %v3874 = vpack.c.bf16 %v3851, %v3850
        %v3875 = vpack.c.bf16 %v3853, %v3852
        %v3876 = vpack.c.bf16 %v3855, %v3854
        %v3877 = vpack.c.bf16 %v3857, %v3856
        %v3878 = vpack.c.bf16 %v3859, %v3858
        %v3879 = vpack.c.bf16 %v3861, %v3860
        %v3880 = vpack.c.bf16 %v3863, %v3862
        %v3881 = vpack.c.bf16 %v3865, %v3864
        %s3882 = scalar_lea.vmem %s5, 32
        %v3883 = vld [vmem:[%s3882] sm:$0xf]
        %v3884 = vld [vmem:[%s3882 + $0x4] sm:$0xf]
        %v3885 = vld [vmem:[%s3882 + $0x8] sm:$0xf]
        %v3886 = vld [vmem:[%s3882 + $0xc] sm:$0xf]
        %v3887 = vld [vmem:[%s3882 + $0x10] sm:$0xf]
        %v3888 = vld [vmem:[%s3882 + $0x14] sm:$0xf]
        %v3889 = vld [vmem:[%s3882 + $0x18] sm:$0xf]
        %v3890 = vld [vmem:[%s3882 + $0x1c] sm:$0xf]
        %v3899 = vunpack.c.l.b16 %v3883
        %v3900 = vunpack.c.l.b16 %v3884
        %v3901 = vunpack.c.l.b16 %v3885
        %v3902 = vunpack.c.l.b16 %v3886
        %v3903 = vunpack.c.l.b16 %v3887
        %v3904 = vunpack.c.l.b16 %v3888
        %v3905 = vunpack.c.l.b16 %v3889
        %v3906 = vunpack.c.l.b16 %v3890
        %v3907 = vpack.c.b16 %v3900, %v3899
        %v3908 = vpack.c.b16 %v3902, %v3901
        %v3909 = vpack.c.b16 %v3904, %v3903
        %v3910 = vpack.c.b16 %v3906, %v3905
        %v3916 = vsel %vm386, %v3866, 0
        %v3919 = vsel %vm386, %v3867, 0
        %v3922 = vsel %vm386, %v3868, 0
        %v3925 = vsel %vm386, %v3869, 0
        %v3928 = vsel %vm386, %v3870, 0
        %v3931 = vsel %vm386, %v3871, 0
        %v3934 = vsel %vm386, %v3872, 0
        %v3937 = vsel %vm386, %v3873, 0
        %v3940 = vsel %vm386, %v3874, 0
        %v3943 = vsel %vm386, %v3875, 0
        %v3946 = vsel %vm386, %v3876, 0
        %v3949 = vsel %vm386, %v3877, 0
        %v3952 = vsel %vm386, %v3878, 0
        %v3955 = vsel %vm386, %v3879, 0
        %v3958 = vsel %vm386, %v3880, 0
        %v3961 = vsel %vm386, %v3881, 0
        %3963 = vmatprep.subr.bf16.mxu0 0
        %3964 = vmatpush1.bf16.msra.mxu0 0
        %3965 = vmatprep.subr.bf16.mxu0 0
        %3966 = vmatpush1.bf16.msra.mxu0 0
        %3967 = vmatprep.subr.bf16.mxu0 0
        %3968 = vmatpush1.bf16.msra.mxu0 0
        %3969 = vmatprep.subr.bf16.mxu0 0
        %3970 = vmatpush1.bf16.msra.mxu0 0
        %3971 = vmatprep.subr.bf16.mxu0 0
        %3972 = vmatpush1.bf16.msra.mxu0 %v3910
        %3973 = vmatprep.subr.bf16.mxu0 0
        %3974 = vmatpush1.bf16.msra.mxu0 %v3909
        %3975 = vmatprep.subr.bf16.mxu0 0
        %3976 = vmatpush1.bf16.msra.mxu0 %v3908
        %3977 = vmatprep.subr.bf16.mxu0 0
        %3978 = vmatpush1.bf16.msra.mxu0 %v3907
        %3979 = vmatprep.subr.bf16.mxu0 0
        %3980 = vmatpush2.bf16.msra.mxu0 0
        %3981 = vmatprep.subr.bf16.mxu0 0
        %3982 = vmatpush2.bf16.msra.mxu0 0
        %3983 = vmatprep.subr.bf16.mxu0 0
        %3984 = vmatpush2.bf16.msra.mxu0 0
        %3985 = vmatprep.subr.bf16.mxu0 0
        %3986 = vmatpush2.bf16.msra.mxu0 0
        %3987 = vmatprep.subr.bf16.mxu0 0
        %3988 = vmatpush2.bf16.msra.mxu0 0
        %3989 = vmatprep.subr.bf16.mxu0 0
        %3990 = vmatpush2.bf16.msra.mxu0 0
        %3991 = vmatprep.subr.bf16.mxu0 0
        %3992 = vmatpush2.bf16.msra.mxu0 0
        %3993 = vmatprep.subr.bf16.mxu0 0
        %3994 = vmatpush2.bf16.msra.mxu0 0
        %3995 = vmatprep.mubr.bf16.mxu0 0
        %3996 = vmatmul.mubr.bf16.gmra.mxu0 %v3916
        %v3997 = vpop.f32.mrf.mxu0
        %v3998 = vadd.f32 0.0, %v3997
        %v3999 = vpop.f32.mrf.mxu0
        %v4000 = vpop.f32.mrf.mxu0
        %v4001 = vadd.f32 0.0, %v4000
        %v4002 = vpop.f32.mrf.mxu0
        %4003 = vmatprep.mubr.bf16.mxu0 0
        %4004 = vmatmul.mubr.bf16.gmra.mxu0 %v3919
        %v4005 = vpop.f32.mrf.mxu0
        %v4006 = vadd.f32 0.0, %v4005
        %v4007 = vpop.f32.mrf.mxu0
        %v4008 = vpop.f32.mrf.mxu0
        %v4009 = vadd.f32 0.0, %v4008
        %v4010 = vpop.f32.mrf.mxu0
        %4011 = vmatprep.mubr.bf16.mxu0 0
        %4012 = vmatmul.mubr.bf16.gmra.mxu0 %v3922
        %v4013 = vpop.f32.mrf.mxu0
        %v4014 = vadd.f32 0.0, %v4013
        %v4015 = vpop.f32.mrf.mxu0
        %v4016 = vpop.f32.mrf.mxu0
        %v4017 = vadd.f32 0.0, %v4016
        %v4018 = vpop.f32.mrf.mxu0
        %4019 = vmatprep.mubr.bf16.mxu0 0
        %4020 = vmatmul.mubr.bf16.gmra.mxu0 %v3925
        %v4021 = vpop.f32.mrf.mxu0
        %v4022 = vadd.f32 0.0, %v4021
        %v4023 = vpop.f32.mrf.mxu0
        %v4024 = vpop.f32.mrf.mxu0
        %v4025 = vadd.f32 0.0, %v4024
        %v4026 = vpop.f32.mrf.mxu0
        %4027 = vmatprep.mubr.bf16.mxu0 0
        %4028 = vmatmul.mubr.bf16.gmra.mxu0 %v3928
        %v4029 = vpop.f32.mrf.mxu0
        %v4030 = vadd.f32 0.0, %v4029
        %v4031 = vpop.f32.mrf.mxu0
        %v4032 = vpop.f32.mrf.mxu0
        %v4033 = vadd.f32 0.0, %v4032
        %v4034 = vpop.f32.mrf.mxu0
        %4035 = vmatprep.mubr.bf16.mxu0 0
        %4036 = vmatmul.mubr.bf16.gmra.mxu0 %v3931
        %v4037 = vpop.f32.mrf.mxu0
        %v4038 = vadd.f32 0.0, %v4037
        %v4039 = vpop.f32.mrf.mxu0
        %v4040 = vpop.f32.mrf.mxu0
        %v4041 = vadd.f32 0.0, %v4040
        %v4042 = vpop.f32.mrf.mxu0
        %4043 = vmatprep.mubr.bf16.mxu0 0
        %4044 = vmatmul.mubr.bf16.gmra.mxu0 %v3934
        %v4045 = vpop.f32.mrf.mxu0
        %v4046 = vadd.f32 0.0, %v4045
        %v4047 = vpop.f32.mrf.mxu0
        %v4048 = vpop.f32.mrf.mxu0
        %v4049 = vadd.f32 0.0, %v4048
        %v4050 = vpop.f32.mrf.mxu0
        %4051 = vmatprep.mubr.bf16.mxu0 0
        %4052 = vmatmul.mubr.bf16.gmra.mxu0 %v3937
        %v4053 = vpop.f32.mrf.mxu0
        %v4054 = vadd.f32 0.0, %v4053
        %v4055 = vpop.f32.mrf.mxu0
        %v4056 = vpop.f32.mrf.mxu0
        %v4057 = vadd.f32 0.0, %v4056
        %v4058 = vpop.f32.mrf.mxu0
        %4059 = vmatprep.mubr.bf16.mxu0 0
        %4060 = vmatmul.mubr.bf16.gmra.mxu0 %v3940
        %v4061 = vpop.f32.mrf.mxu0
        %v4062 = vadd.f32 0.0, %v4061
        %v4063 = vpop.f32.mrf.mxu0
        %v4064 = vpop.f32.mrf.mxu0
        %v4065 = vadd.f32 0.0, %v4064
        %v4066 = vpop.f32.mrf.mxu0
        %4067 = vmatprep.mubr.bf16.mxu0 0
        %4068 = vmatmul.mubr.bf16.gmra.mxu0 %v3943
        %v4069 = vpop.f32.mrf.mxu0
        %v4070 = vadd.f32 0.0, %v4069
        %v4071 = vpop.f32.mrf.mxu0
        %v4072 = vpop.f32.mrf.mxu0
        %v4073 = vadd.f32 0.0, %v4072
        %v4074 = vpop.f32.mrf.mxu0
        %4075 = vmatprep.mubr.bf16.mxu0 0
        %4076 = vmatmul.mubr.bf16.gmra.mxu0 %v3946
        %v4077 = vpop.f32.mrf.mxu0
        %v4078 = vadd.f32 0.0, %v4077
        %v4079 = vpop.f32.mrf.mxu0
        %v4080 = vpop.f32.mrf.mxu0
        %v4081 = vadd.f32 0.0, %v4080
        %v4082 = vpop.f32.mrf.mxu0
        %4083 = vmatprep.mubr.bf16.mxu0 0
        %4084 = vmatmul.mubr.bf16.gmra.mxu0 %v3949
        %v4085 = vpop.f32.mrf.mxu0
        %v4086 = vadd.f32 0.0, %v4085
        %v4087 = vpop.f32.mrf.mxu0
        %v4088 = vpop.f32.mrf.mxu0
        %v4089 = vadd.f32 0.0, %v4088
        %v4090 = vpop.f32.mrf.mxu0
        %4091 = vmatprep.mubr.bf16.mxu0 0
        %4092 = vmatmul.mubr.bf16.gmra.mxu0 %v3952
        %v4093 = vpop.f32.mrf.mxu0
        %v4094 = vadd.f32 0.0, %v4093
        %v4095 = vpop.f32.mrf.mxu0
        %v4096 = vpop.f32.mrf.mxu0
        %v4097 = vadd.f32 0.0, %v4096
        %v4098 = vpop.f32.mrf.mxu0
        %4099 = vmatprep.mubr.bf16.mxu0 0
        %4100 = vmatmul.mubr.bf16.gmra.mxu0 %v3955
        %v4101 = vpop.f32.mrf.mxu0
        %v4102 = vadd.f32 0.0, %v4101
        %v4103 = vpop.f32.mrf.mxu0
        %v4104 = vpop.f32.mrf.mxu0
        %v4105 = vadd.f32 0.0, %v4104
        %v4106 = vpop.f32.mrf.mxu0
        %4107 = vmatprep.mubr.bf16.mxu0 0
        %4108 = vmatmul.mubr.bf16.gmra.mxu0 %v3958
        %v4109 = vpop.f32.mrf.mxu0
        %v4110 = vadd.f32 0.0, %v4109
        %v4111 = vpop.f32.mrf.mxu0
        %v4112 = vpop.f32.mrf.mxu0
        %v4113 = vadd.f32 0.0, %v4112
        %v4114 = vpop.f32.mrf.mxu0
        %4115 = vmatprep.mubr.bf16.mxu0 0
        %4116 = vmatmul.mubr.bf16.gmra.mxu0 %v3961
        %v4117 = vpop.f32.mrf.mxu0
        %v4118 = vadd.f32 0.0, %v4117
        %v4119 = vpop.f32.mrf.mxu0
        %v4120 = vpop.f32.mrf.mxu0
        %v4121 = vadd.f32 0.0, %v4120
        %v4122 = vpop.f32.mrf.mxu0
        %4123 = vdwg.mxu0
        %v4132 = vunpack.c.l.b16 %v3826
        %v4133 = vunpack.c.l.b16 %v3827
        %v4134 = vunpack.c.l.b16 %v3828
        %v4135 = vunpack.c.l.b16 %v3829
        %v4136 = vunpack.c.l.b16 %v3830
        %v4137 = vunpack.c.l.b16 %v3831
        %v4138 = vunpack.c.l.b16 %v3832
        %v4139 = vunpack.c.l.b16 %v3833
        %v4140 = vpack.c.b16 %v4133, %v4132
        %v4141 = vpack.c.b16 %v4135, %v4134
        %v4142 = vpack.c.b16 %v4137, %v4136
        %v4143 = vpack.c.b16 %v4139, %v4138
        %v4149 = vsel %vm386, %v3810, 0
        %v4152 = vsel %vm386, %v3811, 0
        %v4155 = vsel %vm386, %v3812, 0
        %v4158 = vsel %vm386, %v3813, 0
        %v4161 = vsel %vm386, %v3814, 0
        %v4164 = vsel %vm386, %v3815, 0
        %v4167 = vsel %vm386, %v3816, 0
        %v4170 = vsel %vm386, %v3817, 0
        %v4173 = vsel %vm386, %v3818, 0
        %v4176 = vsel %vm386, %v3819, 0
        %v4179 = vsel %vm386, %v3820, 0
        %v4182 = vsel %vm386, %v3821, 0
        %v4185 = vsel %vm386, %v3822, 0
        %v4188 = vsel %vm386, %v3823, 0
        %v4191 = vsel %vm386, %v3824, 0
        %v4194 = vsel %vm386, %v3825, 0
        %4196 = vmatprep.subr.bf16.mxu0 0
        %4197 = vmatpush1.bf16.msra.mxu0 0
        %4198 = vmatprep.subr.bf16.mxu0 0
        %4199 = vmatpush1.bf16.msra.mxu0 0
        %4200 = vmatprep.subr.bf16.mxu0 0
        %4201 = vmatpush1.bf16.msra.mxu0 0
        %4202 = vmatprep.subr.bf16.mxu0 0
        %4203 = vmatpush1.bf16.msra.mxu0 0
        %4204 = vmatprep.subr.bf16.mxu0 0
        %4205 = vmatpush1.bf16.msra.mxu0 %v4143
        %4206 = vmatprep.subr.bf16.mxu0 0
        %4207 = vmatpush1.bf16.msra.mxu0 %v4142
        %4208 = vmatprep.subr.bf16.mxu0 0
        %4209 = vmatpush1.bf16.msra.mxu0 %v4141
        %4210 = vmatprep.subr.bf16.mxu0 0
        %4211 = vmatpush1.bf16.msra.mxu0 %v4140
        %4212 = vmatprep.subr.bf16.mxu0 0
        %4213 = vmatpush2.bf16.msra.mxu0 0
        %4214 = vmatprep.subr.bf16.mxu0 0
        %4215 = vmatpush2.bf16.msra.mxu0 0
        %4216 = vmatprep.subr.bf16.mxu0 0
        %4217 = vmatpush2.bf16.msra.mxu0 0
        %4218 = vmatprep.subr.bf16.mxu0 0
        %4219 = vmatpush2.bf16.msra.mxu0 0
        %4220 = vmatprep.subr.bf16.mxu0 0
        %4221 = vmatpush2.bf16.msra.mxu0 0
        %4222 = vmatprep.subr.bf16.mxu0 0
        %4223 = vmatpush2.bf16.msra.mxu0 0
        %4224 = vmatprep.subr.bf16.mxu0 0
        %4225 = vmatpush2.bf16.msra.mxu0 0
        %4226 = vmatprep.subr.bf16.mxu0 0
        %4227 = vmatpush2.bf16.msra.mxu0 0
        %4228 = vmatprep.mubr.bf16.mxu0 0
        %4229 = vmatmul.mubr.bf16.gmra.mxu0 %v4149
        %v4230 = vpop.f32.mrf.mxu0
        %v4231 = vadd.f32 %v3998, %v4230
        %v4232 = vpop.f32.mrf.mxu0
        %v4233 = vpop.f32.mrf.mxu0
        %v4234 = vadd.f32 %v4001, %v4233
        %v4235 = vpop.f32.mrf.mxu0
        %4236 = vmatprep.mubr.bf16.mxu0 0
        %4237 = vmatmul.mubr.bf16.gmra.mxu0 %v4152
        %v4238 = vpop.f32.mrf.mxu0
        %v4239 = vadd.f32 %v4006, %v4238
        %v4240 = vpop.f32.mrf.mxu0
        %v4241 = vpop.f32.mrf.mxu0
        %v4242 = vadd.f32 %v4009, %v4241
        %v4243 = vpop.f32.mrf.mxu0
        %4244 = vmatprep.mubr.bf16.mxu0 0
        %4245 = vmatmul.mubr.bf16.gmra.mxu0 %v4155
        %v4246 = vpop.f32.mrf.mxu0
        %v4247 = vadd.f32 %v4014, %v4246
        %v4248 = vpop.f32.mrf.mxu0
        %v4249 = vpop.f32.mrf.mxu0
        %v4250 = vadd.f32 %v4017, %v4249
        %v4251 = vpop.f32.mrf.mxu0
        %4252 = vmatprep.mubr.bf16.mxu0 0
        %4253 = vmatmul.mubr.bf16.gmra.mxu0 %v4158
        %v4254 = vpop.f32.mrf.mxu0
        %v4255 = vadd.f32 %v4022, %v4254
        %v4256 = vpop.f32.mrf.mxu0
        %v4257 = vpop.f32.mrf.mxu0
        %v4258 = vadd.f32 %v4025, %v4257
        %v4259 = vpop.f32.mrf.mxu0
        %4260 = vmatprep.mubr.bf16.mxu0 0
        %4261 = vmatmul.mubr.bf16.gmra.mxu0 %v4161
        %v4262 = vpop.f32.mrf.mxu0
        %v4263 = vadd.f32 %v4030, %v4262
        %v4264 = vpop.f32.mrf.mxu0
        %v4265 = vpop.f32.mrf.mxu0
        %v4266 = vadd.f32 %v4033, %v4265
        %v4267 = vpop.f32.mrf.mxu0
        %4268 = vmatprep.mubr.bf16.mxu0 0
        %4269 = vmatmul.mubr.bf16.gmra.mxu0 %v4164
        %v4270 = vpop.f32.mrf.mxu0
        %v4271 = vadd.f32 %v4038, %v4270
        %v4272 = vpop.f32.mrf.mxu0
        %v4273 = vpop.f32.mrf.mxu0
        %v4274 = vadd.f32 %v4041, %v4273
        %v4275 = vpop.f32.mrf.mxu0
        %4276 = vmatprep.mubr.bf16.mxu0 0
        %4277 = vmatmul.mubr.bf16.gmra.mxu0 %v4167
        %v4278 = vpop.f32.mrf.mxu0
        %v4279 = vadd.f32 %v4046, %v4278
        %v4280 = vpop.f32.mrf.mxu0
        %v4281 = vpop.f32.mrf.mxu0
        %v4282 = vadd.f32 %v4049, %v4281
        %v4283 = vpop.f32.mrf.mxu0
        %4284 = vmatprep.mubr.bf16.mxu0 0
        %4285 = vmatmul.mubr.bf16.gmra.mxu0 %v4170
        %v4286 = vpop.f32.mrf.mxu0
        %v4287 = vadd.f32 %v4054, %v4286
        %v4288 = vpop.f32.mrf.mxu0
        %v4289 = vpop.f32.mrf.mxu0
        %v4290 = vadd.f32 %v4057, %v4289
        %v4291 = vpop.f32.mrf.mxu0
        %4292 = vmatprep.mubr.bf16.mxu0 0
        %4293 = vmatmul.mubr.bf16.gmra.mxu0 %v4173
        %v4294 = vpop.f32.mrf.mxu0
        %v4295 = vadd.f32 %v4062, %v4294
        %v4296 = vpop.f32.mrf.mxu0
        %v4297 = vpop.f32.mrf.mxu0
        %v4298 = vadd.f32 %v4065, %v4297
        %v4299 = vpop.f32.mrf.mxu0
        %4300 = vmatprep.mubr.bf16.mxu0 0
        %4301 = vmatmul.mubr.bf16.gmra.mxu0 %v4176
        %v4302 = vpop.f32.mrf.mxu0
        %v4303 = vadd.f32 %v4070, %v4302
        %v4304 = vpop.f32.mrf.mxu0
        %v4305 = vpop.f32.mrf.mxu0
        %v4306 = vadd.f32 %v4073, %v4305
        %v4307 = vpop.f32.mrf.mxu0
        %4308 = vmatprep.mubr.bf16.mxu0 0
        %4309 = vmatmul.mubr.bf16.gmra.mxu0 %v4179
        %v4310 = vpop.f32.mrf.mxu0
        %v4311 = vadd.f32 %v4078, %v4310
        %v4312 = vpop.f32.mrf.mxu0
        %v4313 = vpop.f32.mrf.mxu0
        %v4314 = vadd.f32 %v4081, %v4313
        %v4315 = vpop.f32.mrf.mxu0
        %4316 = vmatprep.mubr.bf16.mxu0 0
        %4317 = vmatmul.mubr.bf16.gmra.mxu0 %v4182
        %v4318 = vpop.f32.mrf.mxu0
        %v4319 = vadd.f32 %v4086, %v4318
        %v4320 = vpop.f32.mrf.mxu0
        %v4321 = vpop.f32.mrf.mxu0
        %v4322 = vadd.f32 %v4089, %v4321
        %v4323 = vpop.f32.mrf.mxu0
        %4324 = vmatprep.mubr.bf16.mxu0 0
        %4325 = vmatmul.mubr.bf16.gmra.mxu0 %v4185
        %v4326 = vpop.f32.mrf.mxu0
        %v4327 = vadd.f32 %v4094, %v4326
        %v4328 = vpop.f32.mrf.mxu0
        %v4329 = vpop.f32.mrf.mxu0
        %v4330 = vadd.f32 %v4097, %v4329
        %v4331 = vpop.f32.mrf.mxu0
        %4332 = vmatprep.mubr.bf16.mxu0 0
        %4333 = vmatmul.mubr.bf16.gmra.mxu0 %v4188
        %v4334 = vpop.f32.mrf.mxu0
        %v4335 = vadd.f32 %v4102, %v4334
        %v4336 = vpop.f32.mrf.mxu0
        %v4337 = vpop.f32.mrf.mxu0
        %v4338 = vadd.f32 %v4105, %v4337
        %v4339 = vpop.f32.mrf.mxu0
        %4340 = vmatprep.mubr.bf16.mxu0 0
        %4341 = vmatmul.mubr.bf16.gmra.mxu0 %v4191
        %v4342 = vpop.f32.mrf.mxu0
        %v4343 = vadd.f32 %v4110, %v4342
        %v4344 = vpop.f32.mrf.mxu0
        %v4345 = vpop.f32.mrf.mxu0
        %v4346 = vadd.f32 %v4113, %v4345
        %v4347 = vpop.f32.mrf.mxu0
        %4348 = vmatprep.mubr.bf16.mxu0 0
        %4349 = vmatmul.mubr.bf16.gmra.mxu0 %v4194
        %v4350 = vpop.f32.mrf.mxu0
        %v4351 = vadd.f32 %v4118, %v4350
        %v4352 = vpop.f32.mrf.mxu0
        %v4353 = vpop.f32.mrf.mxu0
        %v4354 = vadd.f32 %v4121, %v4353
        %v4355 = vpop.f32.mrf.mxu0
        %4356 = vdwg.mxu0
        %v4357 = vld [vmem:[#allocation2 + $0x2] sm:$0xff]
        %v4358 = vld [vmem:[#allocation2 + $0xa] sm:$0xff]
        %v4359 = vld [vmem:[#allocation2 + $0x1a] sm:$0xff]
        %v4360 = vld [vmem:[#allocation2 + $0x22] sm:$0xff]
        %v4361 = vld [vmem:[#allocation2 + $0x32] sm:$0xff]
        %v4362 = vld [vmem:[#allocation2 + $0x3a] sm:$0xff]
        %v4363 = vld [vmem:[#allocation2 + $0x4a] sm:$0xff]
        %v4364 = vld [vmem:[#allocation2 + $0x52] sm:$0xff]
        %v4365 = vld [vmem:[#allocation2 + $0x62] sm:$0xff]
        %v4366 = vld [vmem:[#allocation2 + $0x6a] sm:$0xff]
        %v4367 = vld [vmem:[#allocation2 + $0x7a] sm:$0xff]
        %v4368 = vld [vmem:[#allocation2 + $0x82] sm:$0xff]
        %v4369 = vld [vmem:[#allocation2 + $0x92] sm:$0xff]
        %v4370 = vld [vmem:[#allocation2 + $0x9a] sm:$0xff]
        %v4371 = vld [vmem:[#allocation2 + $0xaa] sm:$0xff]
        %v4372 = vld [vmem:[#allocation2 + $0xb2] sm:$0xff]
        %v4373 = vld [vmem:[#allocation2 + $0xc2] sm:$0xff]
        %v4374 = vld [vmem:[#allocation2 + $0xca] sm:$0xff]
        %v4375 = vld [vmem:[#allocation2 + $0xda] sm:$0xff]
        %v4376 = vld [vmem:[#allocation2 + $0xe2] sm:$0xff]
        %v4377 = vld [vmem:[#allocation2 + $0xf2] sm:$0xff]
        %v4378 = vld [vmem:[#allocation2 + $0xfa] sm:$0xff]
        %v4379 = vld [vmem:[#allocation2 + $0x10a] sm:$0xff]
        %v4380 = vld [vmem:[#allocation2 + $0x112] sm:$0xff]
        %v4381 = vld [vmem:[#allocation2 + $0x122] sm:$0xff]
        %v4382 = vld [vmem:[#allocation2 + $0x12a] sm:$0xff]
        %v4383 = vld [vmem:[#allocation2 + $0x13a] sm:$0xff]
        %v4384 = vld [vmem:[#allocation2 + $0x142] sm:$0xff]
        %v4385 = vld [vmem:[#allocation2 + $0x152] sm:$0xff]
        %v4386 = vld [vmem:[#allocation2 + $0x15a] sm:$0xff]
        %v4387 = vld [vmem:[#allocation2 + $0x16a] sm:$0xff]
        %v4388 = vld [vmem:[#allocation2 + $0x172] sm:$0xff]
        %v4389 = vpack.c.bf16 %v4358, %v4357
        %v4390 = vpack.c.bf16 %v4360, %v4359
        %v4391 = vpack.c.bf16 %v4362, %v4361
        %v4392 = vpack.c.bf16 %v4364, %v4363
        %v4393 = vpack.c.bf16 %v4366, %v4365
        %v4394 = vpack.c.bf16 %v4368, %v4367
        %v4395 = vpack.c.bf16 %v4370, %v4369
        %v4396 = vpack.c.bf16 %v4372, %v4371
        %v4397 = vpack.c.bf16 %v4374, %v4373
        %v4398 = vpack.c.bf16 %v4376, %v4375
        %v4399 = vpack.c.bf16 %v4378, %v4377
        %v4400 = vpack.c.bf16 %v4380, %v4379
        %v4401 = vpack.c.bf16 %v4382, %v4381
        %v4402 = vpack.c.bf16 %v4384, %v4383
        %v4403 = vpack.c.bf16 %v4386, %v4385
        %v4404 = vpack.c.bf16 %v4388, %v4387
        %s4405 = scalar_lea.vmem %s5, 64
        %v4406 = vld [vmem:[%s4405] sm:$0xf]
        %v4407 = vld [vmem:[%s4405 + $0x4] sm:$0xf]
        %v4408 = vld [vmem:[%s4405 + $0x8] sm:$0xf]
        %v4409 = vld [vmem:[%s4405 + $0xc] sm:$0xf]
        %v4410 = vld [vmem:[%s4405 + $0x10] sm:$0xf]
        %v4411 = vld [vmem:[%s4405 + $0x14] sm:$0xf]
        %v4412 = vld [vmem:[%s4405 + $0x18] sm:$0xf]
        %v4413 = vld [vmem:[%s4405 + $0x1c] sm:$0xf]
        %v4422 = vunpack.c.l.b16 %v4406
        %v4423 = vunpack.c.l.b16 %v4407
        %v4424 = vunpack.c.l.b16 %v4408
        %v4425 = vunpack.c.l.b16 %v4409
        %v4426 = vunpack.c.l.b16 %v4410
        %v4427 = vunpack.c.l.b16 %v4411
        %v4428 = vunpack.c.l.b16 %v4412
        %v4429 = vunpack.c.l.b16 %v4413
        %v4430 = vpack.c.b16 %v4423, %v4422
        %v4431 = vpack.c.b16 %v4425, %v4424
        %v4432 = vpack.c.b16 %v4427, %v4426
        %v4433 = vpack.c.b16 %v4429, %v4428
        %v4439 = vsel %vm386, %v4389, 0
        %v4442 = vsel %vm386, %v4390, 0
        %v4445 = vsel %vm386, %v4391, 0
        %v4448 = vsel %vm386, %v4392, 0
        %v4451 = vsel %vm386, %v4393, 0
        %v4454 = vsel %vm386, %v4394, 0
        %v4457 = vsel %vm386, %v4395, 0
        %v4460 = vsel %vm386, %v4396, 0
        %v4463 = vsel %vm386, %v4397, 0
        %v4466 = vsel %vm386, %v4398, 0
        %v4469 = vsel %vm386, %v4399, 0
        %v4472 = vsel %vm386, %v4400, 0
        %v4475 = vsel %vm386, %v4401, 0
        %v4478 = vsel %vm386, %v4402, 0
        %v4481 = vsel %vm386, %v4403, 0
        %v4484 = vsel %vm386, %v4404, 0
        %4486 = vmatprep.subr.bf16.mxu0 0
        %4487 = vmatpush1.bf16.msra.mxu0 0
        %4488 = vmatprep.subr.bf16.mxu0 0
        %4489 = vmatpush1.bf16.msra.mxu0 0
        %4490 = vmatprep.subr.bf16.mxu0 0
        %4491 = vmatpush1.bf16.msra.mxu0 0
        %4492 = vmatprep.subr.bf16.mxu0 0
        %4493 = vmatpush1.bf16.msra.mxu0 0
        %4494 = vmatprep.subr.bf16.mxu0 0
        %4495 = vmatpush1.bf16.msra.mxu0 %v4433
        %4496 = vmatprep.subr.bf16.mxu0 0
        %4497 = vmatpush1.bf16.msra.mxu0 %v4432
        %4498 = vmatprep.subr.bf16.mxu0 0
        %4499 = vmatpush1.bf16.msra.mxu0 %v4431
        %4500 = vmatprep.subr.bf16.mxu0 0
        %4501 = vmatpush1.bf16.msra.mxu0 %v4430
        %4502 = vmatprep.subr.bf16.mxu0 0
        %4503 = vmatpush2.bf16.msra.mxu0 0
        %4504 = vmatprep.subr.bf16.mxu0 0
        %4505 = vmatpush2.bf16.msra.mxu0 0
        %4506 = vmatprep.subr.bf16.mxu0 0
        %4507 = vmatpush2.bf16.msra.mxu0 0
        %4508 = vmatprep.subr.bf16.mxu0 0
        %4509 = vmatpush2.bf16.msra.mxu0 0
        %4510 = vmatprep.subr.bf16.mxu0 0
        %4511 = vmatpush2.bf16.msra.mxu0 0
        %4512 = vmatprep.subr.bf16.mxu0 0
        %4513 = vmatpush2.bf16.msra.mxu0 0
        %4514 = vmatprep.subr.bf16.mxu0 0
        %4515 = vmatpush2.bf16.msra.mxu0 0
        %4516 = vmatprep.subr.bf16.mxu0 0
        %4517 = vmatpush2.bf16.msra.mxu0 0
        %4518 = vmatprep.mubr.bf16.mxu0 0
        %4519 = vmatmul.mubr.bf16.gmra.mxu0 %v4439
        %v4520 = vpop.f32.mrf.mxu0
        %v4521 = vadd.f32 0.0, %v4520
        %v4522 = vpop.f32.mrf.mxu0
        %v4523 = vpop.f32.mrf.mxu0
        %v4524 = vadd.f32 0.0, %v4523
        %v4525 = vpop.f32.mrf.mxu0
        %4526 = vmatprep.mubr.bf16.mxu0 0
        %4527 = vmatmul.mubr.bf16.gmra.mxu0 %v4442
        %v4528 = vpop.f32.mrf.mxu0
        %v4529 = vadd.f32 0.0, %v4528
        %v4530 = vpop.f32.mrf.mxu0
        %v4531 = vpop.f32.mrf.mxu0
        %v4532 = vadd.f32 0.0, %v4531
        %v4533 = vpop.f32.mrf.mxu0
        %4534 = vmatprep.mubr.bf16.mxu0 0
        %4535 = vmatmul.mubr.bf16.gmra.mxu0 %v4445
        %v4536 = vpop.f32.mrf.mxu0
        %v4537 = vadd.f32 0.0, %v4536
        %v4538 = vpop.f32.mrf.mxu0
        %v4539 = vpop.f32.mrf.mxu0
        %v4540 = vadd.f32 0.0, %v4539
        %v4541 = vpop.f32.mrf.mxu0
        %4542 = vmatprep.mubr.bf16.mxu0 0
        %4543 = vmatmul.mubr.bf16.gmra.mxu0 %v4448
        %v4544 = vpop.f32.mrf.mxu0
        %v4545 = vadd.f32 0.0, %v4544
        %v4546 = vpop.f32.mrf.mxu0
        %v4547 = vpop.f32.mrf.mxu0
        %v4548 = vadd.f32 0.0, %v4547
        %v4549 = vpop.f32.mrf.mxu0
        %4550 = vmatprep.mubr.bf16.mxu0 0
        %4551 = vmatmul.mubr.bf16.gmra.mxu0 %v4451
        %v4552 = vpop.f32.mrf.mxu0
        %v4553 = vadd.f32 0.0, %v4552
        %v4554 = vpop.f32.mrf.mxu0
        %v4555 = vpop.f32.mrf.mxu0
        %v4556 = vadd.f32 0.0, %v4555
        %v4557 = vpop.f32.mrf.mxu0
        %4558 = vmatprep.mubr.bf16.mxu0 0
        %4559 = vmatmul.mubr.bf16.gmra.mxu0 %v4454
        %v4560 = vpop.f32.mrf.mxu0
        %v4561 = vadd.f32 0.0, %v4560
        %v4562 = vpop.f32.mrf.mxu0
        %v4563 = vpop.f32.mrf.mxu0
        %v4564 = vadd.f32 0.0, %v4563
        %v4565 = vpop.f32.mrf.mxu0
        %4566 = vmatprep.mubr.bf16.mxu0 0
        %4567 = vmatmul.mubr.bf16.gmra.mxu0 %v4457
        %v4568 = vpop.f32.mrf.mxu0
        %v4569 = vadd.f32 0.0, %v4568
        %v4570 = vpop.f32.mrf.mxu0
        %v4571 = vpop.f32.mrf.mxu0
        %v4572 = vadd.f32 0.0, %v4571
        %v4573 = vpop.f32.mrf.mxu0
        %4574 = vmatprep.mubr.bf16.mxu0 0
        %4575 = vmatmul.mubr.bf16.gmra.mxu0 %v4460
        %v4576 = vpop.f32.mrf.mxu0
        %v4577 = vadd.f32 0.0, %v4576
        %v4578 = vpop.f32.mrf.mxu0
        %v4579 = vpop.f32.mrf.mxu0
        %v4580 = vadd.f32 0.0, %v4579
        %v4581 = vpop.f32.mrf.mxu0
        %4582 = vmatprep.mubr.bf16.mxu0 0
        %4583 = vmatmul.mubr.bf16.gmra.mxu0 %v4463
        %v4584 = vpop.f32.mrf.mxu0
        %v4585 = vadd.f32 0.0, %v4584
        %v4586 = vpop.f32.mrf.mxu0
        %v4587 = vpop.f32.mrf.mxu0
        %v4588 = vadd.f32 0.0, %v4587
        %v4589 = vpop.f32.mrf.mxu0
        %4590 = vmatprep.mubr.bf16.mxu0 0
        %4591 = vmatmul.mubr.bf16.gmra.mxu0 %v4466
        %v4592 = vpop.f32.mrf.mxu0
        %v4593 = vadd.f32 0.0, %v4592
        %v4594 = vpop.f32.mrf.mxu0
        %v4595 = vpop.f32.mrf.mxu0
        %v4596 = vadd.f32 0.0, %v4595
        %v4597 = vpop.f32.mrf.mxu0
        %4598 = vmatprep.mubr.bf16.mxu0 0
        %4599 = vmatmul.mubr.bf16.gmra.mxu0 %v4469
        %v4600 = vpop.f32.mrf.mxu0
        %v4601 = vadd.f32 0.0, %v4600
        %v4602 = vpop.f32.mrf.mxu0
        %v4603 = vpop.f32.mrf.mxu0
        %v4604 = vadd.f32 0.0, %v4603
        %v4605 = vpop.f32.mrf.mxu0
        %4606 = vmatprep.mubr.bf16.mxu0 0
        %4607 = vmatmul.mubr.bf16.gmra.mxu0 %v4472
        %v4608 = vpop.f32.mrf.mxu0
        %v4609 = vadd.f32 0.0, %v4608
        %v4610 = vpop.f32.mrf.mxu0
        %v4611 = vpop.f32.mrf.mxu0
        %v4612 = vadd.f32 0.0, %v4611
        %v4613 = vpop.f32.mrf.mxu0
        %4614 = vmatprep.mubr.bf16.mxu0 0
        %4615 = vmatmul.mubr.bf16.gmra.mxu0 %v4475
        %v4616 = vpop.f32.mrf.mxu0
        %v4617 = vadd.f32 0.0, %v4616
        %v4618 = vpop.f32.mrf.mxu0
        %v4619 = vpop.f32.mrf.mxu0
        %v4620 = vadd.f32 0.0, %v4619
        %v4621 = vpop.f32.mrf.mxu0
        %4622 = vmatprep.mubr.bf16.mxu0 0
        %4623 = vmatmul.mubr.bf16.gmra.mxu0 %v4478
        %v4624 = vpop.f32.mrf.mxu0
        %v4625 = vadd.f32 0.0, %v4624
        %v4626 = vpop.f32.mrf.mxu0
        %v4627 = vpop.f32.mrf.mxu0
        %v4628 = vadd.f32 0.0, %v4627
        %v4629 = vpop.f32.mrf.mxu0
        %4630 = vmatprep.mubr.bf16.mxu0 0
        %4631 = vmatmul.mubr.bf16.gmra.mxu0 %v4481
        %v4632 = vpop.f32.mrf.mxu0
        %v4633 = vadd.f32 0.0, %v4632
        %v4634 = vpop.f32.mrf.mxu0
        %v4635 = vpop.f32.mrf.mxu0
        %v4636 = vadd.f32 0.0, %v4635
        %v4637 = vpop.f32.mrf.mxu0
        %4638 = vmatprep.mubr.bf16.mxu0 0
        %4639 = vmatmul.mubr.bf16.gmra.mxu0 %v4484
        %v4640 = vpop.f32.mrf.mxu0
        %v4641 = vadd.f32 0.0, %v4640
        %v4642 = vpop.f32.mrf.mxu0
        %v4643 = vpop.f32.mrf.mxu0
        %v4644 = vadd.f32 0.0, %v4643
        %v4645 = vpop.f32.mrf.mxu0
        %4646 = vdwg.mxu0
        %v4647 = vadd.f32 %v4231, %v4521
        %v4648 = vadd.f32 %v4234, %v4524
        %v4649 = vadd.f32 %v4239, %v4529
        %v4650 = vadd.f32 %v4242, %v4532
        %v4651 = vadd.f32 %v4247, %v4537
        %v4652 = vadd.f32 %v4250, %v4540
        %v4653 = vadd.f32 %v4255, %v4545
        %v4654 = vadd.f32 %v4258, %v4548
        %v4655 = vadd.f32 %v4263, %v4553
        %v4656 = vadd.f32 %v4266, %v4556
        %v4657 = vadd.f32 %v4271, %v4561
        %v4658 = vadd.f32 %v4274, %v4564
        %v4659 = vadd.f32 %v4279, %v4569
        %v4660 = vadd.f32 %v4282, %v4572
        %v4661 = vadd.f32 %v4287, %v4577
        %v4662 = vadd.f32 %v4290, %v4580
        %v4663 = vadd.f32 %v4295, %v4585
        %v4664 = vadd.f32 %v4298, %v4588
        %v4665 = vadd.f32 %v4303, %v4593
        %v4666 = vadd.f32 %v4306, %v4596
        %v4667 = vadd.f32 %v4311, %v4601
        %v4668 = vadd.f32 %v4314, %v4604
        %v4669 = vadd.f32 %v4319, %v4609
        %v4670 = vadd.f32 %v4322, %v4612
        %v4671 = vadd.f32 %v4327, %v4617
        %v4672 = vadd.f32 %v4330, %v4620
        %v4673 = vadd.f32 %v4335, %v4625
        %v4674 = vadd.f32 %v4338, %v4628
        %v4675 = vadd.f32 %v4343, %v4633
        %v4676 = vadd.f32 %v4346, %v4636
        %v4677 = vadd.f32 %v4351, %v4641
        %v4678 = vadd.f32 %v4354, %v4644
        %v4679 = vld [vmem:[%s808] sm:$0xff]
        %v4680 = vld [vmem:[%s808 + $0x8] sm:$0xff]
        %v4681 = vld [vmem:[%s808 + $0x18] sm:$0xff]
        %v4682 = vld [vmem:[%s808 + $0x20] sm:$0xff]
        %v4683 = vld [vmem:[%s808 + $0x30] sm:$0xff]
        %v4684 = vld [vmem:[%s808 + $0x38] sm:$0xff]
        %v4685 = vld [vmem:[%s808 + $0x48] sm:$0xff]
        %v4686 = vld [vmem:[%s808 + $0x50] sm:$0xff]
        %v4687 = vld [vmem:[%s808 + $0x60] sm:$0xff]
        %v4688 = vld [vmem:[%s808 + $0x68] sm:$0xff]
        %v4689 = vld [vmem:[%s808 + $0x78] sm:$0xff]
        %v4690 = vld [vmem:[%s808 + $0x80] sm:$0xff]
        %v4691 = vld [vmem:[%s808 + $0x90] sm:$0xff]
        %v4692 = vld [vmem:[%s808 + $0x98] sm:$0xff]
        %v4693 = vld [vmem:[%s808 + $0xa8] sm:$0xff]
        %v4694 = vld [vmem:[%s808 + $0xb0] sm:$0xff]
        %v4695 = vld [vmem:[%s808 + $0xc0] sm:$0xff]
        %v4696 = vld [vmem:[%s808 + $0xc8] sm:$0xff]
        %v4697 = vld [vmem:[%s808 + $0xd8] sm:$0xff]
        %v4698 = vld [vmem:[%s808 + $0xe0] sm:$0xff]
        %v4699 = vld [vmem:[%s808 + $0xf0] sm:$0xff]
        %v4700 = vld [vmem:[%s808 + $0xf8] sm:$0xff]
        %v4701 = vld [vmem:[%s808 + $0x108] sm:$0xff]
        %v4702 = vld [vmem:[%s808 + $0x110] sm:$0xff]
        %v4703 = vld [vmem:[%s808 + $0x120] sm:$0xff]
        %v4704 = vld [vmem:[%s808 + $0x128] sm:$0xff]
        %v4705 = vld [vmem:[%s808 + $0x138] sm:$0xff]
        %v4706 = vld [vmem:[%s808 + $0x140] sm:$0xff]
        %v4707 = vld [vmem:[%s808 + $0x150] sm:$0xff]
        %v4708 = vld [vmem:[%s808 + $0x158] sm:$0xff]
        %v4709 = vld [vmem:[%s808 + $0x168] sm:$0xff]
        %v4710 = vld [vmem:[%s808 + $0x170] sm:$0xff]
        %v4711 = vpack.c.bf16 %v4680, %v4679
        %v4712 = vpack.c.bf16 %v4682, %v4681
        %v4713 = vpack.c.bf16 %v4684, %v4683
        %v4714 = vpack.c.bf16 %v4686, %v4685
        %v4715 = vpack.c.bf16 %v4688, %v4687
        %v4716 = vpack.c.bf16 %v4690, %v4689
        %v4717 = vpack.c.bf16 %v4692, %v4691
        %v4718 = vpack.c.bf16 %v4694, %v4693
        %v4719 = vpack.c.bf16 %v4696, %v4695
        %v4720 = vpack.c.bf16 %v4698, %v4697
        %v4721 = vpack.c.bf16 %v4700, %v4699
        %v4722 = vpack.c.bf16 %v4702, %v4701
        %v4723 = vpack.c.bf16 %v4704, %v4703
        %v4724 = vpack.c.bf16 %v4706, %v4705
        %v4725 = vpack.c.bf16 %v4708, %v4707
        %v4726 = vpack.c.bf16 %v4710, %v4709
        %s4727 = scalar_lea.vmem %s5, 96
        %v4728 = vld [vmem:[%s4727] sm:$0xf]
        %v4729 = vld [vmem:[%s4727 + $0x4] sm:$0xf]
        %v4730 = vld [vmem:[%s4727 + $0x8] sm:$0xf]
        %v4731 = vld [vmem:[%s4727 + $0xc] sm:$0xf]
        %v4732 = vld [vmem:[%s4727 + $0x10] sm:$0xf]
        %v4733 = vld [vmem:[%s4727 + $0x14] sm:$0xf]
        %v4734 = vld [vmem:[%s4727 + $0x18] sm:$0xf]
        %v4735 = vld [vmem:[%s4727 + $0x1c] sm:$0xf]
        %v4744 = vunpack.c.l.b16 %v4728
        %v4745 = vunpack.c.l.b16 %v4729
        %v4746 = vunpack.c.l.b16 %v4730
        %v4747 = vunpack.c.l.b16 %v4731
        %v4748 = vunpack.c.l.b16 %v4732
        %v4749 = vunpack.c.l.b16 %v4733
        %v4750 = vunpack.c.l.b16 %v4734
        %v4751 = vunpack.c.l.b16 %v4735
        %v4752 = vpack.c.b16 %v4745, %v4744
        %v4753 = vpack.c.b16 %v4747, %v4746
        %v4754 = vpack.c.b16 %v4749, %v4748
        %v4755 = vpack.c.b16 %v4751, %v4750
        %v4761 = vsel %vm386, %v4711, 0
        %v4764 = vsel %vm386, %v4712, 0
        %v4767 = vsel %vm386, %v4713, 0
        %v4770 = vsel %vm386, %v4714, 0
        %v4773 = vsel %vm386, %v4715, 0
        %v4776 = vsel %vm386, %v4716, 0
        %v4779 = vsel %vm386, %v4717, 0
        %v4782 = vsel %vm386, %v4718, 0
        %v4785 = vsel %vm386, %v4719, 0
        %v4788 = vsel %vm386, %v4720, 0
        %v4791 = vsel %vm386, %v4721, 0
        %v4794 = vsel %vm386, %v4722, 0
        %v4797 = vsel %vm386, %v4723, 0
        %v4800 = vsel %vm386, %v4724, 0
        %v4803 = vsel %vm386, %v4725, 0
        %v4806 = vsel %vm386, %v4726, 0
        %4808 = vmatprep.subr.bf16.mxu0 0
        %4809 = vmatpush1.bf16.msra.mxu0 0
        %4810 = vmatprep.subr.bf16.mxu0 0
        %4811 = vmatpush1.bf16.msra.mxu0 0
        %4812 = vmatprep.subr.bf16.mxu0 0
        %4813 = vmatpush1.bf16.msra.mxu0 0
        %4814 = vmatprep.subr.bf16.mxu0 0
        %4815 = vmatpush1.bf16.msra.mxu0 0
        %4816 = vmatprep.subr.bf16.mxu0 0
        %4817 = vmatpush1.bf16.msra.mxu0 %v4755
        %4818 = vmatprep.subr.bf16.mxu0 0
        %4819 = vmatpush1.bf16.msra.mxu0 %v4754
        %4820 = vmatprep.subr.bf16.mxu0 0
        %4821 = vmatpush1.bf16.msra.mxu0 %v4753
        %4822 = vmatprep.subr.bf16.mxu0 0
        %4823 = vmatpush1.bf16.msra.mxu0 %v4752
        %4824 = vmatprep.subr.bf16.mxu0 0
        %4825 = vmatpush2.bf16.msra.mxu0 0
        %4826 = vmatprep.subr.bf16.mxu0 0
        %4827 = vmatpush2.bf16.msra.mxu0 0
        %4828 = vmatprep.subr.bf16.mxu0 0
        %4829 = vmatpush2.bf16.msra.mxu0 0
        %4830 = vmatprep.subr.bf16.mxu0 0
        %4831 = vmatpush2.bf16.msra.mxu0 0
        %4832 = vmatprep.subr.bf16.mxu0 0
        %4833 = vmatpush2.bf16.msra.mxu0 0
        %4834 = vmatprep.subr.bf16.mxu0 0
        %4835 = vmatpush2.bf16.msra.mxu0 0
        %4836 = vmatprep.subr.bf16.mxu0 0
        %4837 = vmatpush2.bf16.msra.mxu0 0
        %4838 = vmatprep.subr.bf16.mxu0 0
        %4839 = vmatpush2.bf16.msra.mxu0 0
        %4840 = vmatprep.mubr.bf16.mxu0 0
        %4841 = vmatmul.mubr.bf16.gmra.mxu0 %v4761
        %v4842 = vpop.f32.mrf.mxu0
        %v4843 = vadd.f32 0.0, %v4842
        %v4844 = vpop.f32.mrf.mxu0
        %v4845 = vpop.f32.mrf.mxu0
        %v4846 = vadd.f32 0.0, %v4845
        %v4847 = vpop.f32.mrf.mxu0
        %4848 = vmatprep.mubr.bf16.mxu0 0
        %4849 = vmatmul.mubr.bf16.gmra.mxu0 %v4764
        %v4850 = vpop.f32.mrf.mxu0
        %v4851 = vadd.f32 0.0, %v4850
        %v4852 = vpop.f32.mrf.mxu0
        %v4853 = vpop.f32.mrf.mxu0
        %v4854 = vadd.f32 0.0, %v4853
        %v4855 = vpop.f32.mrf.mxu0
        %4856 = vmatprep.mubr.bf16.mxu0 0
        %4857 = vmatmul.mubr.bf16.gmra.mxu0 %v4767
        %v4858 = vpop.f32.mrf.mxu0
        %v4859 = vadd.f32 0.0, %v4858
        %v4860 = vpop.f32.mrf.mxu0
        %v4861 = vpop.f32.mrf.mxu0
        %v4862 = vadd.f32 0.0, %v4861
        %v4863 = vpop.f32.mrf.mxu0
        %4864 = vmatprep.mubr.bf16.mxu0 0
        %4865 = vmatmul.mubr.bf16.gmra.mxu0 %v4770
        %v4866 = vpop.f32.mrf.mxu0
        %v4867 = vadd.f32 0.0, %v4866
        %v4868 = vpop.f32.mrf.mxu0
        %v4869 = vpop.f32.mrf.mxu0
        %v4870 = vadd.f32 0.0, %v4869
        %v4871 = vpop.f32.mrf.mxu0
        %4872 = vmatprep.mubr.bf16.mxu0 0
        %4873 = vmatmul.mubr.bf16.gmra.mxu0 %v4773
        %v4874 = vpop.f32.mrf.mxu0
        %v4875 = vadd.f32 0.0, %v4874
        %v4876 = vpop.f32.mrf.mxu0
        %v4877 = vpop.f32.mrf.mxu0
        %v4878 = vadd.f32 0.0, %v4877
        %v4879 = vpop.f32.mrf.mxu0
        %4880 = vmatprep.mubr.bf16.mxu0 0
        %4881 = vmatmul.mubr.bf16.gmra.mxu0 %v4776
        %v4882 = vpop.f32.mrf.mxu0
        %v4883 = vadd.f32 0.0, %v4882
        %v4884 = vpop.f32.mrf.mxu0
        %v4885 = vpop.f32.mrf.mxu0
        %v4886 = vadd.f32 0.0, %v4885
        %v4887 = vpop.f32.mrf.mxu0
        %4888 = vmatprep.mubr.bf16.mxu0 0
        %4889 = vmatmul.mubr.bf16.gmra.mxu0 %v4779
        %v4890 = vpop.f32.mrf.mxu0
        %v4891 = vadd.f32 0.0, %v4890
        %v4892 = vpop.f32.mrf.mxu0
        %v4893 = vpop.f32.mrf.mxu0
        %v4894 = vadd.f32 0.0, %v4893
        %v4895 = vpop.f32.mrf.mxu0
        %4896 = vmatprep.mubr.bf16.mxu0 0
        %4897 = vmatmul.mubr.bf16.gmra.mxu0 %v4782
        %v4898 = vpop.f32.mrf.mxu0
        %v4899 = vadd.f32 0.0, %v4898
        %v4900 = vpop.f32.mrf.mxu0
        %v4901 = vpop.f32.mrf.mxu0
        %v4902 = vadd.f32 0.0, %v4901
        %v4903 = vpop.f32.mrf.mxu0
        %4904 = vmatprep.mubr.bf16.mxu0 0
        %4905 = vmatmul.mubr.bf16.gmra.mxu0 %v4785
        %v4906 = vpop.f32.mrf.mxu0
        %v4907 = vadd.f32 0.0, %v4906
        %v4908 = vpop.f32.mrf.mxu0
        %v4909 = vpop.f32.mrf.mxu0
        %v4910 = vadd.f32 0.0, %v4909
        %v4911 = vpop.f32.mrf.mxu0
        %4912 = vmatprep.mubr.bf16.mxu0 0
        %4913 = vmatmul.mubr.bf16.gmra.mxu0 %v4788
        %v4914 = vpop.f32.mrf.mxu0
        %v4915 = vadd.f32 0.0, %v4914
        %v4916 = vpop.f32.mrf.mxu0
        %v4917 = vpop.f32.mrf.mxu0
        %v4918 = vadd.f32 0.0, %v4917
        %v4919 = vpop.f32.mrf.mxu0
        %4920 = vmatprep.mubr.bf16.mxu0 0
        %4921 = vmatmul.mubr.bf16.gmra.mxu0 %v4791
        %v4922 = vpop.f32.mrf.mxu0
        %v4923 = vadd.f32 0.0, %v4922
        %v4924 = vpop.f32.mrf.mxu0
        %v4925 = vpop.f32.mrf.mxu0
        %v4926 = vadd.f32 0.0, %v4925
        %v4927 = vpop.f32.mrf.mxu0
        %4928 = vmatprep.mubr.bf16.mxu0 0
        %4929 = vmatmul.mubr.bf16.gmra.mxu0 %v4794
        %v4930 = vpop.f32.mrf.mxu0
        %v4931 = vadd.f32 0.0, %v4930
        %v4932 = vpop.f32.mrf.mxu0
        %v4933 = vpop.f32.mrf.mxu0
        %v4934 = vadd.f32 0.0, %v4933
        %v4935 = vpop.f32.mrf.mxu0
        %4936 = vmatprep.mubr.bf16.mxu0 0
        %4937 = vmatmul.mubr.bf16.gmra.mxu0 %v4797
        %v4938 = vpop.f32.mrf.mxu0
        %v4939 = vadd.f32 0.0, %v4938
        %v4940 = vpop.f32.mrf.mxu0
        %v4941 = vpop.f32.mrf.mxu0
        %v4942 = vadd.f32 0.0, %v4941
        %v4943 = vpop.f32.mrf.mxu0
        %4944 = vmatprep.mubr.bf16.mxu0 0
        %4945 = vmatmul.mubr.bf16.gmra.mxu0 %v4800
        %v4946 = vpop.f32.mrf.mxu0
        %v4947 = vadd.f32 0.0, %v4946
        %v4948 = vpop.f32.mrf.mxu0
        %v4949 = vpop.f32.mrf.mxu0
        %v4950 = vadd.f32 0.0, %v4949
        %v4951 = vpop.f32.mrf.mxu0
        %4952 = vmatprep.mubr.bf16.mxu0 0
        %4953 = vmatmul.mubr.bf16.gmra.mxu0 %v4803
        %v4954 = vpop.f32.mrf.mxu0
        %v4955 = vadd.f32 0.0, %v4954
        %v4956 = vpop.f32.mrf.mxu0
        %v4957 = vpop.f32.mrf.mxu0
        %v4958 = vadd.f32 0.0, %v4957
        %v4959 = vpop.f32.mrf.mxu0
        %4960 = vmatprep.mubr.bf16.mxu0 0
        %4961 = vmatmul.mubr.bf16.gmra.mxu0 %v4806
        %v4962 = vpop.f32.mrf.mxu0
        %v4963 = vadd.f32 0.0, %v4962
        %v4964 = vpop.f32.mrf.mxu0
        %v4965 = vpop.f32.mrf.mxu0
        %v4966 = vadd.f32 0.0, %v4965
        %v4967 = vpop.f32.mrf.mxu0
        %4968 = vdwg.mxu0
        %v4969 = vadd.f32 %v4647, %v4843
        %v4970 = vadd.f32 %v4648, %v4846
        %v4971 = vadd.f32 %v4649, %v4851
        %v4972 = vadd.f32 %v4650, %v4854
        %v4973 = vadd.f32 %v4651, %v4859
        %v4974 = vadd.f32 %v4652, %v4862
        %v4975 = vadd.f32 %v4653, %v4867
        %v4976 = vadd.f32 %v4654, %v4870
        %v4977 = vadd.f32 %v4655, %v4875
        %v4978 = vadd.f32 %v4656, %v4878
        %v4979 = vadd.f32 %v4657, %v4883
        %v4980 = vadd.f32 %v4658, %v4886
        %v4981 = vadd.f32 %v4659, %v4891
        %v4982 = vadd.f32 %v4660, %v4894
        %v4983 = vadd.f32 %v4661, %v4899
        %v4984 = vadd.f32 %v4662, %v4902
        %v4985 = vadd.f32 %v4663, %v4907
        %v4986 = vadd.f32 %v4664, %v4910
        %v4987 = vadd.f32 %v4665, %v4915
        %v4988 = vadd.f32 %v4666, %v4918
        %v4989 = vadd.f32 %v4667, %v4923
        %v4990 = vadd.f32 %v4668, %v4926
        %v4991 = vadd.f32 %v4669, %v4931
        %v4992 = vadd.f32 %v4670, %v4934
        %v4993 = vadd.f32 %v4671, %v4939
        %v4994 = vadd.f32 %v4672, %v4942
        %v4995 = vadd.f32 %v4673, %v4947
        %v4996 = vadd.f32 %v4674, %v4950
        %v4997 = vadd.f32 %v4675, %v4955
        %v4998 = vadd.f32 %v4676, %v4958
        %v4999 = vadd.f32 %v4677, %v4963
        %v5000 = vadd.f32 %v4678, %v4966
        %v5001 = vld [vmem:[%s808 + $0x1] sm:$0xff]
        %v5002 = vld [vmem:[%s808 + $0x9] sm:$0xff]
        %v5003 = vld [vmem:[%s808 + $0x19] sm:$0xff]
        %v5004 = vld [vmem:[%s808 + $0x21] sm:$0xff]
        %v5005 = vld [vmem:[%s808 + $0x31] sm:$0xff]
        %v5006 = vld [vmem:[%s808 + $0x39] sm:$0xff]
        %v5007 = vld [vmem:[%s808 + $0x49] sm:$0xff]
        %v5008 = vld [vmem:[%s808 + $0x51] sm:$0xff]
        %v5009 = vld [vmem:[%s808 + $0x61] sm:$0xff]
        %v5010 = vld [vmem:[%s808 + $0x69] sm:$0xff]
        %v5011 = vld [vmem:[%s808 + $0x79] sm:$0xff]
        %v5012 = vld [vmem:[%s808 + $0x81] sm:$0xff]
        %v5013 = vld [vmem:[%s808 + $0x91] sm:$0xff]
        %v5014 = vld [vmem:[%s808 + $0x99] sm:$0xff]
        %v5015 = vld [vmem:[%s808 + $0xa9] sm:$0xff]
        %v5016 = vld [vmem:[%s808 + $0xb1] sm:$0xff]
        %v5017 = vld [vmem:[%s808 + $0xc1] sm:$0xff]
        %v5018 = vld [vmem:[%s808 + $0xc9] sm:$0xff]
        %v5019 = vld [vmem:[%s808 + $0xd9] sm:$0xff]
        %v5020 = vld [vmem:[%s808 + $0xe1] sm:$0xff]
        %v5021 = vld [vmem:[%s808 + $0xf1] sm:$0xff]
        %v5022 = vld [vmem:[%s808 + $0xf9] sm:$0xff]
        %v5023 = vld [vmem:[%s808 + $0x109] sm:$0xff]
        %v5024 = vld [vmem:[%s808 + $0x111] sm:$0xff]
        %v5025 = vld [vmem:[%s808 + $0x121] sm:$0xff]
        %v5026 = vld [vmem:[%s808 + $0x129] sm:$0xff]
        %v5027 = vld [vmem:[%s808 + $0x139] sm:$0xff]
        %v5028 = vld [vmem:[%s808 + $0x141] sm:$0xff]
        %v5029 = vld [vmem:[%s808 + $0x151] sm:$0xff]
        %v5030 = vld [vmem:[%s808 + $0x159] sm:$0xff]
        %v5031 = vld [vmem:[%s808 + $0x169] sm:$0xff]
        %v5032 = vld [vmem:[%s808 + $0x171] sm:$0xff]
        %v5033 = vpack.c.bf16 %v5002, %v5001
        %v5034 = vpack.c.bf16 %v5004, %v5003
        %v5035 = vpack.c.bf16 %v5006, %v5005
        %v5036 = vpack.c.bf16 %v5008, %v5007
        %v5037 = vpack.c.bf16 %v5010, %v5009
        %v5038 = vpack.c.bf16 %v5012, %v5011
        %v5039 = vpack.c.bf16 %v5014, %v5013
        %v5040 = vpack.c.bf16 %v5016, %v5015
        %v5041 = vpack.c.bf16 %v5018, %v5017
        %v5042 = vpack.c.bf16 %v5020, %v5019
        %v5043 = vpack.c.bf16 %v5022, %v5021
        %v5044 = vpack.c.bf16 %v5024, %v5023
        %v5045 = vpack.c.bf16 %v5026, %v5025
        %v5046 = vpack.c.bf16 %v5028, %v5027
        %v5047 = vpack.c.bf16 %v5030, %v5029
        %v5048 = vpack.c.bf16 %v5032, %v5031
        %s5049 = scalar_lea.vmem %s5, 128
        %v5050 = vld [vmem:[%s5049] sm:$0xf]
        %v5051 = vld [vmem:[%s5049 + $0x4] sm:$0xf]
        %v5052 = vld [vmem:[%s5049 + $0x8] sm:$0xf]
        %v5053 = vld [vmem:[%s5049 + $0xc] sm:$0xf]
        %v5054 = vld [vmem:[%s5049 + $0x10] sm:$0xf]
        %v5055 = vld [vmem:[%s5049 + $0x14] sm:$0xf]
        %v5056 = vld [vmem:[%s5049 + $0x18] sm:$0xf]
        %v5057 = vld [vmem:[%s5049 + $0x1c] sm:$0xf]
        %v5066 = vunpack.c.l.b16 %v5050
        %v5067 = vunpack.c.l.b16 %v5051
        %v5068 = vunpack.c.l.b16 %v5052
        %v5069 = vunpack.c.l.b16 %v5053
        %v5070 = vunpack.c.l.b16 %v5054
        %v5071 = vunpack.c.l.b16 %v5055
        %v5072 = vunpack.c.l.b16 %v5056
        %v5073 = vunpack.c.l.b16 %v5057
        %v5074 = vpack.c.b16 %v5067, %v5066
        %v5075 = vpack.c.b16 %v5069, %v5068
        %v5076 = vpack.c.b16 %v5071, %v5070
        %v5077 = vpack.c.b16 %v5073, %v5072
        %v5083 = vsel %vm386, %v5033, 0
        %v5086 = vsel %vm386, %v5034, 0
        %v5089 = vsel %vm386, %v5035, 0
        %v5092 = vsel %vm386, %v5036, 0
        %v5095 = vsel %vm386, %v5037, 0
        %v5098 = vsel %vm386, %v5038, 0
        %v5101 = vsel %vm386, %v5039, 0
        %v5104 = vsel %vm386, %v5040, 0
        %v5107 = vsel %vm386, %v5041, 0
        %v5110 = vsel %vm386, %v5042, 0
        %v5113 = vsel %vm386, %v5043, 0
        %v5116 = vsel %vm386, %v5044, 0
        %v5119 = vsel %vm386, %v5045, 0
        %v5122 = vsel %vm386, %v5046, 0
        %v5125 = vsel %vm386, %v5047, 0
        %v5128 = vsel %vm386, %v5048, 0
        %5130 = vmatprep.subr.bf16.mxu0 0
        %5131 = vmatpush1.bf16.msra.mxu0 0
        %5132 = vmatprep.subr.bf16.mxu0 0
        %5133 = vmatpush1.bf16.msra.mxu0 0
        %5134 = vmatprep.subr.bf16.mxu0 0
        %5135 = vmatpush1.bf16.msra.mxu0 0
        %5136 = vmatprep.subr.bf16.mxu0 0
        %5137 = vmatpush1.bf16.msra.mxu0 0
        %5138 = vmatprep.subr.bf16.mxu0 0
        %5139 = vmatpush1.bf16.msra.mxu0 %v5077
        %5140 = vmatprep.subr.bf16.mxu0 0
        %5141 = vmatpush1.bf16.msra.mxu0 %v5076
        %5142 = vmatprep.subr.bf16.mxu0 0
        %5143 = vmatpush1.bf16.msra.mxu0 %v5075
        %5144 = vmatprep.subr.bf16.mxu0 0
        %5145 = vmatpush1.bf16.msra.mxu0 %v5074
        %5146 = vmatprep.subr.bf16.mxu0 0
        %5147 = vmatpush2.bf16.msra.mxu0 0
        %5148 = vmatprep.subr.bf16.mxu0 0
        %5149 = vmatpush2.bf16.msra.mxu0 0
        %5150 = vmatprep.subr.bf16.mxu0 0
        %5151 = vmatpush2.bf16.msra.mxu0 0
        %5152 = vmatprep.subr.bf16.mxu0 0
        %5153 = vmatpush2.bf16.msra.mxu0 0
        %5154 = vmatprep.subr.bf16.mxu0 0
        %5155 = vmatpush2.bf16.msra.mxu0 0
        %5156 = vmatprep.subr.bf16.mxu0 0
        %5157 = vmatpush2.bf16.msra.mxu0 0
        %5158 = vmatprep.subr.bf16.mxu0 0
        %5159 = vmatpush2.bf16.msra.mxu0 0
        %5160 = vmatprep.subr.bf16.mxu0 0
        %5161 = vmatpush2.bf16.msra.mxu0 0
        %5162 = vmatprep.mubr.bf16.mxu0 0
        %5163 = vmatmul.mubr.bf16.gmra.mxu0 %v5083
        %v5164 = vpop.f32.mrf.mxu0
        %v5165 = vadd.f32 0.0, %v5164
        %v5166 = vpop.f32.mrf.mxu0
        %v5167 = vpop.f32.mrf.mxu0
        %v5168 = vadd.f32 0.0, %v5167
        %v5169 = vpop.f32.mrf.mxu0
        %5170 = vmatprep.mubr.bf16.mxu0 0
        %5171 = vmatmul.mubr.bf16.gmra.mxu0 %v5086
        %v5172 = vpop.f32.mrf.mxu0
        %v5173 = vadd.f32 0.0, %v5172
        %v5174 = vpop.f32.mrf.mxu0
        %v5175 = vpop.f32.mrf.mxu0
        %v5176 = vadd.f32 0.0, %v5175
        %v5177 = vpop.f32.mrf.mxu0
        %5178 = vmatprep.mubr.bf16.mxu0 0
        %5179 = vmatmul.mubr.bf16.gmra.mxu0 %v5089
        %v5180 = vpop.f32.mrf.mxu0
        %v5181 = vadd.f32 0.0, %v5180
        %v5182 = vpop.f32.mrf.mxu0
        %v5183 = vpop.f32.mrf.mxu0
        %v5184 = vadd.f32 0.0, %v5183
        %v5185 = vpop.f32.mrf.mxu0
        %5186 = vmatprep.mubr.bf16.mxu0 0
        %5187 = vmatmul.mubr.bf16.gmra.mxu0 %v5092
        %v5188 = vpop.f32.mrf.mxu0
        %v5189 = vadd.f32 0.0, %v5188
        %v5190 = vpop.f32.mrf.mxu0
        %v5191 = vpop.f32.mrf.mxu0
        %v5192 = vadd.f32 0.0, %v5191
        %v5193 = vpop.f32.mrf.mxu0
        %5194 = vmatprep.mubr.bf16.mxu0 0
        %5195 = vmatmul.mubr.bf16.gmra.mxu0 %v5095
        %v5196 = vpop.f32.mrf.mxu0
        %v5197 = vadd.f32 0.0, %v5196
        %v5198 = vpop.f32.mrf.mxu0
        %v5199 = vpop.f32.mrf.mxu0
        %v5200 = vadd.f32 0.0, %v5199
        %v5201 = vpop.f32.mrf.mxu0
        %5202 = vmatprep.mubr.bf16.mxu0 0
        %5203 = vmatmul.mubr.bf16.gmra.mxu0 %v5098
        %v5204 = vpop.f32.mrf.mxu0
        %v5205 = vadd.f32 0.0, %v5204
        %v5206 = vpop.f32.mrf.mxu0
        %v5207 = vpop.f32.mrf.mxu0
        %v5208 = vadd.f32 0.0, %v5207
        %v5209 = vpop.f32.mrf.mxu0
        %5210 = vmatprep.mubr.bf16.mxu0 0
        %5211 = vmatmul.mubr.bf16.gmra.mxu0 %v5101
        %v5212 = vpop.f32.mrf.mxu0
        %v5213 = vadd.f32 0.0, %v5212
        %v5214 = vpop.f32.mrf.mxu0
        %v5215 = vpop.f32.mrf.mxu0
        %v5216 = vadd.f32 0.0, %v5215
        %v5217 = vpop.f32.mrf.mxu0
        %5218 = vmatprep.mubr.bf16.mxu0 0
        %5219 = vmatmul.mubr.bf16.gmra.mxu0 %v5104
        %v5220 = vpop.f32.mrf.mxu0
        %v5221 = vadd.f32 0.0, %v5220
        %v5222 = vpop.f32.mrf.mxu0
        %v5223 = vpop.f32.mrf.mxu0
        %v5224 = vadd.f32 0.0, %v5223
        %v5225 = vpop.f32.mrf.mxu0
        %5226 = vmatprep.mubr.bf16.mxu0 0
        %5227 = vmatmul.mubr.bf16.gmra.mxu0 %v5107
        %v5228 = vpop.f32.mrf.mxu0
        %v5229 = vadd.f32 0.0, %v5228
        %v5230 = vpop.f32.mrf.mxu0
        %v5231 = vpop.f32.mrf.mxu0
        %v5232 = vadd.f32 0.0, %v5231
        %v5233 = vpop.f32.mrf.mxu0
        %5234 = vmatprep.mubr.bf16.mxu0 0
        %5235 = vmatmul.mubr.bf16.gmra.mxu0 %v5110
        %v5236 = vpop.f32.mrf.mxu0
        %v5237 = vadd.f32 0.0, %v5236
        %v5238 = vpop.f32.mrf.mxu0
        %v5239 = vpop.f32.mrf.mxu0
        %v5240 = vadd.f32 0.0, %v5239
        %v5241 = vpop.f32.mrf.mxu0
        %5242 = vmatprep.mubr.bf16.mxu0 0
        %5243 = vmatmul.mubr.bf16.gmra.mxu0 %v5113
        %v5244 = vpop.f32.mrf.mxu0
        %v5245 = vadd.f32 0.0, %v5244
        %v5246 = vpop.f32.mrf.mxu0
        %v5247 = vpop.f32.mrf.mxu0
        %v5248 = vadd.f32 0.0, %v5247
        %v5249 = vpop.f32.mrf.mxu0
        %5250 = vmatprep.mubr.bf16.mxu0 0
        %5251 = vmatmul.mubr.bf16.gmra.mxu0 %v5116
        %v5252 = vpop.f32.mrf.mxu0
        %v5253 = vadd.f32 0.0, %v5252
        %v5254 = vpop.f32.mrf.mxu0
        %v5255 = vpop.f32.mrf.mxu0
        %v5256 = vadd.f32 0.0, %v5255
        %v5257 = vpop.f32.mrf.mxu0
        %5258 = vmatprep.mubr.bf16.mxu0 0
        %5259 = vmatmul.mubr.bf16.gmra.mxu0 %v5119
        %v5260 = vpop.f32.mrf.mxu0
        %v5261 = vadd.f32 0.0, %v5260
        %v5262 = vpop.f32.mrf.mxu0
        %v5263 = vpop.f32.mrf.mxu0
        %v5264 = vadd.f32 0.0, %v5263
        %v5265 = vpop.f32.mrf.mxu0
        %5266 = vmatprep.mubr.bf16.mxu0 0
        %5267 = vmatmul.mubr.bf16.gmra.mxu0 %v5122
        %v5268 = vpop.f32.mrf.mxu0
        %v5269 = vadd.f32 0.0, %v5268
        %v5270 = vpop.f32.mrf.mxu0
        %v5271 = vpop.f32.mrf.mxu0
        %v5272 = vadd.f32 0.0, %v5271
        %v5273 = vpop.f32.mrf.mxu0
        %5274 = vmatprep.mubr.bf16.mxu0 0
        %5275 = vmatmul.mubr.bf16.gmra.mxu0 %v5125
        %v5276 = vpop.f32.mrf.mxu0
        %v5277 = vadd.f32 0.0, %v5276
        %v5278 = vpop.f32.mrf.mxu0
        %v5279 = vpop.f32.mrf.mxu0
        %v5280 = vadd.f32 0.0, %v5279
        %v5281 = vpop.f32.mrf.mxu0
        %5282 = vmatprep.mubr.bf16.mxu0 0
        %5283 = vmatmul.mubr.bf16.gmra.mxu0 %v5128
        %v5284 = vpop.f32.mrf.mxu0
        %v5285 = vadd.f32 0.0, %v5284
        %v5286 = vpop.f32.mrf.mxu0
        %v5287 = vpop.f32.mrf.mxu0
        %v5288 = vadd.f32 0.0, %v5287
        %v5289 = vpop.f32.mrf.mxu0
        %5290 = vdwg.mxu0
        %v5291 = vadd.f32 %v4969, %v5165
        %v5292 = vadd.f32 %v4970, %v5168
        %v5293 = vadd.f32 %v4971, %v5173
        %v5294 = vadd.f32 %v4972, %v5176
        %v5295 = vadd.f32 %v4973, %v5181
        %v5296 = vadd.f32 %v4974, %v5184
        %v5297 = vadd.f32 %v4975, %v5189
        %v5298 = vadd.f32 %v4976, %v5192
        %v5299 = vadd.f32 %v4977, %v5197
        %v5300 = vadd.f32 %v4978, %v5200
        %v5301 = vadd.f32 %v4979, %v5205
        %v5302 = vadd.f32 %v4980, %v5208
        %v5303 = vadd.f32 %v4981, %v5213
        %v5304 = vadd.f32 %v4982, %v5216
        %v5305 = vadd.f32 %v4983, %v5221
        %v5306 = vadd.f32 %v4984, %v5224
        %v5307 = vadd.f32 %v4985, %v5229
        %v5308 = vadd.f32 %v4986, %v5232
        %v5309 = vadd.f32 %v4987, %v5237
        %v5310 = vadd.f32 %v4988, %v5240
        %v5311 = vadd.f32 %v4989, %v5245
        %v5312 = vadd.f32 %v4990, %v5248
        %v5313 = vadd.f32 %v4991, %v5253
        %v5314 = vadd.f32 %v4992, %v5256
        %v5315 = vadd.f32 %v4993, %v5261
        %v5316 = vadd.f32 %v4994, %v5264
        %v5317 = vadd.f32 %v4995, %v5269
        %v5318 = vadd.f32 %v4996, %v5272
        %v5319 = vadd.f32 %v4997, %v5277
        %v5320 = vadd.f32 %v4998, %v5280
        %v5321 = vadd.f32 %v4999, %v5285
        %v5322 = vadd.f32 %v5000, %v5288
        %v5323 = vld [vmem:[%s808 + $0x2] sm:$0xff]
        %v5324 = vld [vmem:[%s808 + $0xa] sm:$0xff]
        %v5325 = vld [vmem:[%s808 + $0x1a] sm:$0xff]
        %v5326 = vld [vmem:[%s808 + $0x22] sm:$0xff]
        %v5327 = vld [vmem:[%s808 + $0x32] sm:$0xff]
        %v5328 = vld [vmem:[%s808 + $0x3a] sm:$0xff]
        %v5329 = vld [vmem:[%s808 + $0x4a] sm:$0xff]
        %v5330 = vld [vmem:[%s808 + $0x52] sm:$0xff]
        %v5331 = vld [vmem:[%s808 + $0x62] sm:$0xff]
        %v5332 = vld [vmem:[%s808 + $0x6a] sm:$0xff]
        %v5333 = vld [vmem:[%s808 + $0x7a] sm:$0xff]
        %v5334 = vld [vmem:[%s808 + $0x82] sm:$0xff]
        %v5335 = vld [vmem:[%s808 + $0x92] sm:$0xff]
        %v5336 = vld [vmem:[%s808 + $0x9a] sm:$0xff]
        %v5337 = vld [vmem:[%s808 + $0xaa] sm:$0xff]
        %v5338 = vld [vmem:[%s808 + $0xb2] sm:$0xff]
        %v5339 = vld [vmem:[%s808 + $0xc2] sm:$0xff]
        %v5340 = vld [vmem:[%s808 + $0xca] sm:$0xff]
        %v5341 = vld [vmem:[%s808 + $0xda] sm:$0xff]
        %v5342 = vld [vmem:[%s808 + $0xe2] sm:$0xff]
        %v5343 = vld [vmem:[%s808 + $0xf2] sm:$0xff]
        %v5344 = vld [vmem:[%s808 + $0xfa] sm:$0xff]
        %v5345 = vld [vmem:[%s808 + $0x10a] sm:$0xff]
        %v5346 = vld [vmem:[%s808 + $0x112] sm:$0xff]
        %v5347 = vld [vmem:[%s808 + $0x122] sm:$0xff]
        %v5348 = vld [vmem:[%s808 + $0x12a] sm:$0xff]
        %v5349 = vld [vmem:[%s808 + $0x13a] sm:$0xff]
        %v5350 = vld [vmem:[%s808 + $0x142] sm:$0xff]
        %v5351 = vld [vmem:[%s808 + $0x152] sm:$0xff]
        %v5352 = vld [vmem:[%s808 + $0x15a] sm:$0xff]
        %v5353 = vld [vmem:[%s808 + $0x16a] sm:$0xff]
        %v5354 = vld [vmem:[%s808 + $0x172] sm:$0xff]
        %v5355 = vpack.c.bf16 %v5324, %v5323
        %v5356 = vpack.c.bf16 %v5326, %v5325
        %v5357 = vpack.c.bf16 %v5328, %v5327
        %v5358 = vpack.c.bf16 %v5330, %v5329
        %v5359 = vpack.c.bf16 %v5332, %v5331
        %v5360 = vpack.c.bf16 %v5334, %v5333
        %v5361 = vpack.c.bf16 %v5336, %v5335
        %v5362 = vpack.c.bf16 %v5338, %v5337
        %v5363 = vpack.c.bf16 %v5340, %v5339
        %v5364 = vpack.c.bf16 %v5342, %v5341
        %v5365 = vpack.c.bf16 %v5344, %v5343
        %v5366 = vpack.c.bf16 %v5346, %v5345
        %v5367 = vpack.c.bf16 %v5348, %v5347
        %v5368 = vpack.c.bf16 %v5350, %v5349
        %v5369 = vpack.c.bf16 %v5352, %v5351
        %v5370 = vpack.c.bf16 %v5354, %v5353
        %s5371 = scalar_lea.vmem %s5, 160
        %v5372 = vld [vmem:[%s5371] sm:$0xf]
        %v5373 = vld [vmem:[%s5371 + $0x4] sm:$0xf]
        %v5374 = vld [vmem:[%s5371 + $0x8] sm:$0xf]
        %v5375 = vld [vmem:[%s5371 + $0xc] sm:$0xf]
        %v5376 = vld [vmem:[%s5371 + $0x10] sm:$0xf]
        %v5377 = vld [vmem:[%s5371 + $0x14] sm:$0xf]
        %v5378 = vld [vmem:[%s5371 + $0x18] sm:$0xf]
        %v5379 = vld [vmem:[%s5371 + $0x1c] sm:$0xf]
        %v5388 = vunpack.c.l.b16 %v5372
        %v5389 = vunpack.c.l.b16 %v5373
        %v5390 = vunpack.c.l.b16 %v5374
        %v5391 = vunpack.c.l.b16 %v5375
        %v5392 = vunpack.c.l.b16 %v5376
        %v5393 = vunpack.c.l.b16 %v5377
        %v5394 = vunpack.c.l.b16 %v5378
        %v5395 = vunpack.c.l.b16 %v5379
        %v5396 = vpack.c.b16 %v5389, %v5388
        %v5397 = vpack.c.b16 %v5391, %v5390
        %v5398 = vpack.c.b16 %v5393, %v5392
        %v5399 = vpack.c.b16 %v5395, %v5394
        %v5405 = vsel %vm386, %v5355, 0
        %v5408 = vsel %vm386, %v5356, 0
        %v5411 = vsel %vm386, %v5357, 0
        %v5414 = vsel %vm386, %v5358, 0
        %v5417 = vsel %vm386, %v5359, 0
        %v5420 = vsel %vm386, %v5360, 0
        %v5423 = vsel %vm386, %v5361, 0
        %v5426 = vsel %vm386, %v5362, 0
        %v5429 = vsel %vm386, %v5363, 0
        %v5432 = vsel %vm386, %v5364, 0
        %v5435 = vsel %vm386, %v5365, 0
        %v5438 = vsel %vm386, %v5366, 0
        %v5441 = vsel %vm386, %v5367, 0
        %v5444 = vsel %vm386, %v5368, 0
        %v5447 = vsel %vm386, %v5369, 0
        %v5450 = vsel %vm386, %v5370, 0
        %5452 = vmatprep.subr.bf16.mxu0 0
        %5453 = vmatpush1.bf16.msra.mxu0 0
        %5454 = vmatprep.subr.bf16.mxu0 0
        %5455 = vmatpush1.bf16.msra.mxu0 0
        %5456 = vmatprep.subr.bf16.mxu0 0
        %5457 = vmatpush1.bf16.msra.mxu0 0
        %5458 = vmatprep.subr.bf16.mxu0 0
        %5459 = vmatpush1.bf16.msra.mxu0 0
        %5460 = vmatprep.subr.bf16.mxu0 0
        %5461 = vmatpush1.bf16.msra.mxu0 %v5399
        %5462 = vmatprep.subr.bf16.mxu0 0
        %5463 = vmatpush1.bf16.msra.mxu0 %v5398
        %5464 = vmatprep.subr.bf16.mxu0 0
        %5465 = vmatpush1.bf16.msra.mxu0 %v5397
        %5466 = vmatprep.subr.bf16.mxu0 0
        %5467 = vmatpush1.bf16.msra.mxu0 %v5396
        %5468 = vmatprep.subr.bf16.mxu0 0
        %5469 = vmatpush2.bf16.msra.mxu0 0
        %5470 = vmatprep.subr.bf16.mxu0 0
        %5471 = vmatpush2.bf16.msra.mxu0 0
        %5472 = vmatprep.subr.bf16.mxu0 0
        %5473 = vmatpush2.bf16.msra.mxu0 0
        %5474 = vmatprep.subr.bf16.mxu0 0
        %5475 = vmatpush2.bf16.msra.mxu0 0
        %5476 = vmatprep.subr.bf16.mxu0 0
        %5477 = vmatpush2.bf16.msra.mxu0 0
        %5478 = vmatprep.subr.bf16.mxu0 0
        %5479 = vmatpush2.bf16.msra.mxu0 0
        %5480 = vmatprep.subr.bf16.mxu0 0
        %5481 = vmatpush2.bf16.msra.mxu0 0
        %5482 = vmatprep.subr.bf16.mxu0 0
        %5483 = vmatpush2.bf16.msra.mxu0 0
        %5484 = vmatprep.mubr.bf16.mxu0 0
        %5485 = vmatmul.mubr.bf16.gmra.mxu0 %v5405
        %v5486 = vpop.f32.mrf.mxu0
        %v5487 = vadd.f32 0.0, %v5486
        %v5488 = vpop.f32.mrf.mxu0
        %v5489 = vpop.f32.mrf.mxu0
        %v5490 = vadd.f32 0.0, %v5489
        %v5491 = vpop.f32.mrf.mxu0
        %5492 = vmatprep.mubr.bf16.mxu0 0
        %5493 = vmatmul.mubr.bf16.gmra.mxu0 %v5408
        %v5494 = vpop.f32.mrf.mxu0
        %v5495 = vadd.f32 0.0, %v5494
        %v5496 = vpop.f32.mrf.mxu0
        %v5497 = vpop.f32.mrf.mxu0
        %v5498 = vadd.f32 0.0, %v5497
        %v5499 = vpop.f32.mrf.mxu0
        %5500 = vmatprep.mubr.bf16.mxu0 0
        %5501 = vmatmul.mubr.bf16.gmra.mxu0 %v5411
        %v5502 = vpop.f32.mrf.mxu0
        %v5503 = vadd.f32 0.0, %v5502
        %v5504 = vpop.f32.mrf.mxu0
        %v5505 = vpop.f32.mrf.mxu0
        %v5506 = vadd.f32 0.0, %v5505
        %v5507 = vpop.f32.mrf.mxu0
        %5508 = vmatprep.mubr.bf16.mxu0 0
        %5509 = vmatmul.mubr.bf16.gmra.mxu0 %v5414
        %v5510 = vpop.f32.mrf.mxu0
        %v5511 = vadd.f32 0.0, %v5510
        %v5512 = vpop.f32.mrf.mxu0
        %v5513 = vpop.f32.mrf.mxu0
        %v5514 = vadd.f32 0.0, %v5513
        %v5515 = vpop.f32.mrf.mxu0
        %5516 = vmatprep.mubr.bf16.mxu0 0
        %5517 = vmatmul.mubr.bf16.gmra.mxu0 %v5417
        %v5518 = vpop.f32.mrf.mxu0
        %v5519 = vadd.f32 0.0, %v5518
        %v5520 = vpop.f32.mrf.mxu0
        %v5521 = vpop.f32.mrf.mxu0
        %v5522 = vadd.f32 0.0, %v5521
        %v5523 = vpop.f32.mrf.mxu0
        %5524 = vmatprep.mubr.bf16.mxu0 0
        %5525 = vmatmul.mubr.bf16.gmra.mxu0 %v5420
        %v5526 = vpop.f32.mrf.mxu0
        %v5527 = vadd.f32 0.0, %v5526
        %v5528 = vpop.f32.mrf.mxu0
        %v5529 = vpop.f32.mrf.mxu0
        %v5530 = vadd.f32 0.0, %v5529
        %v5531 = vpop.f32.mrf.mxu0
        %5532 = vmatprep.mubr.bf16.mxu0 0
        %5533 = vmatmul.mubr.bf16.gmra.mxu0 %v5423
        %v5534 = vpop.f32.mrf.mxu0
        %v5535 = vadd.f32 0.0, %v5534
        %v5536 = vpop.f32.mrf.mxu0
        %v5537 = vpop.f32.mrf.mxu0
        %v5538 = vadd.f32 0.0, %v5537
        %v5539 = vpop.f32.mrf.mxu0
        %5540 = vmatprep.mubr.bf16.mxu0 0
        %5541 = vmatmul.mubr.bf16.gmra.mxu0 %v5426
        %v5542 = vpop.f32.mrf.mxu0
        %v5543 = vadd.f32 0.0, %v5542
        %v5544 = vpop.f32.mrf.mxu0
        %v5545 = vpop.f32.mrf.mxu0
        %v5546 = vadd.f32 0.0, %v5545
        %v5547 = vpop.f32.mrf.mxu0
        %5548 = vmatprep.mubr.bf16.mxu0 0
        %5549 = vmatmul.mubr.bf16.gmra.mxu0 %v5429
        %v5550 = vpop.f32.mrf.mxu0
        %v5551 = vadd.f32 0.0, %v5550
        %v5552 = vpop.f32.mrf.mxu0
        %v5553 = vpop.f32.mrf.mxu0
        %v5554 = vadd.f32 0.0, %v5553
        %v5555 = vpop.f32.mrf.mxu0
        %5556 = vmatprep.mubr.bf16.mxu0 0
        %5557 = vmatmul.mubr.bf16.gmra.mxu0 %v5432
        %v5558 = vpop.f32.mrf.mxu0
        %v5559 = vadd.f32 0.0, %v5558
        %v5560 = vpop.f32.mrf.mxu0
        %v5561 = vpop.f32.mrf.mxu0
        %v5562 = vadd.f32 0.0, %v5561
        %v5563 = vpop.f32.mrf.mxu0
        %5564 = vmatprep.mubr.bf16.mxu0 0
        %5565 = vmatmul.mubr.bf16.gmra.mxu0 %v5435
        %v5566 = vpop.f32.mrf.mxu0
        %v5567 = vadd.f32 0.0, %v5566
        %v5568 = vpop.f32.mrf.mxu0
        %v5569 = vpop.f32.mrf.mxu0
        %v5570 = vadd.f32 0.0, %v5569
        %v5571 = vpop.f32.mrf.mxu0
        %5572 = vmatprep.mubr.bf16.mxu0 0
        %5573 = vmatmul.mubr.bf16.gmra.mxu0 %v5438
        %v5574 = vpop.f32.mrf.mxu0
        %v5575 = vadd.f32 0.0, %v5574
        %v5576 = vpop.f32.mrf.mxu0
        %v5577 = vpop.f32.mrf.mxu0
        %v5578 = vadd.f32 0.0, %v5577
        %v5579 = vpop.f32.mrf.mxu0
        %5580 = vmatprep.mubr.bf16.mxu0 0
        %5581 = vmatmul.mubr.bf16.gmra.mxu0 %v5441
        %v5582 = vpop.f32.mrf.mxu0
        %v5583 = vadd.f32 0.0, %v5582
        %v5584 = vpop.f32.mrf.mxu0
        %v5585 = vpop.f32.mrf.mxu0
        %v5586 = vadd.f32 0.0, %v5585
        %v5587 = vpop.f32.mrf.mxu0
        %5588 = vmatprep.mubr.bf16.mxu0 0
        %5589 = vmatmul.mubr.bf16.gmra.mxu0 %v5444
        %v5590 = vpop.f32.mrf.mxu0
        %v5591 = vadd.f32 0.0, %v5590
        %v5592 = vpop.f32.mrf.mxu0
        %v5593 = vpop.f32.mrf.mxu0
        %v5594 = vadd.f32 0.0, %v5593
        %v5595 = vpop.f32.mrf.mxu0
        %5596 = vmatprep.mubr.bf16.mxu0 0
        %5597 = vmatmul.mubr.bf16.gmra.mxu0 %v5447
        %v5598 = vpop.f32.mrf.mxu0
        %v5599 = vadd.f32 0.0, %v5598
        %v5600 = vpop.f32.mrf.mxu0
        %v5601 = vpop.f32.mrf.mxu0
        %v5602 = vadd.f32 0.0, %v5601
        %v5603 = vpop.f32.mrf.mxu0
        %5604 = vmatprep.mubr.bf16.mxu0 0
        %5605 = vmatmul.mubr.bf16.gmra.mxu0 %v5450
        %v5606 = vpop.f32.mrf.mxu0
        %v5607 = vadd.f32 0.0, %v5606
        %v5608 = vpop.f32.mrf.mxu0
        %v5609 = vpop.f32.mrf.mxu0
        %v5610 = vadd.f32 0.0, %v5609
        %v5611 = vpop.f32.mrf.mxu0
        %5612 = vdwg.mxu0
        %v5613 = vadd.f32 %v5291, %v5487
        %v5614 = vadd.f32 %v5292, %v5490
        %v5615 = vadd.f32 %v5293, %v5495
        %v5616 = vadd.f32 %v5294, %v5498
        %v5617 = vadd.f32 %v5295, %v5503
        %v5618 = vadd.f32 %v5296, %v5506
        %v5619 = vadd.f32 %v5297, %v5511
        %v5620 = vadd.f32 %v5298, %v5514
        %v5621 = vadd.f32 %v5299, %v5519
        %v5622 = vadd.f32 %v5300, %v5522
        %v5623 = vadd.f32 %v5301, %v5527
        %v5624 = vadd.f32 %v5302, %v5530
        %v5625 = vadd.f32 %v5303, %v5535
        %v5626 = vadd.f32 %v5304, %v5538
        %v5627 = vadd.f32 %v5305, %v5543
        %v5628 = vadd.f32 %v5306, %v5546
        %v5629 = vadd.f32 %v5307, %v5551
        %v5630 = vadd.f32 %v5308, %v5554
        %v5631 = vadd.f32 %v5309, %v5559
        %v5632 = vadd.f32 %v5310, %v5562
        %v5633 = vadd.f32 %v5311, %v5567
        %v5634 = vadd.f32 %v5312, %v5570
        %v5635 = vadd.f32 %v5313, %v5575
        %v5636 = vadd.f32 %v5314, %v5578
        %v5637 = vadd.f32 %v5315, %v5583
        %v5638 = vadd.f32 %v5316, %v5586
        %v5639 = vadd.f32 %v5317, %v5591
        %v5640 = vadd.f32 %v5318, %v5594
        %v5641 = vadd.f32 %v5319, %v5599
        %v5642 = vadd.f32 %v5320, %v5602
        %v5643 = vadd.f32 %v5321, %v5607
        %v5644 = vadd.f32 %v5322, %v5610
        %v5645 = vld [vmem:[%s2708] sm:$0xff]
        %v5646 = vld [vmem:[%s2708 + $0x8] sm:$0xff]
        %v5647 = vld [vmem:[%s2708 + $0x18] sm:$0xff]
        %v5648 = vld [vmem:[%s2708 + $0x20] sm:$0xff]
        %v5649 = vld [vmem:[%s2708 + $0x30] sm:$0xff]
        %v5650 = vld [vmem:[%s2708 + $0x38] sm:$0xff]
        %v5651 = vld [vmem:[%s2708 + $0x48] sm:$0xff]
        %v5652 = vld [vmem:[%s2708 + $0x50] sm:$0xff]
        %v5653 = vld [vmem:[%s2708 + $0x60] sm:$0xff]
        %v5654 = vld [vmem:[%s2708 + $0x68] sm:$0xff]
        %v5655 = vld [vmem:[%s2708 + $0x78] sm:$0xff]
        %v5656 = vld [vmem:[%s2708 + $0x80] sm:$0xff]
        %v5657 = vld [vmem:[%s2708 + $0x90] sm:$0xff]
        %v5658 = vld [vmem:[%s2708 + $0x98] sm:$0xff]
        %v5659 = vld [vmem:[%s2708 + $0xa8] sm:$0xff]
        %v5660 = vld [vmem:[%s2708 + $0xb0] sm:$0xff]
        %v5661 = vld [vmem:[%s2708 + $0xc0] sm:$0xff]
        %v5662 = vld [vmem:[%s2708 + $0xc8] sm:$0xff]
        %v5663 = vld [vmem:[%s2708 + $0xd8] sm:$0xff]
        %v5664 = vld [vmem:[%s2708 + $0xe0] sm:$0xff]
        %v5665 = vld [vmem:[%s2708 + $0xf0] sm:$0xff]
        %v5666 = vld [vmem:[%s2708 + $0xf8] sm:$0xff]
        %v5667 = vld [vmem:[%s2708 + $0x108] sm:$0xff]
        %v5668 = vld [vmem:[%s2708 + $0x110] sm:$0xff]
        %v5669 = vld [vmem:[%s2708 + $0x120] sm:$0xff]
        %v5670 = vld [vmem:[%s2708 + $0x128] sm:$0xff]
        %v5671 = vld [vmem:[%s2708 + $0x138] sm:$0xff]
        %v5672 = vld [vmem:[%s2708 + $0x140] sm:$0xff]
        %v5673 = vld [vmem:[%s2708 + $0x150] sm:$0xff]
        %v5674 = vld [vmem:[%s2708 + $0x158] sm:$0xff]
        %v5675 = vld [vmem:[%s2708 + $0x168] sm:$0xff]
        %v5676 = vld [vmem:[%s2708 + $0x170] sm:$0xff]
        %v5677 = vpack.c.bf16 %v5646, %v5645
        %v5678 = vpack.c.bf16 %v5648, %v5647
        %v5679 = vpack.c.bf16 %v5650, %v5649
        %v5680 = vpack.c.bf16 %v5652, %v5651
        %v5681 = vpack.c.bf16 %v5654, %v5653
        %v5682 = vpack.c.bf16 %v5656, %v5655
        %v5683 = vpack.c.bf16 %v5658, %v5657
        %v5684 = vpack.c.bf16 %v5660, %v5659
        %v5685 = vpack.c.bf16 %v5662, %v5661
        %v5686 = vpack.c.bf16 %v5664, %v5663
        %v5687 = vpack.c.bf16 %v5666, %v5665
        %v5688 = vpack.c.bf16 %v5668, %v5667
        %v5689 = vpack.c.bf16 %v5670, %v5669
        %v5690 = vpack.c.bf16 %v5672, %v5671
        %v5691 = vpack.c.bf16 %v5674, %v5673
        %v5692 = vpack.c.bf16 %v5676, %v5675
        %s5693 = scalar_lea.vmem %s5, 192
        %v5694 = vld [vmem:[%s5693] sm:$0xf]
        %v5695 = vld [vmem:[%s5693 + $0x4] sm:$0xf]
        %v5696 = vld [vmem:[%s5693 + $0x8] sm:$0xf]
        %v5697 = vld [vmem:[%s5693 + $0xc] sm:$0xf]
        %v5698 = vld [vmem:[%s5693 + $0x10] sm:$0xf]
        %v5699 = vld [vmem:[%s5693 + $0x14] sm:$0xf]
        %v5700 = vld [vmem:[%s5693 + $0x18] sm:$0xf]
        %v5701 = vld [vmem:[%s5693 + $0x1c] sm:$0xf]
        %v5710 = vunpack.c.l.b16 %v5694
        %v5711 = vunpack.c.l.b16 %v5695
        %v5712 = vunpack.c.l.b16 %v5696
        %v5713 = vunpack.c.l.b16 %v5697
        %v5714 = vunpack.c.l.b16 %v5698
        %v5715 = vunpack.c.l.b16 %v5699
        %v5716 = vunpack.c.l.b16 %v5700
        %v5717 = vunpack.c.l.b16 %v5701
        %v5718 = vpack.c.b16 %v5711, %v5710
        %v5719 = vpack.c.b16 %v5713, %v5712
        %v5720 = vpack.c.b16 %v5715, %v5714
        %v5721 = vpack.c.b16 %v5717, %v5716
        %v5727 = vsel %vm386, %v5677, 0
        %v5730 = vsel %vm386, %v5678, 0
        %v5733 = vsel %vm386, %v5679, 0
        %v5736 = vsel %vm386, %v5680, 0
        %v5739 = vsel %vm386, %v5681, 0
        %v5742 = vsel %vm386, %v5682, 0
        %v5745 = vsel %vm386, %v5683, 0
        %v5748 = vsel %vm386, %v5684, 0
        %v5751 = vsel %vm386, %v5685, 0
        %v5754 = vsel %vm386, %v5686, 0
        %v5757 = vsel %vm386, %v5687, 0
        %v5760 = vsel %vm386, %v5688, 0
        %v5763 = vsel %vm386, %v5689, 0
        %v5766 = vsel %vm386, %v5690, 0
        %v5769 = vsel %vm386, %v5691, 0
        %v5772 = vsel %vm386, %v5692, 0
        %5774 = vmatprep.subr.bf16.mxu0 0
        %5775 = vmatpush1.bf16.msra.mxu0 0
        %5776 = vmatprep.subr.bf16.mxu0 0
        %5777 = vmatpush1.bf16.msra.mxu0 0
        %5778 = vmatprep.subr.bf16.mxu0 0
        %5779 = vmatpush1.bf16.msra.mxu0 0
        %5780 = vmatprep.subr.bf16.mxu0 0
        %5781 = vmatpush1.bf16.msra.mxu0 0
        %5782 = vmatprep.subr.bf16.mxu0 0
        %5783 = vmatpush1.bf16.msra.mxu0 %v5721
        %5784 = vmatprep.subr.bf16.mxu0 0
        %5785 = vmatpush1.bf16.msra.mxu0 %v5720
        %5786 = vmatprep.subr.bf16.mxu0 0
        %5787 = vmatpush1.bf16.msra.mxu0 %v5719
        %5788 = vmatprep.subr.bf16.mxu0 0
        %5789 = vmatpush1.bf16.msra.mxu0 %v5718
        %5790 = vmatprep.subr.bf16.mxu0 0
        %5791 = vmatpush2.bf16.msra.mxu0 0
        %5792 = vmatprep.subr.bf16.mxu0 0
        %5793 = vmatpush2.bf16.msra.mxu0 0
        %5794 = vmatprep.subr.bf16.mxu0 0
        %5795 = vmatpush2.bf16.msra.mxu0 0
        %5796 = vmatprep.subr.bf16.mxu0 0
        %5797 = vmatpush2.bf16.msra.mxu0 0
        %5798 = vmatprep.subr.bf16.mxu0 0
        %5799 = vmatpush2.bf16.msra.mxu0 0
        %5800 = vmatprep.subr.bf16.mxu0 0
        %5801 = vmatpush2.bf16.msra.mxu0 0
        %5802 = vmatprep.subr.bf16.mxu0 0
        %5803 = vmatpush2.bf16.msra.mxu0 0
        %5804 = vmatprep.subr.bf16.mxu0 0
        %5805 = vmatpush2.bf16.msra.mxu0 0
        %5806 = vmatprep.mubr.bf16.mxu0 0
        %5807 = vmatmul.mubr.bf16.gmra.mxu0 %v5727
        %v5808 = vpop.f32.mrf.mxu0
        %v5809 = vadd.f32 0.0, %v5808
        %v5810 = vpop.f32.mrf.mxu0
        %v5811 = vpop.f32.mrf.mxu0
        %v5812 = vadd.f32 0.0, %v5811
        %v5813 = vpop.f32.mrf.mxu0
        %5814 = vmatprep.mubr.bf16.mxu0 0
        %5815 = vmatmul.mubr.bf16.gmra.mxu0 %v5730
        %v5816 = vpop.f32.mrf.mxu0
        %v5817 = vadd.f32 0.0, %v5816
        %v5818 = vpop.f32.mrf.mxu0
        %v5819 = vpop.f32.mrf.mxu0
        %v5820 = vadd.f32 0.0, %v5819
        %v5821 = vpop.f32.mrf.mxu0
        %5822 = vmatprep.mubr.bf16.mxu0 0
        %5823 = vmatmul.mubr.bf16.gmra.mxu0 %v5733
        %v5824 = vpop.f32.mrf.mxu0
        %v5825 = vadd.f32 0.0, %v5824
        %v5826 = vpop.f32.mrf.mxu0
        %v5827 = vpop.f32.mrf.mxu0
        %v5828 = vadd.f32 0.0, %v5827
        %v5829 = vpop.f32.mrf.mxu0
        %5830 = vmatprep.mubr.bf16.mxu0 0
        %5831 = vmatmul.mubr.bf16.gmra.mxu0 %v5736
        %v5832 = vpop.f32.mrf.mxu0
        %v5833 = vadd.f32 0.0, %v5832
        %v5834 = vpop.f32.mrf.mxu0
        %v5835 = vpop.f32.mrf.mxu0
        %v5836 = vadd.f32 0.0, %v5835
        %v5837 = vpop.f32.mrf.mxu0
        %5838 = vmatprep.mubr.bf16.mxu0 0
        %5839 = vmatmul.mubr.bf16.gmra.mxu0 %v5739
        %v5840 = vpop.f32.mrf.mxu0
        %v5841 = vadd.f32 0.0, %v5840
        %v5842 = vpop.f32.mrf.mxu0
        %v5843 = vpop.f32.mrf.mxu0
        %v5844 = vadd.f32 0.0, %v5843
        %v5845 = vpop.f32.mrf.mxu0
        %5846 = vmatprep.mubr.bf16.mxu0 0
        %5847 = vmatmul.mubr.bf16.gmra.mxu0 %v5742
        %v5848 = vpop.f32.mrf.mxu0
        %v5849 = vadd.f32 0.0, %v5848
        %v5850 = vpop.f32.mrf.mxu0
        %v5851 = vpop.f32.mrf.mxu0
        %v5852 = vadd.f32 0.0, %v5851
        %v5853 = vpop.f32.mrf.mxu0
        %5854 = vmatprep.mubr.bf16.mxu0 0
        %5855 = vmatmul.mubr.bf16.gmra.mxu0 %v5745
        %v5856 = vpop.f32.mrf.mxu0
        %v5857 = vadd.f32 0.0, %v5856
        %v5858 = vpop.f32.mrf.mxu0
        %v5859 = vpop.f32.mrf.mxu0
        %v5860 = vadd.f32 0.0, %v5859
        %v5861 = vpop.f32.mrf.mxu0
        %5862 = vmatprep.mubr.bf16.mxu0 0
        %5863 = vmatmul.mubr.bf16.gmra.mxu0 %v5748
        %v5864 = vpop.f32.mrf.mxu0
        %v5865 = vadd.f32 0.0, %v5864
        %v5866 = vpop.f32.mrf.mxu0
        %v5867 = vpop.f32.mrf.mxu0
        %v5868 = vadd.f32 0.0, %v5867
        %v5869 = vpop.f32.mrf.mxu0
        %5870 = vmatprep.mubr.bf16.mxu0 0
        %5871 = vmatmul.mubr.bf16.gmra.mxu0 %v5751
        %v5872 = vpop.f32.mrf.mxu0
        %v5873 = vadd.f32 0.0, %v5872
        %v5874 = vpop.f32.mrf.mxu0
        %v5875 = vpop.f32.mrf.mxu0
        %v5876 = vadd.f32 0.0, %v5875
        %v5877 = vpop.f32.mrf.mxu0
        %5878 = vmatprep.mubr.bf16.mxu0 0
        %5879 = vmatmul.mubr.bf16.gmra.mxu0 %v5754
        %v5880 = vpop.f32.mrf.mxu0
        %v5881 = vadd.f32 0.0, %v5880
        %v5882 = vpop.f32.mrf.mxu0
        %v5883 = vpop.f32.mrf.mxu0
        %v5884 = vadd.f32 0.0, %v5883
        %v5885 = vpop.f32.mrf.mxu0
        %5886 = vmatprep.mubr.bf16.mxu0 0
        %5887 = vmatmul.mubr.bf16.gmra.mxu0 %v5757
        %v5888 = vpop.f32.mrf.mxu0
        %v5889 = vadd.f32 0.0, %v5888
        %v5890 = vpop.f32.mrf.mxu0
        %v5891 = vpop.f32.mrf.mxu0
        %v5892 = vadd.f32 0.0, %v5891
        %v5893 = vpop.f32.mrf.mxu0
        %5894 = vmatprep.mubr.bf16.mxu0 0
        %5895 = vmatmul.mubr.bf16.gmra.mxu0 %v5760
        %v5896 = vpop.f32.mrf.mxu0
        %v5897 = vadd.f32 0.0, %v5896
        %v5898 = vpop.f32.mrf.mxu0
        %v5899 = vpop.f32.mrf.mxu0
        %v5900 = vadd.f32 0.0, %v5899
        %v5901 = vpop.f32.mrf.mxu0
        %5902 = vmatprep.mubr.bf16.mxu0 0
        %5903 = vmatmul.mubr.bf16.gmra.mxu0 %v5763
        %v5904 = vpop.f32.mrf.mxu0
        %v5905 = vadd.f32 0.0, %v5904
        %v5906 = vpop.f32.mrf.mxu0
        %v5907 = vpop.f32.mrf.mxu0
        %v5908 = vadd.f32 0.0, %v5907
        %v5909 = vpop.f32.mrf.mxu0
        %5910 = vmatprep.mubr.bf16.mxu0 0
        %5911 = vmatmul.mubr.bf16.gmra.mxu0 %v5766
        %v5912 = vpop.f32.mrf.mxu0
        %v5913 = vadd.f32 0.0, %v5912
        %v5914 = vpop.f32.mrf.mxu0
        %v5915 = vpop.f32.mrf.mxu0
        %v5916 = vadd.f32 0.0, %v5915
        %v5917 = vpop.f32.mrf.mxu0
        %5918 = vmatprep.mubr.bf16.mxu0 0
        %5919 = vmatmul.mubr.bf16.gmra.mxu0 %v5769
        %v5920 = vpop.f32.mrf.mxu0
        %v5921 = vadd.f32 0.0, %v5920
        %v5922 = vpop.f32.mrf.mxu0
        %v5923 = vpop.f32.mrf.mxu0
        %v5924 = vadd.f32 0.0, %v5923
        %v5925 = vpop.f32.mrf.mxu0
        %5926 = vmatprep.mubr.bf16.mxu0 0
        %5927 = vmatmul.mubr.bf16.gmra.mxu0 %v5772
        %v5928 = vpop.f32.mrf.mxu0
        %v5929 = vadd.f32 0.0, %v5928
        %v5930 = vpop.f32.mrf.mxu0
        %v5931 = vpop.f32.mrf.mxu0
        %v5932 = vadd.f32 0.0, %v5931
        %v5933 = vpop.f32.mrf.mxu0
        %5934 = vdwg.mxu0
        %v5935 = vadd.f32 %v5613, %v5809
        %v5936 = vadd.f32 %v5614, %v5812
        %v5937 = vadd.f32 %v5615, %v5817
        %v5938 = vadd.f32 %v5616, %v5820
        %v5939 = vadd.f32 %v5617, %v5825
        %v5940 = vadd.f32 %v5618, %v5828
        %v5941 = vadd.f32 %v5619, %v5833
        %v5942 = vadd.f32 %v5620, %v5836
        %v5943 = vadd.f32 %v5621, %v5841
        %v5944 = vadd.f32 %v5622, %v5844
        %v5945 = vadd.f32 %v5623, %v5849
        %v5946 = vadd.f32 %v5624, %v5852
        %v5947 = vadd.f32 %v5625, %v5857
        %v5948 = vadd.f32 %v5626, %v5860
        %v5949 = vadd.f32 %v5627, %v5865
        %v5950 = vadd.f32 %v5628, %v5868
        %v5951 = vadd.f32 %v5629, %v5873
        %v5952 = vadd.f32 %v5630, %v5876
        %v5953 = vadd.f32 %v5631, %v5881
        %v5954 = vadd.f32 %v5632, %v5884
        %v5955 = vadd.f32 %v5633, %v5889
        %v5956 = vadd.f32 %v5634, %v5892
        %v5957 = vadd.f32 %v5635, %v5897
        %v5958 = vadd.f32 %v5636, %v5900
        %v5959 = vadd.f32 %v5637, %v5905
        %v5960 = vadd.f32 %v5638, %v5908
        %v5961 = vadd.f32 %v5639, %v5913
        %v5962 = vadd.f32 %v5640, %v5916
        %v5963 = vadd.f32 %v5641, %v5921
        %v5964 = vadd.f32 %v5642, %v5924
        %v5965 = vadd.f32 %v5643, %v5929
        %v5966 = vadd.f32 %v5644, %v5932
        %v5967 = vld [vmem:[%s2708 + $0x1] sm:$0xff]
        %v5968 = vld [vmem:[%s2708 + $0x9] sm:$0xff]
        %v5969 = vld [vmem:[%s2708 + $0x19] sm:$0xff]
        %v5970 = vld [vmem:[%s2708 + $0x21] sm:$0xff]
        %v5971 = vld [vmem:[%s2708 + $0x31] sm:$0xff]
        %v5972 = vld [vmem:[%s2708 + $0x39] sm:$0xff]
        %v5973 = vld [vmem:[%s2708 + $0x49] sm:$0xff]
        %v5974 = vld [vmem:[%s2708 + $0x51] sm:$0xff]
        %v5975 = vld [vmem:[%s2708 + $0x61] sm:$0xff]
        %v5976 = vld [vmem:[%s2708 + $0x69] sm:$0xff]
        %v5977 = vld [vmem:[%s2708 + $0x79] sm:$0xff]
        %v5978 = vld [vmem:[%s2708 + $0x81] sm:$0xff]
        %v5979 = vld [vmem:[%s2708 + $0x91] sm:$0xff]
        %v5980 = vld [vmem:[%s2708 + $0x99] sm:$0xff]
        %v5981 = vld [vmem:[%s2708 + $0xa9] sm:$0xff]
        %v5982 = vld [vmem:[%s2708 + $0xb1] sm:$0xff]
        %v5983 = vld [vmem:[%s2708 + $0xc1] sm:$0xff]
        %v5984 = vld [vmem:[%s2708 + $0xc9] sm:$0xff]
        %v5985 = vld [vmem:[%s2708 + $0xd9] sm:$0xff]
        %v5986 = vld [vmem:[%s2708 + $0xe1] sm:$0xff]
        %v5987 = vld [vmem:[%s2708 + $0xf1] sm:$0xff]
        %v5988 = vld [vmem:[%s2708 + $0xf9] sm:$0xff]
        %v5989 = vld [vmem:[%s2708 + $0x109] sm:$0xff]
        %v5990 = vld [vmem:[%s2708 + $0x111] sm:$0xff]
        %v5991 = vld [vmem:[%s2708 + $0x121] sm:$0xff]
        %v5992 = vld [vmem:[%s2708 + $0x129] sm:$0xff]
        %v5993 = vld [vmem:[%s2708 + $0x139] sm:$0xff]
        %v5994 = vld [vmem:[%s2708 + $0x141] sm:$0xff]
        %v5995 = vld [vmem:[%s2708 + $0x151] sm:$0xff]
        %v5996 = vld [vmem:[%s2708 + $0x159] sm:$0xff]
        %v5997 = vld [vmem:[%s2708 + $0x169] sm:$0xff]
        %v5998 = vld [vmem:[%s2708 + $0x171] sm:$0xff]
        %v5999 = vpack.c.bf16 %v5968, %v5967
        %v6000 = vpack.c.bf16 %v5970, %v5969
        %v6001 = vpack.c.bf16 %v5972, %v5971
        %v6002 = vpack.c.bf16 %v5974, %v5973
        %v6003 = vpack.c.bf16 %v5976, %v5975
        %v6004 = vpack.c.bf16 %v5978, %v5977
        %v6005 = vpack.c.bf16 %v5980, %v5979
        %v6006 = vpack.c.bf16 %v5982, %v5981
        %v6007 = vpack.c.bf16 %v5984, %v5983
        %v6008 = vpack.c.bf16 %v5986, %v5985
        %v6009 = vpack.c.bf16 %v5988, %v5987
        %v6010 = vpack.c.bf16 %v5990, %v5989
        %v6011 = vpack.c.bf16 %v5992, %v5991
        %v6012 = vpack.c.bf16 %v5994, %v5993
        %v6013 = vpack.c.bf16 %v5996, %v5995
        %v6014 = vpack.c.bf16 %v5998, %v5997
        %s6015 = scalar_lea.vmem %s5, 224
        %v6016 = vld [vmem:[%s6015] sm:$0xf]
        %v6017 = vld [vmem:[%s6015 + $0x4] sm:$0xf]
        %v6018 = vld [vmem:[%s6015 + $0x8] sm:$0xf]
        %v6019 = vld [vmem:[%s6015 + $0xc] sm:$0xf]
        %v6020 = vld [vmem:[%s6015 + $0x10] sm:$0xf]
        %v6021 = vld [vmem:[%s6015 + $0x14] sm:$0xf]
        %v6022 = vld [vmem:[%s6015 + $0x18] sm:$0xf]
        %v6023 = vld [vmem:[%s6015 + $0x1c] sm:$0xf]
        %v6032 = vunpack.c.l.b16 %v6016
        %v6033 = vunpack.c.l.b16 %v6017
        %v6034 = vunpack.c.l.b16 %v6018
        %v6035 = vunpack.c.l.b16 %v6019
        %v6036 = vunpack.c.l.b16 %v6020
        %v6037 = vunpack.c.l.b16 %v6021
        %v6038 = vunpack.c.l.b16 %v6022
        %v6039 = vunpack.c.l.b16 %v6023
        %v6040 = vpack.c.b16 %v6033, %v6032
        %v6041 = vpack.c.b16 %v6035, %v6034
        %v6042 = vpack.c.b16 %v6037, %v6036
        %v6043 = vpack.c.b16 %v6039, %v6038
        %v6049 = vsel %vm386, %v5999, 0
        %v6052 = vsel %vm386, %v6000, 0
        %v6055 = vsel %vm386, %v6001, 0
        %v6058 = vsel %vm386, %v6002, 0
        %v6061 = vsel %vm386, %v6003, 0
        %v6064 = vsel %vm386, %v6004, 0
        %v6067 = vsel %vm386, %v6005, 0
        %v6070 = vsel %vm386, %v6006, 0
        %v6073 = vsel %vm386, %v6007, 0
        %v6076 = vsel %vm386, %v6008, 0
        %v6079 = vsel %vm386, %v6009, 0
        %v6082 = vsel %vm386, %v6010, 0
        %v6085 = vsel %vm386, %v6011, 0
        %v6088 = vsel %vm386, %v6012, 0
        %v6091 = vsel %vm386, %v6013, 0
        %v6094 = vsel %vm386, %v6014, 0
        %6096 = vmatprep.subr.bf16.mxu0 0
        %6097 = vmatpush1.bf16.msra.mxu0 0
        %6098 = vmatprep.subr.bf16.mxu0 0
        %6099 = vmatpush1.bf16.msra.mxu0 0
        %6100 = vmatprep.subr.bf16.mxu0 0
        %6101 = vmatpush1.bf16.msra.mxu0 0
        %6102 = vmatprep.subr.bf16.mxu0 0
        %6103 = vmatpush1.bf16.msra.mxu0 0
        %6104 = vmatprep.subr.bf16.mxu0 0
        %6105 = vmatpush1.bf16.msra.mxu0 %v6043
        %6106 = vmatprep.subr.bf16.mxu0 0
        %6107 = vmatpush1.bf16.msra.mxu0 %v6042
        %6108 = vmatprep.subr.bf16.mxu0 0
        %6109 = vmatpush1.bf16.msra.mxu0 %v6041
        %6110 = vmatprep.subr.bf16.mxu0 0
        %6111 = vmatpush1.bf16.msra.mxu0 %v6040
        %6112 = vmatprep.subr.bf16.mxu0 0
        %6113 = vmatpush2.bf16.msra.mxu0 0
        %6114 = vmatprep.subr.bf16.mxu0 0
        %6115 = vmatpush2.bf16.msra.mxu0 0
        %6116 = vmatprep.subr.bf16.mxu0 0
        %6117 = vmatpush2.bf16.msra.mxu0 0
        %6118 = vmatprep.subr.bf16.mxu0 0
        %6119 = vmatpush2.bf16.msra.mxu0 0
        %6120 = vmatprep.subr.bf16.mxu0 0
        %6121 = vmatpush2.bf16.msra.mxu0 0
        %6122 = vmatprep.subr.bf16.mxu0 0
        %6123 = vmatpush2.bf16.msra.mxu0 0
        %6124 = vmatprep.subr.bf16.mxu0 0
        %6125 = vmatpush2.bf16.msra.mxu0 0
        %6126 = vmatprep.subr.bf16.mxu0 0
        %6127 = vmatpush2.bf16.msra.mxu0 0
        %6128 = vmatprep.mubr.bf16.mxu0 0
        %6129 = vmatmul.mubr.bf16.gmra.mxu0 %v6049
        %v6130 = vpop.f32.mrf.mxu0
        %v6131 = vadd.f32 0.0, %v6130
        %v6132 = vpop.f32.mrf.mxu0
        %v6133 = vpop.f32.mrf.mxu0
        %v6134 = vadd.f32 0.0, %v6133
        %v6135 = vpop.f32.mrf.mxu0
        %6136 = vmatprep.mubr.bf16.mxu0 0
        %6137 = vmatmul.mubr.bf16.gmra.mxu0 %v6052
        %v6138 = vpop.f32.mrf.mxu0
        %v6139 = vadd.f32 0.0, %v6138
        %v6140 = vpop.f32.mrf.mxu0
        %v6141 = vpop.f32.mrf.mxu0
        %v6142 = vadd.f32 0.0, %v6141
        %v6143 = vpop.f32.mrf.mxu0
        %6144 = vmatprep.mubr.bf16.mxu0 0
        %6145 = vmatmul.mubr.bf16.gmra.mxu0 %v6055
        %v6146 = vpop.f32.mrf.mxu0
        %v6147 = vadd.f32 0.0, %v6146
        %v6148 = vpop.f32.mrf.mxu0
        %v6149 = vpop.f32.mrf.mxu0
        %v6150 = vadd.f32 0.0, %v6149
        %v6151 = vpop.f32.mrf.mxu0
        %6152 = vmatprep.mubr.bf16.mxu0 0
        %6153 = vmatmul.mubr.bf16.gmra.mxu0 %v6058
        %v6154 = vpop.f32.mrf.mxu0
        %v6155 = vadd.f32 0.0, %v6154
        %v6156 = vpop.f32.mrf.mxu0
        %v6157 = vpop.f32.mrf.mxu0
        %v6158 = vadd.f32 0.0, %v6157
        %v6159 = vpop.f32.mrf.mxu0
        %6160 = vmatprep.mubr.bf16.mxu0 0
        %6161 = vmatmul.mubr.bf16.gmra.mxu0 %v6061
        %v6162 = vpop.f32.mrf.mxu0
        %v6163 = vadd.f32 0.0, %v6162
        %v6164 = vpop.f32.mrf.mxu0
        %v6165 = vpop.f32.mrf.mxu0
        %v6166 = vadd.f32 0.0, %v6165
        %v6167 = vpop.f32.mrf.mxu0
        %6168 = vmatprep.mubr.bf16.mxu0 0
        %6169 = vmatmul.mubr.bf16.gmra.mxu0 %v6064
        %v6170 = vpop.f32.mrf.mxu0
        %v6171 = vadd.f32 0.0, %v6170
        %v6172 = vpop.f32.mrf.mxu0
        %v6173 = vpop.f32.mrf.mxu0
        %v6174 = vadd.f32 0.0, %v6173
        %v6175 = vpop.f32.mrf.mxu0
        %6176 = vmatprep.mubr.bf16.mxu0 0
        %6177 = vmatmul.mubr.bf16.gmra.mxu0 %v6067
        %v6178 = vpop.f32.mrf.mxu0
        %v6179 = vadd.f32 0.0, %v6178
        %v6180 = vpop.f32.mrf.mxu0
        %v6181 = vpop.f32.mrf.mxu0
        %v6182 = vadd.f32 0.0, %v6181
        %v6183 = vpop.f32.mrf.mxu0
        %6184 = vmatprep.mubr.bf16.mxu0 0
        %6185 = vmatmul.mubr.bf16.gmra.mxu0 %v6070
        %v6186 = vpop.f32.mrf.mxu0
        %v6187 = vadd.f32 0.0, %v6186
        %v6188 = vpop.f32.mrf.mxu0
        %v6189 = vpop.f32.mrf.mxu0
        %v6190 = vadd.f32 0.0, %v6189
        %v6191 = vpop.f32.mrf.mxu0
        %6192 = vmatprep.mubr.bf16.mxu0 0
        %6193 = vmatmul.mubr.bf16.gmra.mxu0 %v6073
        %v6194 = vpop.f32.mrf.mxu0
        %v6195 = vadd.f32 0.0, %v6194
        %v6196 = vpop.f32.mrf.mxu0
        %v6197 = vpop.f32.mrf.mxu0
        %v6198 = vadd.f32 0.0, %v6197
        %v6199 = vpop.f32.mrf.mxu0
        %6200 = vmatprep.mubr.bf16.mxu0 0
        %6201 = vmatmul.mubr.bf16.gmra.mxu0 %v6076
        %v6202 = vpop.f32.mrf.mxu0
        %v6203 = vadd.f32 0.0, %v6202
        %v6204 = vpop.f32.mrf.mxu0
        %v6205 = vpop.f32.mrf.mxu0
        %v6206 = vadd.f32 0.0, %v6205
        %v6207 = vpop.f32.mrf.mxu0
        %6208 = vmatprep.mubr.bf16.mxu0 0
        %6209 = vmatmul.mubr.bf16.gmra.mxu0 %v6079
        %v6210 = vpop.f32.mrf.mxu0
        %v6211 = vadd.f32 0.0, %v6210
        %v6212 = vpop.f32.mrf.mxu0
        %v6213 = vpop.f32.mrf.mxu0
        %v6214 = vadd.f32 0.0, %v6213
        %v6215 = vpop.f32.mrf.mxu0
        %6216 = vmatprep.mubr.bf16.mxu0 0
        %6217 = vmatmul.mubr.bf16.gmra.mxu0 %v6082
        %v6218 = vpop.f32.mrf.mxu0
        %v6219 = vadd.f32 0.0, %v6218
        %v6220 = vpop.f32.mrf.mxu0
        %v6221 = vpop.f32.mrf.mxu0
        %v6222 = vadd.f32 0.0, %v6221
        %v6223 = vpop.f32.mrf.mxu0
        %6224 = vmatprep.mubr.bf16.mxu0 0
        %6225 = vmatmul.mubr.bf16.gmra.mxu0 %v6085
        %v6226 = vpop.f32.mrf.mxu0
        %v6227 = vadd.f32 0.0, %v6226
        %v6228 = vpop.f32.mrf.mxu0
        %v6229 = vpop.f32.mrf.mxu0
        %v6230 = vadd.f32 0.0, %v6229
        %v6231 = vpop.f32.mrf.mxu0
        %6232 = vmatprep.mubr.bf16.mxu0 0
        %6233 = vmatmul.mubr.bf16.gmra.mxu0 %v6088
        %v6234 = vpop.f32.mrf.mxu0
        %v6235 = vadd.f32 0.0, %v6234
        %v6236 = vpop.f32.mrf.mxu0
        %v6237 = vpop.f32.mrf.mxu0
        %v6238 = vadd.f32 0.0, %v6237
        %v6239 = vpop.f32.mrf.mxu0
        %6240 = vmatprep.mubr.bf16.mxu0 0
        %6241 = vmatmul.mubr.bf16.gmra.mxu0 %v6091
        %v6242 = vpop.f32.mrf.mxu0
        %v6243 = vadd.f32 0.0, %v6242
        %v6244 = vpop.f32.mrf.mxu0
        %v6245 = vpop.f32.mrf.mxu0
        %v6246 = vadd.f32 0.0, %v6245
        %v6247 = vpop.f32.mrf.mxu0
        %6248 = vmatprep.mubr.bf16.mxu0 0
        %6249 = vmatmul.mubr.bf16.gmra.mxu0 %v6094
        %v6250 = vpop.f32.mrf.mxu0
        %v6251 = vadd.f32 0.0, %v6250
        %v6252 = vpop.f32.mrf.mxu0
        %v6253 = vpop.f32.mrf.mxu0
        %v6254 = vadd.f32 0.0, %v6253
        %v6255 = vpop.f32.mrf.mxu0
        %6256 = vdwg.mxu0
        %v6257 = vadd.f32 %v5935, %v6131
        %v6258 = vadd.f32 %v5936, %v6134
        %v6259 = vadd.f32 %v5937, %v6139
        %v6260 = vadd.f32 %v5938, %v6142
        %v6261 = vadd.f32 %v5939, %v6147
        %v6262 = vadd.f32 %v5940, %v6150
        %v6263 = vadd.f32 %v5941, %v6155
        %v6264 = vadd.f32 %v5942, %v6158
        %v6265 = vadd.f32 %v5943, %v6163
        %v6266 = vadd.f32 %v5944, %v6166
        %v6267 = vadd.f32 %v5945, %v6171
        %v6268 = vadd.f32 %v5946, %v6174
        %v6269 = vadd.f32 %v5947, %v6179
        %v6270 = vadd.f32 %v5948, %v6182
        %v6271 = vadd.f32 %v5949, %v6187
        %v6272 = vadd.f32 %v5950, %v6190
        %v6273 = vadd.f32 %v5951, %v6195
        %v6274 = vadd.f32 %v5952, %v6198
        %v6275 = vadd.f32 %v5953, %v6203
        %v6276 = vadd.f32 %v5954, %v6206
        %v6277 = vadd.f32 %v5955, %v6211
        %v6278 = vadd.f32 %v5956, %v6214
        %v6279 = vadd.f32 %v5957, %v6219
        %v6280 = vadd.f32 %v5958, %v6222
        %v6281 = vadd.f32 %v5959, %v6227
        %v6282 = vadd.f32 %v5960, %v6230
        %v6283 = vadd.f32 %v5961, %v6235
        %v6284 = vadd.f32 %v5962, %v6238
        %v6285 = vadd.f32 %v5963, %v6243
        %v6286 = vadd.f32 %v5964, %v6246
        %v6287 = vadd.f32 %v5965, %v6251
        %v6288 = vadd.f32 %v5966, %v6254
        %v6289 = vld [vmem:[%s2708 + $0x2] sm:$0xff]
        %v6290 = vld [vmem:[%s2708 + $0xa] sm:$0xff]
        %v6291 = vld [vmem:[%s2708 + $0x1a] sm:$0xff]
        %v6292 = vld [vmem:[%s2708 + $0x22] sm:$0xff]
        %v6293 = vld [vmem:[%s2708 + $0x32] sm:$0xff]
        %v6294 = vld [vmem:[%s2708 + $0x3a] sm:$0xff]
        %v6295 = vld [vmem:[%s2708 + $0x4a] sm:$0xff]
        %v6296 = vld [vmem:[%s2708 + $0x52] sm:$0xff]
        %v6297 = vld [vmem:[%s2708 + $0x62] sm:$0xff]
        %v6298 = vld [vmem:[%s2708 + $0x6a] sm:$0xff]
        %v6299 = vld [vmem:[%s2708 + $0x7a] sm:$0xff]
        %v6300 = vld [vmem:[%s2708 + $0x82] sm:$0xff]
        %v6301 = vld [vmem:[%s2708 + $0x92] sm:$0xff]
        %v6302 = vld [vmem:[%s2708 + $0x9a] sm:$0xff]
        %v6303 = vld [vmem:[%s2708 + $0xaa] sm:$0xff]
        %v6304 = vld [vmem:[%s2708 + $0xb2] sm:$0xff]
        %v6305 = vld [vmem:[%s2708 + $0xc2] sm:$0xff]
        %v6306 = vld [vmem:[%s2708 + $0xca] sm:$0xff]
        %v6307 = vld [vmem:[%s2708 + $0xda] sm:$0xff]
        %v6308 = vld [vmem:[%s2708 + $0xe2] sm:$0xff]
        %v6309 = vld [vmem:[%s2708 + $0xf2] sm:$0xff]
        %v6310 = vld [vmem:[%s2708 + $0xfa] sm:$0xff]
        %v6311 = vld [vmem:[%s2708 + $0x10a] sm:$0xff]
        %v6312 = vld [vmem:[%s2708 + $0x112] sm:$0xff]
        %v6313 = vld [vmem:[%s2708 + $0x122] sm:$0xff]
        %v6314 = vld [vmem:[%s2708 + $0x12a] sm:$0xff]
        %v6315 = vld [vmem:[%s2708 + $0x13a] sm:$0xff]
        %v6316 = vld [vmem:[%s2708 + $0x142] sm:$0xff]
        %v6317 = vld [vmem:[%s2708 + $0x152] sm:$0xff]
        %v6318 = vld [vmem:[%s2708 + $0x15a] sm:$0xff]
        %v6319 = vld [vmem:[%s2708 + $0x16a] sm:$0xff]
        %v6320 = vld [vmem:[%s2708 + $0x172] sm:$0xff]
        %v6321 = vpack.c.bf16 %v6290, %v6289
        %v6322 = vpack.c.bf16 %v6292, %v6291
        %v6323 = vpack.c.bf16 %v6294, %v6293
        %v6324 = vpack.c.bf16 %v6296, %v6295
        %v6325 = vpack.c.bf16 %v6298, %v6297
        %v6326 = vpack.c.bf16 %v6300, %v6299
        %v6327 = vpack.c.bf16 %v6302, %v6301
        %v6328 = vpack.c.bf16 %v6304, %v6303
        %v6329 = vpack.c.bf16 %v6306, %v6305
        %v6330 = vpack.c.bf16 %v6308, %v6307
        %v6331 = vpack.c.bf16 %v6310, %v6309
        %v6332 = vpack.c.bf16 %v6312, %v6311
        %v6333 = vpack.c.bf16 %v6314, %v6313
        %v6334 = vpack.c.bf16 %v6316, %v6315
        %v6335 = vpack.c.bf16 %v6318, %v6317
        %v6336 = vpack.c.bf16 %v6320, %v6319
        %s6337 = scalar_lea.vmem %s5, 256
        %v6338 = vld [vmem:[%s6337] sm:$0xf]
        %v6339 = vld [vmem:[%s6337 + $0x4] sm:$0xf]
        %v6340 = vld [vmem:[%s6337 + $0x8] sm:$0xf]
        %v6341 = vld [vmem:[%s6337 + $0xc] sm:$0xf]
        %v6342 = vld [vmem:[%s6337 + $0x10] sm:$0xf]
        %v6343 = vld [vmem:[%s6337 + $0x14] sm:$0xf]
        %v6344 = vld [vmem:[%s6337 + $0x18] sm:$0xf]
        %v6345 = vld [vmem:[%s6337 + $0x1c] sm:$0xf]
        %v6354 = vunpack.c.l.b16 %v6338
        %v6355 = vunpack.c.l.b16 %v6339
        %v6356 = vunpack.c.l.b16 %v6340
        %v6357 = vunpack.c.l.b16 %v6341
        %v6358 = vunpack.c.l.b16 %v6342
        %v6359 = vunpack.c.l.b16 %v6343
        %v6360 = vunpack.c.l.b16 %v6344
        %v6361 = vunpack.c.l.b16 %v6345
        %v6362 = vpack.c.b16 %v6355, %v6354
        %v6363 = vpack.c.b16 %v6357, %v6356
        %v6364 = vpack.c.b16 %v6359, %v6358
        %v6365 = vpack.c.b16 %v6361, %v6360
        %v6371 = vsel %vm386, %v6321, 0
        %v6374 = vsel %vm386, %v6322, 0
        %v6377 = vsel %vm386, %v6323, 0
        %v6380 = vsel %vm386, %v6324, 0
        %v6383 = vsel %vm386, %v6325, 0
        %v6386 = vsel %vm386, %v6326, 0
        %v6389 = vsel %vm386, %v6327, 0
        %v6392 = vsel %vm386, %v6328, 0
        %v6395 = vsel %vm386, %v6329, 0
        %v6398 = vsel %vm386, %v6330, 0
        %v6401 = vsel %vm386, %v6331, 0
        %v6404 = vsel %vm386, %v6332, 0
        %v6407 = vsel %vm386, %v6333, 0
        %v6410 = vsel %vm386, %v6334, 0
        %v6413 = vsel %vm386, %v6335, 0
        %v6416 = vsel %vm386, %v6336, 0
        %6418 = vmatprep.subr.bf16.mxu0 0
        %6419 = vmatpush1.bf16.msra.mxu0 0
        %6420 = vmatprep.subr.bf16.mxu0 0
        %6421 = vmatpush1.bf16.msra.mxu0 0
        %6422 = vmatprep.subr.bf16.mxu0 0
        %6423 = vmatpush1.bf16.msra.mxu0 0
        %6424 = vmatprep.subr.bf16.mxu0 0
        %6425 = vmatpush1.bf16.msra.mxu0 0
        %6426 = vmatprep.subr.bf16.mxu0 0
        %6427 = vmatpush1.bf16.msra.mxu0 %v6365
        %6428 = vmatprep.subr.bf16.mxu0 0
        %6429 = vmatpush1.bf16.msra.mxu0 %v6364
        %6430 = vmatprep.subr.bf16.mxu0 0
        %6431 = vmatpush1.bf16.msra.mxu0 %v6363
        %6432 = vmatprep.subr.bf16.mxu0 0
        %6433 = vmatpush1.bf16.msra.mxu0 %v6362
        %6434 = vmatprep.subr.bf16.mxu0 0
        %6435 = vmatpush2.bf16.msra.mxu0 0
        %6436 = vmatprep.subr.bf16.mxu0 0
        %6437 = vmatpush2.bf16.msra.mxu0 0
        %6438 = vmatprep.subr.bf16.mxu0 0
        %6439 = vmatpush2.bf16.msra.mxu0 0
        %6440 = vmatprep.subr.bf16.mxu0 0
        %6441 = vmatpush2.bf16.msra.mxu0 0
        %6442 = vmatprep.subr.bf16.mxu0 0
        %6443 = vmatpush2.bf16.msra.mxu0 0
        %6444 = vmatprep.subr.bf16.mxu0 0
        %6445 = vmatpush2.bf16.msra.mxu0 0
        %6446 = vmatprep.subr.bf16.mxu0 0
        %6447 = vmatpush2.bf16.msra.mxu0 0
        %6448 = vmatprep.subr.bf16.mxu0 0
        %6449 = vmatpush2.bf16.msra.mxu0 0
        %6450 = vmatprep.mubr.bf16.mxu0 0
        %6451 = vmatmul.mubr.bf16.gmra.mxu0 %v6371
        %v6452 = vpop.f32.mrf.mxu0
        %v6453 = vadd.f32 0.0, %v6452
        %v6454 = vpop.f32.mrf.mxu0
        %v6455 = vpop.f32.mrf.mxu0
        %v6456 = vadd.f32 0.0, %v6455
        %v6457 = vpop.f32.mrf.mxu0
        %6458 = vmatprep.mubr.bf16.mxu0 0
        %6459 = vmatmul.mubr.bf16.gmra.mxu0 %v6374
        %v6460 = vpop.f32.mrf.mxu0
        %v6461 = vadd.f32 0.0, %v6460
        %v6462 = vpop.f32.mrf.mxu0
        %v6463 = vpop.f32.mrf.mxu0
        %v6464 = vadd.f32 0.0, %v6463
        %v6465 = vpop.f32.mrf.mxu0
        %6466 = vmatprep.mubr.bf16.mxu0 0
        %6467 = vmatmul.mubr.bf16.gmra.mxu0 %v6377
        %v6468 = vpop.f32.mrf.mxu0
        %v6469 = vadd.f32 0.0, %v6468
        %v6470 = vpop.f32.mrf.mxu0
        %v6471 = vpop.f32.mrf.mxu0
        %v6472 = vadd.f32 0.0, %v6471
        %v6473 = vpop.f32.mrf.mxu0
        %6474 = vmatprep.mubr.bf16.mxu0 0
        %6475 = vmatmul.mubr.bf16.gmra.mxu0 %v6380
        %v6476 = vpop.f32.mrf.mxu0
        %v6477 = vadd.f32 0.0, %v6476
        %v6478 = vpop.f32.mrf.mxu0
        %v6479 = vpop.f32.mrf.mxu0
        %v6480 = vadd.f32 0.0, %v6479
        %v6481 = vpop.f32.mrf.mxu0
        %6482 = vmatprep.mubr.bf16.mxu0 0
        %6483 = vmatmul.mubr.bf16.gmra.mxu0 %v6383
        %v6484 = vpop.f32.mrf.mxu0
        %v6485 = vadd.f32 0.0, %v6484
        %v6486 = vpop.f32.mrf.mxu0
        %v6487 = vpop.f32.mrf.mxu0
        %v6488 = vadd.f32 0.0, %v6487
        %v6489 = vpop.f32.mrf.mxu0
        %6490 = vmatprep.mubr.bf16.mxu0 0
        %6491 = vmatmul.mubr.bf16.gmra.mxu0 %v6386
        %v6492 = vpop.f32.mrf.mxu0
        %v6493 = vadd.f32 0.0, %v6492
        %v6494 = vpop.f32.mrf.mxu0
        %v6495 = vpop.f32.mrf.mxu0
        %v6496 = vadd.f32 0.0, %v6495
        %v6497 = vpop.f32.mrf.mxu0
        %6498 = vmatprep.mubr.bf16.mxu0 0
        %6499 = vmatmul.mubr.bf16.gmra.mxu0 %v6389
        %v6500 = vpop.f32.mrf.mxu0
        %v6501 = vadd.f32 0.0, %v6500
        %v6502 = vpop.f32.mrf.mxu0
        %v6503 = vpop.f32.mrf.mxu0
        %v6504 = vadd.f32 0.0, %v6503
        %v6505 = vpop.f32.mrf.mxu0
        %6506 = vmatprep.mubr.bf16.mxu0 0
        %6507 = vmatmul.mubr.bf16.gmra.mxu0 %v6392
        %v6508 = vpop.f32.mrf.mxu0
        %v6509 = vadd.f32 0.0, %v6508
        %v6510 = vpop.f32.mrf.mxu0
        %v6511 = vpop.f32.mrf.mxu0
        %v6512 = vadd.f32 0.0, %v6511
        %v6513 = vpop.f32.mrf.mxu0
        %6514 = vmatprep.mubr.bf16.mxu0 0
        %6515 = vmatmul.mubr.bf16.gmra.mxu0 %v6395
        %v6516 = vpop.f32.mrf.mxu0
        %v6517 = vadd.f32 0.0, %v6516
        %v6518 = vpop.f32.mrf.mxu0
        %v6519 = vpop.f32.mrf.mxu0
        %v6520 = vadd.f32 0.0, %v6519
        %v6521 = vpop.f32.mrf.mxu0
        %6522 = vmatprep.mubr.bf16.mxu0 0
        %6523 = vmatmul.mubr.bf16.gmra.mxu0 %v6398
        %v6524 = vpop.f32.mrf.mxu0
        %v6525 = vadd.f32 0.0, %v6524
        %v6526 = vpop.f32.mrf.mxu0
        %v6527 = vpop.f32.mrf.mxu0
        %v6528 = vadd.f32 0.0, %v6527
        %v6529 = vpop.f32.mrf.mxu0
        %6530 = vmatprep.mubr.bf16.mxu0 0
        %6531 = vmatmul.mubr.bf16.gmra.mxu0 %v6401
        %v6532 = vpop.f32.mrf.mxu0
        %v6533 = vadd.f32 0.0, %v6532
        %v6534 = vpop.f32.mrf.mxu0
        %v6535 = vpop.f32.mrf.mxu0
        %v6536 = vadd.f32 0.0, %v6535
        %v6537 = vpop.f32.mrf.mxu0
        %6538 = vmatprep.mubr.bf16.mxu0 0
        %6539 = vmatmul.mubr.bf16.gmra.mxu0 %v6404
        %v6540 = vpop.f32.mrf.mxu0
        %v6541 = vadd.f32 0.0, %v6540
        %v6542 = vpop.f32.mrf.mxu0
        %v6543 = vpop.f32.mrf.mxu0
        %v6544 = vadd.f32 0.0, %v6543
        %v6545 = vpop.f32.mrf.mxu0
        %6546 = vmatprep.mubr.bf16.mxu0 0
        %6547 = vmatmul.mubr.bf16.gmra.mxu0 %v6407
        %v6548 = vpop.f32.mrf.mxu0
        %v6549 = vadd.f32 0.0, %v6548
        %v6550 = vpop.f32.mrf.mxu0
        %v6551 = vpop.f32.mrf.mxu0
        %v6552 = vadd.f32 0.0, %v6551
        %v6553 = vpop.f32.mrf.mxu0
        %6554 = vmatprep.mubr.bf16.mxu0 0
        %6555 = vmatmul.mubr.bf16.gmra.mxu0 %v6410
        %v6556 = vpop.f32.mrf.mxu0
        %v6557 = vadd.f32 0.0, %v6556
        %v6558 = vpop.f32.mrf.mxu0
        %v6559 = vpop.f32.mrf.mxu0
        %v6560 = vadd.f32 0.0, %v6559
        %v6561 = vpop.f32.mrf.mxu0
        %6562 = vmatprep.mubr.bf16.mxu0 0
        %6563 = vmatmul.mubr.bf16.gmra.mxu0 %v6413
        %v6564 = vpop.f32.mrf.mxu0
        %v6565 = vadd.f32 0.0, %v6564
        %v6566 = vpop.f32.mrf.mxu0
        %v6567 = vpop.f32.mrf.mxu0
        %v6568 = vadd.f32 0.0, %v6567
        %v6569 = vpop.f32.mrf.mxu0
        %6570 = vmatprep.mubr.bf16.mxu0 0
        %6571 = vmatmul.mubr.bf16.gmra.mxu0 %v6416
        %v6572 = vpop.f32.mrf.mxu0
        %v6573 = vadd.f32 0.0, %v6572
        %v6574 = vpop.f32.mrf.mxu0
        %v6575 = vpop.f32.mrf.mxu0
        %v6576 = vadd.f32 0.0, %v6575
        %v6577 = vpop.f32.mrf.mxu0
        %6578 = vdwg.mxu0
        %v6579 = vadd.f32 %v6257, %v6453
        %v6580 = vadd.f32 %v6258, %v6456
        %v6581 = vadd.f32 %v6259, %v6461
        %v6582 = vadd.f32 %v6260, %v6464
        %v6583 = vadd.f32 %v6261, %v6469
        %v6584 = vadd.f32 %v6262, %v6472
        %v6585 = vadd.f32 %v6263, %v6477
        %v6586 = vadd.f32 %v6264, %v6480
        %v6587 = vadd.f32 %v6265, %v6485
        %v6588 = vadd.f32 %v6266, %v6488
        %v6589 = vadd.f32 %v6267, %v6493
        %v6590 = vadd.f32 %v6268, %v6496
        %v6591 = vadd.f32 %v6269, %v6501
        %v6592 = vadd.f32 %v6270, %v6504
        %v6593 = vadd.f32 %v6271, %v6509
        %v6594 = vadd.f32 %v6272, %v6512
        %v6595 = vadd.f32 %v6273, %v6517
        %v6596 = vadd.f32 %v6274, %v6520
        %v6597 = vadd.f32 %v6275, %v6525
        %v6598 = vadd.f32 %v6276, %v6528
        %v6599 = vadd.f32 %v6277, %v6533
        %v6600 = vadd.f32 %v6278, %v6536
        %v6601 = vadd.f32 %v6279, %v6541
        %v6602 = vadd.f32 %v6280, %v6544
        %v6603 = vadd.f32 %v6281, %v6549
        %v6604 = vadd.f32 %v6282, %v6552
        %v6605 = vadd.f32 %v6283, %v6557
        %v6606 = vadd.f32 %v6284, %v6560
        %v6607 = vadd.f32 %v6285, %v6565
        %v6608 = vadd.f32 %v6286, %v6568
        %v6609 = vadd.f32 %v6287, %v6573
        %v6610 = vadd.f32 %v6288, %v6576
        %v6611 = vld [vmem:[%s6] sm:$0x1]
        %v6613 = vlaneseq
        %v6614 = vshrl.u32 %v6613, 7
        %v6615 = vsub.s32 0, %v6614
        %v6616 = vrot.slane %v6611, %v6615
        %v6618 = vadd.f32 %v6579, %v6616
        %v6619 = vadd.f32 %v6580, %v6616
        %v6620 = vadd.f32 %v6581, %v6616
        %v6621 = vadd.f32 %v6582, %v6616
        %v6622 = vadd.f32 %v6583, %v6616
        %v6623 = vadd.f32 %v6584, %v6616
        %v6624 = vadd.f32 %v6585, %v6616
        %v6625 = vadd.f32 %v6586, %v6616
        %v6626 = vadd.f32 %v6587, %v6616
        %v6627 = vadd.f32 %v6588, %v6616
        %v6628 = vadd.f32 %v6589, %v6616
        %v6629 = vadd.f32 %v6590, %v6616
        %v6630 = vadd.f32 %v6591, %v6616
        %v6631 = vadd.f32 %v6592, %v6616
        %v6632 = vadd.f32 %v6593, %v6616
        %v6633 = vadd.f32 %v6594, %v6616
        %v6634 = vadd.f32 %v6595, %v6616
        %v6635 = vadd.f32 %v6596, %v6616
        %v6636 = vadd.f32 %v6597, %v6616
        %v6637 = vadd.f32 %v6598, %v6616
        %v6638 = vadd.f32 %v6599, %v6616
        %v6639 = vadd.f32 %v6600, %v6616
        %v6640 = vadd.f32 %v6601, %v6616
        %v6641 = vadd.f32 %v6602, %v6616
        %v6642 = vadd.f32 %v6603, %v6616
        %v6643 = vadd.f32 %v6604, %v6616
        %v6644 = vadd.f32 %v6605, %v6616
        %v6645 = vadd.f32 %v6606, %v6616
        %v6646 = vadd.f32 %v6607, %v6616
        %v6647 = vadd.f32 %v6608, %v6616
        %v6648 = vadd.f32 %v6609, %v6616
        %v6649 = vadd.f32 %v6610, %v6616
        %v6650 = vmax.f32 %v6618, 0.0
        %v6651 = vmax.f32 %v6619, 0.0
        %v6652 = vmax.f32 %v6620, 0.0
        %v6653 = vmax.f32 %v6621, 0.0
        %v6654 = vmax.f32 %v6622, 0.0
        %v6655 = vmax.f32 %v6623, 0.0
        %v6656 = vmax.f32 %v6624, 0.0
        %v6657 = vmax.f32 %v6625, 0.0
        %v6658 = vmax.f32 %v6626, 0.0
        %v6659 = vmax.f32 %v6627, 0.0
        %v6660 = vmax.f32 %v6628, 0.0
        %v6661 = vmax.f32 %v6629, 0.0
        %v6662 = vmax.f32 %v6630, 0.0
        %v6663 = vmax.f32 %v6631, 0.0
        %v6664 = vmax.f32 %v6632, 0.0
        %v6665 = vmax.f32 %v6633, 0.0
        %v6666 = vmax.f32 %v6634, 0.0
        %v6667 = vmax.f32 %v6635, 0.0
        %v6668 = vmax.f32 %v6636, 0.0
        %v6669 = vmax.f32 %v6637, 0.0
        %v6670 = vmax.f32 %v6638, 0.0
        %v6671 = vmax.f32 %v6639, 0.0
        %v6672 = vmax.f32 %v6640, 0.0
        %v6673 = vmax.f32 %v6641, 0.0
        %v6674 = vmax.f32 %v6642, 0.0
        %v6675 = vmax.f32 %v6643, 0.0
        %v6676 = vmax.f32 %v6644, 0.0
        %v6677 = vmax.f32 %v6645, 0.0
        %v6678 = vmax.f32 %v6646, 0.0
        %v6679 = vmax.f32 %v6647, 0.0
        %v6680 = vmax.f32 %v6648, 0.0
        %v6681 = vmax.f32 %v6649, 0.0
        %v6682 = vpack.c.bf16 %v6651, %v6650
        %v6683 = vpack.c.bf16 %v6653, %v6652
        %v6684 = vpack.c.bf16 %v6655, %v6654
        %v6685 = vpack.c.bf16 %v6657, %v6656
        %v6686 = vpack.c.bf16 %v6659, %v6658
        %v6687 = vpack.c.bf16 %v6661, %v6660
        %v6688 = vpack.c.bf16 %v6663, %v6662
        %v6689 = vpack.c.bf16 %v6665, %v6664
        %v6690 = vpack.c.bf16 %v6667, %v6666
        %v6691 = vpack.c.bf16 %v6669, %v6668
        %v6692 = vpack.c.bf16 %v6671, %v6670
        %v6693 = vpack.c.bf16 %v6673, %v6672
        %v6694 = vpack.c.bf16 %v6675, %v6674
        %v6695 = vpack.c.bf16 %v6677, %v6676
        %v6696 = vpack.c.bf16 %v6679, %v6678
        %v6697 = vpack.c.bf16 %v6681, %v6680
        %v6698 = vld [vmem:[%s7] sm:$0xf]
        %v6699 = vld [vmem:[%s7 + $0x4] sm:$0xf]
        %v6700 = vld [vmem:[%s7 + $0x8] sm:$0xf]
        %v6701 = vld [vmem:[%s7 + $0xc] sm:$0xf]
        %v6702 = vld [vmem:[%s7 + $0x10] sm:$0xf]
        %v6703 = vld [vmem:[%s7 + $0x14] sm:$0xf]
        %v6704 = vld [vmem:[%s7 + $0x18] sm:$0xf]
        %v6705 = vld [vmem:[%s7 + $0x1c] sm:$0xf]
        %v6706 = vld [vmem:[%s8] sm:$0x1]
        %v6708 = vlaneseq
        %v6709 = vshrl.u32 %v6708, 7
        %v6710 = vsub.s32 0, %v6709
        %v6711 = vrot.slane %v6706, %v6710
        %v6721 = vunpack.c.l.b16 %v6698
        %v6722 = vunpack.c.l.b16 %v6699
        %v6723 = vunpack.c.l.b16 %v6700
        %v6724 = vunpack.c.l.b16 %v6701
        %v6725 = vunpack.c.l.b16 %v6702
        %v6726 = vunpack.c.l.b16 %v6703
        %v6727 = vunpack.c.l.b16 %v6704
        %v6728 = vunpack.c.l.b16 %v6705
        %v6729 = vpack.c.b16 %v6722, %v6721
        %v6730 = vpack.c.b16 %v6724, %v6723
        %v6731 = vpack.c.b16 %v6726, %v6725
        %v6732 = vpack.c.b16 %v6728, %v6727
        %v6738 = vsel %vm386, %v6682, 0
        %v6741 = vsel %vm386, %v6683, 0
        %v6744 = vsel %vm386, %v6684, 0
        %v6747 = vsel %vm386, %v6685, 0
        %v6750 = vsel %vm386, %v6686, 0
        %v6753 = vsel %vm386, %v6687, 0
        %v6756 = vsel %vm386, %v6688, 0
        %v6759 = vsel %vm386, %v6689, 0
        %v6762 = vsel %vm386, %v6690, 0
        %v6765 = vsel %vm386, %v6691, 0
        %v6768 = vsel %vm386, %v6692, 0
        %v6771 = vsel %vm386, %v6693, 0
        %v6774 = vsel %vm386, %v6694, 0
        %v6777 = vsel %vm386, %v6695, 0
        %v6780 = vsel %vm386, %v6696, 0
        %v6783 = vsel %vm386, %v6697, 0
        %6785 = vmatprep.subr.bf16.mxu0 0
        %6786 = vmatpush1.bf16.msra.mxu0 0
        %6787 = vmatprep.subr.bf16.mxu0 0
        %6788 = vmatpush1.bf16.msra.mxu0 0
        %6789 = vmatprep.subr.bf16.mxu0 0
        %6790 = vmatpush1.bf16.msra.mxu0 0
        %6791 = vmatprep.subr.bf16.mxu0 0
        %6792 = vmatpush1.bf16.msra.mxu0 0
        %6793 = vmatprep.subr.bf16.mxu0 0
        %6794 = vmatpush1.bf16.msra.mxu0 %v6732
        %6795 = vmatprep.subr.bf16.mxu0 0
        %6796 = vmatpush1.bf16.msra.mxu0 %v6731
        %6797 = vmatprep.subr.bf16.mxu0 0
        %6798 = vmatpush1.bf16.msra.mxu0 %v6730
        %6799 = vmatprep.subr.bf16.mxu0 0
        %6800 = vmatpush1.bf16.msra.mxu0 %v6729
        %6801 = vmatprep.subr.bf16.mxu0 0
        %6802 = vmatpush2.bf16.msra.mxu0 0
        %6803 = vmatprep.subr.bf16.mxu0 0
        %6804 = vmatpush2.bf16.msra.mxu0 0
        %6805 = vmatprep.subr.bf16.mxu0 0
        %6806 = vmatpush2.bf16.msra.mxu0 0
        %6807 = vmatprep.subr.bf16.mxu0 0
        %6808 = vmatpush2.bf16.msra.mxu0 0
        %6809 = vmatprep.subr.bf16.mxu0 0
        %6810 = vmatpush2.bf16.msra.mxu0 0
        %6811 = vmatprep.subr.bf16.mxu0 0
        %6812 = vmatpush2.bf16.msra.mxu0 0
        %6813 = vmatprep.subr.bf16.mxu0 0
        %6814 = vmatpush2.bf16.msra.mxu0 0
        %6815 = vmatprep.subr.bf16.mxu0 0
        %6816 = vmatpush2.bf16.msra.mxu0 0
        %6817 = vmatprep.mubr.bf16.mxu0 0
        %6818 = vmatmul.mubr.bf16.gmra.mxu0 %v6738
        %v6819 = vpop.f32.mrf.mxu0
        %v6820 = vadd.f32 %v6711, %v6819
        %v6821 = vpop.f32.mrf.mxu0
        %v6822 = vpop.f32.mrf.mxu0
        %v6823 = vadd.f32 %v6711, %v6822
        %v6824 = vpop.f32.mrf.mxu0
        %6825 = vmatprep.mubr.bf16.mxu0 0
        %6826 = vmatmul.mubr.bf16.gmra.mxu0 %v6741
        %v6827 = vpop.f32.mrf.mxu0
        %v6828 = vadd.f32 %v6711, %v6827
        %v6829 = vpop.f32.mrf.mxu0
        %v6830 = vpop.f32.mrf.mxu0
        %v6831 = vadd.f32 %v6711, %v6830
        %v6832 = vpop.f32.mrf.mxu0
        %6833 = vmatprep.mubr.bf16.mxu0 0
        %6834 = vmatmul.mubr.bf16.gmra.mxu0 %v6744
        %v6835 = vpop.f32.mrf.mxu0
        %v6836 = vadd.f32 %v6711, %v6835
        %v6837 = vpop.f32.mrf.mxu0
        %v6838 = vpop.f32.mrf.mxu0
        %v6839 = vadd.f32 %v6711, %v6838
        %v6840 = vpop.f32.mrf.mxu0
        %6841 = vmatprep.mubr.bf16.mxu0 0
        %6842 = vmatmul.mubr.bf16.gmra.mxu0 %v6747
        %v6843 = vpop.f32.mrf.mxu0
        %v6844 = vadd.f32 %v6711, %v6843
        %v6845 = vpop.f32.mrf.mxu0
        %v6846 = vpop.f32.mrf.mxu0
        %v6847 = vadd.f32 %v6711, %v6846
        %v6848 = vpop.f32.mrf.mxu0
        %6849 = vmatprep.mubr.bf16.mxu0 0
        %6850 = vmatmul.mubr.bf16.gmra.mxu0 %v6750
        %v6851 = vpop.f32.mrf.mxu0
        %v6852 = vadd.f32 %v6711, %v6851
        %v6853 = vpop.f32.mrf.mxu0
        %v6854 = vpop.f32.mrf.mxu0
        %v6855 = vadd.f32 %v6711, %v6854
        %v6856 = vpop.f32.mrf.mxu0
        %6857 = vmatprep.mubr.bf16.mxu0 0
        %6858 = vmatmul.mubr.bf16.gmra.mxu0 %v6753
        %v6859 = vpop.f32.mrf.mxu0
        %v6860 = vadd.f32 %v6711, %v6859
        %v6861 = vpop.f32.mrf.mxu0
        %v6862 = vpop.f32.mrf.mxu0
        %v6863 = vadd.f32 %v6711, %v6862
        %v6864 = vpop.f32.mrf.mxu0
        %6865 = vmatprep.mubr.bf16.mxu0 0
        %6866 = vmatmul.mubr.bf16.gmra.mxu0 %v6756
        %v6867 = vpop.f32.mrf.mxu0
        %v6868 = vadd.f32 %v6711, %v6867
        %v6869 = vpop.f32.mrf.mxu0
        %v6870 = vpop.f32.mrf.mxu0
        %v6871 = vadd.f32 %v6711, %v6870
        %v6872 = vpop.f32.mrf.mxu0
        %6873 = vmatprep.mubr.bf16.mxu0 0
        %6874 = vmatmul.mubr.bf16.gmra.mxu0 %v6759
        %v6875 = vpop.f32.mrf.mxu0
        %v6876 = vadd.f32 %v6711, %v6875
        %v6877 = vpop.f32.mrf.mxu0
        %v6878 = vpop.f32.mrf.mxu0
        %v6879 = vadd.f32 %v6711, %v6878
        %v6880 = vpop.f32.mrf.mxu0
        %6881 = vmatprep.mubr.bf16.mxu0 0
        %6882 = vmatmul.mubr.bf16.gmra.mxu0 %v6762
        %v6883 = vpop.f32.mrf.mxu0
        %v6884 = vadd.f32 %v6711, %v6883
        %v6885 = vpop.f32.mrf.mxu0
        %v6886 = vpop.f32.mrf.mxu0
        %v6887 = vadd.f32 %v6711, %v6886
        %v6888 = vpop.f32.mrf.mxu0
        %6889 = vmatprep.mubr.bf16.mxu0 0
        %6890 = vmatmul.mubr.bf16.gmra.mxu0 %v6765
        %v6891 = vpop.f32.mrf.mxu0
        %v6892 = vadd.f32 %v6711, %v6891
        %v6893 = vpop.f32.mrf.mxu0
        %v6894 = vpop.f32.mrf.mxu0
        %v6895 = vadd.f32 %v6711, %v6894
        %v6896 = vpop.f32.mrf.mxu0
        %6897 = vmatprep.mubr.bf16.mxu0 0
        %6898 = vmatmul.mubr.bf16.gmra.mxu0 %v6768
        %v6899 = vpop.f32.mrf.mxu0
        %v6900 = vadd.f32 %v6711, %v6899
        %v6901 = vpop.f32.mrf.mxu0
        %v6902 = vpop.f32.mrf.mxu0
        %v6903 = vadd.f32 %v6711, %v6902
        %v6904 = vpop.f32.mrf.mxu0
        %6905 = vmatprep.mubr.bf16.mxu0 0
        %6906 = vmatmul.mubr.bf16.gmra.mxu0 %v6771
        %v6907 = vpop.f32.mrf.mxu0
        %v6908 = vadd.f32 %v6711, %v6907
        %v6909 = vpop.f32.mrf.mxu0
        %v6910 = vpop.f32.mrf.mxu0
        %v6911 = vadd.f32 %v6711, %v6910
        %v6912 = vpop.f32.mrf.mxu0
        %6913 = vmatprep.mubr.bf16.mxu0 0
        %6914 = vmatmul.mubr.bf16.gmra.mxu0 %v6774
        %v6915 = vpop.f32.mrf.mxu0
        %v6916 = vadd.f32 %v6711, %v6915
        %v6917 = vpop.f32.mrf.mxu0
        %v6918 = vpop.f32.mrf.mxu0
        %v6919 = vadd.f32 %v6711, %v6918
        %v6920 = vpop.f32.mrf.mxu0
        %6921 = vmatprep.mubr.bf16.mxu0 0
        %6922 = vmatmul.mubr.bf16.gmra.mxu0 %v6777
        %v6923 = vpop.f32.mrf.mxu0
        %v6924 = vadd.f32 %v6711, %v6923
        %v6925 = vpop.f32.mrf.mxu0
        %v6926 = vpop.f32.mrf.mxu0
        %v6927 = vadd.f32 %v6711, %v6926
        %v6928 = vpop.f32.mrf.mxu0
        %6929 = vmatprep.mubr.bf16.mxu0 0
        %6930 = vmatmul.mubr.bf16.gmra.mxu0 %v6780
        %v6931 = vpop.f32.mrf.mxu0
        %v6932 = vadd.f32 %v6711, %v6931
        %v6933 = vpop.f32.mrf.mxu0
        %v6934 = vpop.f32.mrf.mxu0
        %v6935 = vadd.f32 %v6711, %v6934
        %v6936 = vpop.f32.mrf.mxu0
        %6937 = vmatprep.mubr.bf16.mxu0 0
        %6938 = vmatmul.mubr.bf16.gmra.mxu0 %v6783
        %v6939 = vpop.f32.mrf.mxu0
        %v6940 = vadd.f32 %v6711, %v6939
        %v6941 = vpop.f32.mrf.mxu0
        %v6942 = vpop.f32.mrf.mxu0
        %v6943 = vadd.f32 %v6711, %v6942
        %v6944 = vpop.f32.mrf.mxu0
        %6945 = vdwg.mxu0
        %v6946 = vmax.f32 %v6820, 0.0
        %v6947 = vmax.f32 %v6823, 0.0
        %v6948 = vmax.f32 %v6828, 0.0
        %v6949 = vmax.f32 %v6831, 0.0
        %v6950 = vmax.f32 %v6836, 0.0
        %v6951 = vmax.f32 %v6839, 0.0
        %v6952 = vmax.f32 %v6844, 0.0
        %v6953 = vmax.f32 %v6847, 0.0
        %v6954 = vmax.f32 %v6852, 0.0
        %v6955 = vmax.f32 %v6855, 0.0
        %v6956 = vmax.f32 %v6860, 0.0
        %v6957 = vmax.f32 %v6863, 0.0
        %v6958 = vmax.f32 %v6868, 0.0
        %v6959 = vmax.f32 %v6871, 0.0
        %v6960 = vmax.f32 %v6876, 0.0
        %v6961 = vmax.f32 %v6879, 0.0
        %v6962 = vmax.f32 %v6884, 0.0
        %v6963 = vmax.f32 %v6887, 0.0
        %v6964 = vmax.f32 %v6892, 0.0
        %v6965 = vmax.f32 %v6895, 0.0
        %v6966 = vmax.f32 %v6900, 0.0
        %v6967 = vmax.f32 %v6903, 0.0
        %v6968 = vmax.f32 %v6908, 0.0
        %v6969 = vmax.f32 %v6911, 0.0
        %v6970 = vmax.f32 %v6916, 0.0
        %v6971 = vmax.f32 %v6919, 0.0
        %v6972 = vmax.f32 %v6924, 0.0
        %v6973 = vmax.f32 %v6927, 0.0
        %v6974 = vmax.f32 %v6932, 0.0
        %v6975 = vmax.f32 %v6935, 0.0
        %v6976 = vmax.f32 %v6940, 0.0
        %v6977 = vmax.f32 %v6943, 0.0
        %v6978 = vld [vmem:[%s9] sm:$0xff]
        %v6979 = vld [vmem:[%s9 + $0x8] sm:$0xff]
        %v6980 = vld [vmem:[%s9 + $0x10] sm:$0xff]
        %v6981 = vld [vmem:[%s9 + $0x18] sm:$0xff]
        %v6982 = vld [vmem:[%s9 + $0x20] sm:$0xff]
        %v6983 = vld [vmem:[%s9 + $0x28] sm:$0xff]
        %v6984 = vld [vmem:[%s9 + $0x30] sm:$0xff]
        %v6985 = vld [vmem:[%s9 + $0x38] sm:$0xff]
        %v6986 = vld [vmem:[%s9 + $0x40] sm:$0xff]
        %v6987 = vld [vmem:[%s9 + $0x48] sm:$0xff]
        %v6988 = vld [vmem:[%s9 + $0x50] sm:$0xff]
        %v6989 = vld [vmem:[%s9 + $0x58] sm:$0xff]
        %v6990 = vld [vmem:[%s9 + $0x60] sm:$0xff]
        %v6991 = vld [vmem:[%s9 + $0x68] sm:$0xff]
        %v6992 = vld [vmem:[%s9 + $0x70] sm:$0xff]
        %v6993 = vld [vmem:[%s9 + $0x78] sm:$0xff]
        %v6994 = vld [vmem:[%s9 + $0x80] sm:$0xff]
        %v6995 = vld [vmem:[%s9 + $0x88] sm:$0xff]
        %v6996 = vld [vmem:[%s9 + $0x90] sm:$0xff]
        %v6997 = vld [vmem:[%s9 + $0x98] sm:$0xff]
        %v6998 = vld [vmem:[%s9 + $0xa0] sm:$0xff]
        %v6999 = vld [vmem:[%s9 + $0xa8] sm:$0xff]
        %v7000 = vld [vmem:[%s9 + $0xb0] sm:$0xff]
        %v7001 = vld [vmem:[%s9 + $0xb8] sm:$0xff]
        %v7002 = vld [vmem:[%s9 + $0xc0] sm:$0xff]
        %v7003 = vld [vmem:[%s9 + $0xc8] sm:$0xff]
        %v7004 = vld [vmem:[%s9 + $0xd0] sm:$0xff]
        %v7005 = vld [vmem:[%s9 + $0xd8] sm:$0xff]
        %v7006 = vld [vmem:[%s9 + $0xe0] sm:$0xff]
        %v7007 = vld [vmem:[%s9 + $0xe8] sm:$0xff]
        %v7008 = vld [vmem:[%s9 + $0xf0] sm:$0xff]
        %v7009 = vld [vmem:[%s9 + $0xf8] sm:$0xff]
        %7011 = vset.pattern.permute.xlu0 0
        %7012 = vperm.xlu0 %7011, %v6946
        %v7013 = vpop.permute.xlu0 %7012
        %7016 = vset.pattern.permute.xlu0 0
        %7017 = vperm.xlu0 %7016, %v6947
        %v7018 = vpop.permute.xlu0 %7017
        %7021 = vset.pattern.permute.xlu0 0
        %7022 = vperm.xlu0 %7021, %v6948
        %v7023 = vpop.permute.xlu0 %7022
        %7026 = vset.pattern.permute.xlu0 0
        %7027 = vperm.xlu0 %7026, %v6949
        %v7028 = vpop.permute.xlu0 %7027
        %7031 = vset.pattern.permute.xlu0 0
        %7032 = vperm.xlu0 %7031, %v6950
        %v7033 = vpop.permute.xlu0 %7032
        %7036 = vset.pattern.permute.xlu0 0
        %7037 = vperm.xlu0 %7036, %v6951
        %v7038 = vpop.permute.xlu0 %7037
        %7041 = vset.pattern.permute.xlu0 0
        %7042 = vperm.xlu0 %7041, %v6952
        %v7043 = vpop.permute.xlu0 %7042
        %7046 = vset.pattern.permute.xlu0 0
        %7047 = vperm.xlu0 %7046, %v6953
        %v7048 = vpop.permute.xlu0 %7047
        %7051 = vset.pattern.permute.xlu0 0
        %7052 = vperm.xlu0 %7051, %v6954
        %v7053 = vpop.permute.xlu0 %7052
        %7056 = vset.pattern.permute.xlu0 0
        %7057 = vperm.xlu0 %7056, %v6955
        %v7058 = vpop.permute.xlu0 %7057
        %7061 = vset.pattern.permute.xlu0 0
        %7062 = vperm.xlu0 %7061, %v6956
        %v7063 = vpop.permute.xlu0 %7062
        %7066 = vset.pattern.permute.xlu0 0
        %7067 = vperm.xlu0 %7066, %v6957
        %v7068 = vpop.permute.xlu0 %7067
        %7071 = vset.pattern.permute.xlu0 0
        %7072 = vperm.xlu0 %7071, %v6958
        %v7073 = vpop.permute.xlu0 %7072
        %7076 = vset.pattern.permute.xlu0 0
        %7077 = vperm.xlu0 %7076, %v6959
        %v7078 = vpop.permute.xlu0 %7077
        %7081 = vset.pattern.permute.xlu0 0
        %7082 = vperm.xlu0 %7081, %v6960
        %v7083 = vpop.permute.xlu0 %7082
        %7086 = vset.pattern.permute.xlu0 0
        %7087 = vperm.xlu0 %7086, %v6961
        %v7088 = vpop.permute.xlu0 %7087
        %7091 = vset.pattern.permute.xlu0 0
        %7092 = vperm.xlu0 %7091, %v6962
        %v7093 = vpop.permute.xlu0 %7092
        %7096 = vset.pattern.permute.xlu0 0
        %7097 = vperm.xlu0 %7096, %v6963
        %v7098 = vpop.permute.xlu0 %7097
        %7101 = vset.pattern.permute.xlu0 0
        %7102 = vperm.xlu0 %7101, %v6964
        %v7103 = vpop.permute.xlu0 %7102
        %7106 = vset.pattern.permute.xlu0 0
        %7107 = vperm.xlu0 %7106, %v6965
        %v7108 = vpop.permute.xlu0 %7107
        %7111 = vset.pattern.permute.xlu0 0
        %7112 = vperm.xlu0 %7111, %v6966
        %v7113 = vpop.permute.xlu0 %7112
        %7116 = vset.pattern.permute.xlu0 0
        %7117 = vperm.xlu0 %7116, %v6967
        %v7118 = vpop.permute.xlu0 %7117
        %7121 = vset.pattern.permute.xlu0 0
        %7122 = vperm.xlu0 %7121, %v6968
        %v7123 = vpop.permute.xlu0 %7122
        %7126 = vset.pattern.permute.xlu0 0
        %7127 = vperm.xlu0 %7126, %v6969
        %v7128 = vpop.permute.xlu0 %7127
        %7131 = vset.pattern.permute.xlu0 0
        %7132 = vperm.xlu0 %7131, %v6970
        %v7133 = vpop.permute.xlu0 %7132
        %7136 = vset.pattern.permute.xlu0 0
        %7137 = vperm.xlu0 %7136, %v6971
        %v7138 = vpop.permute.xlu0 %7137
        %7141 = vset.pattern.permute.xlu0 0
        %7142 = vperm.xlu0 %7141, %v6972
        %v7143 = vpop.permute.xlu0 %7142
        %7146 = vset.pattern.permute.xlu0 0
        %7147 = vperm.xlu0 %7146, %v6973
        %v7148 = vpop.permute.xlu0 %7147
        %7151 = vset.pattern.permute.xlu0 0
        %7152 = vperm.xlu0 %7151, %v6974
        %v7153 = vpop.permute.xlu0 %7152
        %7156 = vset.pattern.permute.xlu0 0
        %7157 = vperm.xlu0 %7156, %v6975
        %v7158 = vpop.permute.xlu0 %7157
        %7161 = vset.pattern.permute.xlu0 0
        %7162 = vperm.xlu0 %7161, %v6976
        %v7163 = vpop.permute.xlu0 %7162
        %7166 = vset.pattern.permute.xlu0 0
        %7167 = vperm.xlu0 %7166, %v6977
        %v7168 = vpop.permute.xlu0 %7167
        %v7170 = vmul.f32 %v7013, %v6978
        %v7171 = vmul.f32 %v7018, %v6979
        %v7172 = vmul.f32 %v7023, %v6980
        %v7173 = vmul.f32 %v7028, %v6981
        %v7174 = vmul.f32 %v7033, %v6982
        %v7175 = vmul.f32 %v7038, %v6983
        %v7176 = vmul.f32 %v7043, %v6984
        %v7177 = vmul.f32 %v7048, %v6985
        %v7178 = vmul.f32 %v7053, %v6986
        %v7179 = vmul.f32 %v7058, %v6987
        %v7180 = vmul.f32 %v7063, %v6988
        %v7181 = vmul.f32 %v7068, %v6989
        %v7182 = vmul.f32 %v7073, %v6990
        %v7183 = vmul.f32 %v7078, %v6991
        %v7184 = vmul.f32 %v7083, %v6992
        %v7185 = vmul.f32 %v7088, %v6993
        %v7186 = vmul.f32 %v7093, %v6994
        %v7187 = vmul.f32 %v7098, %v6995
        %v7188 = vmul.f32 %v7103, %v6996
        %v7189 = vmul.f32 %v7108, %v6997
        %v7190 = vmul.f32 %v7113, %v6998
        %v7191 = vmul.f32 %v7118, %v6999
        %v7192 = vmul.f32 %v7123, %v7000
        %v7193 = vmul.f32 %v7128, %v7001
        %v7194 = vmul.f32 %v7133, %v7002
        %v7195 = vmul.f32 %v7138, %v7003
        %v7196 = vmul.f32 %v7143, %v7004
        %v7197 = vmul.f32 %v7148, %v7005
        %v7198 = vmul.f32 %v7153, %v7006
        %v7199 = vmul.f32 %v7158, %v7007
        %v7200 = vmul.f32 %v7163, %v7008
        %v7201 = vmul.f32 %v7168, %v7009
        %s7202 = scalar_lea.vmem %s9, 256
        %v7203 = vld [vmem:[%s7202] sm:$0xff]
        %v7204 = vld [vmem:[%s7202 + $0x8] sm:$0xff]
        %v7205 = vld [vmem:[%s7202 + $0x10] sm:$0xff]
        %v7206 = vld [vmem:[%s7202 + $0x18] sm:$0xff]
        %v7207 = vld [vmem:[%s7202 + $0x20] sm:$0xff]
        %v7208 = vld [vmem:[%s7202 + $0x28] sm:$0xff]
        %v7209 = vld [vmem:[%s7202 + $0x30] sm:$0xff]
        %v7210 = vld [vmem:[%s7202 + $0x38] sm:$0xff]
        %v7211 = vld [vmem:[%s7202 + $0x40] sm:$0xff]
        %v7212 = vld [vmem:[%s7202 + $0x48] sm:$0xff]
        %v7213 = vld [vmem:[%s7202 + $0x50] sm:$0xff]
        %v7214 = vld [vmem:[%s7202 + $0x58] sm:$0xff]
        %v7215 = vld [vmem:[%s7202 + $0x60] sm:$0xff]
        %v7216 = vld [vmem:[%s7202 + $0x68] sm:$0xff]
        %v7217 = vld [vmem:[%s7202 + $0x70] sm:$0xff]
        %v7218 = vld [vmem:[%s7202 + $0x78] sm:$0xff]
        %v7219 = vld [vmem:[%s7202 + $0x80] sm:$0xff]
        %v7220 = vld [vmem:[%s7202 + $0x88] sm:$0xff]
        %v7221 = vld [vmem:[%s7202 + $0x90] sm:$0xff]
        %v7222 = vld [vmem:[%s7202 + $0x98] sm:$0xff]
        %v7223 = vld [vmem:[%s7202 + $0xa0] sm:$0xff]
        %v7224 = vld [vmem:[%s7202 + $0xa8] sm:$0xff]
        %v7225 = vld [vmem:[%s7202 + $0xb0] sm:$0xff]
        %v7226 = vld [vmem:[%s7202 + $0xb8] sm:$0xff]
        %v7227 = vld [vmem:[%s7202 + $0xc0] sm:$0xff]
        %v7228 = vld [vmem:[%s7202 + $0xc8] sm:$0xff]
        %v7229 = vld [vmem:[%s7202 + $0xd0] sm:$0xff]
        %v7230 = vld [vmem:[%s7202 + $0xd8] sm:$0xff]
        %v7231 = vld [vmem:[%s7202 + $0xe0] sm:$0xff]
        %v7232 = vld [vmem:[%s7202 + $0xe8] sm:$0xff]
        %v7233 = vld [vmem:[%s7202 + $0xf0] sm:$0xff]
        %v7234 = vld [vmem:[%s7202 + $0xf8] sm:$0xff]
        %7235 = vset.pattern.permute.xlu0 1
        %7236 = vperm.xlu0 %7235, %v6946
        %v7237 = vpop.permute.xlu0 %7236
        %7239 = vset.pattern.permute.xlu0 1
        %7240 = vperm.xlu0 %7239, %v6947
        %v7241 = vpop.permute.xlu0 %7240
        %7243 = vset.pattern.permute.xlu0 1
        %7244 = vperm.xlu0 %7243, %v6948
        %v7245 = vpop.permute.xlu0 %7244
        %7247 = vset.pattern.permute.xlu0 1
        %7248 = vperm.xlu0 %7247, %v6949
        %v7249 = vpop.permute.xlu0 %7248
        %7251 = vset.pattern.permute.xlu0 1
        %7252 = vperm.xlu0 %7251, %v6950
        %v7253 = vpop.permute.xlu0 %7252
        %7255 = vset.pattern.permute.xlu0 1
        %7256 = vperm.xlu0 %7255, %v6951
        %v7257 = vpop.permute.xlu0 %7256
        %7259 = vset.pattern.permute.xlu0 1
        %7260 = vperm.xlu0 %7259, %v6952
        %v7261 = vpop.permute.xlu0 %7260
        %7263 = vset.pattern.permute.xlu0 1
        %7264 = vperm.xlu0 %7263, %v6953
        %v7265 = vpop.permute.xlu0 %7264
        %7267 = vset.pattern.permute.xlu0 1
        %7268 = vperm.xlu0 %7267, %v6954
        %v7269 = vpop.permute.xlu0 %7268
        %7271 = vset.pattern.permute.xlu0 1
        %7272 = vperm.xlu0 %7271, %v6955
        %v7273 = vpop.permute.xlu0 %7272
        %7275 = vset.pattern.permute.xlu0 1
        %7276 = vperm.xlu0 %7275, %v6956
        %v7277 = vpop.permute.xlu0 %7276
        %7279 = vset.pattern.permute.xlu0 1
        %7280 = vperm.xlu0 %7279, %v6957
        %v7281 = vpop.permute.xlu0 %7280
        %7283 = vset.pattern.permute.xlu0 1
        %7284 = vperm.xlu0 %7283, %v6958
        %v7285 = vpop.permute.xlu0 %7284
        %7287 = vset.pattern.permute.xlu0 1
        %7288 = vperm.xlu0 %7287, %v6959
        %v7289 = vpop.permute.xlu0 %7288
        %7291 = vset.pattern.permute.xlu0 1
        %7292 = vperm.xlu0 %7291, %v6960
        %v7293 = vpop.permute.xlu0 %7292
        %7295 = vset.pattern.permute.xlu0 1
        %7296 = vperm.xlu0 %7295, %v6961
        %v7297 = vpop.permute.xlu0 %7296
        %7299 = vset.pattern.permute.xlu0 1
        %7300 = vperm.xlu0 %7299, %v6962
        %v7301 = vpop.permute.xlu0 %7300
        %7303 = vset.pattern.permute.xlu0 1
        %7304 = vperm.xlu0 %7303, %v6963
        %v7305 = vpop.permute.xlu0 %7304
        %7307 = vset.pattern.permute.xlu0 1
        %7308 = vperm.xlu0 %7307, %v6964
        %v7309 = vpop.permute.xlu0 %7308
        %7311 = vset.pattern.permute.xlu0 1
        %7312 = vperm.xlu0 %7311, %v6965
        %v7313 = vpop.permute.xlu0 %7312
        %7315 = vset.pattern.permute.xlu0 1
        %7316 = vperm.xlu0 %7315, %v6966
        %v7317 = vpop.permute.xlu0 %7316
        %7319 = vset.pattern.permute.xlu0 1
        %7320 = vperm.xlu0 %7319, %v6967
        %v7321 = vpop.permute.xlu0 %7320
        %7323 = vset.pattern.permute.xlu0 1
        %7324 = vperm.xlu0 %7323, %v6968
        %v7325 = vpop.permute.xlu0 %7324
        %7327 = vset.pattern.permute.xlu0 1
        %7328 = vperm.xlu0 %7327, %v6969
        %v7329 = vpop.permute.xlu0 %7328
        %7331 = vset.pattern.permute.xlu0 1
        %7332 = vperm.xlu0 %7331, %v6970
        %v7333 = vpop.permute.xlu0 %7332
        %7335 = vset.pattern.permute.xlu0 1
        %7336 = vperm.xlu0 %7335, %v6971
        %v7337 = vpop.permute.xlu0 %7336
        %7339 = vset.pattern.permute.xlu0 1
        %7340 = vperm.xlu0 %7339, %v6972
        %v7341 = vpop.permute.xlu0 %7340
        %7343 = vset.pattern.permute.xlu0 1
        %7344 = vperm.xlu0 %7343, %v6973
        %v7345 = vpop.permute.xlu0 %7344
        %7347 = vset.pattern.permute.xlu0 1
        %7348 = vperm.xlu0 %7347, %v6974
        %v7349 = vpop.permute.xlu0 %7348
        %7351 = vset.pattern.permute.xlu0 1
        %7352 = vperm.xlu0 %7351, %v6975
        %v7353 = vpop.permute.xlu0 %7352
        %7355 = vset.pattern.permute.xlu0 1
        %7356 = vperm.xlu0 %7355, %v6976
        %v7357 = vpop.permute.xlu0 %7356
        %7359 = vset.pattern.permute.xlu0 1
        %7360 = vperm.xlu0 %7359, %v6977
        %v7361 = vpop.permute.xlu0 %7360
        %v7363 = vmul.f32 %v7237, %v7203
        %v7364 = vmul.f32 %v7241, %v7204
        %v7365 = vmul.f32 %v7245, %v7205
        %v7366 = vmul.f32 %v7249, %v7206
        %v7367 = vmul.f32 %v7253, %v7207
        %v7368 = vmul.f32 %v7257, %v7208
        %v7369 = vmul.f32 %v7261, %v7209
        %v7370 = vmul.f32 %v7265, %v7210
        %v7371 = vmul.f32 %v7269, %v7211
        %v7372 = vmul.f32 %v7273, %v7212
        %v7373 = vmul.f32 %v7277, %v7213
        %v7374 = vmul.f32 %v7281, %v7214
        %v7375 = vmul.f32 %v7285, %v7215
        %v7376 = vmul.f32 %v7289, %v7216
        %v7377 = vmul.f32 %v7293, %v7217
        %v7378 = vmul.f32 %v7297, %v7218
        %v7379 = vmul.f32 %v7301, %v7219
        %v7380 = vmul.f32 %v7305, %v7220
        %v7381 = vmul.f32 %v7309, %v7221
        %v7382 = vmul.f32 %v7313, %v7222
        %v7383 = vmul.f32 %v7317, %v7223
        %v7384 = vmul.f32 %v7321, %v7224
        %v7385 = vmul.f32 %v7325, %v7225
        %v7386 = vmul.f32 %v7329, %v7226
        %v7387 = vmul.f32 %v7333, %v7227
        %v7388 = vmul.f32 %v7337, %v7228
        %v7389 = vmul.f32 %v7341, %v7229
        %v7390 = vmul.f32 %v7345, %v7230
        %v7391 = vmul.f32 %v7349, %v7231
        %v7392 = vmul.f32 %v7353, %v7232
        %v7393 = vmul.f32 %v7357, %v7233
        %v7394 = vmul.f32 %v7361, %v7234
        %v7395 = vadd.f32 %v7170, %v7363
        %v7396 = vadd.f32 %v7171, %v7364
        %v7397 = vadd.f32 %v7172, %v7365
        %v7398 = vadd.f32 %v7173, %v7366
        %v7399 = vadd.f32 %v7174, %v7367
        %v7400 = vadd.f32 %v7175, %v7368
        %v7401 = vadd.f32 %v7176, %v7369
        %v7402 = vadd.f32 %v7177, %v7370
        %v7403 = vadd.f32 %v7178, %v7371
        %v7404 = vadd.f32 %v7179, %v7372
        %v7405 = vadd.f32 %v7180, %v7373
        %v7406 = vadd.f32 %v7181, %v7374
        %v7407 = vadd.f32 %v7182, %v7375
        %v7408 = vadd.f32 %v7183, %v7376
        %v7409 = vadd.f32 %v7184, %v7377
        %v7410 = vadd.f32 %v7185, %v7378
        %v7411 = vadd.f32 %v7186, %v7379
        %v7412 = vadd.f32 %v7187, %v7380
        %v7413 = vadd.f32 %v7188, %v7381
        %v7414 = vadd.f32 %v7189, %v7382
        %v7415 = vadd.f32 %v7190, %v7383
        %v7416 = vadd.f32 %v7191, %v7384
        %v7417 = vadd.f32 %v7192, %v7385
        %v7418 = vadd.f32 %v7193, %v7386
        %v7419 = vadd.f32 %v7194, %v7387
        %v7420 = vadd.f32 %v7195, %v7388
        %v7421 = vadd.f32 %v7196, %v7389
        %v7422 = vadd.f32 %v7197, %v7390
        %v7423 = vadd.f32 %v7198, %v7391
        %v7424 = vadd.f32 %v7199, %v7392
        %v7425 = vadd.f32 %v7200, %v7393
        %v7426 = vadd.f32 %v7201, %v7394
        %s7427 = scalar_lea.vmem %s9, 512
        %v7428 = vld [vmem:[%s7427] sm:$0xff]
        %v7429 = vld [vmem:[%s7427 + $0x8] sm:$0xff]
        %v7430 = vld [vmem:[%s7427 + $0x10] sm:$0xff]
        %v7431 = vld [vmem:[%s7427 + $0x18] sm:$0xff]
        %v7432 = vld [vmem:[%s7427 + $0x20] sm:$0xff]
        %v7433 = vld [vmem:[%s7427 + $0x28] sm:$0xff]
        %v7434 = vld [vmem:[%s7427 + $0x30] sm:$0xff]
        %v7435 = vld [vmem:[%s7427 + $0x38] sm:$0xff]
        %v7436 = vld [vmem:[%s7427 + $0x40] sm:$0xff]
        %v7437 = vld [vmem:[%s7427 + $0x48] sm:$0xff]
        %v7438 = vld [vmem:[%s7427 + $0x50] sm:$0xff]
        %v7439 = vld [vmem:[%s7427 + $0x58] sm:$0xff]
        %v7440 = vld [vmem:[%s7427 + $0x60] sm:$0xff]
        %v7441 = vld [vmem:[%s7427 + $0x68] sm:$0xff]
        %v7442 = vld [vmem:[%s7427 + $0x70] sm:$0xff]
        %v7443 = vld [vmem:[%s7427 + $0x78] sm:$0xff]
        %v7444 = vld [vmem:[%s7427 + $0x80] sm:$0xff]
        %v7445 = vld [vmem:[%s7427 + $0x88] sm:$0xff]
        %v7446 = vld [vmem:[%s7427 + $0x90] sm:$0xff]
        %v7447 = vld [vmem:[%s7427 + $0x98] sm:$0xff]
        %v7448 = vld [vmem:[%s7427 + $0xa0] sm:$0xff]
        %v7449 = vld [vmem:[%s7427 + $0xa8] sm:$0xff]
        %v7450 = vld [vmem:[%s7427 + $0xb0] sm:$0xff]
        %v7451 = vld [vmem:[%s7427 + $0xb8] sm:$0xff]
        %v7452 = vld [vmem:[%s7427 + $0xc0] sm:$0xff]
        %v7453 = vld [vmem:[%s7427 + $0xc8] sm:$0xff]
        %v7454 = vld [vmem:[%s7427 + $0xd0] sm:$0xff]
        %v7455 = vld [vmem:[%s7427 + $0xd8] sm:$0xff]
        %v7456 = vld [vmem:[%s7427 + $0xe0] sm:$0xff]
        %v7457 = vld [vmem:[%s7427 + $0xe8] sm:$0xff]
        %v7458 = vld [vmem:[%s7427 + $0xf0] sm:$0xff]
        %v7459 = vld [vmem:[%s7427 + $0xf8] sm:$0xff]
        %7460 = vset.pattern.permute.xlu0 2
        %7461 = vperm.xlu0 %7460, %v6946
        %v7462 = vpop.permute.xlu0 %7461
        %7464 = vset.pattern.permute.xlu0 2
        %7465 = vperm.xlu0 %7464, %v6947
        %v7466 = vpop.permute.xlu0 %7465
        %7468 = vset.pattern.permute.xlu0 2
        %7469 = vperm.xlu0 %7468, %v6948
        %v7470 = vpop.permute.xlu0 %7469
        %7472 = vset.pattern.permute.xlu0 2
        %7473 = vperm.xlu0 %7472, %v6949
        %v7474 = vpop.permute.xlu0 %7473
        %7476 = vset.pattern.permute.xlu0 2
        %7477 = vperm.xlu0 %7476, %v6950
        %v7478 = vpop.permute.xlu0 %7477
        %7480 = vset.pattern.permute.xlu0 2
        %7481 = vperm.xlu0 %7480, %v6951
        %v7482 = vpop.permute.xlu0 %7481
        %7484 = vset.pattern.permute.xlu0 2
        %7485 = vperm.xlu0 %7484, %v6952
        %v7486 = vpop.permute.xlu0 %7485
        %7488 = vset.pattern.permute.xlu0 2
        %7489 = vperm.xlu0 %7488, %v6953
        %v7490 = vpop.permute.xlu0 %7489
        %7492 = vset.pattern.permute.xlu0 2
        %7493 = vperm.xlu0 %7492, %v6954
        %v7494 = vpop.permute.xlu0 %7493
        %7496 = vset.pattern.permute.xlu0 2
        %7497 = vperm.xlu0 %7496, %v6955
        %v7498 = vpop.permute.xlu0 %7497
        %7500 = vset.pattern.permute.xlu0 2
        %7501 = vperm.xlu0 %7500, %v6956
        %v7502 = vpop.permute.xlu0 %7501
        %7504 = vset.pattern.permute.xlu0 2
        %7505 = vperm.xlu0 %7504, %v6957
        %v7506 = vpop.permute.xlu0 %7505
        %7508 = vset.pattern.permute.xlu0 2
        %7509 = vperm.xlu0 %7508, %v6958
        %v7510 = vpop.permute.xlu0 %7509
        %7512 = vset.pattern.permute.xlu0 2
        %7513 = vperm.xlu0 %7512, %v6959
        %v7514 = vpop.permute.xlu0 %7513
        %7516 = vset.pattern.permute.xlu0 2
        %7517 = vperm.xlu0 %7516, %v6960
        %v7518 = vpop.permute.xlu0 %7517
        %7520 = vset.pattern.permute.xlu0 2
        %7521 = vperm.xlu0 %7520, %v6961
        %v7522 = vpop.permute.xlu0 %7521
        %7524 = vset.pattern.permute.xlu0 2
        %7525 = vperm.xlu0 %7524, %v6962
        %v7526 = vpop.permute.xlu0 %7525
        %7528 = vset.pattern.permute.xlu0 2
        %7529 = vperm.xlu0 %7528, %v6963
        %v7530 = vpop.permute.xlu0 %7529
        %7532 = vset.pattern.permute.xlu0 2
        %7533 = vperm.xlu0 %7532, %v6964
        %v7534 = vpop.permute.xlu0 %7533
        %7536 = vset.pattern.permute.xlu0 2
        %7537 = vperm.xlu0 %7536, %v6965
        %v7538 = vpop.permute.xlu0 %7537
        %7540 = vset.pattern.permute.xlu0 2
        %7541 = vperm.xlu0 %7540, %v6966
        %v7542 = vpop.permute.xlu0 %7541
        %7544 = vset.pattern.permute.xlu0 2
        %7545 = vperm.xlu0 %7544, %v6967
        %v7546 = vpop.permute.xlu0 %7545
        %7548 = vset.pattern.permute.xlu0 2
        %7549 = vperm.xlu0 %7548, %v6968
        %v7550 = vpop.permute.xlu0 %7549
        %7552 = vset.pattern.permute.xlu0 2
        %7553 = vperm.xlu0 %7552, %v6969
        %v7554 = vpop.permute.xlu0 %7553
        %7556 = vset.pattern.permute.xlu0 2
        %7557 = vperm.xlu0 %7556, %v6970
        %v7558 = vpop.permute.xlu0 %7557
        %7560 = vset.pattern.permute.xlu0 2
        %7561 = vperm.xlu0 %7560, %v6971
        %v7562 = vpop.permute.xlu0 %7561
        %7564 = vset.pattern.permute.xlu0 2
        %7565 = vperm.xlu0 %7564, %v6972
        %v7566 = vpop.permute.xlu0 %7565
        %7568 = vset.pattern.permute.xlu0 2
        %7569 = vperm.xlu0 %7568, %v6973
        %v7570 = vpop.permute.xlu0 %7569
        %7572 = vset.pattern.permute.xlu0 2
        %7573 = vperm.xlu0 %7572, %v6974
        %v7574 = vpop.permute.xlu0 %7573
        %7576 = vset.pattern.permute.xlu0 2
        %7577 = vperm.xlu0 %7576, %v6975
        %v7578 = vpop.permute.xlu0 %7577
        %7580 = vset.pattern.permute.xlu0 2
        %7581 = vperm.xlu0 %7580, %v6976
        %v7582 = vpop.permute.xlu0 %7581
        %7584 = vset.pattern.permute.xlu0 2
        %7585 = vperm.xlu0 %7584, %v6977
        %v7586 = vpop.permute.xlu0 %7585
        %v7588 = vmul.f32 %v7462, %v7428
        %v7589 = vmul.f32 %v7466, %v7429
        %v7590 = vmul.f32 %v7470, %v7430
        %v7591 = vmul.f32 %v7474, %v7431
        %v7592 = vmul.f32 %v7478, %v7432
        %v7593 = vmul.f32 %v7482, %v7433
        %v7594 = vmul.f32 %v7486, %v7434
        %v7595 = vmul.f32 %v7490, %v7435
        %v7596 = vmul.f32 %v7494, %v7436
        %v7597 = vmul.f32 %v7498, %v7437
        %v7598 = vmul.f32 %v7502, %v7438
        %v7599 = vmul.f32 %v7506, %v7439
        %v7600 = vmul.f32 %v7510, %v7440
        %v7601 = vmul.f32 %v7514, %v7441
        %v7602 = vmul.f32 %v7518, %v7442
        %v7603 = vmul.f32 %v7522, %v7443
        %v7604 = vmul.f32 %v7526, %v7444
        %v7605 = vmul.f32 %v7530, %v7445
        %v7606 = vmul.f32 %v7534, %v7446
        %v7607 = vmul.f32 %v7538, %v7447
        %v7608 = vmul.f32 %v7542, %v7448
        %v7609 = vmul.f32 %v7546, %v7449
        %v7610 = vmul.f32 %v7550, %v7450
        %v7611 = vmul.f32 %v7554, %v7451
        %v7612 = vmul.f32 %v7558, %v7452
        %v7613 = vmul.f32 %v7562, %v7453
        %v7614 = vmul.f32 %v7566, %v7454
        %v7615 = vmul.f32 %v7570, %v7455
        %v7616 = vmul.f32 %v7574, %v7456
        %v7617 = vmul.f32 %v7578, %v7457
        %v7618 = vmul.f32 %v7582, %v7458
        %v7619 = vmul.f32 %v7586, %v7459
        %v7620 = vadd.f32 %v7395, %v7588
        %v7621 = vadd.f32 %v7396, %v7589
        %v7622 = vadd.f32 %v7397, %v7590
        %v7623 = vadd.f32 %v7398, %v7591
        %v7624 = vadd.f32 %v7399, %v7592
        %v7625 = vadd.f32 %v7400, %v7593
        %v7626 = vadd.f32 %v7401, %v7594
        %v7627 = vadd.f32 %v7402, %v7595
        %v7628 = vadd.f32 %v7403, %v7596
        %v7629 = vadd.f32 %v7404, %v7597
        %v7630 = vadd.f32 %v7405, %v7598
        %v7631 = vadd.f32 %v7406, %v7599
        %v7632 = vadd.f32 %v7407, %v7600
        %v7633 = vadd.f32 %v7408, %v7601
        %v7634 = vadd.f32 %v7409, %v7602
        %v7635 = vadd.f32 %v7410, %v7603
        %v7636 = vadd.f32 %v7411, %v7604
        %v7637 = vadd.f32 %v7412, %v7605
        %v7638 = vadd.f32 %v7413, %v7606
        %v7639 = vadd.f32 %v7414, %v7607
        %v7640 = vadd.f32 %v7415, %v7608
        %v7641 = vadd.f32 %v7416, %v7609
        %v7642 = vadd.f32 %v7417, %v7610
        %v7643 = vadd.f32 %v7418, %v7611
        %v7644 = vadd.f32 %v7419, %v7612
        %v7645 = vadd.f32 %v7420, %v7613
        %v7646 = vadd.f32 %v7421, %v7614
        %v7647 = vadd.f32 %v7422, %v7615
        %v7648 = vadd.f32 %v7423, %v7616
        %v7649 = vadd.f32 %v7424, %v7617
        %v7650 = vadd.f32 %v7425, %v7618
        %v7651 = vadd.f32 %v7426, %v7619
        %s7652 = scalar_lea.vmem %s9, 768
        %v7653 = vld [vmem:[%s7652] sm:$0xff]
        %v7654 = vld [vmem:[%s7652 + $0x8] sm:$0xff]
        %v7655 = vld [vmem:[%s7652 + $0x10] sm:$0xff]
        %v7656 = vld [vmem:[%s7652 + $0x18] sm:$0xff]
        %v7657 = vld [vmem:[%s7652 + $0x20] sm:$0xff]
        %v7658 = vld [vmem:[%s7652 + $0x28] sm:$0xff]
        %v7659 = vld [vmem:[%s7652 + $0x30] sm:$0xff]
        %v7660 = vld [vmem:[%s7652 + $0x38] sm:$0xff]
        %v7661 = vld [vmem:[%s7652 + $0x40] sm:$0xff]
        %v7662 = vld [vmem:[%s7652 + $0x48] sm:$0xff]
        %v7663 = vld [vmem:[%s7652 + $0x50] sm:$0xff]
        %v7664 = vld [vmem:[%s7652 + $0x58] sm:$0xff]
        %v7665 = vld [vmem:[%s7652 + $0x60] sm:$0xff]
        %v7666 = vld [vmem:[%s7652 + $0x68] sm:$0xff]
        %v7667 = vld [vmem:[%s7652 + $0x70] sm:$0xff]
        %v7668 = vld [vmem:[%s7652 + $0x78] sm:$0xff]
        %v7669 = vld [vmem:[%s7652 + $0x80] sm:$0xff]
        %v7670 = vld [vmem:[%s7652 + $0x88] sm:$0xff]
        %v7671 = vld [vmem:[%s7652 + $0x90] sm:$0xff]
        %v7672 = vld [vmem:[%s7652 + $0x98] sm:$0xff]
        %v7673 = vld [vmem:[%s7652 + $0xa0] sm:$0xff]
        %v7674 = vld [vmem:[%s7652 + $0xa8] sm:$0xff]
        %v7675 = vld [vmem:[%s7652 + $0xb0] sm:$0xff]
        %v7676 = vld [vmem:[%s7652 + $0xb8] sm:$0xff]
        %v7677 = vld [vmem:[%s7652 + $0xc0] sm:$0xff]
        %v7678 = vld [vmem:[%s7652 + $0xc8] sm:$0xff]
        %v7679 = vld [vmem:[%s7652 + $0xd0] sm:$0xff]
        %v7680 = vld [vmem:[%s7652 + $0xd8] sm:$0xff]
        %v7681 = vld [vmem:[%s7652 + $0xe0] sm:$0xff]
        %v7682 = vld [vmem:[%s7652 + $0xe8] sm:$0xff]
        %v7683 = vld [vmem:[%s7652 + $0xf0] sm:$0xff]
        %v7684 = vld [vmem:[%s7652 + $0xf8] sm:$0xff]
        %7685 = vset.pattern.permute.xlu0 3
        %7686 = vperm.xlu0 %7685, %v6946
        %v7687 = vpop.permute.xlu0 %7686
        %7689 = vset.pattern.permute.xlu0 3
        %7690 = vperm.xlu0 %7689, %v6947
        %v7691 = vpop.permute.xlu0 %7690
        %7693 = vset.pattern.permute.xlu0 3
        %7694 = vperm.xlu0 %7693, %v6948
        %v7695 = vpop.permute.xlu0 %7694
        %7697 = vset.pattern.permute.xlu0 3
        %7698 = vperm.xlu0 %7697, %v6949
        %v7699 = vpop.permute.xlu0 %7698
        %7701 = vset.pattern.permute.xlu0 3
        %7702 = vperm.xlu0 %7701, %v6950
        %v7703 = vpop.permute.xlu0 %7702
        %7705 = vset.pattern.permute.xlu0 3
        %7706 = vperm.xlu0 %7705, %v6951
        %v7707 = vpop.permute.xlu0 %7706
        %7709 = vset.pattern.permute.xlu0 3
        %7710 = vperm.xlu0 %7709, %v6952
        %v7711 = vpop.permute.xlu0 %7710
        %7713 = vset.pattern.permute.xlu0 3
        %7714 = vperm.xlu0 %7713, %v6953
        %v7715 = vpop.permute.xlu0 %7714
        %7717 = vset.pattern.permute.xlu0 3
        %7718 = vperm.xlu0 %7717, %v6954
        %v7719 = vpop.permute.xlu0 %7718
        %7721 = vset.pattern.permute.xlu0 3
        %7722 = vperm.xlu0 %7721, %v6955
        %v7723 = vpop.permute.xlu0 %7722
        %7725 = vset.pattern.permute.xlu0 3
        %7726 = vperm.xlu0 %7725, %v6956
        %v7727 = vpop.permute.xlu0 %7726
        %7729 = vset.pattern.permute.xlu0 3
        %7730 = vperm.xlu0 %7729, %v6957
        %v7731 = vpop.permute.xlu0 %7730
        %7733 = vset.pattern.permute.xlu0 3
        %7734 = vperm.xlu0 %7733, %v6958
        %v7735 = vpop.permute.xlu0 %7734
        %7737 = vset.pattern.permute.xlu0 3
        %7738 = vperm.xlu0 %7737, %v6959
        %v7739 = vpop.permute.xlu0 %7738
        %7741 = vset.pattern.permute.xlu0 3
        %7742 = vperm.xlu0 %7741, %v6960
        %v7743 = vpop.permute.xlu0 %7742
        %7745 = vset.pattern.permute.xlu0 3
        %7746 = vperm.xlu0 %7745, %v6961
        %v7747 = vpop.permute.xlu0 %7746
        %7749 = vset.pattern.permute.xlu0 3
        %7750 = vperm.xlu0 %7749, %v6962
        %v7751 = vpop.permute.xlu0 %7750
        %7753 = vset.pattern.permute.xlu0 3
        %7754 = vperm.xlu0 %7753, %v6963
        %v7755 = vpop.permute.xlu0 %7754
        %7757 = vset.pattern.permute.xlu0 3
        %7758 = vperm.xlu0 %7757, %v6964
        %v7759 = vpop.permute.xlu0 %7758
        %7761 = vset.pattern.permute.xlu0 3
        %7762 = vperm.xlu0 %7761, %v6965
        %v7763 = vpop.permute.xlu0 %7762
        %7765 = vset.pattern.permute.xlu0 3
        %7766 = vperm.xlu0 %7765, %v6966
        %v7767 = vpop.permute.xlu0 %7766
        %7769 = vset.pattern.permute.xlu0 3
        %7770 = vperm.xlu0 %7769, %v6967
        %v7771 = vpop.permute.xlu0 %7770
        %7773 = vset.pattern.permute.xlu0 3
        %7774 = vperm.xlu0 %7773, %v6968
        %v7775 = vpop.permute.xlu0 %7774
        %7777 = vset.pattern.permute.xlu0 3
        %7778 = vperm.xlu0 %7777, %v6969
        %v7779 = vpop.permute.xlu0 %7778
        %7781 = vset.pattern.permute.xlu0 3
        %7782 = vperm.xlu0 %7781, %v6970
        %v7783 = vpop.permute.xlu0 %7782
        %7785 = vset.pattern.permute.xlu0 3
        %7786 = vperm.xlu0 %7785, %v6971
        %v7787 = vpop.permute.xlu0 %7786
        %7789 = vset.pattern.permute.xlu0 3
        %7790 = vperm.xlu0 %7789, %v6972
        %v7791 = vpop.permute.xlu0 %7790
        %7793 = vset.pattern.permute.xlu0 3
        %7794 = vperm.xlu0 %7793, %v6973
        %v7795 = vpop.permute.xlu0 %7794
        %7797 = vset.pattern.permute.xlu0 3
        %7798 = vperm.xlu0 %7797, %v6974
        %v7799 = vpop.permute.xlu0 %7798
        %7801 = vset.pattern.permute.xlu0 3
        %7802 = vperm.xlu0 %7801, %v6975
        %v7803 = vpop.permute.xlu0 %7802
        %7805 = vset.pattern.permute.xlu0 3
        %7806 = vperm.xlu0 %7805, %v6976
        %v7807 = vpop.permute.xlu0 %7806
        %7809 = vset.pattern.permute.xlu0 3
        %7810 = vperm.xlu0 %7809, %v6977
        %v7811 = vpop.permute.xlu0 %7810
        %v7813 = vmul.f32 %v7687, %v7653
        %v7814 = vmul.f32 %v7691, %v7654
        %v7815 = vmul.f32 %v7695, %v7655
        %v7816 = vmul.f32 %v7699, %v7656
        %v7817 = vmul.f32 %v7703, %v7657
        %v7818 = vmul.f32 %v7707, %v7658
        %v7819 = vmul.f32 %v7711, %v7659
        %v7820 = vmul.f32 %v7715, %v7660
        %v7821 = vmul.f32 %v7719, %v7661
        %v7822 = vmul.f32 %v7723, %v7662
        %v7823 = vmul.f32 %v7727, %v7663
        %v7824 = vmul.f32 %v7731, %v7664
        %v7825 = vmul.f32 %v7735, %v7665
        %v7826 = vmul.f32 %v7739, %v7666
        %v7827 = vmul.f32 %v7743, %v7667
        %v7828 = vmul.f32 %v7747, %v7668
        %v7829 = vmul.f32 %v7751, %v7669
        %v7830 = vmul.f32 %v7755, %v7670
        %v7831 = vmul.f32 %v7759, %v7671
        %v7832 = vmul.f32 %v7763, %v7672
        %v7833 = vmul.f32 %v7767, %v7673
        %v7834 = vmul.f32 %v7771, %v7674
        %v7835 = vmul.f32 %v7775, %v7675
        %v7836 = vmul.f32 %v7779, %v7676
        %v7837 = vmul.f32 %v7783, %v7677
        %v7838 = vmul.f32 %v7787, %v7678
        %v7839 = vmul.f32 %v7791, %v7679
        %v7840 = vmul.f32 %v7795, %v7680
        %v7841 = vmul.f32 %v7799, %v7681
        %v7842 = vmul.f32 %v7803, %v7682
        %v7843 = vmul.f32 %v7807, %v7683
        %v7844 = vmul.f32 %v7811, %v7684
        %v7845 = vadd.f32 %v7620, %v7813
        %v7846 = vadd.f32 %v7621, %v7814
        %v7847 = vadd.f32 %v7622, %v7815
        %v7848 = vadd.f32 %v7623, %v7816
        %v7849 = vadd.f32 %v7624, %v7817
        %v7850 = vadd.f32 %v7625, %v7818
        %v7851 = vadd.f32 %v7626, %v7819
        %v7852 = vadd.f32 %v7627, %v7820
        %v7853 = vadd.f32 %v7628, %v7821
        %v7854 = vadd.f32 %v7629, %v7822
        %v7855 = vadd.f32 %v7630, %v7823
        %v7856 = vadd.f32 %v7631, %v7824
        %v7857 = vadd.f32 %v7632, %v7825
        %v7858 = vadd.f32 %v7633, %v7826
        %v7859 = vadd.f32 %v7634, %v7827
        %v7860 = vadd.f32 %v7635, %v7828
        %v7861 = vadd.f32 %v7636, %v7829
        %v7862 = vadd.f32 %v7637, %v7830
        %v7863 = vadd.f32 %v7638, %v7831
        %v7864 = vadd.f32 %v7639, %v7832
        %v7865 = vadd.f32 %v7640, %v7833
        %v7866 = vadd.f32 %v7641, %v7834
        %v7867 = vadd.f32 %v7642, %v7835
        %v7868 = vadd.f32 %v7643, %v7836
        %v7869 = vadd.f32 %v7644, %v7837
        %v7870 = vadd.f32 %v7645, %v7838
        %v7871 = vadd.f32 %v7646, %v7839
        %v7872 = vadd.f32 %v7647, %v7840
        %v7873 = vadd.f32 %v7648, %v7841
        %v7874 = vadd.f32 %v7649, %v7842
        %v7875 = vadd.f32 %v7650, %v7843
        %v7876 = vadd.f32 %v7651, %v7844
        %v7877 = vld [vmem:[%s10] sm:$0xff]
        %v7878 = vld [vmem:[%s10 + $0x8] sm:$0xff]
        %v7879 = vpack.c.bf16 %v7846, %v7845
        %v7880 = vpack.c.bf16 %v7848, %v7847
        %v7881 = vpack.c.bf16 %v7850, %v7849
        %v7882 = vpack.c.bf16 %v7852, %v7851
        %v7883 = vpack.c.bf16 %v7854, %v7853
        %v7884 = vpack.c.bf16 %v7856, %v7855
        %v7885 = vpack.c.bf16 %v7858, %v7857
        %v7886 = vpack.c.bf16 %v7860, %v7859
        %v7887 = vpack.c.bf16 %v7862, %v7861
        %v7888 = vpack.c.bf16 %v7864, %v7863
        %v7889 = vpack.c.bf16 %v7866, %v7865
        %v7890 = vpack.c.bf16 %v7868, %v7867
        %v7891 = vpack.c.bf16 %v7870, %v7869
        %v7892 = vpack.c.bf16 %v7872, %v7871
        %v7893 = vpack.c.bf16 %v7874, %v7873
        %v7894 = vpack.c.bf16 %v7876, %v7875
        %v7897 = vunpack.c.l.b16 %v7877
        %v7898 = vunpack.c.h.b16 %v7877
        %v7899 = vunpack.c.l.b16 %v7878
        %v7900 = vunpack.c.h.b16 %v7878
        %v7901 = vpack.c.b16 %v7899, %v7897
        %v7902 = vpack.c.b16 %v7900, %v7898
        %7905 = vmatprep.subr.bf16.mxu0 0
        %7906 = vmatpush1.bf16.msra.mxu0 %v7886
        %7907 = vmatprep.subr.bf16.mxu0 0
        %7908 = vmatpush1.bf16.msra.mxu0 %v7885
        %7909 = vmatprep.subr.bf16.mxu0 0
        %7910 = vmatpush1.bf16.msra.mxu0 %v7884
        %7911 = vmatprep.subr.bf16.mxu0 0
        %7912 = vmatpush1.bf16.msra.mxu0 %v7883
        %7913 = vmatprep.subr.bf16.mxu0 0
        %7914 = vmatpush1.bf16.msra.mxu0 %v7882
        %7915 = vmatprep.subr.bf16.mxu0 0
        %7916 = vmatpush1.bf16.msra.mxu0 %v7881
        %7917 = vmatprep.subr.bf16.mxu0 0
        %7918 = vmatpush1.bf16.msra.mxu0 %v7880
        %7919 = vmatprep.subr.bf16.mxu0 0
        %7920 = vmatpush1.bf16.msra.mxu0 %v7879
        %7921 = vmatprep.subr.bf16.mxu0 0
        %7922 = vmatpush2.bf16.msra.mxu0 %v7894
        %7923 = vmatprep.subr.bf16.mxu0 0
        %7924 = vmatpush2.bf16.msra.mxu0 %v7893
        %7925 = vmatprep.subr.bf16.mxu0 0
        %7926 = vmatpush2.bf16.msra.mxu0 %v7892
        %7927 = vmatprep.subr.bf16.mxu0 0
        %7928 = vmatpush2.bf16.msra.mxu0 %v7891
        %7929 = vmatprep.subr.bf16.mxu0 0
        %7930 = vmatpush2.bf16.msra.mxu0 %v7890
        %7931 = vmatprep.subr.bf16.mxu0 0
        %7932 = vmatpush2.bf16.msra.mxu0 %v7889
        %7933 = vmatprep.subr.bf16.mxu0 0
        %7934 = vmatpush2.bf16.msra.mxu0 %v7888
        %7935 = vmatprep.subr.bf16.mxu0 0
        %7936 = vmatpush2.bf16.msra.mxu0 %v7887
        %7937 = vmatprep.mubr.bf16.mxu0 %v7902
        %7938 = vmatmul.mubr.bf16.gmra.mxu0 %v7901
        %v7939 = vpop.f32.mrf.mxu0
        %v7940 = vadd.f32 0.0, %v7939
        %v7941 = vpop.f32.mrf.mxu0
        %v7942 = vpop.f32.mrf.mxu0
        %v7943 = vadd.f32 0.0, %v7942
        %v7944 = vpop.f32.mrf.mxu0
        %7945 = vdwg.mxu0
        %vm7946 = vcmask 261120
        %7947 = vst.msk [vmem:[%s379] sm:$0xff] %vm7946, %v7940
        %7948 = vst.msk [vmem:[%s379 + $0x8] sm:$0xff] %vm7946, %v7943
        %s7949 = sand.u32 %s269, 1
        %s7950 = scalar_lea.sflag [#allocation4], %s7949
        %s7951 = sand.u32 %s269, 1
        %s7952 = smul.addr %s7951, 16
        %s7953 = scalar_lea.vmem [#allocation3], %s7952
        // Predicated region
        $region65: #{embed_encoder_forward.1} parent=63 // pred_check
          %p7954 = pneg %p279
        $region66: #{embed_encoder_forward.1} parent=63 // pred_check_branch
          %7956 = sbr.rel (%p7954) target = $region68
        $region67: #{embed_encoder_forward.1} parent=63 // pred_region
          %s7958 = ssub.s32 256, 256
          %7959 = vsyncadd %s7950, %s7958
          %s7960 = smul.addr %s25, 2
          %s7961 = smul.addr %s7960, 128
          %s7962 = scalar_lea.hbm %s11, %s7961
          %s7963 = sshll.u32 %s7953, 4
          %s7964 = int_to_ptr.vmem [resolvable:$true] %s7963
          %7969 = dma.vmem_to_hbm [thread:$0]  %s7964, 256, %s7962, %s7950, 128, 128, 8
        $region68: #{embed_encoder_forward.1} parent=63 // pred_fallthru
          _
      $region64: #{embed_encoder_forward.1} parent=5 // pred_fallthru
        _
      %p7970 = scmp.le.s32.totalorder 2, %s20
      // Predicated region
      $region69: #{embed_encoder_forward.1} parent=5 // pred_check
        %p7971 = pneg %p7970
      $region70: #{embed_encoder_forward.1} parent=5 // pred_check_branch
        %7973 = sbr.rel (%p7971) target = $region72
      $region71: #{embed_encoder_forward.1} parent=5 // pred_region
        %s7974 = ssub.s32 %s20, 2
        // Predicated region
        $region73: #{embed_encoder_forward.1} parent=71 // pred_check
          %p7975 = pneg %p285
        $region74: #{embed_encoder_forward.1} parent=71 // pred_check_branch
          %7977 = sbr.rel (%p7975) target = $region76
        $region75: #{embed_encoder_forward.1} parent=71 // pred_region
          %s7978 = sand.u32 %s270, 1
          %s7979 = scalar_lea.sflag [#allocation4], %s7978
          %s7980 = sand.u32 %s270, 1
          %s7981 = smul.addr %s7980, 16
          %s7982 = scalar_lea.vmem [#allocation3], %s7981
          %7983 = dma.done %s7979, 256
        $region76: #{embed_encoder_forward.1} parent=71 // pred_fallthru
          _
      $region72: #{embed_encoder_forward.1} parent=5 // pred_fallthru
        _
    $region6: #{embed_encoder_forward.1} parent=1 // loop_footer
      %s24 = sadd.s32 1, %s20
    $region7: #{embed_encoder_forward.1} parent=1 // loop_footer_branch
      %19 = sbr.rel target = $region3
    $region8: #{embed_encoder_forward.1} parent=1 // loop_exit
      _
    %7984 = vsyncpa [#allocation4], 1
    %s7985 = scalar_lea.sflag [#allocation4], 1
    %7986 = vsyncpa %s7985, 1

</llo_original>
